<compile_context>
chip_gen: v6e
topology: v6e:2x2x1
jax: 0.10.0
libtpu: 0.0.40
codegen_flags: <defaults>
</compile_context>

<pallas_src>
import jax
import jax.numpy as jnp
from jax.experimental import pallas as pl
from jax.experimental.pallas import tpu as pltpu


# ----------------------------- Pallas kernel -------------------------------

def _make_kernel(H, W, c_out):
    """Build the fused NetPart1 kernel for a fixed (H, W, c_out)."""
    H2, W2 = H - 4, W - 4          # conv2 output spatial dims
    Hp, Wp = H2 // 2, W2 // 2      # pooled output spatial dims
    n2 = H2 * W                    # conv2 rows in the flat (stride-W) grid

    def kernel(p1_ref, w1_ref, b1_ref, w2_ref, b2_ref, o_ref,
               y1_ref, z_ref):
        # ---- conv1 (1 -> d1, 3x3, valid) + bias + ReLU: one K=9 MXU GEMM.
        # Rows of p1 / y1 are r = h*W + w over the full HxW grid; rows with
        # h >= H-2 or w >= W-2 hold finite (zero-padded-input) garbage that
        # valid conv2/pool outputs never consume.
        y1 = jnp.dot(p1_ref[0], w1_ref[...],
                     preferred_element_type=jnp.float32)
        y1_ref[...] = jnp.maximum(y1 + b1_ref[...], 0.0)

        # ---- conv2 (d1 -> c_out, 3x3, valid): 9 shifted GEMMs, f32 accum.
        # Output row r = h*W + w reads y1 rows r + i*W + j for tap (i, j).
        acc = jnp.zeros((n2, c_out), jnp.float32)
        for t in range(9):
            i, j = divmod(t, 3)
            s = i * W + j
            acc = acc + jnp.dot(y1_ref[pl.ds(s, n2), :], w2_ref[t],
                                preferred_element_type=jnp.float32)
        # Fused bias + ReLU epilogue.
        z_ref[...] = jnp.maximum(acc + b2_ref[...], 0.0)

        # ---- 2x2 / stride-2 max pool over the H2 x W2 valid region.
        # For pooled row ph, the four taps of all Wp output columns are the
        # stride-2 row slices of z starting at 2*ph*W (+1, +W, +W+1).
        for ph in range(Hp):
            r0 = 2 * ph * W
            r1 = r0 + W
            top = jnp.maximum(z_ref[pl.ds(r0, Wp, stride=2), :],
                              z_ref[pl.ds(r0 + 1, Wp, stride=2), :])
            bot = jnp.maximum(z_ref[pl.ds(r1, Wp, stride=2), :],
                              z_ref[pl.ds(r1 + 1, Wp, stride=2), :])
            o_ref[0, pl.ds(ph * Wp, Wp), :] = jnp.maximum(top, bot)

    return kernel


# ------------------------------- JAX glue ----------------------------------

def net_part1_forward(x_nchw, params):
    """Forward pass of NetPart1.  x_nchw: [B, 1, H, W] float32."""
    w1, b1, w2, b2 = params["w1"], params["b1"], params["w2"], params["b2"]
    B, c_in, H, W = x_nchw.shape
    assert c_in == 1
    d1, c_out = w1.shape[0], w2.shape[0]
    H2, W2 = H - 4, W - 4
    Hp, Wp = H2 // 2, W2 // 2

    # conv1 im2col patches on the flat (row-stride W) grid; tiny (B*H*W*9 f32).
    xp = jnp.pad(x_nchw[:, 0], ((0, 0), (0, 2), (0, 2)))           # [B, H+2, W+2]
    p1 = jnp.stack([xp[:, a:a + H, b:b + W].reshape(B, H * W)
                    for a in range(3) for b in range(3)], axis=-1)  # [B, H*W, 9]

    # Weight / bias layouts matching the kernel's GEMMs.
    w1_mat = w1.reshape(d1, 9).T                                    # [9, d1]
    b1_row = b1.reshape(1, d1)
    w2_taps = jnp.transpose(w2, (2, 3, 1, 0)).reshape(9, d1, c_out)  # [9, d1, 64]
    b2_row = b2.reshape(1, c_out)

    pooled = pl.pallas_call(
        _make_kernel(H, W, c_out),
        out_shape=jax.ShapeDtypeStruct((B, Hp * Wp, c_out), jnp.float32),
        grid_spec=pltpu.PrefetchScalarGridSpec(
            num_scalar_prefetch=0,
            grid=(B,),
            in_specs=[
                pl.BlockSpec((1, H * W, 9), lambda b: (b, 0, 0)),     # p1
                pl.BlockSpec((9, d1), lambda b: (0, 0)),              # w1
                pl.BlockSpec((1, d1), lambda b: (0, 0)),              # b1
                pl.BlockSpec((9, d1, c_out), lambda b: (0, 0, 0)),    # w2 taps
                pl.BlockSpec((1, c_out), lambda b: (0, 0)),           # b2
            ],
            out_specs=pl.BlockSpec((1, Hp * Wp, c_out), lambda b: (b, 0, 0)),
            scratch_shapes=[
                pltpu.VMEM((H * W, d1), jnp.float32),                 # y1
                pltpu.VMEM((H2 * W, c_out), jnp.float32),             # z (conv2)
            ],
        ),
        compiler_params=pltpu.CompilerParams(
            dimension_semantics=("parallel",)),
    )(p1, w1_mat, b1_row, w2_taps, b2_row)

    # Dropout2d(0.25) is identity in inference mode.
    # TODO(synk): training-mode Dropout2d (per-channel Bernoulli mask +
    # 1/(1-p) scaling) not implemented; forward matches model.eval().

    # torch.flatten(x, 1) on the NCHW tensor: channel-major ordering -> tiny
    # transpose of the ~18 KB pooled slab, then a free reshape.
    return jnp.transpose(pooled, (0, 2, 1)).reshape(B, c_out * Hp * Wp)


def _reference_forward(x_nchw, params):
    """Pure-XLA reference (matches PyTorch NetPart1 in eval mode)."""
    hi = jax.lax.Precision.HIGHEST
    dn = ("NCHW", "OIHW", "NCHW")
    y = jax.lax.conv_general_dilated(x_nchw, params["w1"], (1, 1), "VALID",
                                     dimension_numbers=dn, precision=hi)
    y = jax.nn.relu(y + params["b1"][None, :, None, None])
    y = jax.lax.conv_general_dilated(y, params["w2"], (1, 1), "VALID",
                                     dimension_numbers=dn, precision=hi)
    y = jax.nn.relu(y + params["b2"][None, :, None, None])
    B, C, Hc, Wc = y.shape
    Hp, Wp = Hc // 2, Wc // 2
    y = y[:, :, :2 * Hp, :2 * Wp].reshape(B, C, Hp, 2, Wp, 2).max(axis=(3, 5))
    return y.reshape(B, -1)


def init_params(key):
    d1, c_out = 768, 64
    k1, k2, k3, k4 = jax.random.split(key, 4)
    return {
        "w1": jax.random.normal(k1, (d1, 1, 3, 3), jnp.float32) * 0.1,
        "b1": jax.random.normal(k2, (d1,), jnp.float32) * 0.01,
        "w2": jax.random.normal(k3, (c_out, d1, 3, 3), jnp.float32) * 0.02,
        "b2": jax.random.normal(k4, (c_out,), jnp.float32) * 0.01,
    }


if __name__ == "__main__":
    key = jax.random.PRNGKey(0)
    pkey, xkey = jax.random.split(key)
    params = init_params(pkey)

    # Small input consistent with the module: 1 input channel, NCHW.
    B, H, W = 2, 16, 16
    x = jax.random.normal(xkey, (B, 1, H, W), jnp.float32)

    fwd = jax.jit(net_part1_forward)
    out = jax.block_until_ready(fwd(x, params))

    expected = (B, 64 * ((H - 4) // 2) * ((W - 4) // 2))  # (2, 2304)
    assert out.shape == expected, (out.shape, expected)
    assert out.dtype == jnp.float32

    ref = jax.block_until_ready(_reference_forward(x, params))
    assert bool(jnp.allclose(out, ref, atol=2e-2, rtol=2e-2)), (
        float(jnp.max(jnp.abs(out - ref))))

    print("KERNEL_OK")
</pallas_src>

<mosaic_0001>
module attributes {stable_mosaic.version = 11 : i64} {
  func.func @kernel(%arg0: i32, %arg1: memref<1x256x9xf32, #tpu.memory_space<vmem>>, %arg2: memref<9x768xf32, #tpu.memory_space<vmem>>, %arg3: memref<1x768xf32, #tpu.memory_space<vmem>>, %arg4: memref<9x768x64xf32, #tpu.memory_space<vmem>>, %arg5: memref<1x64xf32, #tpu.memory_space<vmem>>, %arg6: memref<1x36x64xf32, #tpu.memory_space<vmem>>, %arg7: memref<256x768xf32, #tpu.memory_space<vmem>>, %arg8: memref<192x64xf32, #tpu.memory_space<vmem>>) attributes {dimension_semantics = [#tpu.dimension_semantics<parallel>], iteration_bounds = array<i64: 2>, scalar_prefetch = 0 : i64, scratch_operands = 2 : i64, tpu.core_type = #tpu.core_type<tc>, window_params = [{transform_indices = @transform_0, window_bounds = array<i64: 1, 256, 9>}, {pipeline_mode = #tpu.pipeline_mode<synchronous>, transform_indices = @transform_1, window_bounds = array<i64: 9, 768>}, {pipeline_mode = #tpu.pipeline_mode<synchronous>, transform_indices = @transform_2, window_bounds = array<i64: 1, 768>}, {pipeline_mode = #tpu.pipeline_mode<synchronous>, transform_indices = @transform_3, window_bounds = array<i64: 9, 768, 64>}, {pipeline_mode = #tpu.pipeline_mode<synchronous>, transform_indices = @transform_4, window_bounds = array<i64: 1, 64>}, {transform_indices = @transform_5, window_bounds = array<i64: 1, 36, 64>}]} {
    %c0 = arith.constant 0 : index
    %c0_0 = arith.constant 0 : index
    %c0_1 = arith.constant 0 : index
    %0 = vector.load %arg1[%c0, %c0_0, %c0_1] : memref<1x256x9xf32, #tpu.memory_space<vmem>>, vector<1x256x9xf32>
    %1 = vector.shape_cast %0 : vector<1x256x9xf32> to vector<256x9xf32>
    %c0_2 = arith.constant 0 : index
    %c0_3 = arith.constant 0 : index
    %2 = vector.load %arg2[%c0_2, %c0_3] : memref<9x768xf32, #tpu.memory_space<vmem>>, vector<9x768xf32>
    %cst = arith.constant dense<0.000000e+00> : vector<256x768xf32>
    %3 = tpu.matmul %1, %2, %cst {dimension_numbers = #tpu.dot_dimension_numbers<[1], [0], [0], [1], [0, 0, 1, 1], [], []>} : vector<256x9xf32>, vector<9x768xf32>, vector<256x768xf32> -> vector<256x768xf32>
    %c0_4 = arith.constant 0 : index
    %c0_5 = arith.constant 0 : index
    %4 = vector.load %arg3[%c0_4, %c0_5] : memref<1x768xf32, #tpu.memory_space<vmem>>, vector<1x768xf32>
    %5 = vector.broadcast %4 : vector<1x768xf32> to vector<256x768xf32>
    %6 = arith.addf %3, %5 : vector<256x768xf32>
    %cst_6 = arith.constant 0.000000e+00 : f32
    %7 = vector.broadcast %cst_6 : f32 to vector<256x768xf32>
    %8 = arith.maximumf %6, %7 : vector<256x768xf32>
    %c0_7 = arith.constant 0 : index
    %c0_8 = arith.constant 0 : index
    %9 = vector.load %arg7[%c0_7, %c0_8] : memref<256x768xf32, #tpu.memory_space<vmem>>, vector<256x768xf32>
    tpu.vector_store %arg7[%c0_7, %c0_8], %8 {strides = array<i32>} : memref<256x768xf32, #tpu.memory_space<vmem>>, vector<256x768xf32>,
    %cst_9 = arith.constant 0.000000e+00 : f32
    %10 = vector.broadcast %cst_9 : f32 to vector<192x64xf32>
    %c0_10 = arith.constant 0 : index
    %c0_11 = arith.constant 0 : index
    %11 = vector.load %arg7[%c0_10, %c0_11] : memref<256x768xf32, #tpu.memory_space<vmem>>, vector<192x768xf32>
    %c0_12 = arith.constant 0 : index
    %c0_13 = arith.constant 0 : index
    %c0_14 = arith.constant 0 : index
    %12 = vector.load %arg4[%c0_12, %c0_13, %c0_14] : memref<9x768x64xf32, #tpu.memory_space<vmem>>, vector<1x768x64xf32>
    %13 = vector.shape_cast %12 : vector<1x768x64xf32> to vector<768x64xf32>
    %cst_15 = arith.constant dense<0.000000e+00> : vector<192x64xf32>
    %14 = tpu.matmul %11, %13, %cst_15 {dimension_numbers = #tpu.dot_dimension_numbers<[1], [0], [0], [1], [0, 0, 1, 1], [], []>} : vector<192x768xf32>, vector<768x64xf32>, vector<192x64xf32> -> vector<192x64xf32>
    %15 = arith.addf %10, %14 : vector<192x64xf32>
    %c1 = arith.constant 1 : index
    %c0_16 = arith.constant 0 : index
    %16 = vector.load %arg7[%c1, %c0_16] : memref<256x768xf32, #tpu.memory_space<vmem>>, vector<192x768xf32>
    %c1_17 = arith.constant 1 : index
    %c0_18 = arith.constant 0 : index
    %c0_19 = arith.constant 0 : index
    %17 = vector.load %arg4[%c1_17, %c0_18, %c0_19] : memref<9x768x64xf32, #tpu.memory_space<vmem>>, vector<1x768x64xf32>
    %18 = vector.shape_cast %17 : vector<1x768x64xf32> to vector<768x64xf32>
    %cst_20 = arith.constant dense<0.000000e+00> : vector<192x64xf32>
    %19 = tpu.matmul %16, %18, %cst_20 {dimension_numbers = #tpu.dot_dimension_numbers<[1], [0], [0], [1], [0, 0, 1, 1], [], []>} : vector<192x768xf32>, vector<768x64xf32>, vector<192x64xf32> -> vector<192x64xf32>
    %20 = arith.addf %15, %19 : vector<192x64xf32>
    %c2 = arith.constant 2 : index
    %c0_21 = arith.constant 0 : index
    %21 = vector.load %arg7[%c2, %c0_21] : memref<256x768xf32, #tpu.memory_space<vmem>>, vector<192x768xf32>
    %c2_22 = arith.constant 2 : index
    %c0_23 = arith.constant 0 : index
    %c0_24 = arith.constant 0 : index
    %22 = vector.load %arg4[%c2_22, %c0_23, %c0_24] : memref<9x768x64xf32, #tpu.memory_space<vmem>>, vector<1x768x64xf32>
    %23 = vector.shape_cast %22 : vector<1x768x64xf32> to vector<768x64xf32>
    %cst_25 = arith.constant dense<0.000000e+00> : vector<192x64xf32>
    %24 = tpu.matmul %21, %23, %cst_25 {dimension_numbers = #tpu.dot_dimension_numbers<[1], [0], [0], [1], [0, 0, 1, 1], [], []>} : vector<192x768xf32>, vector<768x64xf32>, vector<192x64xf32> -> vector<192x64xf32>
    %25 = arith.addf %20, %24 : vector<192x64xf32>
    %c16 = arith.constant 16 : index
    %c0_26 = arith.constant 0 : index
    %26 = vector.load %arg7[%c16, %c0_26] : memref<256x768xf32, #tpu.memory_space<vmem>>, vector<192x768xf32>
    %c3 = arith.constant 3 : index
    %c0_27 = arith.constant 0 : index
    %c0_28 = arith.constant 0 : index
    %27 = vector.load %arg4[%c3, %c0_27, %c0_28] : memref<9x768x64xf32, #tpu.memory_space<vmem>>, vector<1x768x64xf32>
    %28 = vector.shape_cast %27 : vector<1x768x64xf32> to vector<768x64xf32>
    %cst_29 = arith.constant dense<0.000000e+00> : vector<192x64xf32>
    %29 = tpu.matmul %26, %28, %cst_29 {dimension_numbers = #tpu.dot_dimension_numbers<[1], [0], [0], [1], [0, 0, 1, 1], [], []>} : vector<192x768xf32>, vector<768x64xf32>, vector<192x64xf32> -> vector<192x64xf32>
    %30 = arith.addf %25, %29 : vector<192x64xf32>
    %c17 = arith.constant 17 : index
    %c0_30 = arith.constant 0 : index
    %31 = vector.load %arg7[%c17, %c0_30] : memref<256x768xf32, #tpu.memory_space<vmem>>, vector<192x768xf32>
    %c4 = arith.constant 4 : index
    %c0_31 = arith.constant 0 : index
    %c0_32 = arith.constant 0 : index
    %32 = vector.load %arg4[%c4, %c0_31, %c0_32] : memref<9x768x64xf32, #tpu.memory_space<vmem>>, vector<1x768x64xf32>
    %33 = vector.shape_cast %32 : vector<1x768x64xf32> to vector<768x64xf32>
    %cst_33 = arith.constant dense<0.000000e+00> : vector<192x64xf32>
    %34 = tpu.matmul %31, %33, %cst_33 {dimension_numbers = #tpu.dot_dimension_numbers<[1], [0], [0], [1], [0, 0, 1, 1], [], []>} : vector<192x768xf32>, vector<768x64xf32>, vector<192x64xf32> -> vector<192x64xf32>
    %35 = arith.addf %30, %34 : vector<192x64xf32>
    %c18 = arith.constant 18 : index
    %c0_34 = arith.constant 0 : index
    %36 = vector.load %arg7[%c18, %c0_34] : memref<256x768xf32, #tpu.memory_space<vmem>>, vector<192x768xf32>
    %c5 = arith.constant 5 : index
    %c0_35 = arith.constant 0 : index
    %c0_36 = arith.constant 0 : index
    %37 = vector.load %arg4[%c5, %c0_35, %c0_36] : memref<9x768x64xf32, #tpu.memory_space<vmem>>, vector<1x768x64xf32>
    %38 = vector.shape_cast %37 : vector<1x768x64xf32> to vector<768x64xf32>
    %cst_37 = arith.constant dense<0.000000e+00> : vector<192x64xf32>
    %39 = tpu.matmul %36, %38, %cst_37 {dimension_numbers = #tpu.dot_dimension_numbers<[1], [0], [0], [1], [0, 0, 1, 1], [], []>} : vector<192x768xf32>, vector<768x64xf32>, vector<192x64xf32> -> vector<192x64xf32>
    %40 = arith.addf %35, %39 : vector<192x64xf32>
    %c32 = arith.constant 32 : index
    %c0_38 = arith.constant 0 : index
    %41 = vector.load %arg7[%c32, %c0_38] : memref<256x768xf32, #tpu.memory_space<vmem>>, vector<192x768xf32>
    %c6 = arith.constant 6 : index
    %c0_39 = arith.constant 0 : index
    %c0_40 = arith.constant 0 : index
    %42 = vector.load %arg4[%c6, %c0_39, %c0_40] : memref<9x768x64xf32, #tpu.memory_space<vmem>>, vector<1x768x64xf32>
    %43 = vector.shape_cast %42 : vector<1x768x64xf32> to vector<768x64xf32>
    %cst_41 = arith.constant dense<0.000000e+00> : vector<192x64xf32>
    %44 = tpu.matmul %41, %43, %cst_41 {dimension_numbers = #tpu.dot_dimension_numbers<[1], [0], [0], [1], [0, 0, 1, 1], [], []>} : vector<192x768xf32>, vector<768x64xf32>, vector<192x64xf32> -> vector<192x64xf32>
    %45 = arith.addf %40, %44 : vector<192x64xf32>
    %c33 = arith.constant 33 : index
    %c0_42 = arith.constant 0 : index
    %46 = vector.load %arg7[%c33, %c0_42] : memref<256x768xf32, #tpu.memory_space<vmem>>, vector<192x768xf32>
    %c7 = arith.constant 7 : index
    %c0_43 = arith.constant 0 : index
    %c0_44 = arith.constant 0 : index
    %47 = vector.load %arg4[%c7, %c0_43, %c0_44] : memref<9x768x64xf32, #tpu.memory_space<vmem>>, vector<1x768x64xf32>
    %48 = vector.shape_cast %47 : vector<1x768x64xf32> to vector<768x64xf32>
    %cst_45 = arith.constant dense<0.000000e+00> : vector<192x64xf32>
    %49 = tpu.matmul %46, %48, %cst_45 {dimension_numbers = #tpu.dot_dimension_numbers<[1], [0], [0], [1], [0, 0, 1, 1], [], []>} : vector<192x768xf32>, vector<768x64xf32>, vector<192x64xf32> -> vector<192x64xf32>
    %50 = arith.addf %45, %49 : vector<192x64xf32>
    %c34 = arith.constant 34 : index
    %c0_46 = arith.constant 0 : index
    %51 = vector.load %arg7[%c34, %c0_46] : memref<256x768xf32, #tpu.memory_space<vmem>>, vector<192x768xf32>
    %c8 = arith.constant 8 : index
    %c0_47 = arith.constant 0 : index
    %c0_48 = arith.constant 0 : index
    %52 = vector.load %arg4[%c8, %c0_47, %c0_48] : memref<9x768x64xf32, #tpu.memory_space<vmem>>, vector<1x768x64xf32>
    %53 = vector.shape_cast %52 : vector<1x768x64xf32> to vector<768x64xf32>
    %cst_49 = arith.constant dense<0.000000e+00> : vector<192x64xf32>
    %54 = tpu.matmul %51, %53, %cst_49 {dimension_numbers = #tpu.dot_dimension_numbers<[1], [0], [0], [1], [0, 0, 1, 1], [], []>} : vector<192x768xf32>, vector<768x64xf32>, vector<192x64xf32> -> vector<192x64xf32>
    %55 = arith.addf %50, %54 : vector<192x64xf32>
    %c0_50 = arith.constant 0 : index
    %c0_51 = arith.constant 0 : index
    %56 = vector.load %arg5[%c0_50, %c0_51] : memref<1x64xf32, #tpu.memory_space<vmem>>, vector<1x64xf32>
    %57 = vector.broadcast %56 : vector<1x64xf32> to vector<192x64xf32>
    %58 = arith.addf %55, %57 : vector<192x64xf32>
    %cst_52 = arith.constant 0.000000e+00 : f32
    %59 = vector.broadcast %cst_52 : f32 to vector<192x64xf32>
    %60 = arith.maximumf %58, %59 : vector<192x64xf32>
    %c0_53 = arith.constant 0 : index
    %c0_54 = arith.constant 0 : index
    %61 = vector.load %arg8[%c0_53, %c0_54] : memref<192x64xf32, #tpu.memory_space<vmem>>, vector<192x64xf32>
    tpu.vector_store %arg8[%c0_53, %c0_54], %60 {strides = array<i32>} : memref<192x64xf32, #tpu.memory_space<vmem>>, vector<192x64xf32>,
    %c0_55 = arith.constant 0 : index
    %c0_56 = arith.constant 0 : index
    %62 = tpu.strided_load %arg8[%c0_55, %c0_56] {strides = array<i32: 2, 1>} : memref<192x64xf32, #tpu.memory_space<vmem>>, vector<6x64xf32>
    %c1_57 = arith.constant 1 : index
    %c0_58 = arith.constant 0 : index
    %63 = tpu.strided_load %arg8[%c1_57, %c0_58] {strides = array<i32: 2, 1>} : memref<192x64xf32, #tpu.memory_space<vmem>>, vector<6x64xf32>
    %64 = arith.maximumf %62, %63 : vector<6x64xf32>
    %c16_59 = arith.constant 16 : index
    %c0_60 = arith.constant 0 : index
    %65 = tpu.strided_load %arg8[%c16_59, %c0_60] {strides = array<i32: 2, 1>} : memref<192x64xf32, #tpu.memory_space<vmem>>, vector<6x64xf32>
    %c17_61 = arith.constant 17 : index
    %c0_62 = arith.constant 0 : index
    %66 = tpu.strided_load %arg8[%c17_61, %c0_62] {strides = array<i32: 2, 1>} : memref<192x64xf32, #tpu.memory_space<vmem>>, vector<6x64xf32>
    %67 = arith.maximumf %65, %66 : vector<6x64xf32>
    %68 = arith.maximumf %64, %67 : vector<6x64xf32>
    %c0_63 = arith.constant 0 : index
    %c0_64 = arith.constant 0 : index
    %c0_65 = arith.constant 0 : index
    %69 = vector.load %arg6[%c0_63, %c0_64, %c0_65] : memref<1x36x64xf32, #tpu.memory_space<vmem>>, vector<1x6x64xf32>
    %70 = vector.shape_cast %69 : vector<1x6x64xf32> to vector<6x64xf32>
    %71 = vector.shape_cast %68 : vector<6x64xf32> to vector<1x6x64xf32>
    tpu.vector_store %arg6[%c0_63, %c0_64, %c0_65], %71 {strides = array<i32>} : memref<1x36x64xf32, #tpu.memory_space<vmem>>, vector<1x6x64xf32>,
    %c32_66 = arith.constant 32 : index
    %c0_67 = arith.constant 0 : index
    %72 = tpu.strided_load %arg8[%c32_66, %c0_67] {strides = array<i32: 2, 1>} : memref<192x64xf32, #tpu.memory_space<vmem>>, vector<6x64xf32>
    %c33_68 = arith.constant 33 : index
    %c0_69 = arith.constant 0 : index
    %73 = tpu.strided_load %arg8[%c33_68, %c0_69] {strides = array<i32: 2, 1>} : memref<192x64xf32, #tpu.memory_space<vmem>>, vector<6x64xf32>
    %74 = arith.maximumf %72, %73 : vector<6x64xf32>
    %c48 = arith.constant 48 : index
    %c0_70 = arith.constant 0 : index
    %75 = tpu.strided_load %arg8[%c48, %c0_70] {strides = array<i32: 2, 1>} : memref<192x64xf32, #tpu.memory_space<vmem>>, vector<6x64xf32>
    %c49 = arith.constant 49 : index
    %c0_71 = arith.constant 0 : index
    %76 = tpu.strided_load %arg8[%c49, %c0_71] {strides = array<i32: 2, 1>} : memref<192x64xf32, #tpu.memory_space<vmem>>, vector<6x64xf32>
    %77 = arith.maximumf %75, %76 : vector<6x64xf32>
    %78 = arith.maximumf %74, %77 : vector<6x64xf32>
    %c0_72 = arith.constant 0 : index
    %c6_73 = arith.constant 6 : index
    %c0_74 = arith.constant 0 : index
    %79 = vector.load %arg6[%c0_72, %c6_73, %c0_74] : memref<1x36x64xf32, #tpu.memory_space<vmem>>, vector<1x6x64xf32>
    %80 = vector.shape_cast %79 : vector<1x6x64xf32> to vector<6x64xf32>
    %81 = vector.shape_cast %78 : vector<6x64xf32> to vector<1x6x64xf32>
    tpu.vector_store %arg6[%c0_72, %c6_73, %c0_74], %81 {strides = array<i32>} : memref<1x36x64xf32, #tpu.memory_space<vmem>>, vector<1x6x64xf32>,
    %c64 = arith.constant 64 : index
    %c0_75 = arith.constant 0 : index
    %82 = tpu.strided_load %arg8[%c64, %c0_75] {strides = array<i32: 2, 1>} : memref<192x64xf32, #tpu.memory_space<vmem>>, vector<6x64xf32>
    %c65 = arith.constant 65 : index
    %c0_76 = arith.constant 0 : index
    %83 = tpu.strided_load %arg8[%c65, %c0_76] {strides = array<i32: 2, 1>} : memref<192x64xf32, #tpu.memory_space<vmem>>, vector<6x64xf32>
    %84 = arith.maximumf %82, %83 : vector<6x64xf32>
    %c80 = arith.constant 80 : index
    %c0_77 = arith.constant 0 : index
    %85 = tpu.strided_load %arg8[%c80, %c0_77] {strides = array<i32: 2, 1>} : memref<192x64xf32, #tpu.memory_space<vmem>>, vector<6x64xf32>
    %c81 = arith.constant 81 : index
    %c0_78 = arith.constant 0 : index
    %86 = tpu.strided_load %arg8[%c81, %c0_78] {strides = array<i32: 2, 1>} : memref<192x64xf32, #tpu.memory_space<vmem>>, vector<6x64xf32>
    %87 = arith.maximumf %85, %86 : vector<6x64xf32>
    %88 = arith.maximumf %84, %87 : vector<6x64xf32>
    %c0_79 = arith.constant 0 : index
    %c12 = arith.constant 12 : index
    %c0_80 = arith.constant 0 : index
    %89 = vector.load %arg6[%c0_79, %c12, %c0_80] : memref<1x36x64xf32, #tpu.memory_space<vmem>>, vector<1x6x64xf32>
    %90 = vector.shape_cast %89 : vector<1x6x64xf32> to vector<6x64xf32>
    %91 = vector.shape_cast %88 : vector<6x64xf32> to vector<1x6x64xf32>
    tpu.vector_store %arg6[%c0_79, %c12, %c0_80], %91 {strides = array<i32>} : memref<1x36x64xf32, #tpu.memory_space<vmem>>, vector<1x6x64xf32>,
    %c96 = arith.constant 96 : index
    %c0_81 = arith.constant 0 : index
    %92 = tpu.strided_load %arg8[%c96, %c0_81] {strides = array<i32: 2, 1>} : memref<192x64xf32, #tpu.memory_space<vmem>>, vector<6x64xf32>
    %c97 = arith.constant 97 : index
    %c0_82 = arith.constant 0 : index
    %93 = tpu.strided_load %arg8[%c97, %c0_82] {strides = array<i32: 2, 1>} : memref<192x64xf32, #tpu.memory_space<vmem>>, vector<6x64xf32>
    %94 = arith.maximumf %92, %93 : vector<6x64xf32>
    %c112 = arith.constant 112 : index
    %c0_83 = arith.constant 0 : index
    %95 = tpu.strided_load %arg8[%c112, %c0_83] {strides = array<i32: 2, 1>} : memref<192x64xf32, #tpu.memory_space<vmem>>, vector<6x64xf32>
    %c113 = arith.constant 113 : index
    %c0_84 = arith.constant 0 : index
    %96 = tpu.strided_load %arg8[%c113, %c0_84] {strides = array<i32: 2, 1>} : memref<192x64xf32, #tpu.memory_space<vmem>>, vector<6x64xf32>
    %97 = arith.maximumf %95, %96 : vector<6x64xf32>
    %98 = arith.maximumf %94, %97 : vector<6x64xf32>
    %c0_85 = arith.constant 0 : index
    %c18_86 = arith.constant 18 : index
    %c0_87 = arith.constant 0 : index
    %99 = vector.load %arg6[%c0_85, %c18_86, %c0_87] : memref<1x36x64xf32, #tpu.memory_space<vmem>>, vector<1x6x64xf32>
    %100 = vector.shape_cast %99 : vector<1x6x64xf32> to vector<6x64xf32>
    %101 = vector.shape_cast %98 : vector<6x64xf32> to vector<1x6x64xf32>
    tpu.vector_store %arg6[%c0_85, %c18_86, %c0_87], %101 {strides = array<i32>} : memref<1x36x64xf32, #tpu.memory_space<vmem>>, vector<1x6x64xf32>,
    %c128 = arith.constant 128 : index
    %c0_88 = arith.constant 0 : index
    %102 = tpu.strided_load %arg8[%c128, %c0_88] {strides = array<i32: 2, 1>} : memref<192x64xf32, #tpu.memory_space<vmem>>, vector<6x64xf32>
    %c129 = arith.constant 129 : index
    %c0_89 = arith.constant 0 : index
    %103 = tpu.strided_load %arg8[%c129, %c0_89] {strides = array<i32: 2, 1>} : memref<192x64xf32, #tpu.memory_space<vmem>>, vector<6x64xf32>
    %104 = arith.maximumf %102, %103 : vector<6x64xf32>
    %c144 = arith.constant 144 : index
    %c0_90 = arith.constant 0 : index
    %105 = tpu.strided_load %arg8[%c144, %c0_90] {strides = array<i32: 2, 1>} : memref<192x64xf32, #tpu.memory_space<vmem>>, vector<6x64xf32>
    %c145 = arith.constant 145 : index
    %c0_91 = arith.constant 0 : index
    %106 = tpu.strided_load %arg8[%c145, %c0_91] {strides = array<i32: 2, 1>} : memref<192x64xf32, #tpu.memory_space<vmem>>, vector<6x64xf32>
    %107 = arith.maximumf %105, %106 : vector<6x64xf32>
    %108 = arith.maximumf %104, %107 : vector<6x64xf32>
    %c0_92 = arith.constant 0 : index
    %c24 = arith.constant 24 : index
    %c0_93 = arith.constant 0 : index
    %109 = vector.load %arg6[%c0_92, %c24, %c0_93] : memref<1x36x64xf32, #tpu.memory_space<vmem>>, vector<1x6x64xf32>
    %110 = vector.shape_cast %109 : vector<1x6x64xf32> to vector<6x64xf32>
    %111 = vector.shape_cast %108 : vector<6x64xf32> to vector<1x6x64xf32>
    tpu.vector_store %arg6[%c0_92, %c24, %c0_93], %111 {strides = array<i32>} : memref<1x36x64xf32, #tpu.memory_space<vmem>>, vector<1x6x64xf32>,
    %c160 = arith.constant 160 : index
    %c0_94 = arith.constant 0 : index
    %112 = tpu.strided_load %arg8[%c160, %c0_94] {strides = array<i32: 2, 1>} : memref<192x64xf32, #tpu.memory_space<vmem>>, vector<6x64xf32>
    %c161 = arith.constant 161 : index
    %c0_95 = arith.constant 0 : index
    %113 = tpu.strided_load %arg8[%c161, %c0_95] {strides = array<i32: 2, 1>} : memref<192x64xf32, #tpu.memory_space<vmem>>, vector<6x64xf32>
    %114 = arith.maximumf %112, %113 : vector<6x64xf32>
    %c176 = arith.constant 176 : index
    %c0_96 = arith.constant 0 : index
    %115 = tpu.strided_load %arg8[%c176, %c0_96] {strides = array<i32: 2, 1>} : memref<192x64xf32, #tpu.memory_space<vmem>>, vector<6x64xf32>
    %c177 = arith.constant 177 : index
    %c0_97 = arith.constant 0 : index
    %116 = tpu.strided_load %arg8[%c177, %c0_97] {strides = array<i32: 2, 1>} : memref<192x64xf32, #tpu.memory_space<vmem>>, vector<6x64xf32>
    %117 = arith.maximumf %115, %116 : vector<6x64xf32>
    %118 = arith.maximumf %114, %117 : vector<6x64xf32>
    %c0_98 = arith.constant 0 : index
    %c30 = arith.constant 30 : index
    %c0_99 = arith.constant 0 : index
    %119 = vector.load %arg6[%c0_98, %c30, %c0_99] : memref<1x36x64xf32, #tpu.memory_space<vmem>>, vector<1x6x64xf32>
    %120 = vector.shape_cast %119 : vector<1x6x64xf32> to vector<6x64xf32>
    %121 = vector.shape_cast %118 : vector<6x64xf32> to vector<1x6x64xf32>
    tpu.vector_store %arg6[%c0_98, %c30, %c0_99], %121 {strides = array<i32>} : memref<1x36x64xf32, #tpu.memory_space<vmem>>, vector<1x6x64xf32>,
    return
  }
  func.func @transform_0(%arg0: i32) -> (i32, i32, i32) {
    %c0_i32 = arith.constant 0 : i32
    %c0_i32_0 = arith.constant 0 : i32
    %c0_i32_1 = arith.constant 0 : i32
    return %arg0, %c0_i32, %c0_i32_0 : i32, i32, i32
  }
  func.func @transform_1(%arg0: i32) -> (i32, i32) {
    %c0_i32 = arith.constant 0 : i32
    %c0_i32_0 = arith.constant 0 : i32
    %c0_i32_1 = arith.constant 0 : i32
    return %c0_i32, %c0_i32_0 : i32, i32
  }
  func.func @transform_2(%arg0: i32) -> (i32, i32) {
    %c0_i32 = arith.constant 0 : i32
    %c0_i32_0 = arith.constant 0 : i32
    %c0_i32_1 = arith.constant 0 : i32
    return %c0_i32, %c0_i32_0 : i32, i32
  }
  func.func @transform_3(%arg0: i32) -> (i32, i32, i32) {
    %c0_i32 = arith.constant 0 : i32
    %c0_i32_0 = arith.constant 0 : i32
    %c0_i32_1 = arith.constant 0 : i32
    %c0_i32_2 = arith.constant 0 : i32
    return %c0_i32, %c0_i32_0, %c0_i32_1 : i32, i32, i32
  }
  func.func @transform_4(%arg0: i32) -> (i32, i32) {
    %c0_i32 = arith.constant 0 : i32
    %c0_i32_0 = arith.constant 0 : i32
    %c0_i32_1 = arith.constant 0 : i32
    return %c0_i32, %c0_i32_0 : i32, i32
  }
  func.func @transform_5(%arg0: i32) -> (i32, i32, i32) {
    %c0_i32 = arith.constant 0 : i32
    %c0_i32_0 = arith.constant 0 : i32
    %c0_i32_1 = arith.constant 0 : i32
    return %arg0, %c0_i32, %c0_i32_0 : i32, i32, i32
  }
}

</mosaic_0001>

<llo_original>
// kernel: net_part1_forward.1
$region0: #{net_part1_forward.1}
  #allocation0 [shape = 'u32[]', space=smem, size = 0x4, offset = 0x4, fixed_abs, tag = 'smem constant byte address 0x4 - core index']
  #allocation1 [shape = 'u32[144,128]{1,0:T(1,128)}', space=vmem, size = 0x12000, scoped, tag = 'internal scratch']
  #allocation2 [shape = 'f32[256,768]{1,0:T(8,128)}', space=vmem, size = 0xc0000, scoped, tag = 'scratch operand']
  #allocation3 [shape = 'f32[192,64]{1,0:T(8,128)}', space=vmem, size = 0x18000, scoped, tag = 'scratch operand']
  %s0 = inlined_call_operand.vmem [shape: f32[2,256,9], index: 0, kind: input, shape index: {}]
  %s1 = inlined_call_operand.vmem [shape: f32[9,768], index: 1, kind: input, shape index: {}]
  %s2 = inlined_call_operand.vmem [shape: f32[1,768], index: 2, kind: input, shape index: {}]
  %s3 = inlined_call_operand.vmem [shape: f32[9,768,64], index: 3, kind: input, shape index: {}]
  %s4 = inlined_call_operand.vmem [shape: f32[1,64], index: 4, kind: input, shape index: {}]
  %s5 = inlined_call_operand.vmem [shape: f32[2,36,64], index: 5, kind: output, shape index: {}]
  %s6 = sld [smem:[#allocation0]]
  $region53: #{net_part1_forward.1} parent=0
    _
  %s8 = ssub.s32 1, %s6
  %s9 = scalar_select 0, %s8, %s6
  loop: start=0, step=1, limit=4
  $region2: #{net_part1_forward.1} parent=0 // loop_pre_header
    _
  $region3: #{net_part1_forward.1} parent=0 // loop_header
    %s11 = sphi 0, %s15
    %p12 = scmp.ge.s32.totalorder %s11, 4
    %s21 = sphi 0, %s23
    %s24 = sphi 0, %s21
    %s25 = sphi 0, %s24
    %s41 = sphi 0, %s25
    %s45 = sphi 0, %s45
    %s47 = sphi 0, %s45
    %s48 = sphi 0, %s47
    %s62 = sphi 0, %s48
    %s66 = sphi 0, %s66
    %s68 = sphi 0, %s66
    %s69 = sphi 0, %s68
    %s83 = sphi 0, %s69
    %s87 = sphi 0, %s87
    %s89 = sphi 0, %s87
    %s90 = sphi 0, %s89
    %s104 = sphi 0, %s90
    %s108 = sphi 0, %s108
    %s110 = sphi 0, %s108
    %s111 = sphi 0, %s110
    %s125 = sphi 0, %s111
    %s131 = sphi 0, %s133
    %s134 = sphi 0, %s131
    %s135 = sphi 0, %s134
    %s151 = sphi 0, %s135
  $region4: #{net_part1_forward.1} parent=0 // loop_header_branch
    %14 = sbr.rel (%p12) target = $region8
  $region5: #{net_part1_forward.1} parent=0 // loop_body
    %s16 = ssub.s32 %s11, 1
    %s17 = ssub.s32 %s11, 2
    %s18 = sadd.s32 %s11, 1
    %s19 = ssub.s32 %s11, %s18
    %p20 = scmp.eq.s32.totalorder %s19, 0
    %s22 = sadd.s32 %s21, 1
    %s23 = scalar_select %p20, %s21, %s22
    %p26 = pneg %p20
    %p27 = scmp.eq.s32.totalorder %s11, 1
    %p28 = por %p26, %p27
    %p29 = scmp.ne.s32.totalorder %s21, %s24
    %p30 = scmp.eq.s32.totalorder %s11, 0
    %p31 = por %p29, %p30
    %p32 = scmp.ne.s32.totalorder %s21, %s24
    %p33 = scmp.eq.s32.totalorder %s16, 1
    %p34 = por %p32, %p33
    %p35 = scmp.ne.s32.totalorder %s24, %s25
    %p36 = scmp.eq.s32.totalorder %s16, 0
    %p37 = por %p35, %p36
    %p38 = scmp.ne.s32.totalorder %s24, %s25
    %p39 = scmp.eq.s32.totalorder %s17, 1
    %p40 = por %p38, %p39
    %p42 = scmp.ne.s32.totalorder %s25, %s41
    %p43 = scmp.eq.s32.totalorder %s17, 0
    %p44 = por %p42, %p43
    %s46 = sadd.s32 %s45, 1
    %p49 = scmp.eq.s32.totalorder %s11, 1
    %p50 = scmp.ne.s32.totalorder %s45, %s47
    %p51 = scmp.eq.s32.totalorder %s11, 0
    %p52 = por %p50, %p51
    %p53 = scmp.ne.s32.totalorder %s45, %s47
    %p54 = scmp.eq.s32.totalorder %s16, 1
    %p55 = por %p53, %p54
    %p56 = scmp.ne.s32.totalorder %s47, %s48
    %p57 = scmp.eq.s32.totalorder %s16, 0
    %p58 = por %p56, %p57
    %p59 = scmp.ne.s32.totalorder %s47, %s48
    %p60 = scmp.eq.s32.totalorder %s17, 1
    %p61 = por %p59, %p60
    %p63 = scmp.ne.s32.totalorder %s48, %s62
    %p64 = scmp.eq.s32.totalorder %s17, 0
    %p65 = por %p63, %p64
    %s67 = sadd.s32 %s66, 1
    %p70 = scmp.eq.s32.totalorder %s11, 1
    %p71 = scmp.ne.s32.totalorder %s66, %s68
    %p72 = scmp.eq.s32.totalorder %s11, 0
    %p73 = por %p71, %p72
    %p74 = scmp.ne.s32.totalorder %s66, %s68
    %p75 = scmp.eq.s32.totalorder %s16, 1
    %p76 = por %p74, %p75
    %p77 = scmp.ne.s32.totalorder %s68, %s69
    %p78 = scmp.eq.s32.totalorder %s16, 0
    %p79 = por %p77, %p78
    %p80 = scmp.ne.s32.totalorder %s68, %s69
    %p81 = scmp.eq.s32.totalorder %s17, 1
    %p82 = por %p80, %p81
    %p84 = scmp.ne.s32.totalorder %s69, %s83
    %p85 = scmp.eq.s32.totalorder %s17, 0
    %p86 = por %p84, %p85
    %s88 = sadd.s32 %s87, 1
    %p91 = scmp.eq.s32.totalorder %s11, 1
    %p92 = scmp.ne.s32.totalorder %s87, %s89
    %p93 = scmp.eq.s32.totalorder %s11, 0
    %p94 = por %p92, %p93
    %p95 = scmp.ne.s32.totalorder %s87, %s89
    %p96 = scmp.eq.s32.totalorder %s16, 1
    %p97 = por %p95, %p96
    %p98 = scmp.ne.s32.totalorder %s89, %s90
    %p99 = scmp.eq.s32.totalorder %s16, 0
    %p100 = por %p98, %p99
    %p101 = scmp.ne.s32.totalorder %s89, %s90
    %p102 = scmp.eq.s32.totalorder %s17, 1
    %p103 = por %p101, %p102
    %p105 = scmp.ne.s32.totalorder %s90, %s104
    %p106 = scmp.eq.s32.totalorder %s17, 0
    %p107 = por %p105, %p106
    %s109 = sadd.s32 %s108, 1
    %p112 = scmp.eq.s32.totalorder %s11, 1
    %p113 = scmp.ne.s32.totalorder %s108, %s110
    %p114 = scmp.eq.s32.totalorder %s11, 0
    %p115 = por %p113, %p114
    %p116 = scmp.ne.s32.totalorder %s108, %s110
    %p117 = scmp.eq.s32.totalorder %s16, 1
    %p118 = por %p116, %p117
    %p119 = scmp.ne.s32.totalorder %s110, %s111
    %p120 = scmp.eq.s32.totalorder %s16, 0
    %p121 = por %p119, %p120
    %p122 = scmp.ne.s32.totalorder %s110, %s111
    %p123 = scmp.eq.s32.totalorder %s17, 1
    %p124 = por %p122, %p123
    %p126 = scmp.ne.s32.totalorder %s111, %s125
    %p127 = scmp.eq.s32.totalorder %s17, 0
    %p128 = por %p126, %p127
    %s129 = ssub.s32 %s11, %s18
    %p130 = scmp.eq.s32.totalorder %s129, 0
    %s132 = sadd.s32 %s131, 1
    %s133 = scalar_select %p130, %s131, %s132
    %p136 = pneg %p130
    %p137 = scmp.eq.s32.totalorder %s11, 1
    %p138 = por %p136, %p137
    %p139 = scmp.ne.s32.totalorder %s131, %s134
    %p140 = scmp.eq.s32.totalorder %s11, 0
    %p141 = por %p139, %p140
    %p142 = scmp.ne.s32.totalorder %s131, %s134
    %p143 = scmp.eq.s32.totalorder %s16, 1
    %p144 = por %p142, %p143
    %p145 = scmp.ne.s32.totalorder %s134, %s135
    %p146 = scmp.eq.s32.totalorder %s16, 0
    %p147 = por %p145, %p146
    %p148 = scmp.ne.s32.totalorder %s134, %s135
    %p149 = scmp.eq.s32.totalorder %s17, 1
    %p150 = por %p148, %p149
    %p152 = scmp.ne.s32.totalorder %s135, %s151
    %p153 = scmp.eq.s32.totalorder %s17, 0
    %p154 = por %p152, %p153
    %p155 = scmp.le.s32.totalorder 1, %s11
    %p156 = scmp.lt.s32.totalorder %s11, 3
    %p157 = pnand %p155, %p156
    %p158 = pneg %p157
    // Predicated region
    $region9: #{net_part1_forward.1} parent=5 // pred_check
      _
    $region10: #{net_part1_forward.1} parent=5 // pred_check_branch
      %160 = sbr.rel (%p157) target = $region12
    $region11: #{net_part1_forward.1} parent=5 // pred_region
      %s161 = ssub.s32 %s11, 1
      // Predicated region
      $region13: #{net_part1_forward.1} parent=11 // pred_check
        %p162 = pneg %p58
      $region14: #{net_part1_forward.1} parent=11 // pred_check_branch
        %164 = sbr.rel (%p162) target = $region16
      $region15: #{net_part1_forward.1} parent=11 // pred_region
        _
      $region16: #{net_part1_forward.1} parent=11 // pred_fallthru
        _
      // Predicated region
      $region17: #{net_part1_forward.1} parent=11 // pred_check
        %p165 = pneg %p79
      $region18: #{net_part1_forward.1} parent=11 // pred_check_branch
        %167 = sbr.rel (%p165) target = $region20
      $region19: #{net_part1_forward.1} parent=11 // pred_region
        _
      $region20: #{net_part1_forward.1} parent=11 // pred_fallthru
        _
      // Predicated region
      $region21: #{net_part1_forward.1} parent=11 // pred_check
        %p168 = pneg %p100
      $region22: #{net_part1_forward.1} parent=11 // pred_check_branch
        %170 = sbr.rel (%p168) target = $region24
      $region23: #{net_part1_forward.1} parent=11 // pred_region
        _
      $region24: #{net_part1_forward.1} parent=11 // pred_fallthru
        _
      // Predicated region
      $region25: #{net_part1_forward.1} parent=11 // pred_check
        %p171 = pneg %p121
      $region26: #{net_part1_forward.1} parent=11 // pred_check_branch
        %173 = sbr.rel (%p171) target = $region28
      $region27: #{net_part1_forward.1} parent=11 // pred_region
        _
      $region28: #{net_part1_forward.1} parent=11 // pred_fallthru
        _
    $region12: #{net_part1_forward.1} parent=5 // pred_fallthru
      _
    %p174 = scmp.lt.s32.totalorder %s11, 2
    // Predicated region
    $region29: #{net_part1_forward.1} parent=5 // pred_check
      %p175 = pneg %p174
    $region30: #{net_part1_forward.1} parent=5 // pred_check_branch
      %177 = sbr.rel (%p175) target = $region32
    $region31: #{net_part1_forward.1} parent=5 // pred_region
      // Predicated region
      $region33: #{net_part1_forward.1} parent=31 // pred_check
        %p178 = pneg %p31
      $region34: #{net_part1_forward.1} parent=31 // pred_check_branch
        %180 = sbr.rel (%p178) target = $region36
      $region35: #{net_part1_forward.1} parent=31 // pred_region
        %p181 = scmp.lt.s32.totalorder %s11, 1
        %s182 = scalar_select %p181, %s11, 1
        %s183 = smul.addr %s182, 32
        %s184 = smul.addr %s183, 8
        %s185 = scalar_lea.vmem %s0, %s184
      $region36: #{net_part1_forward.1} parent=31 // pred_fallthru
        _
    $region32: #{net_part1_forward.1} parent=5 // pred_fallthru
      _
    %p186 = scmp.le.s32.totalorder 1, %s11
    %p187 = scmp.lt.s32.totalorder %s11, 3
    %p188 = pnand %p186, %p187
    %p189 = pneg %p188
    // Predicated region
    $region37: #{net_part1_forward.1} parent=5 // pred_check
      _
    $region38: #{net_part1_forward.1} parent=5 // pred_check_branch
      %191 = sbr.rel (%p188) target = $region40
    $region39: #{net_part1_forward.1} parent=5 // pred_region
      %s192 = ssub.s32 %s11, 1
      %p193 = scmp.lt.s32.totalorder %s16, 1
      %s194 = scalar_select %p193, %s16, 1
      %s195 = smul.addr %s194, 32
      %s196 = smul.addr %s195, 8
      %s197 = scalar_lea.vmem %s0, %s196
      %p198 = pneg %p37
      %p199 = pneg %p34
      %p200 = pneg %p58
      %p201 = pneg %p55
      %p202 = pneg %p79
      %p203 = pneg %p76
      %p204 = pneg %p100
      %p205 = pneg %p97
      %p206 = pneg %p121
      %p207 = pneg %p118
      %p208 = pneg %p147
      %p209 = pneg %p144
      %p210 = scmp.lt.s32.totalorder %s16, 1
      %s211 = scalar_select %p210, %s16, 1
      %s212 = smul.addr %s211, 5
      %s213 = smul.addr %s212, 8
      %s214 = scalar_lea.vmem %s5, %s213
      %p215 = scmp.lt.s32.totalorder %s16, 1
      %s216 = scalar_select %p215, %s16, 1
      %s217 = smul.addr %s216, 32
      %s218 = smul.addr %s217, 8
      %s219 = scalar_lea.vmem %s0, %s218
      %p220 = scmp.lt.s32.totalorder %s16, 1
      %s221 = scalar_select %p220, %s16, 1
      %s222 = smul.addr %s221, 5
      %s223 = smul.addr %s222, 8
      %s224 = scalar_lea.vmem %s5, %s223
      %v225 = vld [vmem:[%s219] sm:$0xff]
      %v226 = vld [vmem:[%s219 + $0x8] sm:$0xff]
      %v227 = vld [vmem:[%s219 + $0x10] sm:$0xff]
      %v228 = vld [vmem:[%s219 + $0x18] sm:$0xff]
      %v229 = vld [vmem:[%s219 + $0x20] sm:$0xff]
      %v230 = vld [vmem:[%s219 + $0x28] sm:$0xff]
      %v231 = vld [vmem:[%s219 + $0x30] sm:$0xff]
      %v232 = vld [vmem:[%s219 + $0x38] sm:$0xff]
      %v233 = vld [vmem:[%s219 + $0x40] sm:$0xff]
      %v234 = vld [vmem:[%s219 + $0x48] sm:$0xff]
      %v235 = vld [vmem:[%s219 + $0x50] sm:$0xff]
      %v236 = vld [vmem:[%s219 + $0x58] sm:$0xff]
      %v237 = vld [vmem:[%s219 + $0x60] sm:$0xff]
      %v238 = vld [vmem:[%s219 + $0x68] sm:$0xff]
      %v239 = vld [vmem:[%s219 + $0x70] sm:$0xff]
      %v240 = vld [vmem:[%s219 + $0x78] sm:$0xff]
      %v241 = vld [vmem:[%s219 + $0x80] sm:$0xff]
      %v242 = vld [vmem:[%s219 + $0x88] sm:$0xff]
      %v243 = vld [vmem:[%s219 + $0x90] sm:$0xff]
      %v244 = vld [vmem:[%s219 + $0x98] sm:$0xff]
      %v245 = vld [vmem:[%s219 + $0xa0] sm:$0xff]
      %v246 = vld [vmem:[%s219 + $0xa8] sm:$0xff]
      %v247 = vld [vmem:[%s219 + $0xb0] sm:$0xff]
      %v248 = vld [vmem:[%s219 + $0xb8] sm:$0xff]
      %v249 = vld [vmem:[%s219 + $0xc0] sm:$0xff]
      %v250 = vld [vmem:[%s219 + $0xc8] sm:$0xff]
      %v251 = vld [vmem:[%s219 + $0xd0] sm:$0xff]
      %v252 = vld [vmem:[%s219 + $0xd8] sm:$0xff]
      %v253 = vld [vmem:[%s219 + $0xe0] sm:$0xff]
      %v254 = vld [vmem:[%s219 + $0xe8] sm:$0xff]
      %v255 = vld [vmem:[%s219 + $0xf0] sm:$0xff]
      %v256 = vld [vmem:[%s219 + $0xf8] sm:$0xff]
      %v257 = vld [vmem:[%s1] sm:$0xff]
      %v258 = vld [vmem:[%s1 + $0x8] sm:$0xff]
      %v259 = vld [vmem:[%s1 + $0x10] sm:$0xff]
      %v260 = vld [vmem:[%s1 + $0x18] sm:$0xff]
      %v261 = vld [vmem:[%s1 + $0x20] sm:$0xff]
      %v262 = vld [vmem:[%s1 + $0x28] sm:$0xff]
      %v263 = vld [vmem:[%s1 + $0x30] sm:$0x1]
      %v264 = vld [vmem:[%s1 + $0x38] sm:$0x1]
      %v265 = vld [vmem:[%s1 + $0x40] sm:$0x1]
      %v266 = vld [vmem:[%s1 + $0x48] sm:$0x1]
      %v267 = vld [vmem:[%s1 + $0x50] sm:$0x1]
      %v268 = vld [vmem:[%s1 + $0x58] sm:$0x1]
      %v269 = vld [vmem:[%s2] sm:$0x3f]
      %v271 = vlaneseq
      %v272 = vshrl.u32 %v271, 7
      %v273 = vsub.s32 0, %v272
      %v274 = vrot.slane %v269, %v273
      %v275 = vlaneseq
      %v276 = vshrl.u32 %v275, 7
      %v277 = vsub.s32 1, %v276
      %v278 = vrot.slane %v269, %v277
      %v279 = vlaneseq
      %v280 = vshrl.u32 %v279, 7
      %v281 = vsub.s32 2, %v280
      %v282 = vrot.slane %v269, %v281
      %v283 = vlaneseq
      %v284 = vshrl.u32 %v283, 7
      %v285 = vsub.s32 3, %v284
      %v286 = vrot.slane %v269, %v285
      %v287 = vlaneseq
      %v288 = vshrl.u32 %v287, 7
      %v289 = vsub.s32 4, %v288
      %v290 = vrot.slane %v269, %v289
      %v291 = vlaneseq
      %v292 = vshrl.u32 %v291, 7
      %v293 = vsub.s32 5, %v292
      %v294 = vrot.slane %v269, %v293
      %vm301 = vcmask 72704
      %v303 = vsel %vm301, %v225, 0
      %v306 = vsel %vm301, %v226, 0
      %v309 = vsel %vm301, %v227, 0
      %v312 = vsel %vm301, %v228, 0
      %v315 = vsel %vm301, %v229, 0
      %v318 = vsel %vm301, %v230, 0
      %v321 = vsel %vm301, %v231, 0
      %v324 = vsel %vm301, %v232, 0
      %v327 = vsel %vm301, %v233, 0
      %v330 = vsel %vm301, %v234, 0
      %v333 = vsel %vm301, %v235, 0
      %v336 = vsel %vm301, %v236, 0
      %v339 = vsel %vm301, %v237, 0
      %v342 = vsel %vm301, %v238, 0
      %v345 = vsel %vm301, %v239, 0
      %v348 = vsel %vm301, %v240, 0
      %v351 = vsel %vm301, %v241, 0
      %v354 = vsel %vm301, %v242, 0
      %v357 = vsel %vm301, %v243, 0
      %v360 = vsel %vm301, %v244, 0
      %v363 = vsel %vm301, %v245, 0
      %v366 = vsel %vm301, %v246, 0
      %v369 = vsel %vm301, %v247, 0
      %v372 = vsel %vm301, %v248, 0
      %v375 = vsel %vm301, %v249, 0
      %v378 = vsel %vm301, %v250, 0
      %v381 = vsel %vm301, %v251, 0
      %v384 = vsel %vm301, %v252, 0
      %v387 = vsel %vm301, %v253, 0
      %v390 = vsel %vm301, %v254, 0
      %v393 = vsel %vm301, %v255, 0
      %v396 = vsel %vm301, %v256, 0
      %vm398 = vcmask 1040384
      %v400 = vsel %vm398, %v263, 0
      %v403 = vsel %vm398, %v264, 0
      %v406 = vsel %vm398, %v265, 0
      %v409 = vsel %vm398, %v266, 0
      %v412 = vsel %vm398, %v267, 0
      %v415 = vsel %vm398, %v268, 0
      %417 = vmatprep.subr.mxu0 0.0
      %418 = vmatpush1.msra.mxu0 0.0
      %419 = vmatprep.subr.mxu0 0.0
      %420 = vmatpush1.msra.mxu0 0.0
      %421 = vmatprep.subr.mxu0 0.0
      %422 = vmatpush1.msra.mxu0 0.0
      %423 = vmatprep.subr.mxu0 0.0
      %424 = vmatpush1.msra.mxu0 0.0
      %425 = vmatprep.subr.mxu0 0.0
      %426 = vmatpush1.msra.mxu0 0.0
      %427 = vmatprep.subr.mxu0 0.0
      %428 = vmatpush1.msra.mxu0 0.0
      %429 = vmatprep.subr.mxu0 0.0
      %430 = vmatpush1.msra.mxu0 0.0
      %431 = vmatprep.subr.mxu0 0.0
      %432 = vmatpush1.msra.mxu0 0.0
      %433 = vmatprep.subr.mxu0 0.0
      %434 = vmatpush1.msra.mxu0 0.0
      %435 = vmatprep.subr.mxu0 0.0
      %436 = vmatpush1.msra.mxu0 0.0
      %437 = vmatprep.subr.mxu0 0.0
      %438 = vmatpush1.msra.mxu0 0.0
      %439 = vmatprep.subr.mxu0 0.0
      %440 = vmatpush1.msra.mxu0 0.0
      %441 = vmatprep.subr.mxu0 0.0
      %442 = vmatpush1.msra.mxu0 0.0
      %443 = vmatprep.subr.mxu0 0.0
      %444 = vmatpush1.msra.mxu0 0.0
      %445 = vmatprep.subr.mxu0 %v403
      %446 = vmatpush1.msra.mxu0 %v400
      %447 = vmatprep.subr.mxu0 %v258
      %448 = vmatpush1.msra.mxu0 %v257
      %449 = vmatprep.subr.mxu0 0.0
      %450 = vmatpush2.msra.mxu0 0.0
      %451 = vmatprep.subr.mxu0 0.0
      %452 = vmatpush2.msra.mxu0 0.0
      %453 = vmatprep.subr.mxu0 0.0
      %454 = vmatpush2.msra.mxu0 0.0
      %455 = vmatprep.subr.mxu0 0.0
      %456 = vmatpush2.msra.mxu0 0.0
      %457 = vmatprep.subr.mxu0 0.0
      %458 = vmatpush2.msra.mxu0 0.0
      %459 = vmatprep.subr.mxu0 0.0
      %460 = vmatpush2.msra.mxu0 0.0
      %461 = vmatprep.subr.mxu0 0.0
      %462 = vmatpush2.msra.mxu0 0.0
      %463 = vmatprep.subr.mxu0 0.0
      %464 = vmatpush2.msra.mxu0 0.0
      %465 = vmatprep.subr.mxu0 0.0
      %466 = vmatpush2.msra.mxu0 0.0
      %467 = vmatprep.subr.mxu0 0.0
      %468 = vmatpush2.msra.mxu0 0.0
      %469 = vmatprep.subr.mxu0 0.0
      %470 = vmatpush2.msra.mxu0 0.0
      %471 = vmatprep.subr.mxu0 0.0
      %472 = vmatpush2.msra.mxu0 0.0
      %473 = vmatprep.subr.mxu0 0.0
      %474 = vmatpush2.msra.mxu0 0.0
      %475 = vmatprep.subr.mxu0 0.0
      %476 = vmatpush2.msra.mxu0 0.0
      %477 = vmatprep.subr.mxu0 0.0
      %478 = vmatpush2.msra.mxu0 0.0
      %479 = vmatprep.subr.mxu0 0.0
      %480 = vmatpush2.msra.mxu0 0.0
      %481 = vmatprep.mubr.f32.mxu0 0.0
      %482 = vmatmul.mubr.f32.gmra.mxu0 %v303
      %v483 = vpop.f32.mrf.mxu0
      %v484 = vadd.f32 %v274, %v483
      %v485 = vpop.f32.mrf.mxu0
      %v486 = vadd.f32 %v278, %v485
      %487 = vmatprep.mubr.f32.mxu0 0.0
      %488 = vmatmul.mubr.f32.gmra.mxu0 %v306
      %v489 = vpop.f32.mrf.mxu0
      %v490 = vadd.f32 %v274, %v489
      %v491 = vpop.f32.mrf.mxu0
      %v492 = vadd.f32 %v278, %v491
      %493 = vmatprep.mubr.f32.mxu0 0.0
      %494 = vmatmul.mubr.f32.gmra.mxu0 %v309
      %v495 = vpop.f32.mrf.mxu0
      %v496 = vadd.f32 %v274, %v495
      %v497 = vpop.f32.mrf.mxu0
      %v498 = vadd.f32 %v278, %v497
      %499 = vmatprep.mubr.f32.mxu0 0.0
      %500 = vmatmul.mubr.f32.gmra.mxu0 %v312
      %v501 = vpop.f32.mrf.mxu0
      %v502 = vadd.f32 %v274, %v501
      %v503 = vpop.f32.mrf.mxu0
      %v504 = vadd.f32 %v278, %v503
      %505 = vmatprep.mubr.f32.mxu0 0.0
      %506 = vmatmul.mubr.f32.gmra.mxu0 %v315
      %v507 = vpop.f32.mrf.mxu0
      %v508 = vadd.f32 %v274, %v507
      %v509 = vpop.f32.mrf.mxu0
      %v510 = vadd.f32 %v278, %v509
      %511 = vmatprep.mubr.f32.mxu0 0.0
      %512 = vmatmul.mubr.f32.gmra.mxu0 %v318
      %v513 = vpop.f32.mrf.mxu0
      %v514 = vadd.f32 %v274, %v513
      %v515 = vpop.f32.mrf.mxu0
      %v516 = vadd.f32 %v278, %v515
      %517 = vmatprep.mubr.f32.mxu0 0.0
      %518 = vmatmul.mubr.f32.gmra.mxu0 %v321
      %v519 = vpop.f32.mrf.mxu0
      %v520 = vadd.f32 %v274, %v519
      %v521 = vpop.f32.mrf.mxu0
      %v522 = vadd.f32 %v278, %v521
      %523 = vmatprep.mubr.f32.mxu0 0.0
      %524 = vmatmul.mubr.f32.gmra.mxu0 %v324
      %v525 = vpop.f32.mrf.mxu0
      %v526 = vadd.f32 %v274, %v525
      %v527 = vpop.f32.mrf.mxu0
      %v528 = vadd.f32 %v278, %v527
      %529 = vmatprep.mubr.f32.mxu0 0.0
      %530 = vmatmul.mubr.f32.gmra.mxu0 %v327
      %v531 = vpop.f32.mrf.mxu0
      %v532 = vadd.f32 %v274, %v531
      %v533 = vpop.f32.mrf.mxu0
      %v534 = vadd.f32 %v278, %v533
      %535 = vmatprep.mubr.f32.mxu0 0.0
      %536 = vmatmul.mubr.f32.gmra.mxu0 %v330
      %v537 = vpop.f32.mrf.mxu0
      %v538 = vadd.f32 %v274, %v537
      %v539 = vpop.f32.mrf.mxu0
      %v540 = vadd.f32 %v278, %v539
      %541 = vmatprep.mubr.f32.mxu0 0.0
      %542 = vmatmul.mubr.f32.gmra.mxu0 %v333
      %v543 = vpop.f32.mrf.mxu0
      %v544 = vadd.f32 %v274, %v543
      %v545 = vpop.f32.mrf.mxu0
      %v546 = vadd.f32 %v278, %v545
      %547 = vmatprep.mubr.f32.mxu0 0.0
      %548 = vmatmul.mubr.f32.gmra.mxu0 %v336
      %v549 = vpop.f32.mrf.mxu0
      %v550 = vadd.f32 %v274, %v549
      %v551 = vpop.f32.mrf.mxu0
      %v552 = vadd.f32 %v278, %v551
      %553 = vmatprep.mubr.f32.mxu0 0.0
      %554 = vmatmul.mubr.f32.gmra.mxu0 %v339
      %v555 = vpop.f32.mrf.mxu0
      %v556 = vadd.f32 %v274, %v555
      %v557 = vpop.f32.mrf.mxu0
      %v558 = vadd.f32 %v278, %v557
      %559 = vmatprep.mubr.f32.mxu0 0.0
      %560 = vmatmul.mubr.f32.gmra.mxu0 %v342
      %v561 = vpop.f32.mrf.mxu0
      %v562 = vadd.f32 %v274, %v561
      %v563 = vpop.f32.mrf.mxu0
      %v564 = vadd.f32 %v278, %v563
      %565 = vmatprep.mubr.f32.mxu0 0.0
      %566 = vmatmul.mubr.f32.gmra.mxu0 %v345
      %v567 = vpop.f32.mrf.mxu0
      %v568 = vadd.f32 %v274, %v567
      %v569 = vpop.f32.mrf.mxu0
      %v570 = vadd.f32 %v278, %v569
      %571 = vmatprep.mubr.f32.mxu0 0.0
      %572 = vmatmul.mubr.f32.gmra.mxu0 %v348
      %v573 = vpop.f32.mrf.mxu0
      %v574 = vadd.f32 %v274, %v573
      %v575 = vpop.f32.mrf.mxu0
      %v576 = vadd.f32 %v278, %v575
      %577 = vmatprep.mubr.f32.mxu0 0.0
      %578 = vmatmul.mubr.f32.gmra.mxu0 %v351
      %v579 = vpop.f32.mrf.mxu0
      %v580 = vadd.f32 %v274, %v579
      %v581 = vpop.f32.mrf.mxu0
      %v582 = vadd.f32 %v278, %v581
      %583 = vmatprep.mubr.f32.mxu0 0.0
      %584 = vmatmul.mubr.f32.gmra.mxu0 %v354
      %v585 = vpop.f32.mrf.mxu0
      %v586 = vadd.f32 %v274, %v585
      %v587 = vpop.f32.mrf.mxu0
      %v588 = vadd.f32 %v278, %v587
      %589 = vmatprep.mubr.f32.mxu0 0.0
      %590 = vmatmul.mubr.f32.gmra.mxu0 %v357
      %v591 = vpop.f32.mrf.mxu0
      %v592 = vadd.f32 %v274, %v591
      %v593 = vpop.f32.mrf.mxu0
      %v594 = vadd.f32 %v278, %v593
      %595 = vmatprep.mubr.f32.mxu0 0.0
      %596 = vmatmul.mubr.f32.gmra.mxu0 %v360
      %v597 = vpop.f32.mrf.mxu0
      %v598 = vadd.f32 %v274, %v597
      %v599 = vpop.f32.mrf.mxu0
      %v600 = vadd.f32 %v278, %v599
      %601 = vmatprep.mubr.f32.mxu0 0.0
      %602 = vmatmul.mubr.f32.gmra.mxu0 %v363
      %v603 = vpop.f32.mrf.mxu0
      %v604 = vadd.f32 %v274, %v603
      %v605 = vpop.f32.mrf.mxu0
      %v606 = vadd.f32 %v278, %v605
      %607 = vmatprep.mubr.f32.mxu0 0.0
      %608 = vmatmul.mubr.f32.gmra.mxu0 %v366
      %v609 = vpop.f32.mrf.mxu0
      %v610 = vadd.f32 %v274, %v609
      %v611 = vpop.f32.mrf.mxu0
      %v612 = vadd.f32 %v278, %v611
      %613 = vmatprep.mubr.f32.mxu0 0.0
      %614 = vmatmul.mubr.f32.gmra.mxu0 %v369
      %v615 = vpop.f32.mrf.mxu0
      %v616 = vadd.f32 %v274, %v615
      %v617 = vpop.f32.mrf.mxu0
      %v618 = vadd.f32 %v278, %v617
      %619 = vmatprep.mubr.f32.mxu0 0.0
      %620 = vmatmul.mubr.f32.gmra.mxu0 %v372
      %v621 = vpop.f32.mrf.mxu0
      %v622 = vadd.f32 %v274, %v621
      %v623 = vpop.f32.mrf.mxu0
      %v624 = vadd.f32 %v278, %v623
      %625 = vmatprep.mubr.f32.mxu0 0.0
      %626 = vmatmul.mubr.f32.gmra.mxu0 %v375
      %v627 = vpop.f32.mrf.mxu0
      %v628 = vadd.f32 %v274, %v627
      %v629 = vpop.f32.mrf.mxu0
      %v630 = vadd.f32 %v278, %v629
      %631 = vmatprep.mubr.f32.mxu0 0.0
      %632 = vmatmul.mubr.f32.gmra.mxu0 %v378
      %v633 = vpop.f32.mrf.mxu0
      %v634 = vadd.f32 %v274, %v633
      %v635 = vpop.f32.mrf.mxu0
      %v636 = vadd.f32 %v278, %v635
      %637 = vmatprep.mubr.f32.mxu0 0.0
      %638 = vmatmul.mubr.f32.gmra.mxu0 %v381
      %v639 = vpop.f32.mrf.mxu0
      %v640 = vadd.f32 %v274, %v639
      %v641 = vpop.f32.mrf.mxu0
      %v642 = vadd.f32 %v278, %v641
      %643 = vmatprep.mubr.f32.mxu0 0.0
      %644 = vmatmul.mubr.f32.gmra.mxu0 %v384
      %v645 = vpop.f32.mrf.mxu0
      %v646 = vadd.f32 %v274, %v645
      %v647 = vpop.f32.mrf.mxu0
      %v648 = vadd.f32 %v278, %v647
      %649 = vmatprep.mubr.f32.mxu0 0.0
      %650 = vmatmul.mubr.f32.gmra.mxu0 %v387
      %v651 = vpop.f32.mrf.mxu0
      %v652 = vadd.f32 %v274, %v651
      %v653 = vpop.f32.mrf.mxu0
      %v654 = vadd.f32 %v278, %v653
      %655 = vmatprep.mubr.f32.mxu0 0.0
      %656 = vmatmul.mubr.f32.gmra.mxu0 %v390
      %v657 = vpop.f32.mrf.mxu0
      %v658 = vadd.f32 %v274, %v657
      %v659 = vpop.f32.mrf.mxu0
      %v660 = vadd.f32 %v278, %v659
      %661 = vmatprep.mubr.f32.mxu0 0.0
      %662 = vmatmul.mubr.f32.gmra.mxu0 %v393
      %v663 = vpop.f32.mrf.mxu0
      %v664 = vadd.f32 %v274, %v663
      %v665 = vpop.f32.mrf.mxu0
      %v666 = vadd.f32 %v278, %v665
      %667 = vmatprep.mubr.f32.mxu0 0.0
      %668 = vmatmul.mubr.f32.gmra.mxu0 %v396
      %v669 = vpop.f32.mrf.mxu0
      %v670 = vadd.f32 %v274, %v669
      %v671 = vpop.f32.mrf.mxu0
      %v672 = vadd.f32 %v278, %v671
      %673 = vdwg.mxu0
      %674 = vmatprep.subr.mxu0 0.0
      %675 = vmatpush1.msra.mxu0 0.0
      %676 = vmatprep.subr.mxu0 0.0
      %677 = vmatpush1.msra.mxu0 0.0
      %678 = vmatprep.subr.mxu0 0.0
      %679 = vmatpush1.msra.mxu0 0.0
      %680 = vmatprep.subr.mxu0 0.0
      %681 = vmatpush1.msra.mxu0 0.0
      %682 = vmatprep.subr.mxu0 0.0
      %683 = vmatpush1.msra.mxu0 0.0
      %684 = vmatprep.subr.mxu0 0.0
      %685 = vmatpush1.msra.mxu0 0.0
      %686 = vmatprep.subr.mxu0 0.0
      %687 = vmatpush1.msra.mxu0 0.0
      %688 = vmatprep.subr.mxu0 0.0
      %689 = vmatpush1.msra.mxu0 0.0
      %690 = vmatprep.subr.mxu0 0.0
      %691 = vmatpush1.msra.mxu0 0.0
      %692 = vmatprep.subr.mxu0 0.0
      %693 = vmatpush1.msra.mxu0 0.0
      %694 = vmatprep.subr.mxu0 0.0
      %695 = vmatpush1.msra.mxu0 0.0
      %696 = vmatprep.subr.mxu0 0.0
      %697 = vmatpush1.msra.mxu0 0.0
      %698 = vmatprep.subr.mxu0 0.0
      %699 = vmatpush1.msra.mxu0 0.0
      %700 = vmatprep.subr.mxu0 0.0
      %701 = vmatpush1.msra.mxu0 0.0
      %702 = vmatprep.subr.mxu0 %v409
      %703 = vmatpush1.msra.mxu0 %v406
      %704 = vmatprep.subr.mxu0 %v260
      %705 = vmatpush1.msra.mxu0 %v259
      %706 = vmatprep.subr.mxu0 0.0
      %707 = vmatpush2.msra.mxu0 0.0
      %708 = vmatprep.subr.mxu0 0.0
      %709 = vmatpush2.msra.mxu0 0.0
      %710 = vmatprep.subr.mxu0 0.0
      %711 = vmatpush2.msra.mxu0 0.0
      %712 = vmatprep.subr.mxu0 0.0
      %713 = vmatpush2.msra.mxu0 0.0
      %714 = vmatprep.subr.mxu0 0.0
      %715 = vmatpush2.msra.mxu0 0.0
      %716 = vmatprep.subr.mxu0 0.0
      %717 = vmatpush2.msra.mxu0 0.0
      %718 = vmatprep.subr.mxu0 0.0
      %719 = vmatpush2.msra.mxu0 0.0
      %720 = vmatprep.subr.mxu0 0.0
      %721 = vmatpush2.msra.mxu0 0.0
      %722 = vmatprep.subr.mxu0 0.0
      %723 = vmatpush2.msra.mxu0 0.0
      %724 = vmatprep.subr.mxu0 0.0
      %725 = vmatpush2.msra.mxu0 0.0
      %726 = vmatprep.subr.mxu0 0.0
      %727 = vmatpush2.msra.mxu0 0.0
      %728 = vmatprep.subr.mxu0 0.0
      %729 = vmatpush2.msra.mxu0 0.0
      %730 = vmatprep.subr.mxu0 0.0
      %731 = vmatpush2.msra.mxu0 0.0
      %732 = vmatprep.subr.mxu0 0.0
      %733 = vmatpush2.msra.mxu0 0.0
      %734 = vmatprep.subr.mxu0 0.0
      %735 = vmatpush2.msra.mxu0 0.0
      %736 = vmatprep.subr.mxu0 0.0
      %737 = vmatpush2.msra.mxu0 0.0
      %738 = vmatprep.mubr.f32.mxu0 0.0
      %739 = vmatmul.mubr.f32.gmra.mxu0 %v303
      %v740 = vpop.f32.mrf.mxu0
      %v741 = vadd.f32 %v282, %v740
      %v742 = vpop.f32.mrf.mxu0
      %v743 = vadd.f32 %v286, %v742
      %744 = vmatprep.mubr.f32.mxu0 0.0
      %745 = vmatmul.mubr.f32.gmra.mxu0 %v306
      %v746 = vpop.f32.mrf.mxu0
      %v747 = vadd.f32 %v282, %v746
      %v748 = vpop.f32.mrf.mxu0
      %v749 = vadd.f32 %v286, %v748
      %750 = vmatprep.mubr.f32.mxu0 0.0
      %751 = vmatmul.mubr.f32.gmra.mxu0 %v309
      %v752 = vpop.f32.mrf.mxu0
      %v753 = vadd.f32 %v282, %v752
      %v754 = vpop.f32.mrf.mxu0
      %v755 = vadd.f32 %v286, %v754
      %756 = vmatprep.mubr.f32.mxu0 0.0
      %757 = vmatmul.mubr.f32.gmra.mxu0 %v312
      %v758 = vpop.f32.mrf.mxu0
      %v759 = vadd.f32 %v282, %v758
      %v760 = vpop.f32.mrf.mxu0
      %v761 = vadd.f32 %v286, %v760
      %762 = vmatprep.mubr.f32.mxu0 0.0
      %763 = vmatmul.mubr.f32.gmra.mxu0 %v315
      %v764 = vpop.f32.mrf.mxu0
      %v765 = vadd.f32 %v282, %v764
      %v766 = vpop.f32.mrf.mxu0
      %v767 = vadd.f32 %v286, %v766
      %768 = vmatprep.mubr.f32.mxu0 0.0
      %769 = vmatmul.mubr.f32.gmra.mxu0 %v318
      %v770 = vpop.f32.mrf.mxu0
      %v771 = vadd.f32 %v282, %v770
      %v772 = vpop.f32.mrf.mxu0
      %v773 = vadd.f32 %v286, %v772
      %774 = vmatprep.mubr.f32.mxu0 0.0
      %775 = vmatmul.mubr.f32.gmra.mxu0 %v321
      %v776 = vpop.f32.mrf.mxu0
      %v777 = vadd.f32 %v282, %v776
      %v778 = vpop.f32.mrf.mxu0
      %v779 = vadd.f32 %v286, %v778
      %780 = vmatprep.mubr.f32.mxu0 0.0
      %781 = vmatmul.mubr.f32.gmra.mxu0 %v324
      %v782 = vpop.f32.mrf.mxu0
      %v783 = vadd.f32 %v282, %v782
      %v784 = vpop.f32.mrf.mxu0
      %v785 = vadd.f32 %v286, %v784
      %786 = vmatprep.mubr.f32.mxu0 0.0
      %787 = vmatmul.mubr.f32.gmra.mxu0 %v327
      %v788 = vpop.f32.mrf.mxu0
      %v789 = vadd.f32 %v282, %v788
      %v790 = vpop.f32.mrf.mxu0
      %v791 = vadd.f32 %v286, %v790
      %792 = vmatprep.mubr.f32.mxu0 0.0
      %793 = vmatmul.mubr.f32.gmra.mxu0 %v330
      %v794 = vpop.f32.mrf.mxu0
      %v795 = vadd.f32 %v282, %v794
      %v796 = vpop.f32.mrf.mxu0
      %v797 = vadd.f32 %v286, %v796
      %798 = vmatprep.mubr.f32.mxu0 0.0
      %799 = vmatmul.mubr.f32.gmra.mxu0 %v333
      %v800 = vpop.f32.mrf.mxu0
      %v801 = vadd.f32 %v282, %v800
      %v802 = vpop.f32.mrf.mxu0
      %v803 = vadd.f32 %v286, %v802
      %804 = vmatprep.mubr.f32.mxu0 0.0
      %805 = vmatmul.mubr.f32.gmra.mxu0 %v336
      %v806 = vpop.f32.mrf.mxu0
      %v807 = vadd.f32 %v282, %v806
      %v808 = vpop.f32.mrf.mxu0
      %v809 = vadd.f32 %v286, %v808
      %810 = vmatprep.mubr.f32.mxu0 0.0
      %811 = vmatmul.mubr.f32.gmra.mxu0 %v339
      %v812 = vpop.f32.mrf.mxu0
      %v813 = vadd.f32 %v282, %v812
      %v814 = vpop.f32.mrf.mxu0
      %v815 = vadd.f32 %v286, %v814
      %816 = vmatprep.mubr.f32.mxu0 0.0
      %817 = vmatmul.mubr.f32.gmra.mxu0 %v342
      %v818 = vpop.f32.mrf.mxu0
      %v819 = vadd.f32 %v282, %v818
      %v820 = vpop.f32.mrf.mxu0
      %v821 = vadd.f32 %v286, %v820
      %822 = vmatprep.mubr.f32.mxu0 0.0
      %823 = vmatmul.mubr.f32.gmra.mxu0 %v345
      %v824 = vpop.f32.mrf.mxu0
      %v825 = vadd.f32 %v282, %v824
      %v826 = vpop.f32.mrf.mxu0
      %v827 = vadd.f32 %v286, %v826
      %828 = vmatprep.mubr.f32.mxu0 0.0
      %829 = vmatmul.mubr.f32.gmra.mxu0 %v348
      %v830 = vpop.f32.mrf.mxu0
      %v831 = vadd.f32 %v282, %v830
      %v832 = vpop.f32.mrf.mxu0
      %v833 = vadd.f32 %v286, %v832
      %834 = vmatprep.mubr.f32.mxu0 0.0
      %835 = vmatmul.mubr.f32.gmra.mxu0 %v351
      %v836 = vpop.f32.mrf.mxu0
      %v837 = vadd.f32 %v282, %v836
      %v838 = vpop.f32.mrf.mxu0
      %v839 = vadd.f32 %v286, %v838
      %840 = vmatprep.mubr.f32.mxu0 0.0
      %841 = vmatmul.mubr.f32.gmra.mxu0 %v354
      %v842 = vpop.f32.mrf.mxu0
      %v843 = vadd.f32 %v282, %v842
      %v844 = vpop.f32.mrf.mxu0
      %v845 = vadd.f32 %v286, %v844
      %846 = vmatprep.mubr.f32.mxu0 0.0
      %847 = vmatmul.mubr.f32.gmra.mxu0 %v357
      %v848 = vpop.f32.mrf.mxu0
      %v849 = vadd.f32 %v282, %v848
      %v850 = vpop.f32.mrf.mxu0
      %v851 = vadd.f32 %v286, %v850
      %852 = vmatprep.mubr.f32.mxu0 0.0
      %853 = vmatmul.mubr.f32.gmra.mxu0 %v360
      %v854 = vpop.f32.mrf.mxu0
      %v855 = vadd.f32 %v282, %v854
      %v856 = vpop.f32.mrf.mxu0
      %v857 = vadd.f32 %v286, %v856
      %858 = vmatprep.mubr.f32.mxu0 0.0
      %859 = vmatmul.mubr.f32.gmra.mxu0 %v363
      %v860 = vpop.f32.mrf.mxu0
      %v861 = vadd.f32 %v282, %v860
      %v862 = vpop.f32.mrf.mxu0
      %v863 = vadd.f32 %v286, %v862
      %864 = vmatprep.mubr.f32.mxu0 0.0
      %865 = vmatmul.mubr.f32.gmra.mxu0 %v366
      %v866 = vpop.f32.mrf.mxu0
      %v867 = vadd.f32 %v282, %v866
      %v868 = vpop.f32.mrf.mxu0
      %v869 = vadd.f32 %v286, %v868
      %870 = vmatprep.mubr.f32.mxu0 0.0
      %871 = vmatmul.mubr.f32.gmra.mxu0 %v369
      %v872 = vpop.f32.mrf.mxu0
      %v873 = vadd.f32 %v282, %v872
      %v874 = vpop.f32.mrf.mxu0
      %v875 = vadd.f32 %v286, %v874
      %876 = vmatprep.mubr.f32.mxu0 0.0
      %877 = vmatmul.mubr.f32.gmra.mxu0 %v372
      %v878 = vpop.f32.mrf.mxu0
      %v879 = vadd.f32 %v282, %v878
      %v880 = vpop.f32.mrf.mxu0
      %v881 = vadd.f32 %v286, %v880
      %882 = vmatprep.mubr.f32.mxu0 0.0
      %883 = vmatmul.mubr.f32.gmra.mxu0 %v375
      %v884 = vpop.f32.mrf.mxu0
      %v885 = vadd.f32 %v282, %v884
      %v886 = vpop.f32.mrf.mxu0
      %v887 = vadd.f32 %v286, %v886
      %888 = vmatprep.mubr.f32.mxu0 0.0
      %889 = vmatmul.mubr.f32.gmra.mxu0 %v378
      %v890 = vpop.f32.mrf.mxu0
      %v891 = vadd.f32 %v282, %v890
      %v892 = vpop.f32.mrf.mxu0
      %v893 = vadd.f32 %v286, %v892
      %894 = vmatprep.mubr.f32.mxu0 0.0
      %895 = vmatmul.mubr.f32.gmra.mxu0 %v381
      %v896 = vpop.f32.mrf.mxu0
      %v897 = vadd.f32 %v282, %v896
      %v898 = vpop.f32.mrf.mxu0
      %v899 = vadd.f32 %v286, %v898
      %900 = vmatprep.mubr.f32.mxu0 0.0
      %901 = vmatmul.mubr.f32.gmra.mxu0 %v384
      %v902 = vpop.f32.mrf.mxu0
      %v903 = vadd.f32 %v282, %v902
      %v904 = vpop.f32.mrf.mxu0
      %v905 = vadd.f32 %v286, %v904
      %906 = vmatprep.mubr.f32.mxu0 0.0
      %907 = vmatmul.mubr.f32.gmra.mxu0 %v387
      %v908 = vpop.f32.mrf.mxu0
      %v909 = vadd.f32 %v282, %v908
      %v910 = vpop.f32.mrf.mxu0
      %v911 = vadd.f32 %v286, %v910
      %912 = vmatprep.mubr.f32.mxu0 0.0
      %913 = vmatmul.mubr.f32.gmra.mxu0 %v390
      %v914 = vpop.f32.mrf.mxu0
      %v915 = vadd.f32 %v282, %v914
      %v916 = vpop.f32.mrf.mxu0
      %v917 = vadd.f32 %v286, %v916
      %918 = vmatprep.mubr.f32.mxu0 0.0
      %919 = vmatmul.mubr.f32.gmra.mxu0 %v393
      %v920 = vpop.f32.mrf.mxu0
      %v921 = vadd.f32 %v282, %v920
      %v922 = vpop.f32.mrf.mxu0
      %v923 = vadd.f32 %v286, %v922
      %924 = vmatprep.mubr.f32.mxu0 0.0
      %925 = vmatmul.mubr.f32.gmra.mxu0 %v396
      %v926 = vpop.f32.mrf.mxu0
      %v927 = vadd.f32 %v282, %v926
      %v928 = vpop.f32.mrf.mxu0
      %v929 = vadd.f32 %v286, %v928
      %930 = vdwg.mxu0
      %931 = vmatprep.subr.mxu0 0.0
      %932 = vmatpush1.msra.mxu0 0.0
      %933 = vmatprep.subr.mxu0 0.0
      %934 = vmatpush1.msra.mxu0 0.0
      %935 = vmatprep.subr.mxu0 0.0
      %936 = vmatpush1.msra.mxu0 0.0
      %937 = vmatprep.subr.mxu0 0.0
      %938 = vmatpush1.msra.mxu0 0.0
      %939 = vmatprep.subr.mxu0 0.0
      %940 = vmatpush1.msra.mxu0 0.0
      %941 = vmatprep.subr.mxu0 0.0
      %942 = vmatpush1.msra.mxu0 0.0
      %943 = vmatprep.subr.mxu0 0.0
      %944 = vmatpush1.msra.mxu0 0.0
      %945 = vmatprep.subr.mxu0 0.0
      %946 = vmatpush1.msra.mxu0 0.0
      %947 = vmatprep.subr.mxu0 0.0
      %948 = vmatpush1.msra.mxu0 0.0
      %949 = vmatprep.subr.mxu0 0.0
      %950 = vmatpush1.msra.mxu0 0.0
      %951 = vmatprep.subr.mxu0 0.0
      %952 = vmatpush1.msra.mxu0 0.0
      %953 = vmatprep.subr.mxu0 0.0
      %954 = vmatpush1.msra.mxu0 0.0
      %955 = vmatprep.subr.mxu0 0.0
      %956 = vmatpush1.msra.mxu0 0.0
      %957 = vmatprep.subr.mxu0 0.0
      %958 = vmatpush1.msra.mxu0 0.0
      %959 = vmatprep.subr.mxu0 %v415
      %960 = vmatpush1.msra.mxu0 %v412
      %961 = vmatprep.subr.mxu0 %v262
      %962 = vmatpush1.msra.mxu0 %v261
      %963 = vmatprep.subr.mxu0 0.0
      %964 = vmatpush2.msra.mxu0 0.0
      %965 = vmatprep.subr.mxu0 0.0
      %966 = vmatpush2.msra.mxu0 0.0
      %967 = vmatprep.subr.mxu0 0.0
      %968 = vmatpush2.msra.mxu0 0.0
      %969 = vmatprep.subr.mxu0 0.0
      %970 = vmatpush2.msra.mxu0 0.0
      %971 = vmatprep.subr.mxu0 0.0
      %972 = vmatpush2.msra.mxu0 0.0
      %973 = vmatprep.subr.mxu0 0.0
      %974 = vmatpush2.msra.mxu0 0.0
      %975 = vmatprep.subr.mxu0 0.0
      %976 = vmatpush2.msra.mxu0 0.0
      %977 = vmatprep.subr.mxu0 0.0
      %978 = vmatpush2.msra.mxu0 0.0
      %979 = vmatprep.subr.mxu0 0.0
      %980 = vmatpush2.msra.mxu0 0.0
      %981 = vmatprep.subr.mxu0 0.0
      %982 = vmatpush2.msra.mxu0 0.0
      %983 = vmatprep.subr.mxu0 0.0
      %984 = vmatpush2.msra.mxu0 0.0
      %985 = vmatprep.subr.mxu0 0.0
      %986 = vmatpush2.msra.mxu0 0.0
      %987 = vmatprep.subr.mxu0 0.0
      %988 = vmatpush2.msra.mxu0 0.0
      %989 = vmatprep.subr.mxu0 0.0
      %990 = vmatpush2.msra.mxu0 0.0
      %991 = vmatprep.subr.mxu0 0.0
      %992 = vmatpush2.msra.mxu0 0.0
      %993 = vmatprep.subr.mxu0 0.0
      %994 = vmatpush2.msra.mxu0 0.0
      %995 = vmatprep.mubr.f32.mxu0 0.0
      %996 = vmatmul.mubr.f32.gmra.mxu0 %v303
      %v997 = vpop.f32.mrf.mxu0
      %v998 = vadd.f32 %v290, %v997
      %v999 = vpop.f32.mrf.mxu0
      %v1000 = vadd.f32 %v294, %v999
      %1001 = vmatprep.mubr.f32.mxu0 0.0
      %1002 = vmatmul.mubr.f32.gmra.mxu0 %v306
      %v1003 = vpop.f32.mrf.mxu0
      %v1004 = vadd.f32 %v290, %v1003
      %v1005 = vpop.f32.mrf.mxu0
      %v1006 = vadd.f32 %v294, %v1005
      %1007 = vmatprep.mubr.f32.mxu0 0.0
      %1008 = vmatmul.mubr.f32.gmra.mxu0 %v309
      %v1009 = vpop.f32.mrf.mxu0
      %v1010 = vadd.f32 %v290, %v1009
      %v1011 = vpop.f32.mrf.mxu0
      %v1012 = vadd.f32 %v294, %v1011
      %1013 = vmatprep.mubr.f32.mxu0 0.0
      %1014 = vmatmul.mubr.f32.gmra.mxu0 %v312
      %v1015 = vpop.f32.mrf.mxu0
      %v1016 = vadd.f32 %v290, %v1015
      %v1017 = vpop.f32.mrf.mxu0
      %v1018 = vadd.f32 %v294, %v1017
      %1019 = vmatprep.mubr.f32.mxu0 0.0
      %1020 = vmatmul.mubr.f32.gmra.mxu0 %v315
      %v1021 = vpop.f32.mrf.mxu0
      %v1022 = vadd.f32 %v290, %v1021
      %v1023 = vpop.f32.mrf.mxu0
      %v1024 = vadd.f32 %v294, %v1023
      %1025 = vmatprep.mubr.f32.mxu0 0.0
      %1026 = vmatmul.mubr.f32.gmra.mxu0 %v318
      %v1027 = vpop.f32.mrf.mxu0
      %v1028 = vadd.f32 %v290, %v1027
      %v1029 = vpop.f32.mrf.mxu0
      %v1030 = vadd.f32 %v294, %v1029
      %1031 = vmatprep.mubr.f32.mxu0 0.0
      %1032 = vmatmul.mubr.f32.gmra.mxu0 %v321
      %v1033 = vpop.f32.mrf.mxu0
      %v1034 = vadd.f32 %v290, %v1033
      %v1035 = vpop.f32.mrf.mxu0
      %v1036 = vadd.f32 %v294, %v1035
      %1037 = vmatprep.mubr.f32.mxu0 0.0
      %1038 = vmatmul.mubr.f32.gmra.mxu0 %v324
      %v1039 = vpop.f32.mrf.mxu0
      %v1040 = vadd.f32 %v290, %v1039
      %v1041 = vpop.f32.mrf.mxu0
      %v1042 = vadd.f32 %v294, %v1041
      %1043 = vmatprep.mubr.f32.mxu0 0.0
      %1044 = vmatmul.mubr.f32.gmra.mxu0 %v327
      %v1045 = vpop.f32.mrf.mxu0
      %v1046 = vadd.f32 %v290, %v1045
      %v1047 = vpop.f32.mrf.mxu0
      %v1048 = vadd.f32 %v294, %v1047
      %1049 = vmatprep.mubr.f32.mxu0 0.0
      %1050 = vmatmul.mubr.f32.gmra.mxu0 %v330
      %v1051 = vpop.f32.mrf.mxu0
      %v1052 = vadd.f32 %v290, %v1051
      %v1053 = vpop.f32.mrf.mxu0
      %v1054 = vadd.f32 %v294, %v1053
      %1055 = vmatprep.mubr.f32.mxu0 0.0
      %1056 = vmatmul.mubr.f32.gmra.mxu0 %v333
      %v1057 = vpop.f32.mrf.mxu0
      %v1058 = vadd.f32 %v290, %v1057
      %v1059 = vpop.f32.mrf.mxu0
      %v1060 = vadd.f32 %v294, %v1059
      %1061 = vmatprep.mubr.f32.mxu0 0.0
      %1062 = vmatmul.mubr.f32.gmra.mxu0 %v336
      %v1063 = vpop.f32.mrf.mxu0
      %v1064 = vadd.f32 %v290, %v1063
      %v1065 = vpop.f32.mrf.mxu0
      %v1066 = vadd.f32 %v294, %v1065
      %1067 = vmatprep.mubr.f32.mxu0 0.0
      %1068 = vmatmul.mubr.f32.gmra.mxu0 %v339
      %v1069 = vpop.f32.mrf.mxu0
      %v1070 = vadd.f32 %v290, %v1069
      %v1071 = vpop.f32.mrf.mxu0
      %v1072 = vadd.f32 %v294, %v1071
      %1073 = vmatprep.mubr.f32.mxu0 0.0
      %1074 = vmatmul.mubr.f32.gmra.mxu0 %v342
      %v1075 = vpop.f32.mrf.mxu0
      %v1076 = vadd.f32 %v290, %v1075
      %v1077 = vpop.f32.mrf.mxu0
      %v1078 = vadd.f32 %v294, %v1077
      %1079 = vmatprep.mubr.f32.mxu0 0.0
      %1080 = vmatmul.mubr.f32.gmra.mxu0 %v345
      %v1081 = vpop.f32.mrf.mxu0
      %v1082 = vadd.f32 %v290, %v1081
      %v1083 = vpop.f32.mrf.mxu0
      %v1084 = vadd.f32 %v294, %v1083
      %1085 = vmatprep.mubr.f32.mxu0 0.0
      %1086 = vmatmul.mubr.f32.gmra.mxu0 %v348
      %v1087 = vpop.f32.mrf.mxu0
      %v1088 = vadd.f32 %v290, %v1087
      %v1089 = vpop.f32.mrf.mxu0
      %v1090 = vadd.f32 %v294, %v1089
      %1091 = vmatprep.mubr.f32.mxu0 0.0
      %1092 = vmatmul.mubr.f32.gmra.mxu0 %v351
      %v1093 = vpop.f32.mrf.mxu0
      %v1094 = vadd.f32 %v290, %v1093
      %v1095 = vpop.f32.mrf.mxu0
      %v1096 = vadd.f32 %v294, %v1095
      %1097 = vmatprep.mubr.f32.mxu0 0.0
      %1098 = vmatmul.mubr.f32.gmra.mxu0 %v354
      %v1099 = vpop.f32.mrf.mxu0
      %v1100 = vadd.f32 %v290, %v1099
      %v1101 = vpop.f32.mrf.mxu0
      %v1102 = vadd.f32 %v294, %v1101
      %1103 = vmatprep.mubr.f32.mxu0 0.0
      %1104 = vmatmul.mubr.f32.gmra.mxu0 %v357
      %v1105 = vpop.f32.mrf.mxu0
      %v1106 = vadd.f32 %v290, %v1105
      %v1107 = vpop.f32.mrf.mxu0
      %v1108 = vadd.f32 %v294, %v1107
      %1109 = vmatprep.mubr.f32.mxu0 0.0
      %1110 = vmatmul.mubr.f32.gmra.mxu0 %v360
      %v1111 = vpop.f32.mrf.mxu0
      %v1112 = vadd.f32 %v290, %v1111
      %v1113 = vpop.f32.mrf.mxu0
      %v1114 = vadd.f32 %v294, %v1113
      %1115 = vmatprep.mubr.f32.mxu0 0.0
      %1116 = vmatmul.mubr.f32.gmra.mxu0 %v363
      %v1117 = vpop.f32.mrf.mxu0
      %v1118 = vadd.f32 %v290, %v1117
      %v1119 = vpop.f32.mrf.mxu0
      %v1120 = vadd.f32 %v294, %v1119
      %1121 = vmatprep.mubr.f32.mxu0 0.0
      %1122 = vmatmul.mubr.f32.gmra.mxu0 %v366
      %v1123 = vpop.f32.mrf.mxu0
      %v1124 = vadd.f32 %v290, %v1123
      %v1125 = vpop.f32.mrf.mxu0
      %v1126 = vadd.f32 %v294, %v1125
      %1127 = vmatprep.mubr.f32.mxu0 0.0
      %1128 = vmatmul.mubr.f32.gmra.mxu0 %v369
      %v1129 = vpop.f32.mrf.mxu0
      %v1130 = vadd.f32 %v290, %v1129
      %v1131 = vpop.f32.mrf.mxu0
      %v1132 = vadd.f32 %v294, %v1131
      %1133 = vmatprep.mubr.f32.mxu0 0.0
      %1134 = vmatmul.mubr.f32.gmra.mxu0 %v372
      %v1135 = vpop.f32.mrf.mxu0
      %v1136 = vadd.f32 %v290, %v1135
      %v1137 = vpop.f32.mrf.mxu0
      %v1138 = vadd.f32 %v294, %v1137
      %1139 = vmatprep.mubr.f32.mxu0 0.0
      %1140 = vmatmul.mubr.f32.gmra.mxu0 %v375
      %v1141 = vpop.f32.mrf.mxu0
      %v1142 = vadd.f32 %v290, %v1141
      %v1143 = vpop.f32.mrf.mxu0
      %v1144 = vadd.f32 %v294, %v1143
      %1145 = vmatprep.mubr.f32.mxu0 0.0
      %1146 = vmatmul.mubr.f32.gmra.mxu0 %v378
      %v1147 = vpop.f32.mrf.mxu0
      %v1148 = vadd.f32 %v290, %v1147
      %v1149 = vpop.f32.mrf.mxu0
      %v1150 = vadd.f32 %v294, %v1149
      %1151 = vmatprep.mubr.f32.mxu0 0.0
      %1152 = vmatmul.mubr.f32.gmra.mxu0 %v381
      %v1153 = vpop.f32.mrf.mxu0
      %v1154 = vadd.f32 %v290, %v1153
      %v1155 = vpop.f32.mrf.mxu0
      %v1156 = vadd.f32 %v294, %v1155
      %1157 = vmatprep.mubr.f32.mxu0 0.0
      %1158 = vmatmul.mubr.f32.gmra.mxu0 %v384
      %v1159 = vpop.f32.mrf.mxu0
      %v1160 = vadd.f32 %v290, %v1159
      %v1161 = vpop.f32.mrf.mxu0
      %v1162 = vadd.f32 %v294, %v1161
      %1163 = vmatprep.mubr.f32.mxu0 0.0
      %1164 = vmatmul.mubr.f32.gmra.mxu0 %v387
      %v1165 = vpop.f32.mrf.mxu0
      %v1166 = vadd.f32 %v290, %v1165
      %v1167 = vpop.f32.mrf.mxu0
      %v1168 = vadd.f32 %v294, %v1167
      %1169 = vmatprep.mubr.f32.mxu0 0.0
      %1170 = vmatmul.mubr.f32.gmra.mxu0 %v390
      %v1171 = vpop.f32.mrf.mxu0
      %v1172 = vadd.f32 %v290, %v1171
      %v1173 = vpop.f32.mrf.mxu0
      %v1174 = vadd.f32 %v294, %v1173
      %1175 = vmatprep.mubr.f32.mxu0 0.0
      %1176 = vmatmul.mubr.f32.gmra.mxu0 %v393
      %v1177 = vpop.f32.mrf.mxu0
      %v1178 = vadd.f32 %v290, %v1177
      %v1179 = vpop.f32.mrf.mxu0
      %v1180 = vadd.f32 %v294, %v1179
      %1181 = vmatprep.mubr.f32.mxu0 0.0
      %1182 = vmatmul.mubr.f32.gmra.mxu0 %v396
      %v1183 = vpop.f32.mrf.mxu0
      %v1184 = vadd.f32 %v290, %v1183
      %v1185 = vpop.f32.mrf.mxu0
      %v1186 = vadd.f32 %v294, %v1185
      %1187 = vdwg.mxu0
      %v1188 = vmax.f32 %v484, 0.0
      %v1189 = vmax.f32 %v486, 0.0
      %v1190 = vmax.f32 %v741, 0.0
      %v1191 = vmax.f32 %v743, 0.0
      %v1192 = vmax.f32 %v998, 0.0
      %v1193 = vmax.f32 %v1000, 0.0
      %v1194 = vmax.f32 %v490, 0.0
      %v1195 = vmax.f32 %v492, 0.0
      %v1196 = vmax.f32 %v747, 0.0
      %v1197 = vmax.f32 %v749, 0.0
      %v1198 = vmax.f32 %v1004, 0.0
      %v1199 = vmax.f32 %v1006, 0.0
      %v1200 = vmax.f32 %v496, 0.0
      %v1201 = vmax.f32 %v498, 0.0
      %v1202 = vmax.f32 %v753, 0.0
      %v1203 = vmax.f32 %v755, 0.0
      %v1204 = vmax.f32 %v1010, 0.0
      %v1205 = vmax.f32 %v1012, 0.0
      %v1206 = vmax.f32 %v502, 0.0
      %v1207 = vmax.f32 %v504, 0.0
      %v1208 = vmax.f32 %v759, 0.0
      %v1209 = vmax.f32 %v761, 0.0
      %v1210 = vmax.f32 %v1016, 0.0
      %v1211 = vmax.f32 %v1018, 0.0
      %v1212 = vmax.f32 %v508, 0.0
      %v1213 = vmax.f32 %v510, 0.0
      %v1214 = vmax.f32 %v765, 0.0
      %v1215 = vmax.f32 %v767, 0.0
      %v1216 = vmax.f32 %v1022, 0.0
      %v1217 = vmax.f32 %v1024, 0.0
      %v1218 = vmax.f32 %v514, 0.0
      %v1219 = vmax.f32 %v516, 0.0
      %v1220 = vmax.f32 %v771, 0.0
      %v1221 = vmax.f32 %v773, 0.0
      %v1222 = vmax.f32 %v1028, 0.0
      %v1223 = vmax.f32 %v1030, 0.0
      %v1224 = vmax.f32 %v520, 0.0
      %v1225 = vmax.f32 %v522, 0.0
      %v1226 = vmax.f32 %v777, 0.0
      %v1227 = vmax.f32 %v779, 0.0
      %v1228 = vmax.f32 %v1034, 0.0
      %v1229 = vmax.f32 %v1036, 0.0
      %v1230 = vmax.f32 %v526, 0.0
      %v1231 = vmax.f32 %v528, 0.0
      %v1232 = vmax.f32 %v783, 0.0
      %v1233 = vmax.f32 %v785, 0.0
      %v1234 = vmax.f32 %v1040, 0.0
      %v1235 = vmax.f32 %v1042, 0.0
      %v1236 = vmax.f32 %v532, 0.0
      %v1237 = vmax.f32 %v534, 0.0
      %v1238 = vmax.f32 %v789, 0.0
      %v1239 = vmax.f32 %v791, 0.0
      %v1240 = vmax.f32 %v1046, 0.0
      %v1241 = vmax.f32 %v1048, 0.0
      %v1242 = vmax.f32 %v538, 0.0
      %v1243 = vmax.f32 %v540, 0.0
      %v1244 = vmax.f32 %v795, 0.0
      %v1245 = vmax.f32 %v797, 0.0
      %v1246 = vmax.f32 %v1052, 0.0
      %v1247 = vmax.f32 %v1054, 0.0
      %v1248 = vmax.f32 %v544, 0.0
      %v1249 = vmax.f32 %v546, 0.0
      %v1250 = vmax.f32 %v801, 0.0
      %v1251 = vmax.f32 %v803, 0.0
      %v1252 = vmax.f32 %v1058, 0.0
      %v1253 = vmax.f32 %v1060, 0.0
      %v1254 = vmax.f32 %v550, 0.0
      %v1255 = vmax.f32 %v552, 0.0
      %v1256 = vmax.f32 %v807, 0.0
      %v1257 = vmax.f32 %v809, 0.0
      %v1258 = vmax.f32 %v1064, 0.0
      %v1259 = vmax.f32 %v1066, 0.0
      %v1260 = vmax.f32 %v556, 0.0
      %v1261 = vmax.f32 %v558, 0.0
      %v1262 = vmax.f32 %v813, 0.0
      %v1263 = vmax.f32 %v815, 0.0
      %v1264 = vmax.f32 %v1070, 0.0
      %v1265 = vmax.f32 %v1072, 0.0
      %v1266 = vmax.f32 %v562, 0.0
      %v1267 = vmax.f32 %v564, 0.0
      %v1268 = vmax.f32 %v819, 0.0
      %v1269 = vmax.f32 %v821, 0.0
      %v1270 = vmax.f32 %v1076, 0.0
      %v1271 = vmax.f32 %v1078, 0.0
      %v1272 = vmax.f32 %v568, 0.0
      %v1273 = vmax.f32 %v570, 0.0
      %v1274 = vmax.f32 %v825, 0.0
      %v1275 = vmax.f32 %v827, 0.0
      %v1276 = vmax.f32 %v1082, 0.0
      %v1277 = vmax.f32 %v1084, 0.0
      %v1278 = vmax.f32 %v574, 0.0
      %v1279 = vmax.f32 %v576, 0.0
      %v1280 = vmax.f32 %v831, 0.0
      %v1281 = vmax.f32 %v833, 0.0
      %v1282 = vmax.f32 %v1088, 0.0
      %v1283 = vmax.f32 %v1090, 0.0
      %v1284 = vmax.f32 %v580, 0.0
      %v1285 = vmax.f32 %v582, 0.0
      %v1286 = vmax.f32 %v837, 0.0
      %v1287 = vmax.f32 %v839, 0.0
      %v1288 = vmax.f32 %v1094, 0.0
      %v1289 = vmax.f32 %v1096, 0.0
      %v1290 = vmax.f32 %v586, 0.0
      %v1291 = vmax.f32 %v588, 0.0
      %v1292 = vmax.f32 %v843, 0.0
      %v1293 = vmax.f32 %v845, 0.0
      %v1294 = vmax.f32 %v1100, 0.0
      %v1295 = vmax.f32 %v1102, 0.0
      %v1296 = vmax.f32 %v592, 0.0
      %v1297 = vmax.f32 %v594, 0.0
      %v1298 = vmax.f32 %v849, 0.0
      %v1299 = vmax.f32 %v851, 0.0
      %v1300 = vmax.f32 %v1106, 0.0
      %v1301 = vmax.f32 %v1108, 0.0
      %v1302 = vmax.f32 %v598, 0.0
      %v1303 = vmax.f32 %v600, 0.0
      %v1304 = vmax.f32 %v855, 0.0
      %v1305 = vmax.f32 %v857, 0.0
      %v1306 = vmax.f32 %v1112, 0.0
      %v1307 = vmax.f32 %v1114, 0.0
      %v1308 = vmax.f32 %v604, 0.0
      %v1309 = vmax.f32 %v606, 0.0
      %v1310 = vmax.f32 %v861, 0.0
      %v1311 = vmax.f32 %v863, 0.0
      %v1312 = vmax.f32 %v1118, 0.0
      %v1313 = vmax.f32 %v1120, 0.0
      %v1314 = vmax.f32 %v610, 0.0
      %v1315 = vmax.f32 %v612, 0.0
      %v1316 = vmax.f32 %v867, 0.0
      %v1317 = vmax.f32 %v869, 0.0
      %v1318 = vmax.f32 %v1124, 0.0
      %v1319 = vmax.f32 %v1126, 0.0
      %v1320 = vmax.f32 %v616, 0.0
      %v1321 = vmax.f32 %v618, 0.0
      %v1322 = vmax.f32 %v873, 0.0
      %v1323 = vmax.f32 %v875, 0.0
      %v1324 = vmax.f32 %v1130, 0.0
      %v1325 = vmax.f32 %v1132, 0.0
      %v1326 = vmax.f32 %v622, 0.0
      %v1327 = vmax.f32 %v624, 0.0
      %v1328 = vmax.f32 %v879, 0.0
      %v1329 = vmax.f32 %v881, 0.0
      %v1330 = vmax.f32 %v1136, 0.0
      %v1331 = vmax.f32 %v1138, 0.0
      %v1332 = vmax.f32 %v628, 0.0
      %v1333 = vmax.f32 %v630, 0.0
      %v1334 = vmax.f32 %v885, 0.0
      %v1335 = vmax.f32 %v887, 0.0
      %v1336 = vmax.f32 %v1142, 0.0
      %v1337 = vmax.f32 %v1144, 0.0
      %v1338 = vmax.f32 %v634, 0.0
      %v1339 = vmax.f32 %v636, 0.0
      %v1340 = vmax.f32 %v891, 0.0
      %v1341 = vmax.f32 %v893, 0.0
      %v1342 = vmax.f32 %v1148, 0.0
      %v1343 = vmax.f32 %v1150, 0.0
      %v1344 = vmax.f32 %v640, 0.0
      %v1345 = vmax.f32 %v642, 0.0
      %v1346 = vmax.f32 %v897, 0.0
      %v1347 = vmax.f32 %v899, 0.0
      %v1348 = vmax.f32 %v1154, 0.0
      %v1349 = vmax.f32 %v1156, 0.0
      %v1350 = vmax.f32 %v646, 0.0
      %v1351 = vmax.f32 %v648, 0.0
      %v1352 = vmax.f32 %v903, 0.0
      %v1353 = vmax.f32 %v905, 0.0
      %v1354 = vmax.f32 %v1160, 0.0
      %v1355 = vmax.f32 %v1162, 0.0
      %v1356 = vmax.f32 %v652, 0.0
      %v1357 = vmax.f32 %v654, 0.0
      %v1358 = vmax.f32 %v909, 0.0
      %v1359 = vmax.f32 %v911, 0.0
      %v1360 = vmax.f32 %v1166, 0.0
      %v1361 = vmax.f32 %v1168, 0.0
      %v1362 = vmax.f32 %v658, 0.0
      %v1363 = vmax.f32 %v660, 0.0
      %v1364 = vmax.f32 %v915, 0.0
      %v1365 = vmax.f32 %v917, 0.0
      %v1366 = vmax.f32 %v1172, 0.0
      %v1367 = vmax.f32 %v1174, 0.0
      %v1368 = vmax.f32 %v664, 0.0
      %v1369 = vmax.f32 %v666, 0.0
      %v1370 = vmax.f32 %v921, 0.0
      %v1371 = vmax.f32 %v923, 0.0
      %v1372 = vmax.f32 %v1178, 0.0
      %v1373 = vmax.f32 %v1180, 0.0
      %v1374 = vmax.f32 %v670, 0.0
      %v1375 = vmax.f32 %v672, 0.0
      %v1376 = vmax.f32 %v927, 0.0
      %v1377 = vmax.f32 %v929, 0.0
      %v1378 = vmax.f32 %v1184, 0.0
      %v1379 = vmax.f32 %v1186, 0.0
      %1380 = vst [vmem:[#allocation2] sm:$0xff] %v1188
      %1381 = vst [vmem:[#allocation2 + $0x8] sm:$0xff] %v1189
      %1382 = vst [vmem:[#allocation2 + $0x10] sm:$0xff] %v1190
      %1383 = vst [vmem:[#allocation2 + $0x18] sm:$0xff] %v1191
      %1384 = vst [vmem:[#allocation2 + $0x20] sm:$0xff] %v1192
      %1385 = vst [vmem:[#allocation2 + $0x28] sm:$0xff] %v1193
      %1386 = vst [vmem:[#allocation2 + $0x30] sm:$0xff] %v1194
      %1387 = vst [vmem:[#allocation2 + $0x38] sm:$0xff] %v1195
      %1388 = vst [vmem:[#allocation2 + $0x40] sm:$0xff] %v1196
      %1389 = vst [vmem:[#allocation2 + $0x48] sm:$0xff] %v1197
      %1390 = vst [vmem:[#allocation2 + $0x50] sm:$0xff] %v1198
      %1391 = vst [vmem:[#allocation2 + $0x58] sm:$0xff] %v1199
      %1392 = vst [vmem:[#allocation2 + $0x60] sm:$0xff] %v1200
      %1393 = vst [vmem:[#allocation2 + $0x68] sm:$0xff] %v1201
      %1394 = vst [vmem:[#allocation2 + $0x70] sm:$0xff] %v1202
      %1395 = vst [vmem:[#allocation2 + $0x78] sm:$0xff] %v1203
      %1396 = vst [vmem:[#allocation2 + $0x80] sm:$0xff] %v1204
      %1397 = vst [vmem:[#allocation2 + $0x88] sm:$0xff] %v1205
      %1398 = vst [vmem:[#allocation2 + $0x90] sm:$0xff] %v1206
      %1399 = vst [vmem:[#allocation2 + $0x98] sm:$0xff] %v1207
      %1400 = vst [vmem:[#allocation2 + $0xa0] sm:$0xff] %v1208
      %1401 = vst [vmem:[#allocation2 + $0xa8] sm:$0xff] %v1209
      %1402 = vst [vmem:[#allocation2 + $0xb0] sm:$0xff] %v1210
      %1403 = vst [vmem:[#allocation2 + $0xb8] sm:$0xff] %v1211
      %1404 = vst [vmem:[#allocation2 + $0xc0] sm:$0xff] %v1212
      %1405 = vst [vmem:[#allocation2 + $0xc8] sm:$0xff] %v1213
      %1406 = vst [vmem:[#allocation2 + $0xd0] sm:$0xff] %v1214
      %1407 = vst [vmem:[#allocation2 + $0xd8] sm:$0xff] %v1215
      %1408 = vst [vmem:[#allocation2 + $0xe0] sm:$0xff] %v1216
      %1409 = vst [vmem:[#allocation2 + $0xe8] sm:$0xff] %v1217
      %1410 = vst [vmem:[#allocation2 + $0xf0] sm:$0xff] %v1218
      %1411 = vst [vmem:[#allocation2 + $0xf8] sm:$0xff] %v1219
      %1412 = vst [vmem:[#allocation2 + $0x100] sm:$0xff] %v1220
      %1413 = vst [vmem:[#allocation2 + $0x108] sm:$0xff] %v1221
      %1414 = vst [vmem:[#allocation2 + $0x110] sm:$0xff] %v1222
      %1415 = vst [vmem:[#allocation2 + $0x118] sm:$0xff] %v1223
      %1416 = vst [vmem:[#allocation2 + $0x120] sm:$0xff] %v1224
      %1417 = vst [vmem:[#allocation2 + $0x128] sm:$0xff] %v1225
      %1418 = vst [vmem:[#allocation2 + $0x130] sm:$0xff] %v1226
      %1419 = vst [vmem:[#allocation2 + $0x138] sm:$0xff] %v1227
      %1420 = vst [vmem:[#allocation2 + $0x140] sm:$0xff] %v1228
      %1421 = vst [vmem:[#allocation2 + $0x148] sm:$0xff] %v1229
      %1422 = vst [vmem:[#allocation2 + $0x150] sm:$0xff] %v1230
      %1423 = vst [vmem:[#allocation2 + $0x158] sm:$0xff] %v1231
      %1424 = vst [vmem:[#allocation2 + $0x160] sm:$0xff] %v1232
      %1425 = vst [vmem:[#allocation2 + $0x168] sm:$0xff] %v1233
      %1426 = vst [vmem:[#allocation2 + $0x170] sm:$0xff] %v1234
      %1427 = vst [vmem:[#allocation2 + $0x178] sm:$0xff] %v1235
      %1428 = vst [vmem:[#allocation2 + $0x180] sm:$0xff] %v1236
      %1429 = vst [vmem:[#allocation2 + $0x188] sm:$0xff] %v1237
      %1430 = vst [vmem:[#allocation2 + $0x190] sm:$0xff] %v1238
      %1431 = vst [vmem:[#allocation2 + $0x198] sm:$0xff] %v1239
      %1432 = vst [vmem:[#allocation2 + $0x1a0] sm:$0xff] %v1240
      %1433 = vst [vmem:[#allocation2 + $0x1a8] sm:$0xff] %v1241
      %1434 = vst [vmem:[#allocation2 + $0x1b0] sm:$0xff] %v1242
      %1435 = vst [vmem:[#allocation2 + $0x1b8] sm:$0xff] %v1243
      %1436 = vst [vmem:[#allocation2 + $0x1c0] sm:$0xff] %v1244
      %1437 = vst [vmem:[#allocation2 + $0x1c8] sm:$0xff] %v1245
      %1438 = vst [vmem:[#allocation2 + $0x1d0] sm:$0xff] %v1246
      %1439 = vst [vmem:[#allocation2 + $0x1d8] sm:$0xff] %v1247
      %1440 = vst [vmem:[#allocation2 + $0x1e0] sm:$0xff] %v1248
      %1441 = vst [vmem:[#allocation2 + $0x1e8] sm:$0xff] %v1249
      %1442 = vst [vmem:[#allocation2 + $0x1f0] sm:$0xff] %v1250
      %1443 = vst [vmem:[#allocation2 + $0x1f8] sm:$0xff] %v1251
      %1444 = vst [vmem:[#allocation2 + $0x200] sm:$0xff] %v1252
      %1445 = vst [vmem:[#allocation2 + $0x208] sm:$0xff] %v1253
      %1446 = vst [vmem:[#allocation2 + $0x210] sm:$0xff] %v1254
      %1447 = vst [vmem:[#allocation2 + $0x218] sm:$0xff] %v1255
      %1448 = vst [vmem:[#allocation2 + $0x220] sm:$0xff] %v1256
      %1449 = vst [vmem:[#allocation2 + $0x228] sm:$0xff] %v1257
      %1450 = vst [vmem:[#allocation2 + $0x230] sm:$0xff] %v1258
      %1451 = vst [vmem:[#allocation2 + $0x238] sm:$0xff] %v1259
      %1452 = vst [vmem:[#allocation2 + $0x240] sm:$0xff] %v1260
      %1453 = vst [vmem:[#allocation2 + $0x248] sm:$0xff] %v1261
      %1454 = vst [vmem:[#allocation2 + $0x250] sm:$0xff] %v1262
      %1455 = vst [vmem:[#allocation2 + $0x258] sm:$0xff] %v1263
      %1456 = vst [vmem:[#allocation2 + $0x260] sm:$0xff] %v1264
      %1457 = vst [vmem:[#allocation2 + $0x268] sm:$0xff] %v1265
      %1458 = vst [vmem:[#allocation2 + $0x270] sm:$0xff] %v1266
      %1459 = vst [vmem:[#allocation2 + $0x278] sm:$0xff] %v1267
      %1460 = vst [vmem:[#allocation2 + $0x280] sm:$0xff] %v1268
      %1461 = vst [vmem:[#allocation2 + $0x288] sm:$0xff] %v1269
      %1462 = vst [vmem:[#allocation2 + $0x290] sm:$0xff] %v1270
      %1463 = vst [vmem:[#allocation2 + $0x298] sm:$0xff] %v1271
      %1464 = vst [vmem:[#allocation2 + $0x2a0] sm:$0xff] %v1272
      %1465 = vst [vmem:[#allocation2 + $0x2a8] sm:$0xff] %v1273
      %1466 = vst [vmem:[#allocation2 + $0x2b0] sm:$0xff] %v1274
      %1467 = vst [vmem:[#allocation2 + $0x2b8] sm:$0xff] %v1275
      %1468 = vst [vmem:[#allocation2 + $0x2c0] sm:$0xff] %v1276
      %1469 = vst [vmem:[#allocation2 + $0x2c8] sm:$0xff] %v1277
      %1470 = vst [vmem:[#allocation2 + $0x2d0] sm:$0xff] %v1278
      %1471 = vst [vmem:[#allocation2 + $0x2d8] sm:$0xff] %v1279
      %1472 = vst [vmem:[#allocation2 + $0x2e0] sm:$0xff] %v1280
      %1473 = vst [vmem:[#allocation2 + $0x2e8] sm:$0xff] %v1281
      %1474 = vst [vmem:[#allocation2 + $0x2f0] sm:$0xff] %v1282
      %1475 = vst [vmem:[#allocation2 + $0x2f8] sm:$0xff] %v1283
      %1476 = vst [vmem:[#allocation2 + $0x300] sm:$0xff] %v1284
      %1477 = vst [vmem:[#allocation2 + $0x308] sm:$0xff] %v1285
      %1478 = vst [vmem:[#allocation2 + $0x310] sm:$0xff] %v1286
      %1479 = vst [vmem:[#allocation2 + $0x318] sm:$0xff] %v1287
      %1480 = vst [vmem:[#allocation2 + $0x320] sm:$0xff] %v1288
      %1481 = vst [vmem:[#allocation2 + $0x328] sm:$0xff] %v1289
      %1482 = vst [vmem:[#allocation2 + $0x330] sm:$0xff] %v1290
      %1483 = vst [vmem:[#allocation2 + $0x338] sm:$0xff] %v1291
      %1484 = vst [vmem:[#allocation2 + $0x340] sm:$0xff] %v1292
      %1485 = vst [vmem:[#allocation2 + $0x348] sm:$0xff] %v1293
      %1486 = vst [vmem:[#allocation2 + $0x350] sm:$0xff] %v1294
      %1487 = vst [vmem:[#allocation2 + $0x358] sm:$0xff] %v1295
      %1488 = vst [vmem:[#allocation2 + $0x360] sm:$0xff] %v1296
      %1489 = vst [vmem:[#allocation2 + $0x368] sm:$0xff] %v1297
      %1490 = vst [vmem:[#allocation2 + $0x370] sm:$0xff] %v1298
      %1491 = vst [vmem:[#allocation2 + $0x378] sm:$0xff] %v1299
      %1492 = vst [vmem:[#allocation2 + $0x380] sm:$0xff] %v1300
      %1493 = vst [vmem:[#allocation2 + $0x388] sm:$0xff] %v1301
      %1494 = vst [vmem:[#allocation2 + $0x390] sm:$0xff] %v1302
      %1495 = vst [vmem:[#allocation2 + $0x398] sm:$0xff] %v1303
      %1496 = vst [vmem:[#allocation2 + $0x3a0] sm:$0xff] %v1304
      %1497 = vst [vmem:[#allocation2 + $0x3a8] sm:$0xff] %v1305
      %1498 = vst [vmem:[#allocation2 + $0x3b0] sm:$0xff] %v1306
      %1499 = vst [vmem:[#allocation2 + $0x3b8] sm:$0xff] %v1307
      %1500 = vst [vmem:[#allocation2 + $0x3c0] sm:$0xff] %v1308
      %1501 = vst [vmem:[#allocation2 + $0x3c8] sm:$0xff] %v1309
      %1502 = vst [vmem:[#allocation2 + $0x3d0] sm:$0xff] %v1310
      %1503 = vst [vmem:[#allocation2 + $0x3d8] sm:$0xff] %v1311
      %1504 = vst [vmem:[#allocation2 + $0x3e0] sm:$0xff] %v1312
      %1505 = vst [vmem:[#allocation2 + $0x3e8] sm:$0xff] %v1313
      %1506 = vst [vmem:[#allocation2 + $0x3f0] sm:$0xff] %v1314
      %1507 = vst [vmem:[#allocation2 + $0x3f8] sm:$0xff] %v1315
      %1508 = vst [vmem:[#allocation2 + $0x400] sm:$0xff] %v1316
      %1509 = vst [vmem:[#allocation2 + $0x408] sm:$0xff] %v1317
      %1510 = vst [vmem:[#allocation2 + $0x410] sm:$0xff] %v1318
      %1511 = vst [vmem:[#allocation2 + $0x418] sm:$0xff] %v1319
      %1512 = vst [vmem:[#allocation2 + $0x420] sm:$0xff] %v1320
      %1513 = vst [vmem:[#allocation2 + $0x428] sm:$0xff] %v1321
      %1514 = vst [vmem:[#allocation2 + $0x430] sm:$0xff] %v1322
      %1515 = vst [vmem:[#allocation2 + $0x438] sm:$0xff] %v1323
      %1516 = vst [vmem:[#allocation2 + $0x440] sm:$0xff] %v1324
      %1517 = vst [vmem:[#allocation2 + $0x448] sm:$0xff] %v1325
      %1518 = vst [vmem:[#allocation2 + $0x450] sm:$0xff] %v1326
      %1519 = vst [vmem:[#allocation2 + $0x458] sm:$0xff] %v1327
      %1520 = vst [vmem:[#allocation2 + $0x460] sm:$0xff] %v1328
      %1521 = vst [vmem:[#allocation2 + $0x468] sm:$0xff] %v1329
      %1522 = vst [vmem:[#allocation2 + $0x470] sm:$0xff] %v1330
      %1523 = vst [vmem:[#allocation2 + $0x478] sm:$0xff] %v1331
      %1524 = vst [vmem:[#allocation2 + $0x480] sm:$0xff] %v1332
      %1525 = vst [vmem:[#allocation2 + $0x488] sm:$0xff] %v1333
      %1526 = vst [vmem:[#allocation2 + $0x490] sm:$0xff] %v1334
      %1527 = vst [vmem:[#allocation2 + $0x498] sm:$0xff] %v1335
      %1528 = vst [vmem:[#allocation2 + $0x4a0] sm:$0xff] %v1336
      %1529 = vst [vmem:[#allocation2 + $0x4a8] sm:$0xff] %v1337
      %1530 = vst [vmem:[#allocation2 + $0x4b0] sm:$0xff] %v1338
      %1531 = vst [vmem:[#allocation2 + $0x4b8] sm:$0xff] %v1339
      %1532 = vst [vmem:[#allocation2 + $0x4c0] sm:$0xff] %v1340
      %1533 = vst [vmem:[#allocation2 + $0x4c8] sm:$0xff] %v1341
      %1534 = vst [vmem:[#allocation2 + $0x4d0] sm:$0xff] %v1342
      %1535 = vst [vmem:[#allocation2 + $0x4d8] sm:$0xff] %v1343
      %1536 = vst [vmem:[#allocation2 + $0x4e0] sm:$0xff] %v1344
      %1537 = vst [vmem:[#allocation2 + $0x4e8] sm:$0xff] %v1345
      %1538 = vst [vmem:[#allocation2 + $0x4f0] sm:$0xff] %v1346
      %1539 = vst [vmem:[#allocation2 + $0x4f8] sm:$0xff] %v1347
      %1540 = vst [vmem:[#allocation2 + $0x500] sm:$0xff] %v1348
      %1541 = vst [vmem:[#allocation2 + $0x508] sm:$0xff] %v1349
      %1542 = vst [vmem:[#allocation2 + $0x510] sm:$0xff] %v1350
      %1543 = vst [vmem:[#allocation2 + $0x518] sm:$0xff] %v1351
      %1544 = vst [vmem:[#allocation2 + $0x520] sm:$0xff] %v1352
      %1545 = vst [vmem:[#allocation2 + $0x528] sm:$0xff] %v1353
      %1546 = vst [vmem:[#allocation2 + $0x530] sm:$0xff] %v1354
      %1547 = vst [vmem:[#allocation2 + $0x538] sm:$0xff] %v1355
      %1548 = vst [vmem:[#allocation2 + $0x540] sm:$0xff] %v1356
      %1549 = vst [vmem:[#allocation2 + $0x548] sm:$0xff] %v1357
      %1550 = vst [vmem:[#allocation2 + $0x550] sm:$0xff] %v1358
      %1551 = vst [vmem:[#allocation2 + $0x558] sm:$0xff] %v1359
      %1552 = vst [vmem:[#allocation2 + $0x560] sm:$0xff] %v1360
      %1553 = vst [vmem:[#allocation2 + $0x568] sm:$0xff] %v1361
      %1554 = vst [vmem:[#allocation2 + $0x570] sm:$0xff] %v1362
      %1555 = vst [vmem:[#allocation2 + $0x578] sm:$0xff] %v1363
      %1556 = vst [vmem:[#allocation2 + $0x580] sm:$0xff] %v1364
      %1557 = vst [vmem:[#allocation2 + $0x588] sm:$0xff] %v1365
      %1558 = vst [vmem:[#allocation2 + $0x590] sm:$0xff] %v1366
      %1559 = vst [vmem:[#allocation2 + $0x598] sm:$0xff] %v1367
      %1560 = vst [vmem:[#allocation2 + $0x5a0] sm:$0xff] %v1368
      %1561 = vst [vmem:[#allocation2 + $0x5a8] sm:$0xff] %v1369
      %1562 = vst [vmem:[#allocation2 + $0x5b0] sm:$0xff] %v1370
      %1563 = vst [vmem:[#allocation2 + $0x5b8] sm:$0xff] %v1371
      %1564 = vst [vmem:[#allocation2 + $0x5c0] sm:$0xff] %v1372
      %1565 = vst [vmem:[#allocation2 + $0x5c8] sm:$0xff] %v1373
      %1566 = vst [vmem:[#allocation2 + $0x5d0] sm:$0xff] %v1374
      %1567 = vst [vmem:[#allocation2 + $0x5d8] sm:$0xff] %v1375
      %1568 = vst [vmem:[#allocation2 + $0x5e0] sm:$0xff] %v1376
      %1569 = vst [vmem:[#allocation2 + $0x5e8] sm:$0xff] %v1377
      %1570 = vst [vmem:[#allocation2 + $0x5f0] sm:$0xff] %v1378
      %1571 = vst [vmem:[#allocation2 + $0x5f8] sm:$0xff] %v1379
      %v1572 = vld [vmem:[#allocation2] sm:$0xff]
      %v1573 = vld [vmem:[#allocation2 + $0x8] sm:$0xff]
      %v1574 = vld [vmem:[#allocation2 + $0x10] sm:$0xff]
      %v1575 = vld [vmem:[#allocation2 + $0x18] sm:$0xff]
      %v1576 = vld [vmem:[#allocation2 + $0x20] sm:$0xff]
      %v1577 = vld [vmem:[#allocation2 + $0x28] sm:$0xff]
      %v1578 = vld [vmem:[#allocation2 + $0x30] sm:$0xff]
      %v1579 = vld [vmem:[#allocation2 + $0x38] sm:$0xff]
      %v1580 = vld [vmem:[#allocation2 + $0x40] sm:$0xff]
      %v1581 = vld [vmem:[#allocation2 + $0x48] sm:$0xff]
      %v1582 = vld [vmem:[#allocation2 + $0x50] sm:$0xff]
      %v1583 = vld [vmem:[#allocation2 + $0x58] sm:$0xff]
      %v1584 = vld [vmem:[#allocation2 + $0x60] sm:$0xff]
      %v1585 = vld [vmem:[#allocation2 + $0x68] sm:$0xff]
      %v1586 = vld [vmem:[#allocation2 + $0x70] sm:$0xff]
      %v1587 = vld [vmem:[#allocation2 + $0x78] sm:$0xff]
      %v1588 = vld [vmem:[#allocation2 + $0x80] sm:$0xff]
      %v1589 = vld [vmem:[#allocation2 + $0x88] sm:$0xff]
      %v1590 = vld [vmem:[#allocation2 + $0x90] sm:$0xff]
      %v1591 = vld [vmem:[#allocation2 + $0x98] sm:$0xff]
      %v1592 = vld [vmem:[#allocation2 + $0xa0] sm:$0xff]
      %v1593 = vld [vmem:[#allocation2 + $0xa8] sm:$0xff]
      %v1594 = vld [vmem:[#allocation2 + $0xb0] sm:$0xff]
      %v1595 = vld [vmem:[#allocation2 + $0xb8] sm:$0xff]
      %v1596 = vld [vmem:[#allocation2 + $0xc0] sm:$0xff]
      %v1597 = vld [vmem:[#allocation2 + $0xc8] sm:$0xff]
      %v1598 = vld [vmem:[#allocation2 + $0xd0] sm:$0xff]
      %v1599 = vld [vmem:[#allocation2 + $0xd8] sm:$0xff]
      %v1600 = vld [vmem:[#allocation2 + $0xe0] sm:$0xff]
      %v1601 = vld [vmem:[#allocation2 + $0xe8] sm:$0xff]
      %v1602 = vld [vmem:[#allocation2 + $0xf0] sm:$0xff]
      %v1603 = vld [vmem:[#allocation2 + $0xf8] sm:$0xff]
      %v1604 = vld [vmem:[#allocation2 + $0x100] sm:$0xff]
      %v1605 = vld [vmem:[#allocation2 + $0x108] sm:$0xff]
      %v1606 = vld [vmem:[#allocation2 + $0x110] sm:$0xff]
      %v1607 = vld [vmem:[#allocation2 + $0x118] sm:$0xff]
      %v1608 = vld [vmem:[#allocation2 + $0x120] sm:$0xff]
      %v1609 = vld [vmem:[#allocation2 + $0x128] sm:$0xff]
      %v1610 = vld [vmem:[#allocation2 + $0x130] sm:$0xff]
      %v1611 = vld [vmem:[#allocation2 + $0x138] sm:$0xff]
      %v1612 = vld [vmem:[#allocation2 + $0x140] sm:$0xff]
      %v1613 = vld [vmem:[#allocation2 + $0x148] sm:$0xff]
      %v1614 = vld [vmem:[#allocation2 + $0x150] sm:$0xff]
      %v1615 = vld [vmem:[#allocation2 + $0x158] sm:$0xff]
      %v1616 = vld [vmem:[#allocation2 + $0x160] sm:$0xff]
      %v1617 = vld [vmem:[#allocation2 + $0x168] sm:$0xff]
      %v1618 = vld [vmem:[#allocation2 + $0x170] sm:$0xff]
      %v1619 = vld [vmem:[#allocation2 + $0x178] sm:$0xff]
      %v1620 = vld [vmem:[#allocation2 + $0x180] sm:$0xff]
      %v1621 = vld [vmem:[#allocation2 + $0x188] sm:$0xff]
      %v1622 = vld [vmem:[#allocation2 + $0x190] sm:$0xff]
      %v1623 = vld [vmem:[#allocation2 + $0x198] sm:$0xff]
      %v1624 = vld [vmem:[#allocation2 + $0x1a0] sm:$0xff]
      %v1625 = vld [vmem:[#allocation2 + $0x1a8] sm:$0xff]
      %v1626 = vld [vmem:[#allocation2 + $0x1b0] sm:$0xff]
      %v1627 = vld [vmem:[#allocation2 + $0x1b8] sm:$0xff]
      %v1628 = vld [vmem:[#allocation2 + $0x1c0] sm:$0xff]
      %v1629 = vld [vmem:[#allocation2 + $0x1c8] sm:$0xff]
      %v1630 = vld [vmem:[#allocation2 + $0x1d0] sm:$0xff]
      %v1631 = vld [vmem:[#allocation2 + $0x1d8] sm:$0xff]
      %v1632 = vld [vmem:[#allocation2 + $0x1e0] sm:$0xff]
      %v1633 = vld [vmem:[#allocation2 + $0x1e8] sm:$0xff]
      %v1634 = vld [vmem:[#allocation2 + $0x1f0] sm:$0xff]
      %v1635 = vld [vmem:[#allocation2 + $0x1f8] sm:$0xff]
      %v1636 = vld [vmem:[#allocation2 + $0x200] sm:$0xff]
      %v1637 = vld [vmem:[#allocation2 + $0x208] sm:$0xff]
      %v1638 = vld [vmem:[#allocation2 + $0x210] sm:$0xff]
      %v1639 = vld [vmem:[#allocation2 + $0x218] sm:$0xff]
      %v1640 = vld [vmem:[#allocation2 + $0x220] sm:$0xff]
      %v1641 = vld [vmem:[#allocation2 + $0x228] sm:$0xff]
      %v1642 = vld [vmem:[#allocation2 + $0x230] sm:$0xff]
      %v1643 = vld [vmem:[#allocation2 + $0x238] sm:$0xff]
      %v1644 = vld [vmem:[#allocation2 + $0x240] sm:$0xff]
      %v1645 = vld [vmem:[#allocation2 + $0x248] sm:$0xff]
      %v1646 = vld [vmem:[#allocation2 + $0x250] sm:$0xff]
      %v1647 = vld [vmem:[#allocation2 + $0x258] sm:$0xff]
      %v1648 = vld [vmem:[#allocation2 + $0x260] sm:$0xff]
      %v1649 = vld [vmem:[#allocation2 + $0x268] sm:$0xff]
      %v1650 = vld [vmem:[#allocation2 + $0x270] sm:$0xff]
      %v1651 = vld [vmem:[#allocation2 + $0x278] sm:$0xff]
      %v1652 = vld [vmem:[#allocation2 + $0x280] sm:$0xff]
      %v1653 = vld [vmem:[#allocation2 + $0x288] sm:$0xff]
      %v1654 = vld [vmem:[#allocation2 + $0x290] sm:$0xff]
      %v1655 = vld [vmem:[#allocation2 + $0x298] sm:$0xff]
      %v1656 = vld [vmem:[#allocation2 + $0x2a0] sm:$0xff]
      %v1657 = vld [vmem:[#allocation2 + $0x2a8] sm:$0xff]
      %v1658 = vld [vmem:[#allocation2 + $0x2b0] sm:$0xff]
      %v1659 = vld [vmem:[#allocation2 + $0x2b8] sm:$0xff]
      %v1660 = vld [vmem:[#allocation2 + $0x2c0] sm:$0xff]
      %v1661 = vld [vmem:[#allocation2 + $0x2c8] sm:$0xff]
      %v1662 = vld [vmem:[#allocation2 + $0x2d0] sm:$0xff]
      %v1663 = vld [vmem:[#allocation2 + $0x2d8] sm:$0xff]
      %v1664 = vld [vmem:[#allocation2 + $0x2e0] sm:$0xff]
      %v1665 = vld [vmem:[#allocation2 + $0x2e8] sm:$0xff]
      %v1666 = vld [vmem:[#allocation2 + $0x2f0] sm:$0xff]
      %v1667 = vld [vmem:[#allocation2 + $0x2f8] sm:$0xff]
      %v1668 = vld [vmem:[#allocation2 + $0x300] sm:$0xff]
      %v1669 = vld [vmem:[#allocation2 + $0x308] sm:$0xff]
      %v1670 = vld [vmem:[#allocation2 + $0x310] sm:$0xff]
      %v1671 = vld [vmem:[#allocation2 + $0x318] sm:$0xff]
      %v1672 = vld [vmem:[#allocation2 + $0x320] sm:$0xff]
      %v1673 = vld [vmem:[#allocation2 + $0x328] sm:$0xff]
      %v1674 = vld [vmem:[#allocation2 + $0x330] sm:$0xff]
      %v1675 = vld [vmem:[#allocation2 + $0x338] sm:$0xff]
      %v1676 = vld [vmem:[#allocation2 + $0x340] sm:$0xff]
      %v1677 = vld [vmem:[#allocation2 + $0x348] sm:$0xff]
      %v1678 = vld [vmem:[#allocation2 + $0x350] sm:$0xff]
      %v1679 = vld [vmem:[#allocation2 + $0x358] sm:$0xff]
      %v1680 = vld [vmem:[#allocation2 + $0x360] sm:$0xff]
      %v1681 = vld [vmem:[#allocation2 + $0x368] sm:$0xff]
      %v1682 = vld [vmem:[#allocation2 + $0x370] sm:$0xff]
      %v1683 = vld [vmem:[#allocation2 + $0x378] sm:$0xff]
      %v1684 = vld [vmem:[#allocation2 + $0x380] sm:$0xff]
      %v1685 = vld [vmem:[#allocation2 + $0x388] sm:$0xff]
      %v1686 = vld [vmem:[#allocation2 + $0x390] sm:$0xff]
      %v1687 = vld [vmem:[#allocation2 + $0x398] sm:$0xff]
      %v1688 = vld [vmem:[#allocation2 + $0x3a0] sm:$0xff]
      %v1689 = vld [vmem:[#allocation2 + $0x3a8] sm:$0xff]
      %v1690 = vld [vmem:[#allocation2 + $0x3b0] sm:$0xff]
      %v1691 = vld [vmem:[#allocation2 + $0x3b8] sm:$0xff]
      %v1692 = vld [vmem:[#allocation2 + $0x3c0] sm:$0xff]
      %v1693 = vld [vmem:[#allocation2 + $0x3c8] sm:$0xff]
      %v1694 = vld [vmem:[#allocation2 + $0x3d0] sm:$0xff]
      %v1695 = vld [vmem:[#allocation2 + $0x3d8] sm:$0xff]
      %v1696 = vld [vmem:[#allocation2 + $0x3e0] sm:$0xff]
      %v1697 = vld [vmem:[#allocation2 + $0x3e8] sm:$0xff]
      %v1698 = vld [vmem:[#allocation2 + $0x3f0] sm:$0xff]
      %v1699 = vld [vmem:[#allocation2 + $0x3f8] sm:$0xff]
      %v1700 = vld [vmem:[#allocation2 + $0x400] sm:$0xff]
      %v1701 = vld [vmem:[#allocation2 + $0x408] sm:$0xff]
      %v1702 = vld [vmem:[#allocation2 + $0x410] sm:$0xff]
      %v1703 = vld [vmem:[#allocation2 + $0x418] sm:$0xff]
      %v1704 = vld [vmem:[#allocation2 + $0x420] sm:$0xff]
      %v1705 = vld [vmem:[#allocation2 + $0x428] sm:$0xff]
      %v1706 = vld [vmem:[#allocation2 + $0x430] sm:$0xff]
      %v1707 = vld [vmem:[#allocation2 + $0x438] sm:$0xff]
      %v1708 = vld [vmem:[#allocation2 + $0x440] sm:$0xff]
      %v1709 = vld [vmem:[#allocation2 + $0x448] sm:$0xff]
      %v1710 = vld [vmem:[#allocation2 + $0x450] sm:$0xff]
      %v1711 = vld [vmem:[#allocation2 + $0x458] sm:$0xff]
      %v1712 = vld [vmem:[#allocation2 + $0x460] sm:$0xff]
      %v1713 = vld [vmem:[#allocation2 + $0x468] sm:$0xff]
      %v1714 = vld [vmem:[#allocation2 + $0x470] sm:$0xff]
      %v1715 = vld [vmem:[#allocation2 + $0x478] sm:$0xff]
      %v1716 = vld [vmem:[%s3] sm:$0xff]
      %v1717 = vld [vmem:[%s3 + $0x8] sm:$0xff]
      %v1718 = vld [vmem:[%s3 + $0x10] sm:$0xff]
      %v1719 = vld [vmem:[%s3 + $0x18] sm:$0xff]
      %v1720 = vld [vmem:[%s3 + $0x20] sm:$0xff]
      %v1721 = vld [vmem:[%s3 + $0x28] sm:$0xff]
      %v1722 = vld [vmem:[%s3 + $0x30] sm:$0xff]
      %v1723 = vld [vmem:[%s3 + $0x38] sm:$0xff]
      %v1724 = vld [vmem:[%s3 + $0x40] sm:$0xff]
      %v1725 = vld [vmem:[%s3 + $0x48] sm:$0xff]
      %v1726 = vld [vmem:[%s3 + $0x50] sm:$0xff]
      %v1727 = vld [vmem:[%s3 + $0x58] sm:$0xff]
      %v1728 = vld [vmem:[%s3 + $0x60] sm:$0xff]
      %v1729 = vld [vmem:[%s3 + $0x68] sm:$0xff]
      %v1730 = vld [vmem:[%s3 + $0x70] sm:$0xff]
      %v1731 = vld [vmem:[%s3 + $0x78] sm:$0xff]
      %v1732 = vld [vmem:[%s3 + $0x80] sm:$0xff]
      %v1733 = vld [vmem:[%s3 + $0x88] sm:$0xff]
      %v1734 = vld [vmem:[%s3 + $0x90] sm:$0xff]
      %v1735 = vld [vmem:[%s3 + $0x98] sm:$0xff]
      %v1736 = vld [vmem:[%s3 + $0xa0] sm:$0xff]
      %v1737 = vld [vmem:[%s3 + $0xa8] sm:$0xff]
      %v1738 = vld [vmem:[%s3 + $0xb0] sm:$0xff]
      %v1739 = vld [vmem:[%s3 + $0xb8] sm:$0xff]
      %v1740 = vld [vmem:[%s3 + $0xc0] sm:$0xff]
      %v1741 = vld [vmem:[%s3 + $0xc8] sm:$0xff]
      %v1742 = vld [vmem:[%s3 + $0xd0] sm:$0xff]
      %v1743 = vld [vmem:[%s3 + $0xd8] sm:$0xff]
      %v1744 = vld [vmem:[%s3 + $0xe0] sm:$0xff]
      %v1745 = vld [vmem:[%s3 + $0xe8] sm:$0xff]
      %v1746 = vld [vmem:[%s3 + $0xf0] sm:$0xff]
      %v1747 = vld [vmem:[%s3 + $0xf8] sm:$0xff]
      %v1748 = vld [vmem:[%s3 + $0x100] sm:$0xff]
      %v1749 = vld [vmem:[%s3 + $0x108] sm:$0xff]
      %v1750 = vld [vmem:[%s3 + $0x110] sm:$0xff]
      %v1751 = vld [vmem:[%s3 + $0x118] sm:$0xff]
      %v1752 = vld [vmem:[%s3 + $0x120] sm:$0xff]
      %v1753 = vld [vmem:[%s3 + $0x128] sm:$0xff]
      %v1754 = vld [vmem:[%s3 + $0x130] sm:$0xff]
      %v1755 = vld [vmem:[%s3 + $0x138] sm:$0xff]
      %v1756 = vld [vmem:[%s3 + $0x140] sm:$0xff]
      %v1757 = vld [vmem:[%s3 + $0x148] sm:$0xff]
      %v1758 = vld [vmem:[%s3 + $0x150] sm:$0xff]
      %v1759 = vld [vmem:[%s3 + $0x158] sm:$0xff]
      %v1760 = vld [vmem:[%s3 + $0x160] sm:$0xff]
      %v1761 = vld [vmem:[%s3 + $0x168] sm:$0xff]
      %v1762 = vld [vmem:[%s3 + $0x170] sm:$0xff]
      %v1763 = vld [vmem:[%s3 + $0x178] sm:$0xff]
      %v1764 = vld [vmem:[%s3 + $0x180] sm:$0xff]
      %v1765 = vld [vmem:[%s3 + $0x188] sm:$0xff]
      %v1766 = vld [vmem:[%s3 + $0x190] sm:$0xff]
      %v1767 = vld [vmem:[%s3 + $0x198] sm:$0xff]
      %v1768 = vld [vmem:[%s3 + $0x1a0] sm:$0xff]
      %v1769 = vld [vmem:[%s3 + $0x1a8] sm:$0xff]
      %v1770 = vld [vmem:[%s3 + $0x1b0] sm:$0xff]
      %v1771 = vld [vmem:[%s3 + $0x1b8] sm:$0xff]
      %v1772 = vld [vmem:[%s3 + $0x1c0] sm:$0xff]
      %v1773 = vld [vmem:[%s3 + $0x1c8] sm:$0xff]
      %v1774 = vld [vmem:[%s3 + $0x1d0] sm:$0xff]
      %v1775 = vld [vmem:[%s3 + $0x1d8] sm:$0xff]
      %v1776 = vld [vmem:[%s3 + $0x1e0] sm:$0xff]
      %v1777 = vld [vmem:[%s3 + $0x1e8] sm:$0xff]
      %v1778 = vld [vmem:[%s3 + $0x1f0] sm:$0xff]
      %v1779 = vld [vmem:[%s3 + $0x1f8] sm:$0xff]
      %v1780 = vld [vmem:[%s3 + $0x200] sm:$0xff]
      %v1781 = vld [vmem:[%s3 + $0x208] sm:$0xff]
      %v1782 = vld [vmem:[%s3 + $0x210] sm:$0xff]
      %v1783 = vld [vmem:[%s3 + $0x218] sm:$0xff]
      %v1784 = vld [vmem:[%s3 + $0x220] sm:$0xff]
      %v1785 = vld [vmem:[%s3 + $0x228] sm:$0xff]
      %v1786 = vld [vmem:[%s3 + $0x230] sm:$0xff]
      %v1787 = vld [vmem:[%s3 + $0x238] sm:$0xff]
      %v1788 = vld [vmem:[%s3 + $0x240] sm:$0xff]
      %v1789 = vld [vmem:[%s3 + $0x248] sm:$0xff]
      %v1790 = vld [vmem:[%s3 + $0x250] sm:$0xff]
      %v1791 = vld [vmem:[%s3 + $0x258] sm:$0xff]
      %v1792 = vld [vmem:[%s3 + $0x260] sm:$0xff]
      %v1793 = vld [vmem:[%s3 + $0x268] sm:$0xff]
      %v1794 = vld [vmem:[%s3 + $0x270] sm:$0xff]
      %v1795 = vld [vmem:[%s3 + $0x278] sm:$0xff]
      %v1796 = vld [vmem:[%s3 + $0x280] sm:$0xff]
      %v1797 = vld [vmem:[%s3 + $0x288] sm:$0xff]
      %v1798 = vld [vmem:[%s3 + $0x290] sm:$0xff]
      %v1799 = vld [vmem:[%s3 + $0x298] sm:$0xff]
      %v1800 = vld [vmem:[%s3 + $0x2a0] sm:$0xff]
      %v1801 = vld [vmem:[%s3 + $0x2a8] sm:$0xff]
      %v1802 = vld [vmem:[%s3 + $0x2b0] sm:$0xff]
      %v1803 = vld [vmem:[%s3 + $0x2b8] sm:$0xff]
      %v1804 = vld [vmem:[%s3 + $0x2c0] sm:$0xff]
      %v1805 = vld [vmem:[%s3 + $0x2c8] sm:$0xff]
      %v1806 = vld [vmem:[%s3 + $0x2d0] sm:$0xff]
      %v1807 = vld [vmem:[%s3 + $0x2d8] sm:$0xff]
      %v1808 = vld [vmem:[%s3 + $0x2e0] sm:$0xff]
      %v1809 = vld [vmem:[%s3 + $0x2e8] sm:$0xff]
      %v1810 = vld [vmem:[%s3 + $0x2f0] sm:$0xff]
      %v1811 = vld [vmem:[%s3 + $0x2f8] sm:$0xff]
      %v1812 = vld [vmem:[#allocation2] sm:$0xfe]
      %v1813 = vld [vmem:[#allocation2 + $0x8] sm:$0xfe]
      %v1814 = vld [vmem:[#allocation2 + $0x10] sm:$0xfe]
      %v1815 = vld [vmem:[#allocation2 + $0x18] sm:$0xfe]
      %v1816 = vld [vmem:[#allocation2 + $0x20] sm:$0xfe]
      %v1817 = vld [vmem:[#allocation2 + $0x28] sm:$0xfe]
      %v1818 = vld [vmem:[#allocation2 + $0x480] sm:$0x1]
      %v1819 = vld [vmem:[#allocation2 + $0x488] sm:$0x1]
      %v1820 = vld [vmem:[#allocation2 + $0x490] sm:$0x1]
      %v1821 = vld [vmem:[#allocation2 + $0x498] sm:$0x1]
      %v1822 = vld [vmem:[#allocation2 + $0x4a0] sm:$0x1]
      %v1823 = vld [vmem:[#allocation2 + $0x4a8] sm:$0x1]
      %s1824 = scalar_lea.vmem %s3, 768
      %v1825 = vld [vmem:[%s1824] sm:$0xff]
      %v1826 = vld [vmem:[%s1824 + $0x8] sm:$0xff]
      %v1827 = vld [vmem:[%s1824 + $0x10] sm:$0xff]
      %v1828 = vld [vmem:[%s1824 + $0x18] sm:$0xff]
      %v1829 = vld [vmem:[%s1824 + $0x20] sm:$0xff]
      %v1830 = vld [vmem:[%s1824 + $0x28] sm:$0xff]
      %v1831 = vld [vmem:[%s1824 + $0x30] sm:$0xff]
      %v1832 = vld [vmem:[%s1824 + $0x38] sm:$0xff]
      %v1833 = vld [vmem:[%s1824 + $0x40] sm:$0xff]
      %v1834 = vld [vmem:[%s1824 + $0x48] sm:$0xff]
      %v1835 = vld [vmem:[%s1824 + $0x50] sm:$0xff]
      %v1836 = vld [vmem:[%s1824 + $0x58] sm:$0xff]
      %v1837 = vld [vmem:[%s1824 + $0x60] sm:$0xff]
      %v1838 = vld [vmem:[%s1824 + $0x68] sm:$0xff]
      %v1839 = vld [vmem:[%s1824 + $0x70] sm:$0xff]
      %v1840 = vld [vmem:[%s1824 + $0x78] sm:$0xff]
      %v1841 = vld [vmem:[%s1824 + $0x80] sm:$0xff]
      %v1842 = vld [vmem:[%s1824 + $0x88] sm:$0xff]
      %v1843 = vld [vmem:[%s1824 + $0x90] sm:$0xff]
      %v1844 = vld [vmem:[%s1824 + $0x98] sm:$0xff]
      %v1845 = vld [vmem:[%s1824 + $0xa0] sm:$0xff]
      %v1846 = vld [vmem:[%s1824 + $0xa8] sm:$0xff]
      %v1847 = vld [vmem:[%s1824 + $0xb0] sm:$0xff]
      %v1848 = vld [vmem:[%s1824 + $0xb8] sm:$0xff]
      %v1849 = vld [vmem:[%s1824 + $0xc0] sm:$0xff]
      %v1850 = vld [vmem:[%s1824 + $0xc8] sm:$0xff]
      %v1851 = vld [vmem:[%s1824 + $0xd0] sm:$0xff]
      %v1852 = vld [vmem:[%s1824 + $0xd8] sm:$0xff]
      %v1853 = vld [vmem:[%s1824 + $0xe0] sm:$0xff]
      %v1854 = vld [vmem:[%s1824 + $0xe8] sm:$0xff]
      %v1855 = vld [vmem:[%s1824 + $0xf0] sm:$0xff]
      %v1856 = vld [vmem:[%s1824 + $0xf8] sm:$0xff]
      %v1857 = vld [vmem:[%s1824 + $0x100] sm:$0xff]
      %v1858 = vld [vmem:[%s1824 + $0x108] sm:$0xff]
      %v1859 = vld [vmem:[%s1824 + $0x110] sm:$0xff]
      %v1860 = vld [vmem:[%s1824 + $0x118] sm:$0xff]
      %v1861 = vld [vmem:[%s1824 + $0x120] sm:$0xff]
      %v1862 = vld [vmem:[%s1824 + $0x128] sm:$0xff]
      %v1863 = vld [vmem:[%s1824 + $0x130] sm:$0xff]
      %v1864 = vld [vmem:[%s1824 + $0x138] sm:$0xff]
      %v1865 = vld [vmem:[%s1824 + $0x140] sm:$0xff]
      %v1866 = vld [vmem:[%s1824 + $0x148] sm:$0xff]
      %v1867 = vld [vmem:[%s1824 + $0x150] sm:$0xff]
      %v1868 = vld [vmem:[%s1824 + $0x158] sm:$0xff]
      %v1869 = vld [vmem:[%s1824 + $0x160] sm:$0xff]
      %v1870 = vld [vmem:[%s1824 + $0x168] sm:$0xff]
      %v1871 = vld [vmem:[%s1824 + $0x170] sm:$0xff]
      %v1872 = vld [vmem:[%s1824 + $0x178] sm:$0xff]
      %v1873 = vld [vmem:[%s1824 + $0x180] sm:$0xff]
      %v1874 = vld [vmem:[%s1824 + $0x188] sm:$0xff]
      %v1875 = vld [vmem:[%s1824 + $0x190] sm:$0xff]
      %v1876 = vld [vmem:[%s1824 + $0x198] sm:$0xff]
      %v1877 = vld [vmem:[%s1824 + $0x1a0] sm:$0xff]
      %v1878 = vld [vmem:[%s1824 + $0x1a8] sm:$0xff]
      %v1879 = vld [vmem:[%s1824 + $0x1b0] sm:$0xff]
      %v1880 = vld [vmem:[%s1824 + $0x1b8] sm:$0xff]
      %v1881 = vld [vmem:[%s1824 + $0x1c0] sm:$0xff]
      %v1882 = vld [vmem:[%s1824 + $0x1c8] sm:$0xff]
      %v1883 = vld [vmem:[%s1824 + $0x1d0] sm:$0xff]
      %v1884 = vld [vmem:[%s1824 + $0x1d8] sm:$0xff]
      %v1885 = vld [vmem:[%s1824 + $0x1e0] sm:$0xff]
      %v1886 = vld [vmem:[%s1824 + $0x1e8] sm:$0xff]
      %v1887 = vld [vmem:[%s1824 + $0x1f0] sm:$0xff]
      %v1888 = vld [vmem:[%s1824 + $0x1f8] sm:$0xff]
      %v1889 = vld [vmem:[%s1824 + $0x200] sm:$0xff]
      %v1890 = vld [vmem:[%s1824 + $0x208] sm:$0xff]
      %v1891 = vld [vmem:[%s1824 + $0x210] sm:$0xff]
      %v1892 = vld [vmem:[%s1824 + $0x218] sm:$0xff]
      %v1893 = vld [vmem:[%s1824 + $0x220] sm:$0xff]
      %v1894 = vld [vmem:[%s1824 + $0x228] sm:$0xff]
      %v1895 = vld [vmem:[%s1824 + $0x230] sm:$0xff]
      %v1896 = vld [vmem:[%s1824 + $0x238] sm:$0xff]
      %v1897 = vld [vmem:[%s1824 + $0x240] sm:$0xff]
      %v1898 = vld [vmem:[%s1824 + $0x248] sm:$0xff]
      %v1899 = vld [vmem:[%s1824 + $0x250] sm:$0xff]
      %v1900 = vld [vmem:[%s1824 + $0x258] sm:$0xff]
      %v1901 = vld [vmem:[%s1824 + $0x260] sm:$0xff]
      %v1902 = vld [vmem:[%s1824 + $0x268] sm:$0xff]
      %v1903 = vld [vmem:[%s1824 + $0x270] sm:$0xff]
      %v1904 = vld [vmem:[%s1824 + $0x278] sm:$0xff]
      %v1905 = vld [vmem:[%s1824 + $0x280] sm:$0xff]
      %v1906 = vld [vmem:[%s1824 + $0x288] sm:$0xff]
      %v1907 = vld [vmem:[%s1824 + $0x290] sm:$0xff]
      %v1908 = vld [vmem:[%s1824 + $0x298] sm:$0xff]
      %v1909 = vld [vmem:[%s1824 + $0x2a0] sm:$0xff]
      %v1910 = vld [vmem:[%s1824 + $0x2a8] sm:$0xff]
      %v1911 = vld [vmem:[%s1824 + $0x2b0] sm:$0xff]
      %v1912 = vld [vmem:[%s1824 + $0x2b8] sm:$0xff]
      %v1913 = vld [vmem:[%s1824 + $0x2c0] sm:$0xff]
      %v1914 = vld [vmem:[%s1824 + $0x2c8] sm:$0xff]
      %v1915 = vld [vmem:[%s1824 + $0x2d0] sm:$0xff]
      %v1916 = vld [vmem:[%s1824 + $0x2d8] sm:$0xff]
      %v1917 = vld [vmem:[%s1824 + $0x2e0] sm:$0xff]
      %v1918 = vld [vmem:[%s1824 + $0x2e8] sm:$0xff]
      %v1919 = vld [vmem:[%s1824 + $0x2f0] sm:$0xff]
      %v1920 = vld [vmem:[%s1824 + $0x2f8] sm:$0xff]
      %vm2071 = vcmask 1046528
      %v2072 = vrot.slane %v1812, 1
      %v2073 = vrot.slane %v1578, 1
      %v2074 = vsel %vm2071, %v2072, %v2073
      %v2075 = vrot.slane %v1813, 1
      %v2076 = vrot.slane %v1579, 1
      %v2077 = vsel %vm2071, %v2075, %v2076
      %v2078 = vrot.slane %v1814, 1
      %v2079 = vrot.slane %v1580, 1
      %v2080 = vsel %vm2071, %v2078, %v2079
      %v2081 = vrot.slane %v1815, 1
      %v2082 = vrot.slane %v1581, 1
      %v2083 = vsel %vm2071, %v2081, %v2082
      %v2084 = vrot.slane %v1816, 1
      %v2085 = vrot.slane %v1582, 1
      %v2086 = vsel %vm2071, %v2084, %v2085
      %v2087 = vrot.slane %v1817, 1
      %v2088 = vrot.slane %v1583, 1
      %v2089 = vsel %vm2071, %v2087, %v2088
      %v2090 = vrot.slane %v1584, 1
      %v2091 = vsel %vm2071, %v2073, %v2090
      %v2092 = vrot.slane %v1585, 1
      %v2093 = vsel %vm2071, %v2076, %v2092
      %v2094 = vrot.slane %v1586, 1
      %v2095 = vsel %vm2071, %v2079, %v2094
      %v2096 = vrot.slane %v1587, 1
      %v2097 = vsel %vm2071, %v2082, %v2096
      %v2098 = vrot.slane %v1588, 1
      %v2099 = vsel %vm2071, %v2085, %v2098
      %v2100 = vrot.slane %v1589, 1
      %v2101 = vsel %vm2071, %v2088, %v2100
      %v2102 = vrot.slane %v1590, 1
      %v2103 = vsel %vm2071, %v2090, %v2102
      %v2104 = vrot.slane %v1591, 1
      %v2105 = vsel %vm2071, %v2092, %v2104
      %v2106 = vrot.slane %v1592, 1
      %v2107 = vsel %vm2071, %v2094, %v2106
      %v2108 = vrot.slane %v1593, 1
      %v2109 = vsel %vm2071, %v2096, %v2108
      %v2110 = vrot.slane %v1594, 1
      %v2111 = vsel %vm2071, %v2098, %v2110
      %v2112 = vrot.slane %v1595, 1
      %v2113 = vsel %vm2071, %v2100, %v2112
      %v2114 = vrot.slane %v1596, 1
      %v2115 = vsel %vm2071, %v2102, %v2114
      %v2116 = vrot.slane %v1597, 1
      %v2117 = vsel %vm2071, %v2104, %v2116
      %v2118 = vrot.slane %v1598, 1
      %v2119 = vsel %vm2071, %v2106, %v2118
      %v2120 = vrot.slane %v1599, 1
      %v2121 = vsel %vm2071, %v2108, %v2120
      %v2122 = vrot.slane %v1600, 1
      %v2123 = vsel %vm2071, %v2110, %v2122
      %v2124 = vrot.slane %v1601, 1
      %v2125 = vsel %vm2071, %v2112, %v2124
      %v2126 = vrot.slane %v1602, 1
      %v2127 = vsel %vm2071, %v2114, %v2126
      %v2128 = vrot.slane %v1603, 1
      %v2129 = vsel %vm2071, %v2116, %v2128
      %v2130 = vrot.slane %v1604, 1
      %v2131 = vsel %vm2071, %v2118, %v2130
      %v2132 = vrot.slane %v1605, 1
      %v2133 = vsel %vm2071, %v2120, %v2132
      %v2134 = vrot.slane %v1606, 1
      %v2135 = vsel %vm2071, %v2122, %v2134
      %v2136 = vrot.slane %v1607, 1
      %v2137 = vsel %vm2071, %v2124, %v2136
      %v2138 = vrot.slane %v1608, 1
      %v2139 = vsel %vm2071, %v2126, %v2138
      %v2140 = vrot.slane %v1609, 1
      %v2141 = vsel %vm2071, %v2128, %v2140
      %v2142 = vrot.slane %v1610, 1
      %v2143 = vsel %vm2071, %v2130, %v2142
      %v2144 = vrot.slane %v1611, 1
      %v2145 = vsel %vm2071, %v2132, %v2144
      %v2146 = vrot.slane %v1612, 1
      %v2147 = vsel %vm2071, %v2134, %v2146
      %v2148 = vrot.slane %v1613, 1
      %v2149 = vsel %vm2071, %v2136, %v2148
      %v2150 = vrot.slane %v1614, 1
      %v2151 = vsel %vm2071, %v2138, %v2150
      %v2152 = vrot.slane %v1615, 1
      %v2153 = vsel %vm2071, %v2140, %v2152
      %v2154 = vrot.slane %v1616, 1
      %v2155 = vsel %vm2071, %v2142, %v2154
      %v2156 = vrot.slane %v1617, 1
      %v2157 = vsel %vm2071, %v2144, %v2156
      %v2158 = vrot.slane %v1618, 1
      %v2159 = vsel %vm2071, %v2146, %v2158
      %v2160 = vrot.slane %v1619, 1
      %v2161 = vsel %vm2071, %v2148, %v2160
      %v2162 = vrot.slane %v1620, 1
      %v2163 = vsel %vm2071, %v2150, %v2162
      %v2164 = vrot.slane %v1621, 1
      %v2165 = vsel %vm2071, %v2152, %v2164
      %v2166 = vrot.slane %v1622, 1
      %v2167 = vsel %vm2071, %v2154, %v2166
      %v2168 = vrot.slane %v1623, 1
      %v2169 = vsel %vm2071, %v2156, %v2168
      %v2170 = vrot.slane %v1624, 1
      %v2171 = vsel %vm2071, %v2158, %v2170
      %v2172 = vrot.slane %v1625, 1
      %v2173 = vsel %vm2071, %v2160, %v2172
      %v2174 = vrot.slane %v1626, 1
      %v2175 = vsel %vm2071, %v2162, %v2174
      %v2176 = vrot.slane %v1627, 1
      %v2177 = vsel %vm2071, %v2164, %v2176
      %v2178 = vrot.slane %v1628, 1
      %v2179 = vsel %vm2071, %v2166, %v2178
      %v2180 = vrot.slane %v1629, 1
      %v2181 = vsel %vm2071, %v2168, %v2180
      %v2182 = vrot.slane %v1630, 1
      %v2183 = vsel %vm2071, %v2170, %v2182
      %v2184 = vrot.slane %v1631, 1
      %v2185 = vsel %vm2071, %v2172, %v2184
      %v2186 = vrot.slane %v1632, 1
      %v2187 = vsel %vm2071, %v2174, %v2186
      %v2188 = vrot.slane %v1633, 1
      %v2189 = vsel %vm2071, %v2176, %v2188
      %v2190 = vrot.slane %v1634, 1
      %v2191 = vsel %vm2071, %v2178, %v2190
      %v2192 = vrot.slane %v1635, 1
      %v2193 = vsel %vm2071, %v2180, %v2192
      %v2194 = vrot.slane %v1636, 1
      %v2195 = vsel %vm2071, %v2182, %v2194
      %v2196 = vrot.slane %v1637, 1
      %v2197 = vsel %vm2071, %v2184, %v2196
      %v2198 = vrot.slane %v1638, 1
      %v2199 = vsel %vm2071, %v2186, %v2198
      %v2200 = vrot.slane %v1639, 1
      %v2201 = vsel %vm2071, %v2188, %v2200
      %v2202 = vrot.slane %v1640, 1
      %v2203 = vsel %vm2071, %v2190, %v2202
      %v2204 = vrot.slane %v1641, 1
      %v2205 = vsel %vm2071, %v2192, %v2204
      %v2206 = vrot.slane %v1642, 1
      %v2207 = vsel %vm2071, %v2194, %v2206
      %v2208 = vrot.slane %v1643, 1
      %v2209 = vsel %vm2071, %v2196, %v2208
      %v2210 = vrot.slane %v1644, 1
      %v2211 = vsel %vm2071, %v2198, %v2210
      %v2212 = vrot.slane %v1645, 1
      %v2213 = vsel %vm2071, %v2200, %v2212
      %v2214 = vrot.slane %v1646, 1
      %v2215 = vsel %vm2071, %v2202, %v2214
      %v2216 = vrot.slane %v1647, 1
      %v2217 = vsel %vm2071, %v2204, %v2216
      %v2218 = vrot.slane %v1648, 1
      %v2219 = vsel %vm2071, %v2206, %v2218
      %v2220 = vrot.slane %v1649, 1
      %v2221 = vsel %vm2071, %v2208, %v2220
      %v2222 = vrot.slane %v1650, 1
      %v2223 = vsel %vm2071, %v2210, %v2222
      %v2224 = vrot.slane %v1651, 1
      %v2225 = vsel %vm2071, %v2212, %v2224
      %v2226 = vrot.slane %v1652, 1
      %v2227 = vsel %vm2071, %v2214, %v2226
      %v2228 = vrot.slane %v1653, 1
      %v2229 = vsel %vm2071, %v2216, %v2228
      %v2230 = vrot.slane %v1654, 1
      %v2231 = vsel %vm2071, %v2218, %v2230
      %v2232 = vrot.slane %v1655, 1
      %v2233 = vsel %vm2071, %v2220, %v2232
      %v2234 = vrot.slane %v1656, 1
      %v2235 = vsel %vm2071, %v2222, %v2234
      %v2236 = vrot.slane %v1657, 1
      %v2237 = vsel %vm2071, %v2224, %v2236
      %v2238 = vrot.slane %v1658, 1
      %v2239 = vsel %vm2071, %v2226, %v2238
      %v2240 = vrot.slane %v1659, 1
      %v2241 = vsel %vm2071, %v2228, %v2240
      %v2242 = vrot.slane %v1660, 1
      %v2243 = vsel %vm2071, %v2230, %v2242
      %v2244 = vrot.slane %v1661, 1
      %v2245 = vsel %vm2071, %v2232, %v2244
      %v2246 = vrot.slane %v1662, 1
      %v2247 = vsel %vm2071, %v2234, %v2246
      %v2248 = vrot.slane %v1663, 1
      %v2249 = vsel %vm2071, %v2236, %v2248
      %v2250 = vrot.slane %v1664, 1
      %v2251 = vsel %vm2071, %v2238, %v2250
      %v2252 = vrot.slane %v1665, 1
      %v2253 = vsel %vm2071, %v2240, %v2252
      %v2254 = vrot.slane %v1666, 1
      %v2255 = vsel %vm2071, %v2242, %v2254
      %v2256 = vrot.slane %v1667, 1
      %v2257 = vsel %vm2071, %v2244, %v2256
      %v2258 = vrot.slane %v1668, 1
      %v2259 = vsel %vm2071, %v2246, %v2258
      %v2260 = vrot.slane %v1669, 1
      %v2261 = vsel %vm2071, %v2248, %v2260
      %v2262 = vrot.slane %v1670, 1
      %v2263 = vsel %vm2071, %v2250, %v2262
      %v2264 = vrot.slane %v1671, 1
      %v2265 = vsel %vm2071, %v2252, %v2264
      %v2266 = vrot.slane %v1672, 1
      %v2267 = vsel %vm2071, %v2254, %v2266
      %v2268 = vrot.slane %v1673, 1
      %v2269 = vsel %vm2071, %v2256, %v2268
      %v2270 = vrot.slane %v1674, 1
      %v2271 = vsel %vm2071, %v2258, %v2270
      %v2272 = vrot.slane %v1675, 1
      %v2273 = vsel %vm2071, %v2260, %v2272
      %v2274 = vrot.slane %v1676, 1
      %v2275 = vsel %vm2071, %v2262, %v2274
      %v2276 = vrot.slane %v1677, 1
      %v2277 = vsel %vm2071, %v2264, %v2276
      %v2278 = vrot.slane %v1678, 1
      %v2279 = vsel %vm2071, %v2266, %v2278
      %v2280 = vrot.slane %v1679, 1
      %v2281 = vsel %vm2071, %v2268, %v2280
      %v2282 = vrot.slane %v1680, 1
      %v2283 = vsel %vm2071, %v2270, %v2282
      %v2284 = vrot.slane %v1681, 1
      %v2285 = vsel %vm2071, %v2272, %v2284
      %v2286 = vrot.slane %v1682, 1
      %v2287 = vsel %vm2071, %v2274, %v2286
      %v2288 = vrot.slane %v1683, 1
      %v2289 = vsel %vm2071, %v2276, %v2288
      %v2290 = vrot.slane %v1684, 1
      %v2291 = vsel %vm2071, %v2278, %v2290
      %v2292 = vrot.slane %v1685, 1
      %v2293 = vsel %vm2071, %v2280, %v2292
      %v2294 = vrot.slane %v1686, 1
      %v2295 = vsel %vm2071, %v2282, %v2294
      %v2296 = vrot.slane %v1687, 1
      %v2297 = vsel %vm2071, %v2284, %v2296
      %v2298 = vrot.slane %v1688, 1
      %v2299 = vsel %vm2071, %v2286, %v2298
      %v2300 = vrot.slane %v1689, 1
      %v2301 = vsel %vm2071, %v2288, %v2300
      %v2302 = vrot.slane %v1690, 1
      %v2303 = vsel %vm2071, %v2290, %v2302
      %v2304 = vrot.slane %v1691, 1
      %v2305 = vsel %vm2071, %v2292, %v2304
      %v2306 = vrot.slane %v1692, 1
      %v2307 = vsel %vm2071, %v2294, %v2306
      %v2308 = vrot.slane %v1693, 1
      %v2309 = vsel %vm2071, %v2296, %v2308
      %v2310 = vrot.slane %v1694, 1
      %v2311 = vsel %vm2071, %v2298, %v2310
      %v2312 = vrot.slane %v1695, 1
      %v2313 = vsel %vm2071, %v2300, %v2312
      %v2314 = vrot.slane %v1696, 1
      %v2315 = vsel %vm2071, %v2302, %v2314
      %v2316 = vrot.slane %v1697, 1
      %v2317 = vsel %vm2071, %v2304, %v2316
      %v2318 = vrot.slane %v1698, 1
      %v2319 = vsel %vm2071, %v2306, %v2318
      %v2320 = vrot.slane %v1699, 1
      %v2321 = vsel %vm2071, %v2308, %v2320
      %v2322 = vrot.slane %v1700, 1
      %v2323 = vsel %vm2071, %v2310, %v2322
      %v2324 = vrot.slane %v1701, 1
      %v2325 = vsel %vm2071, %v2312, %v2324
      %v2326 = vrot.slane %v1702, 1
      %v2327 = vsel %vm2071, %v2314, %v2326
      %v2328 = vrot.slane %v1703, 1
      %v2329 = vsel %vm2071, %v2316, %v2328
      %v2330 = vrot.slane %v1704, 1
      %v2331 = vsel %vm2071, %v2318, %v2330
      %v2332 = vrot.slane %v1705, 1
      %v2333 = vsel %vm2071, %v2320, %v2332
      %v2334 = vrot.slane %v1706, 1
      %v2335 = vsel %vm2071, %v2322, %v2334
      %v2336 = vrot.slane %v1707, 1
      %v2337 = vsel %vm2071, %v2324, %v2336
      %v2338 = vrot.slane %v1708, 1
      %v2339 = vsel %vm2071, %v2326, %v2338
      %v2340 = vrot.slane %v1709, 1
      %v2341 = vsel %vm2071, %v2328, %v2340
      %v2342 = vrot.slane %v1710, 1
      %v2343 = vsel %vm2071, %v2330, %v2342
      %v2344 = vrot.slane %v1711, 1
      %v2345 = vsel %vm2071, %v2332, %v2344
      %v2346 = vrot.slane %v1712, 1
      %v2347 = vsel %vm2071, %v2334, %v2346
      %v2348 = vrot.slane %v1713, 1
      %v2349 = vsel %vm2071, %v2336, %v2348
      %v2350 = vrot.slane %v1714, 1
      %v2351 = vsel %vm2071, %v2338, %v2350
      %v2352 = vrot.slane %v1715, 1
      %v2353 = vsel %vm2071, %v2340, %v2352
      %v2354 = vrot.slane %v1818, 1
      %v2355 = vsel %vm2071, %v2342, %v2354
      %v2356 = vrot.slane %v1819, 1
      %v2357 = vsel %vm2071, %v2344, %v2356
      %v2358 = vrot.slane %v1820, 1
      %v2359 = vsel %vm2071, %v2346, %v2358
      %v2360 = vrot.slane %v1821, 1
      %v2361 = vsel %vm2071, %v2348, %v2360
      %v2362 = vrot.slane %v1822, 1
      %v2363 = vsel %vm2071, %v2350, %v2362
      %v2364 = vrot.slane %v1823, 1
      %v2365 = vsel %vm2071, %v2352, %v2364
      %2510 = vmatprep.subr.mxu0 0.0
      %2511 = vmatpush1.msra.mxu0 %v1840
      %2512 = vmatprep.subr.mxu0 0.0
      %2513 = vmatpush1.msra.mxu0 %v1839
      %2514 = vmatprep.subr.mxu0 0.0
      %2515 = vmatpush1.msra.mxu0 %v1838
      %2516 = vmatprep.subr.mxu0 0.0
      %2517 = vmatpush1.msra.mxu0 %v1837
      %2518 = vmatprep.subr.mxu0 0.0
      %2519 = vmatpush1.msra.mxu0 %v1836
      %2520 = vmatprep.subr.mxu0 0.0
      %2521 = vmatpush1.msra.mxu0 %v1835
      %2522 = vmatprep.subr.mxu0 0.0
      %2523 = vmatpush1.msra.mxu0 %v1834
      %2524 = vmatprep.subr.mxu0 0.0
      %2525 = vmatpush1.msra.mxu0 %v1833
      %2526 = vmatprep.subr.mxu0 0.0
      %2527 = vmatpush1.msra.mxu0 %v1832
      %2528 = vmatprep.subr.mxu0 0.0
      %2529 = vmatpush1.msra.mxu0 %v1831
      %2530 = vmatprep.subr.mxu0 0.0
      %2531 = vmatpush1.msra.mxu0 %v1830
      %2532 = vmatprep.subr.mxu0 0.0
      %2533 = vmatpush1.msra.mxu0 %v1829
      %2534 = vmatprep.subr.mxu0 0.0
      %2535 = vmatpush1.msra.mxu0 %v1828
      %2536 = vmatprep.subr.mxu0 0.0
      %2537 = vmatpush1.msra.mxu0 %v1827
      %2538 = vmatprep.subr.mxu0 0.0
      %2539 = vmatpush1.msra.mxu0 %v1826
      %2540 = vmatprep.subr.mxu0 0.0
      %2541 = vmatpush1.msra.mxu0 %v1825
      %2542 = vmatprep.subr.mxu0 0.0
      %2543 = vmatpush2.msra.mxu0 %v1856
      %2544 = vmatprep.subr.mxu0 0.0
      %2545 = vmatpush2.msra.mxu0 %v1855
      %2546 = vmatprep.subr.mxu0 0.0
      %2547 = vmatpush2.msra.mxu0 %v1854
      %2548 = vmatprep.subr.mxu0 0.0
      %2549 = vmatpush2.msra.mxu0 %v1853
      %2550 = vmatprep.subr.mxu0 0.0
      %2551 = vmatpush2.msra.mxu0 %v1852
      %2552 = vmatprep.subr.mxu0 0.0
      %2553 = vmatpush2.msra.mxu0 %v1851
      %2554 = vmatprep.subr.mxu0 0.0
      %2555 = vmatpush2.msra.mxu0 %v1850
      %2556 = vmatprep.subr.mxu0 0.0
      %2557 = vmatpush2.msra.mxu0 %v1849
      %2558 = vmatprep.subr.mxu0 0.0
      %2559 = vmatpush2.msra.mxu0 %v1848
      %2560 = vmatprep.subr.mxu0 0.0
      %2561 = vmatpush2.msra.mxu0 %v1847
      %2562 = vmatprep.subr.mxu0 0.0
      %2563 = vmatpush2.msra.mxu0 %v1846
      %2564 = vmatprep.subr.mxu0 0.0
      %2565 = vmatpush2.msra.mxu0 %v1845
      %2566 = vmatprep.subr.mxu0 0.0
      %2567 = vmatpush2.msra.mxu0 %v1844
      %2568 = vmatprep.subr.mxu0 0.0
      %2569 = vmatpush2.msra.mxu0 %v1843
      %2570 = vmatprep.subr.mxu0 0.0
      %2571 = vmatpush2.msra.mxu0 %v1842
      %2572 = vmatprep.subr.mxu0 0.0
      %2573 = vmatpush2.msra.mxu0 %v1841
      %2574 = vmatprep.mubr.f32.mxu0 %v2077
      %2575 = vmatmul.mubr.f32.gmra.mxu0 %v2074
      %v2576 = vpop.f32.mrf.mxu0
      %v2577 = vadd.f32 0.0, %v2576
      %v2578 = vpop.f32.mrf.mxu0
      %2579 = vmatprep.mubr.f32.mxu0 %v2093
      %2580 = vmatmul.mubr.f32.gmra.mxu0 %v2091
      %v2581 = vpop.f32.mrf.mxu0
      %v2582 = vadd.f32 0.0, %v2581
      %v2583 = vpop.f32.mrf.mxu0
      %2584 = vmatprep.mubr.f32.mxu0 %v2105
      %2585 = vmatmul.mubr.f32.gmra.mxu0 %v2103
      %v2586 = vpop.f32.mrf.mxu0
      %v2587 = vadd.f32 0.0, %v2586
      %v2588 = vpop.f32.mrf.mxu0
      %2589 = vmatprep.mubr.f32.mxu0 %v2117
      %2590 = vmatmul.mubr.f32.gmra.mxu0 %v2115
      %v2591 = vpop.f32.mrf.mxu0
      %v2592 = vadd.f32 0.0, %v2591
      %v2593 = vpop.f32.mrf.mxu0
      %2594 = vmatprep.mubr.f32.mxu0 %v2129
      %2595 = vmatmul.mubr.f32.gmra.mxu0 %v2127
      %v2596 = vpop.f32.mrf.mxu0
      %v2597 = vadd.f32 0.0, %v2596
      %v2598 = vpop.f32.mrf.mxu0
      %2599 = vmatprep.mubr.f32.mxu0 %v2141
      %2600 = vmatmul.mubr.f32.gmra.mxu0 %v2139
      %v2601 = vpop.f32.mrf.mxu0
      %v2602 = vadd.f32 0.0, %v2601
      %v2603 = vpop.f32.mrf.mxu0
      %2604 = vmatprep.mubr.f32.mxu0 %v2153
      %2605 = vmatmul.mubr.f32.gmra.mxu0 %v2151
      %v2606 = vpop.f32.mrf.mxu0
      %v2607 = vadd.f32 0.0, %v2606
      %v2608 = vpop.f32.mrf.mxu0
      %2609 = vmatprep.mubr.f32.mxu0 %v2165
      %2610 = vmatmul.mubr.f32.gmra.mxu0 %v2163
      %v2611 = vpop.f32.mrf.mxu0
      %v2612 = vadd.f32 0.0, %v2611
      %v2613 = vpop.f32.mrf.mxu0
      %2614 = vmatprep.mubr.f32.mxu0 %v2177
      %2615 = vmatmul.mubr.f32.gmra.mxu0 %v2175
      %v2616 = vpop.f32.mrf.mxu0
      %v2617 = vadd.f32 0.0, %v2616
      %v2618 = vpop.f32.mrf.mxu0
      %2619 = vmatprep.mubr.f32.mxu0 %v2189
      %2620 = vmatmul.mubr.f32.gmra.mxu0 %v2187
      %v2621 = vpop.f32.mrf.mxu0
      %v2622 = vadd.f32 0.0, %v2621
      %v2623 = vpop.f32.mrf.mxu0
      %2624 = vmatprep.mubr.f32.mxu0 %v2201
      %2625 = vmatmul.mubr.f32.gmra.mxu0 %v2199
      %v2626 = vpop.f32.mrf.mxu0
      %v2627 = vadd.f32 0.0, %v2626
      %v2628 = vpop.f32.mrf.mxu0
      %2629 = vmatprep.mubr.f32.mxu0 %v2213
      %2630 = vmatmul.mubr.f32.gmra.mxu0 %v2211
      %v2631 = vpop.f32.mrf.mxu0
      %v2632 = vadd.f32 0.0, %v2631
      %v2633 = vpop.f32.mrf.mxu0
      %2634 = vmatprep.mubr.f32.mxu0 %v2225
      %2635 = vmatmul.mubr.f32.gmra.mxu0 %v2223
      %v2636 = vpop.f32.mrf.mxu0
      %v2637 = vadd.f32 0.0, %v2636
      %v2638 = vpop.f32.mrf.mxu0
      %2639 = vmatprep.mubr.f32.mxu0 %v2237
      %2640 = vmatmul.mubr.f32.gmra.mxu0 %v2235
      %v2641 = vpop.f32.mrf.mxu0
      %v2642 = vadd.f32 0.0, %v2641
      %v2643 = vpop.f32.mrf.mxu0
      %2644 = vmatprep.mubr.f32.mxu0 %v2249
      %2645 = vmatmul.mubr.f32.gmra.mxu0 %v2247
      %v2646 = vpop.f32.mrf.mxu0
      %v2647 = vadd.f32 0.0, %v2646
      %v2648 = vpop.f32.mrf.mxu0
      %2649 = vmatprep.mubr.f32.mxu0 %v2261
      %2650 = vmatmul.mubr.f32.gmra.mxu0 %v2259
      %v2651 = vpop.f32.mrf.mxu0
      %v2652 = vadd.f32 0.0, %v2651
      %v2653 = vpop.f32.mrf.mxu0
      %2654 = vmatprep.mubr.f32.mxu0 %v2273
      %2655 = vmatmul.mubr.f32.gmra.mxu0 %v2271
      %v2656 = vpop.f32.mrf.mxu0
      %v2657 = vadd.f32 0.0, %v2656
      %v2658 = vpop.f32.mrf.mxu0
      %2659 = vmatprep.mubr.f32.mxu0 %v2285
      %2660 = vmatmul.mubr.f32.gmra.mxu0 %v2283
      %v2661 = vpop.f32.mrf.mxu0
      %v2662 = vadd.f32 0.0, %v2661
      %v2663 = vpop.f32.mrf.mxu0
      %2664 = vmatprep.mubr.f32.mxu0 %v2297
      %2665 = vmatmul.mubr.f32.gmra.mxu0 %v2295
      %v2666 = vpop.f32.mrf.mxu0
      %v2667 = vadd.f32 0.0, %v2666
      %v2668 = vpop.f32.mrf.mxu0
      %2669 = vmatprep.mubr.f32.mxu0 %v2309
      %2670 = vmatmul.mubr.f32.gmra.mxu0 %v2307
      %v2671 = vpop.f32.mrf.mxu0
      %v2672 = vadd.f32 0.0, %v2671
      %v2673 = vpop.f32.mrf.mxu0
      %2674 = vmatprep.mubr.f32.mxu0 %v2321
      %2675 = vmatmul.mubr.f32.gmra.mxu0 %v2319
      %v2676 = vpop.f32.mrf.mxu0
      %v2677 = vadd.f32 0.0, %v2676
      %v2678 = vpop.f32.mrf.mxu0
      %2679 = vmatprep.mubr.f32.mxu0 %v2333
      %2680 = vmatmul.mubr.f32.gmra.mxu0 %v2331
      %v2681 = vpop.f32.mrf.mxu0
      %v2682 = vadd.f32 0.0, %v2681
      %v2683 = vpop.f32.mrf.mxu0
      %2684 = vmatprep.mubr.f32.mxu0 %v2345
      %2685 = vmatmul.mubr.f32.gmra.mxu0 %v2343
      %v2686 = vpop.f32.mrf.mxu0
      %v2687 = vadd.f32 0.0, %v2686
      %v2688 = vpop.f32.mrf.mxu0
      %2689 = vmatprep.mubr.f32.mxu0 %v2357
      %2690 = vmatmul.mubr.f32.gmra.mxu0 %v2355
      %v2691 = vpop.f32.mrf.mxu0
      %v2692 = vadd.f32 0.0, %v2691
      %v2693 = vpop.f32.mrf.mxu0
      %2694 = vdwg.mxu0
      %2695 = vmatprep.subr.mxu0 0.0
      %2696 = vmatpush1.msra.mxu0 %v1872
      %2697 = vmatprep.subr.mxu0 0.0
      %2698 = vmatpush1.msra.mxu0 %v1871
      %2699 = vmatprep.subr.mxu0 0.0
      %2700 = vmatpush1.msra.mxu0 %v1870
      %2701 = vmatprep.subr.mxu0 0.0
      %2702 = vmatpush1.msra.mxu0 %v1869
      %2703 = vmatprep.subr.mxu0 0.0
      %2704 = vmatpush1.msra.mxu0 %v1868
      %2705 = vmatprep.subr.mxu0 0.0
      %2706 = vmatpush1.msra.mxu0 %v1867
      %2707 = vmatprep.subr.mxu0 0.0
      %2708 = vmatpush1.msra.mxu0 %v1866
      %2709 = vmatprep.subr.mxu0 0.0
      %2710 = vmatpush1.msra.mxu0 %v1865
      %2711 = vmatprep.subr.mxu0 0.0
      %2712 = vmatpush1.msra.mxu0 %v1864
      %2713 = vmatprep.subr.mxu0 0.0
      %2714 = vmatpush1.msra.mxu0 %v1863
      %2715 = vmatprep.subr.mxu0 0.0
      %2716 = vmatpush1.msra.mxu0 %v1862
      %2717 = vmatprep.subr.mxu0 0.0
      %2718 = vmatpush1.msra.mxu0 %v1861
      %2719 = vmatprep.subr.mxu0 0.0
      %2720 = vmatpush1.msra.mxu0 %v1860
      %2721 = vmatprep.subr.mxu0 0.0
      %2722 = vmatpush1.msra.mxu0 %v1859
      %2723 = vmatprep.subr.mxu0 0.0
      %2724 = vmatpush1.msra.mxu0 %v1858
      %2725 = vmatprep.subr.mxu0 0.0
      %2726 = vmatpush1.msra.mxu0 %v1857
      %2727 = vmatprep.subr.mxu0 0.0
      %2728 = vmatpush2.msra.mxu0 %v1888
      %2729 = vmatprep.subr.mxu0 0.0
      %2730 = vmatpush2.msra.mxu0 %v1887
      %2731 = vmatprep.subr.mxu0 0.0
      %2732 = vmatpush2.msra.mxu0 %v1886
      %2733 = vmatprep.subr.mxu0 0.0
      %2734 = vmatpush2.msra.mxu0 %v1885
      %2735 = vmatprep.subr.mxu0 0.0
      %2736 = vmatpush2.msra.mxu0 %v1884
      %2737 = vmatprep.subr.mxu0 0.0
      %2738 = vmatpush2.msra.mxu0 %v1883
      %2739 = vmatprep.subr.mxu0 0.0
      %2740 = vmatpush2.msra.mxu0 %v1882
      %2741 = vmatprep.subr.mxu0 0.0
      %2742 = vmatpush2.msra.mxu0 %v1881
      %2743 = vmatprep.subr.mxu0 0.0
      %2744 = vmatpush2.msra.mxu0 %v1880
      %2745 = vmatprep.subr.mxu0 0.0
      %2746 = vmatpush2.msra.mxu0 %v1879
      %2747 = vmatprep.subr.mxu0 0.0
      %2748 = vmatpush2.msra.mxu0 %v1878
      %2749 = vmatprep.subr.mxu0 0.0
      %2750 = vmatpush2.msra.mxu0 %v1877
      %2751 = vmatprep.subr.mxu0 0.0
      %2752 = vmatpush2.msra.mxu0 %v1876
      %2753 = vmatprep.subr.mxu0 0.0
      %2754 = vmatpush2.msra.mxu0 %v1875
      %2755 = vmatprep.subr.mxu0 0.0
      %2756 = vmatpush2.msra.mxu0 %v1874
      %2757 = vmatprep.subr.mxu0 0.0
      %2758 = vmatpush2.msra.mxu0 %v1873
      %2759 = vmatprep.mubr.f32.mxu0 %v2083
      %2760 = vmatmul.mubr.f32.gmra.mxu0 %v2080
      %v2761 = vpop.f32.mrf.mxu0
      %v2762 = vadd.f32 %v2577, %v2761
      %v2763 = vpop.f32.mrf.mxu0
      %2764 = vmatprep.mubr.f32.mxu0 %v2097
      %2765 = vmatmul.mubr.f32.gmra.mxu0 %v2095
      %v2766 = vpop.f32.mrf.mxu0
      %v2767 = vadd.f32 %v2582, %v2766
      %v2768 = vpop.f32.mrf.mxu0
      %2769 = vmatprep.mubr.f32.mxu0 %v2109
      %2770 = vmatmul.mubr.f32.gmra.mxu0 %v2107
      %v2771 = vpop.f32.mrf.mxu0
      %v2772 = vadd.f32 %v2587, %v2771
      %v2773 = vpop.f32.mrf.mxu0
      %2774 = vmatprep.mubr.f32.mxu0 %v2121
      %2775 = vmatmul.mubr.f32.gmra.mxu0 %v2119
      %v2776 = vpop.f32.mrf.mxu0
      %v2777 = vadd.f32 %v2592, %v2776
      %v2778 = vpop.f32.mrf.mxu0
      %2779 = vmatprep.mubr.f32.mxu0 %v2133
      %2780 = vmatmul.mubr.f32.gmra.mxu0 %v2131
      %v2781 = vpop.f32.mrf.mxu0
      %v2782 = vadd.f32 %v2597, %v2781
      %v2783 = vpop.f32.mrf.mxu0
      %2784 = vmatprep.mubr.f32.mxu0 %v2145
      %2785 = vmatmul.mubr.f32.gmra.mxu0 %v2143
      %v2786 = vpop.f32.mrf.mxu0
      %v2787 = vadd.f32 %v2602, %v2786
      %v2788 = vpop.f32.mrf.mxu0
      %2789 = vmatprep.mubr.f32.mxu0 %v2157
      %2790 = vmatmul.mubr.f32.gmra.mxu0 %v2155
      %v2791 = vpop.f32.mrf.mxu0
      %v2792 = vadd.f32 %v2607, %v2791
      %v2793 = vpop.f32.mrf.mxu0
      %2794 = vmatprep.mubr.f32.mxu0 %v2169
      %2795 = vmatmul.mubr.f32.gmra.mxu0 %v2167
      %v2796 = vpop.f32.mrf.mxu0
      %v2797 = vadd.f32 %v2612, %v2796
      %v2798 = vpop.f32.mrf.mxu0
      %2799 = vmatprep.mubr.f32.mxu0 %v2181
      %2800 = vmatmul.mubr.f32.gmra.mxu0 %v2179
      %v2801 = vpop.f32.mrf.mxu0
      %v2802 = vadd.f32 %v2617, %v2801
      %v2803 = vpop.f32.mrf.mxu0
      %2804 = vmatprep.mubr.f32.mxu0 %v2193
      %2805 = vmatmul.mubr.f32.gmra.mxu0 %v2191
      %v2806 = vpop.f32.mrf.mxu0
      %v2807 = vadd.f32 %v2622, %v2806
      %v2808 = vpop.f32.mrf.mxu0
      %2809 = vmatprep.mubr.f32.mxu0 %v2205
      %2810 = vmatmul.mubr.f32.gmra.mxu0 %v2203
      %v2811 = vpop.f32.mrf.mxu0
      %v2812 = vadd.f32 %v2627, %v2811
      %v2813 = vpop.f32.mrf.mxu0
      %2814 = vmatprep.mubr.f32.mxu0 %v2217
      %2815 = vmatmul.mubr.f32.gmra.mxu0 %v2215
      %v2816 = vpop.f32.mrf.mxu0
      %v2817 = vadd.f32 %v2632, %v2816
      %v2818 = vpop.f32.mrf.mxu0
      %2819 = vmatprep.mubr.f32.mxu0 %v2229
      %2820 = vmatmul.mubr.f32.gmra.mxu0 %v2227
      %v2821 = vpop.f32.mrf.mxu0
      %v2822 = vadd.f32 %v2637, %v2821
      %v2823 = vpop.f32.mrf.mxu0
      %2824 = vmatprep.mubr.f32.mxu0 %v2241
      %2825 = vmatmul.mubr.f32.gmra.mxu0 %v2239
      %v2826 = vpop.f32.mrf.mxu0
      %v2827 = vadd.f32 %v2642, %v2826
      %v2828 = vpop.f32.mrf.mxu0
      %2829 = vmatprep.mubr.f32.mxu0 %v2253
      %2830 = vmatmul.mubr.f32.gmra.mxu0 %v2251
      %v2831 = vpop.f32.mrf.mxu0
      %v2832 = vadd.f32 %v2647, %v2831
      %v2833 = vpop.f32.mrf.mxu0
      %2834 = vmatprep.mubr.f32.mxu0 %v2265
      %2835 = vmatmul.mubr.f32.gmra.mxu0 %v2263
      %v2836 = vpop.f32.mrf.mxu0
      %v2837 = vadd.f32 %v2652, %v2836
      %v2838 = vpop.f32.mrf.mxu0
      %2839 = vmatprep.mubr.f32.mxu0 %v2277
      %2840 = vmatmul.mubr.f32.gmra.mxu0 %v2275
      %v2841 = vpop.f32.mrf.mxu0
      %v2842 = vadd.f32 %v2657, %v2841
      %v2843 = vpop.f32.mrf.mxu0
      %2844 = vmatprep.mubr.f32.mxu0 %v2289
      %2845 = vmatmul.mubr.f32.gmra.mxu0 %v2287
      %v2846 = vpop.f32.mrf.mxu0
      %v2847 = vadd.f32 %v2662, %v2846
      %v2848 = vpop.f32.mrf.mxu0
      %2849 = vmatprep.mubr.f32.mxu0 %v2301
      %2850 = vmatmul.mubr.f32.gmra.mxu0 %v2299
      %v2851 = vpop.f32.mrf.mxu0
      %v2852 = vadd.f32 %v2667, %v2851
      %v2853 = vpop.f32.mrf.mxu0
      %2854 = vmatprep.mubr.f32.mxu0 %v2313
      %2855 = vmatmul.mubr.f32.gmra.mxu0 %v2311
      %v2856 = vpop.f32.mrf.mxu0
      %v2857 = vadd.f32 %v2672, %v2856
      %v2858 = vpop.f32.mrf.mxu0
      %2859 = vmatprep.mubr.f32.mxu0 %v2325
      %2860 = vmatmul.mubr.f32.gmra.mxu0 %v2323
      %v2861 = vpop.f32.mrf.mxu0
      %v2862 = vadd.f32 %v2677, %v2861
      %v2863 = vpop.f32.mrf.mxu0
      %2864 = vmatprep.mubr.f32.mxu0 %v2337
      %2865 = vmatmul.mubr.f32.gmra.mxu0 %v2335
      %v2866 = vpop.f32.mrf.mxu0
      %v2867 = vadd.f32 %v2682, %v2866
      %v2868 = vpop.f32.mrf.mxu0
      %2869 = vmatprep.mubr.f32.mxu0 %v2349
      %2870 = vmatmul.mubr.f32.gmra.mxu0 %v2347
      %v2871 = vpop.f32.mrf.mxu0
      %v2872 = vadd.f32 %v2687, %v2871
      %v2873 = vpop.f32.mrf.mxu0
      %2874 = vmatprep.mubr.f32.mxu0 %v2361
      %2875 = vmatmul.mubr.f32.gmra.mxu0 %v2359
      %v2876 = vpop.f32.mrf.mxu0
      %v2877 = vadd.f32 %v2692, %v2876
      %v2878 = vpop.f32.mrf.mxu0
      %2879 = vdwg.mxu0
      %2880 = vmatprep.subr.mxu0 0.0
      %2881 = vmatpush1.msra.mxu0 %v1904
      %2882 = vmatprep.subr.mxu0 0.0
      %2883 = vmatpush1.msra.mxu0 %v1903
      %2884 = vmatprep.subr.mxu0 0.0
      %2885 = vmatpush1.msra.mxu0 %v1902
      %2886 = vmatprep.subr.mxu0 0.0
      %2887 = vmatpush1.msra.mxu0 %v1901
      %2888 = vmatprep.subr.mxu0 0.0
      %2889 = vmatpush1.msra.mxu0 %v1900
      %2890 = vmatprep.subr.mxu0 0.0
      %2891 = vmatpush1.msra.mxu0 %v1899
      %2892 = vmatprep.subr.mxu0 0.0
      %2893 = vmatpush1.msra.mxu0 %v1898
      %2894 = vmatprep.subr.mxu0 0.0
      %2895 = vmatpush1.msra.mxu0 %v1897
      %2896 = vmatprep.subr.mxu0 0.0
      %2897 = vmatpush1.msra.mxu0 %v1896
      %2898 = vmatprep.subr.mxu0 0.0
      %2899 = vmatpush1.msra.mxu0 %v1895
      %2900 = vmatprep.subr.mxu0 0.0
      %2901 = vmatpush1.msra.mxu0 %v1894
      %2902 = vmatprep.subr.mxu0 0.0
      %2903 = vmatpush1.msra.mxu0 %v1893
      %2904 = vmatprep.subr.mxu0 0.0
      %2905 = vmatpush1.msra.mxu0 %v1892
      %2906 = vmatprep.subr.mxu0 0.0
      %2907 = vmatpush1.msra.mxu0 %v1891
      %2908 = vmatprep.subr.mxu0 0.0
      %2909 = vmatpush1.msra.mxu0 %v1890
      %2910 = vmatprep.subr.mxu0 0.0
      %2911 = vmatpush1.msra.mxu0 %v1889
      %2912 = vmatprep.subr.mxu0 0.0
      %2913 = vmatpush2.msra.mxu0 %v1920
      %2914 = vmatprep.subr.mxu0 0.0
      %2915 = vmatpush2.msra.mxu0 %v1919
      %2916 = vmatprep.subr.mxu0 0.0
      %2917 = vmatpush2.msra.mxu0 %v1918
      %2918 = vmatprep.subr.mxu0 0.0
      %2919 = vmatpush2.msra.mxu0 %v1917
      %2920 = vmatprep.subr.mxu0 0.0
      %2921 = vmatpush2.msra.mxu0 %v1916
      %2922 = vmatprep.subr.mxu0 0.0
      %2923 = vmatpush2.msra.mxu0 %v1915
      %2924 = vmatprep.subr.mxu0 0.0
      %2925 = vmatpush2.msra.mxu0 %v1914
      %2926 = vmatprep.subr.mxu0 0.0
      %2927 = vmatpush2.msra.mxu0 %v1913
      %2928 = vmatprep.subr.mxu0 0.0
      %2929 = vmatpush2.msra.mxu0 %v1912
      %2930 = vmatprep.subr.mxu0 0.0
      %2931 = vmatpush2.msra.mxu0 %v1911
      %2932 = vmatprep.subr.mxu0 0.0
      %2933 = vmatpush2.msra.mxu0 %v1910
      %2934 = vmatprep.subr.mxu0 0.0
      %2935 = vmatpush2.msra.mxu0 %v1909
      %2936 = vmatprep.subr.mxu0 0.0
      %2937 = vmatpush2.msra.mxu0 %v1908
      %2938 = vmatprep.subr.mxu0 0.0
      %2939 = vmatpush2.msra.mxu0 %v1907
      %2940 = vmatprep.subr.mxu0 0.0
      %2941 = vmatpush2.msra.mxu0 %v1906
      %2942 = vmatprep.subr.mxu0 0.0
      %2943 = vmatpush2.msra.mxu0 %v1905
      %2944 = vmatprep.mubr.f32.mxu0 %v2089
      %2945 = vmatmul.mubr.f32.gmra.mxu0 %v2086
      %v2946 = vpop.f32.mrf.mxu0
      %v2947 = vadd.f32 %v2762, %v2946
      %v2948 = vpop.f32.mrf.mxu0
      %2949 = vmatprep.mubr.f32.mxu0 %v2101
      %2950 = vmatmul.mubr.f32.gmra.mxu0 %v2099
      %v2951 = vpop.f32.mrf.mxu0
      %v2952 = vadd.f32 %v2767, %v2951
      %v2953 = vpop.f32.mrf.mxu0
      %2954 = vmatprep.mubr.f32.mxu0 %v2113
      %2955 = vmatmul.mubr.f32.gmra.mxu0 %v2111
      %v2956 = vpop.f32.mrf.mxu0
      %v2957 = vadd.f32 %v2772, %v2956
      %v2958 = vpop.f32.mrf.mxu0
      %2959 = vmatprep.mubr.f32.mxu0 %v2125
      %2960 = vmatmul.mubr.f32.gmra.mxu0 %v2123
      %v2961 = vpop.f32.mrf.mxu0
      %v2962 = vadd.f32 %v2777, %v2961
      %v2963 = vpop.f32.mrf.mxu0
      %2964 = vmatprep.mubr.f32.mxu0 %v2137
      %2965 = vmatmul.mubr.f32.gmra.mxu0 %v2135
      %v2966 = vpop.f32.mrf.mxu0
      %v2967 = vadd.f32 %v2782, %v2966
      %v2968 = vpop.f32.mrf.mxu0
      %2969 = vmatprep.mubr.f32.mxu0 %v2149
      %2970 = vmatmul.mubr.f32.gmra.mxu0 %v2147
      %v2971 = vpop.f32.mrf.mxu0
      %v2972 = vadd.f32 %v2787, %v2971
      %v2973 = vpop.f32.mrf.mxu0
      %2974 = vmatprep.mubr.f32.mxu0 %v2161
      %2975 = vmatmul.mubr.f32.gmra.mxu0 %v2159
      %v2976 = vpop.f32.mrf.mxu0
      %v2977 = vadd.f32 %v2792, %v2976
      %v2978 = vpop.f32.mrf.mxu0
      %2979 = vmatprep.mubr.f32.mxu0 %v2173
      %2980 = vmatmul.mubr.f32.gmra.mxu0 %v2171
      %v2981 = vpop.f32.mrf.mxu0
      %v2982 = vadd.f32 %v2797, %v2981
      %v2983 = vpop.f32.mrf.mxu0
      %2984 = vmatprep.mubr.f32.mxu0 %v2185
      %2985 = vmatmul.mubr.f32.gmra.mxu0 %v2183
      %v2986 = vpop.f32.mrf.mxu0
      %v2987 = vadd.f32 %v2802, %v2986
      %v2988 = vpop.f32.mrf.mxu0
      %2989 = vmatprep.mubr.f32.mxu0 %v2197
      %2990 = vmatmul.mubr.f32.gmra.mxu0 %v2195
      %v2991 = vpop.f32.mrf.mxu0
      %v2992 = vadd.f32 %v2807, %v2991
      %v2993 = vpop.f32.mrf.mxu0
      %2994 = vmatprep.mubr.f32.mxu0 %v2209
      %2995 = vmatmul.mubr.f32.gmra.mxu0 %v2207
      %v2996 = vpop.f32.mrf.mxu0
      %v2997 = vadd.f32 %v2812, %v2996
      %v2998 = vpop.f32.mrf.mxu0
      %2999 = vmatprep.mubr.f32.mxu0 %v2221
      %3000 = vmatmul.mubr.f32.gmra.mxu0 %v2219
      %v3001 = vpop.f32.mrf.mxu0
      %v3002 = vadd.f32 %v2817, %v3001
      %v3003 = vpop.f32.mrf.mxu0
      %3004 = vmatprep.mubr.f32.mxu0 %v2233
      %3005 = vmatmul.mubr.f32.gmra.mxu0 %v2231
      %v3006 = vpop.f32.mrf.mxu0
      %v3007 = vadd.f32 %v2822, %v3006
      %v3008 = vpop.f32.mrf.mxu0
      %3009 = vmatprep.mubr.f32.mxu0 %v2245
      %3010 = vmatmul.mubr.f32.gmra.mxu0 %v2243
      %v3011 = vpop.f32.mrf.mxu0
      %v3012 = vadd.f32 %v2827, %v3011
      %v3013 = vpop.f32.mrf.mxu0
      %3014 = vmatprep.mubr.f32.mxu0 %v2257
      %3015 = vmatmul.mubr.f32.gmra.mxu0 %v2255
      %v3016 = vpop.f32.mrf.mxu0
      %v3017 = vadd.f32 %v2832, %v3016
      %v3018 = vpop.f32.mrf.mxu0
      %3019 = vmatprep.mubr.f32.mxu0 %v2269
      %3020 = vmatmul.mubr.f32.gmra.mxu0 %v2267
      %v3021 = vpop.f32.mrf.mxu0
      %v3022 = vadd.f32 %v2837, %v3021
      %v3023 = vpop.f32.mrf.mxu0
      %3024 = vmatprep.mubr.f32.mxu0 %v2281
      %3025 = vmatmul.mubr.f32.gmra.mxu0 %v2279
      %v3026 = vpop.f32.mrf.mxu0
      %v3027 = vadd.f32 %v2842, %v3026
      %v3028 = vpop.f32.mrf.mxu0
      %3029 = vmatprep.mubr.f32.mxu0 %v2293
      %3030 = vmatmul.mubr.f32.gmra.mxu0 %v2291
      %v3031 = vpop.f32.mrf.mxu0
      %v3032 = vadd.f32 %v2847, %v3031
      %v3033 = vpop.f32.mrf.mxu0
      %3034 = vmatprep.mubr.f32.mxu0 %v2305
      %3035 = vmatmul.mubr.f32.gmra.mxu0 %v2303
      %v3036 = vpop.f32.mrf.mxu0
      %v3037 = vadd.f32 %v2852, %v3036
      %v3038 = vpop.f32.mrf.mxu0
      %3039 = vmatprep.mubr.f32.mxu0 %v2317
      %3040 = vmatmul.mubr.f32.gmra.mxu0 %v2315
      %v3041 = vpop.f32.mrf.mxu0
      %v3042 = vadd.f32 %v2857, %v3041
      %v3043 = vpop.f32.mrf.mxu0
      %3044 = vmatprep.mubr.f32.mxu0 %v2329
      %3045 = vmatmul.mubr.f32.gmra.mxu0 %v2327
      %v3046 = vpop.f32.mrf.mxu0
      %v3047 = vadd.f32 %v2862, %v3046
      %v3048 = vpop.f32.mrf.mxu0
      %3049 = vmatprep.mubr.f32.mxu0 %v2341
      %3050 = vmatmul.mubr.f32.gmra.mxu0 %v2339
      %v3051 = vpop.f32.mrf.mxu0
      %v3052 = vadd.f32 %v2867, %v3051
      %v3053 = vpop.f32.mrf.mxu0
      %3054 = vmatprep.mubr.f32.mxu0 %v2353
      %3055 = vmatmul.mubr.f32.gmra.mxu0 %v2351
      %v3056 = vpop.f32.mrf.mxu0
      %v3057 = vadd.f32 %v2872, %v3056
      %v3058 = vpop.f32.mrf.mxu0
      %3059 = vmatprep.mubr.f32.mxu0 %v2365
      %3060 = vmatmul.mubr.f32.gmra.mxu0 %v2363
      %v3061 = vpop.f32.mrf.mxu0
      %v3062 = vadd.f32 %v2877, %v3061
      %v3063 = vpop.f32.mrf.mxu0
      %3064 = vdwg.mxu0
      %3065 = vmatprep.subr.mxu0 0.0
      %3066 = vmatpush1.msra.mxu0 %v1731
      %3067 = vmatprep.subr.mxu0 0.0
      %3068 = vmatpush1.msra.mxu0 %v1730
      %3069 = vmatprep.subr.mxu0 0.0
      %3070 = vmatpush1.msra.mxu0 %v1729
      %3071 = vmatprep.subr.mxu0 0.0
      %3072 = vmatpush1.msra.mxu0 %v1728
      %3073 = vmatprep.subr.mxu0 0.0
      %3074 = vmatpush1.msra.mxu0 %v1727
      %3075 = vmatprep.subr.mxu0 0.0
      %3076 = vmatpush1.msra.mxu0 %v1726
      %3077 = vmatprep.subr.mxu0 0.0
      %3078 = vmatpush1.msra.mxu0 %v1725
      %3079 = vmatprep.subr.mxu0 0.0
      %3080 = vmatpush1.msra.mxu0 %v1724
      %3081 = vmatprep.subr.mxu0 0.0
      %3082 = vmatpush1.msra.mxu0 %v1723
      %3083 = vmatprep.subr.mxu0 0.0
      %3084 = vmatpush1.msra.mxu0 %v1722
      %3085 = vmatprep.subr.mxu0 0.0
      %3086 = vmatpush1.msra.mxu0 %v1721
      %3087 = vmatprep.subr.mxu0 0.0
      %3088 = vmatpush1.msra.mxu0 %v1720
      %3089 = vmatprep.subr.mxu0 0.0
      %3090 = vmatpush1.msra.mxu0 %v1719
      %3091 = vmatprep.subr.mxu0 0.0
      %3092 = vmatpush1.msra.mxu0 %v1718
      %3093 = vmatprep.subr.mxu0 0.0
      %3094 = vmatpush1.msra.mxu0 %v1717
      %3095 = vmatprep.subr.mxu0 0.0
      %3096 = vmatpush1.msra.mxu0 %v1716
      %3097 = vmatprep.subr.mxu0 0.0
      %3098 = vmatpush2.msra.mxu0 %v1747
      %3099 = vmatprep.subr.mxu0 0.0
      %3100 = vmatpush2.msra.mxu0 %v1746
      %3101 = vmatprep.subr.mxu0 0.0
      %3102 = vmatpush2.msra.mxu0 %v1745
      %3103 = vmatprep.subr.mxu0 0.0
      %3104 = vmatpush2.msra.mxu0 %v1744
      %3105 = vmatprep.subr.mxu0 0.0
      %3106 = vmatpush2.msra.mxu0 %v1743
      %3107 = vmatprep.subr.mxu0 0.0
      %3108 = vmatpush2.msra.mxu0 %v1742
      %3109 = vmatprep.subr.mxu0 0.0
      %3110 = vmatpush2.msra.mxu0 %v1741
      %3111 = vmatprep.subr.mxu0 0.0
      %3112 = vmatpush2.msra.mxu0 %v1740
      %3113 = vmatprep.subr.mxu0 0.0
      %3114 = vmatpush2.msra.mxu0 %v1739
      %3115 = vmatprep.subr.mxu0 0.0
      %3116 = vmatpush2.msra.mxu0 %v1738
      %3117 = vmatprep.subr.mxu0 0.0
      %3118 = vmatpush2.msra.mxu0 %v1737
      %3119 = vmatprep.subr.mxu0 0.0
      %3120 = vmatpush2.msra.mxu0 %v1736
      %3121 = vmatprep.subr.mxu0 0.0
      %3122 = vmatpush2.msra.mxu0 %v1735
      %3123 = vmatprep.subr.mxu0 0.0
      %3124 = vmatpush2.msra.mxu0 %v1734
      %3125 = vmatprep.subr.mxu0 0.0
      %3126 = vmatpush2.msra.mxu0 %v1733
      %3127 = vmatprep.subr.mxu0 0.0
      %3128 = vmatpush2.msra.mxu0 %v1732
      %3129 = vmatprep.mubr.f32.mxu0 %v1573
      %3130 = vmatmul.mubr.f32.gmra.mxu0 %v1572
      %v3131 = vpop.f32.mrf.mxu0
      %v3132 = vadd.f32 %v2947, %v3131
      %v3133 = vpop.f32.mrf.mxu0
      %3134 = vmatprep.mubr.f32.mxu0 %v1579
      %3135 = vmatmul.mubr.f32.gmra.mxu0 %v1578
      %v3136 = vpop.f32.mrf.mxu0
      %v3137 = vadd.f32 %v2952, %v3136
      %v3138 = vpop.f32.mrf.mxu0
      %3139 = vmatprep.mubr.f32.mxu0 %v1585
      %3140 = vmatmul.mubr.f32.gmra.mxu0 %v1584
      %v3141 = vpop.f32.mrf.mxu0
      %v3142 = vadd.f32 %v2957, %v3141
      %v3143 = vpop.f32.mrf.mxu0
      %3144 = vmatprep.mubr.f32.mxu0 %v1591
      %3145 = vmatmul.mubr.f32.gmra.mxu0 %v1590
      %v3146 = vpop.f32.mrf.mxu0
      %v3147 = vadd.f32 %v2962, %v3146
      %v3148 = vpop.f32.mrf.mxu0
      %3149 = vmatprep.mubr.f32.mxu0 %v1597
      %3150 = vmatmul.mubr.f32.gmra.mxu0 %v1596
      %v3151 = vpop.f32.mrf.mxu0
      %v3152 = vadd.f32 %v2967, %v3151
      %v3153 = vpop.f32.mrf.mxu0
      %3154 = vmatprep.mubr.f32.mxu0 %v1603
      %3155 = vmatmul.mubr.f32.gmra.mxu0 %v1602
      %v3156 = vpop.f32.mrf.mxu0
      %v3157 = vadd.f32 %v2972, %v3156
      %v3158 = vpop.f32.mrf.mxu0
      %3159 = vmatprep.mubr.f32.mxu0 %v1609
      %3160 = vmatmul.mubr.f32.gmra.mxu0 %v1608
      %v3161 = vpop.f32.mrf.mxu0
      %v3162 = vadd.f32 %v2977, %v3161
      %v3163 = vpop.f32.mrf.mxu0
      %3164 = vmatprep.mubr.f32.mxu0 %v1615
      %3165 = vmatmul.mubr.f32.gmra.mxu0 %v1614
      %v3166 = vpop.f32.mrf.mxu0
      %v3167 = vadd.f32 %v2982, %v3166
      %v3168 = vpop.f32.mrf.mxu0
      %3169 = vmatprep.mubr.f32.mxu0 %v1621
      %3170 = vmatmul.mubr.f32.gmra.mxu0 %v1620
      %v3171 = vpop.f32.mrf.mxu0
      %v3172 = vadd.f32 %v2987, %v3171
      %v3173 = vpop.f32.mrf.mxu0
      %3174 = vmatprep.mubr.f32.mxu0 %v1627
      %3175 = vmatmul.mubr.f32.gmra.mxu0 %v1626
      %v3176 = vpop.f32.mrf.mxu0
      %v3177 = vadd.f32 %v2992, %v3176
      %v3178 = vpop.f32.mrf.mxu0
      %3179 = vmatprep.mubr.f32.mxu0 %v1633
      %3180 = vmatmul.mubr.f32.gmra.mxu0 %v1632
      %v3181 = vpop.f32.mrf.mxu0
      %v3182 = vadd.f32 %v2997, %v3181
      %v3183 = vpop.f32.mrf.mxu0
      %3184 = vmatprep.mubr.f32.mxu0 %v1639
      %3185 = vmatmul.mubr.f32.gmra.mxu0 %v1638
      %v3186 = vpop.f32.mrf.mxu0
      %v3187 = vadd.f32 %v3002, %v3186
      %v3188 = vpop.f32.mrf.mxu0
      %3189 = vmatprep.mubr.f32.mxu0 %v1645
      %3190 = vmatmul.mubr.f32.gmra.mxu0 %v1644
      %v3191 = vpop.f32.mrf.mxu0
      %v3192 = vadd.f32 %v3007, %v3191
      %v3193 = vpop.f32.mrf.mxu0
      %3194 = vmatprep.mubr.f32.mxu0 %v1651
      %3195 = vmatmul.mubr.f32.gmra.mxu0 %v1650
      %v3196 = vpop.f32.mrf.mxu0
      %v3197 = vadd.f32 %v3012, %v3196
      %v3198 = vpop.f32.mrf.mxu0
      %3199 = vmatprep.mubr.f32.mxu0 %v1657
      %3200 = vmatmul.mubr.f32.gmra.mxu0 %v1656
      %v3201 = vpop.f32.mrf.mxu0
      %v3202 = vadd.f32 %v3017, %v3201
      %v3203 = vpop.f32.mrf.mxu0
      %3204 = vmatprep.mubr.f32.mxu0 %v1663
      %3205 = vmatmul.mubr.f32.gmra.mxu0 %v1662
      %v3206 = vpop.f32.mrf.mxu0
      %v3207 = vadd.f32 %v3022, %v3206
      %v3208 = vpop.f32.mrf.mxu0
      %3209 = vmatprep.mubr.f32.mxu0 %v1669
      %3210 = vmatmul.mubr.f32.gmra.mxu0 %v1668
      %v3211 = vpop.f32.mrf.mxu0
      %v3212 = vadd.f32 %v3027, %v3211
      %v3213 = vpop.f32.mrf.mxu0
      %3214 = vmatprep.mubr.f32.mxu0 %v1675
      %3215 = vmatmul.mubr.f32.gmra.mxu0 %v1674
      %v3216 = vpop.f32.mrf.mxu0
      %v3217 = vadd.f32 %v3032, %v3216
      %v3218 = vpop.f32.mrf.mxu0
      %3219 = vmatprep.mubr.f32.mxu0 %v1681
      %3220 = vmatmul.mubr.f32.gmra.mxu0 %v1680
      %v3221 = vpop.f32.mrf.mxu0
      %v3222 = vadd.f32 %v3037, %v3221
      %v3223 = vpop.f32.mrf.mxu0
      %3224 = vmatprep.mubr.f32.mxu0 %v1687
      %3225 = vmatmul.mubr.f32.gmra.mxu0 %v1686
      %v3226 = vpop.f32.mrf.mxu0
      %v3227 = vadd.f32 %v3042, %v3226
      %v3228 = vpop.f32.mrf.mxu0
      %3229 = vmatprep.mubr.f32.mxu0 %v1693
      %3230 = vmatmul.mubr.f32.gmra.mxu0 %v1692
      %v3231 = vpop.f32.mrf.mxu0
      %v3232 = vadd.f32 %v3047, %v3231
      %v3233 = vpop.f32.mrf.mxu0
      %3234 = vmatprep.mubr.f32.mxu0 %v1699
      %3235 = vmatmul.mubr.f32.gmra.mxu0 %v1698
      %v3236 = vpop.f32.mrf.mxu0
      %v3237 = vadd.f32 %v3052, %v3236
      %v3238 = vpop.f32.mrf.mxu0
      %3239 = vmatprep.mubr.f32.mxu0 %v1705
      %3240 = vmatmul.mubr.f32.gmra.mxu0 %v1704
      %v3241 = vpop.f32.mrf.mxu0
      %v3242 = vadd.f32 %v3057, %v3241
      %v3243 = vpop.f32.mrf.mxu0
      %3244 = vmatprep.mubr.f32.mxu0 %v1711
      %3245 = vmatmul.mubr.f32.gmra.mxu0 %v1710
      %v3246 = vpop.f32.mrf.mxu0
      %v3247 = vadd.f32 %v3062, %v3246
      %v3248 = vpop.f32.mrf.mxu0
      %3249 = vdwg.mxu0
      %3250 = vmatprep.subr.mxu0 0.0
      %3251 = vmatpush1.msra.mxu0 %v1763
      %3252 = vmatprep.subr.mxu0 0.0
      %3253 = vmatpush1.msra.mxu0 %v1762
      %3254 = vmatprep.subr.mxu0 0.0
      %3255 = vmatpush1.msra.mxu0 %v1761
      %3256 = vmatprep.subr.mxu0 0.0
      %3257 = vmatpush1.msra.mxu0 %v1760
      %3258 = vmatprep.subr.mxu0 0.0
      %3259 = vmatpush1.msra.mxu0 %v1759
      %3260 = vmatprep.subr.mxu0 0.0
      %3261 = vmatpush1.msra.mxu0 %v1758
      %3262 = vmatprep.subr.mxu0 0.0
      %3263 = vmatpush1.msra.mxu0 %v1757
      %3264 = vmatprep.subr.mxu0 0.0
      %3265 = vmatpush1.msra.mxu0 %v1756
      %3266 = vmatprep.subr.mxu0 0.0
      %3267 = vmatpush1.msra.mxu0 %v1755
      %3268 = vmatprep.subr.mxu0 0.0
      %3269 = vmatpush1.msra.mxu0 %v1754
      %3270 = vmatprep.subr.mxu0 0.0
      %3271 = vmatpush1.msra.mxu0 %v1753
      %3272 = vmatprep.subr.mxu0 0.0
      %3273 = vmatpush1.msra.mxu0 %v1752
      %3274 = vmatprep.subr.mxu0 0.0
      %3275 = vmatpush1.msra.mxu0 %v1751
      %3276 = vmatprep.subr.mxu0 0.0
      %3277 = vmatpush1.msra.mxu0 %v1750
      %3278 = vmatprep.subr.mxu0 0.0
      %3279 = vmatpush1.msra.mxu0 %v1749
      %3280 = vmatprep.subr.mxu0 0.0
      %3281 = vmatpush1.msra.mxu0 %v1748
      %3282 = vmatprep.subr.mxu0 0.0
      %3283 = vmatpush2.msra.mxu0 %v1779
      %3284 = vmatprep.subr.mxu0 0.0
      %3285 = vmatpush2.msra.mxu0 %v1778
      %3286 = vmatprep.subr.mxu0 0.0
      %3287 = vmatpush2.msra.mxu0 %v1777
      %3288 = vmatprep.subr.mxu0 0.0
      %3289 = vmatpush2.msra.mxu0 %v1776
      %3290 = vmatprep.subr.mxu0 0.0
      %3291 = vmatpush2.msra.mxu0 %v1775
      %3292 = vmatprep.subr.mxu0 0.0
      %3293 = vmatpush2.msra.mxu0 %v1774
      %3294 = vmatprep.subr.mxu0 0.0
      %3295 = vmatpush2.msra.mxu0 %v1773
      %3296 = vmatprep.subr.mxu0 0.0
      %3297 = vmatpush2.msra.mxu0 %v1772
      %3298 = vmatprep.subr.mxu0 0.0
      %3299 = vmatpush2.msra.mxu0 %v1771
      %3300 = vmatprep.subr.mxu0 0.0
      %3301 = vmatpush2.msra.mxu0 %v1770
      %3302 = vmatprep.subr.mxu0 0.0
      %3303 = vmatpush2.msra.mxu0 %v1769
      %3304 = vmatprep.subr.mxu0 0.0
      %3305 = vmatpush2.msra.mxu0 %v1768
      %3306 = vmatprep.subr.mxu0 0.0
      %3307 = vmatpush2.msra.mxu0 %v1767
      %3308 = vmatprep.subr.mxu0 0.0
      %3309 = vmatpush2.msra.mxu0 %v1766
      %3310 = vmatprep.subr.mxu0 0.0
      %3311 = vmatpush2.msra.mxu0 %v1765
      %3312 = vmatprep.subr.mxu0 0.0
      %3313 = vmatpush2.msra.mxu0 %v1764
      %3314 = vmatprep.mubr.f32.mxu0 %v1575
      %3315 = vmatmul.mubr.f32.gmra.mxu0 %v1574
      %v3316 = vpop.f32.mrf.mxu0
      %v3317 = vadd.f32 %v3132, %v3316
      %v3318 = vpop.f32.mrf.mxu0
      %3319 = vmatprep.mubr.f32.mxu0 %v1581
      %3320 = vmatmul.mubr.f32.gmra.mxu0 %v1580
      %v3321 = vpop.f32.mrf.mxu0
      %v3322 = vadd.f32 %v3137, %v3321
      %v3323 = vpop.f32.mrf.mxu0
      %3324 = vmatprep.mubr.f32.mxu0 %v1587
      %3325 = vmatmul.mubr.f32.gmra.mxu0 %v1586
      %v3326 = vpop.f32.mrf.mxu0
      %v3327 = vadd.f32 %v3142, %v3326
      %v3328 = vpop.f32.mrf.mxu0
      %3329 = vmatprep.mubr.f32.mxu0 %v1593
      %3330 = vmatmul.mubr.f32.gmra.mxu0 %v1592
      %v3331 = vpop.f32.mrf.mxu0
      %v3332 = vadd.f32 %v3147, %v3331
      %v3333 = vpop.f32.mrf.mxu0
      %3334 = vmatprep.mubr.f32.mxu0 %v1599
      %3335 = vmatmul.mubr.f32.gmra.mxu0 %v1598
      %v3336 = vpop.f32.mrf.mxu0
      %v3337 = vadd.f32 %v3152, %v3336
      %v3338 = vpop.f32.mrf.mxu0
      %3339 = vmatprep.mubr.f32.mxu0 %v1605
      %3340 = vmatmul.mubr.f32.gmra.mxu0 %v1604
      %v3341 = vpop.f32.mrf.mxu0
      %v3342 = vadd.f32 %v3157, %v3341
      %v3343 = vpop.f32.mrf.mxu0
      %3344 = vmatprep.mubr.f32.mxu0 %v1611
      %3345 = vmatmul.mubr.f32.gmra.mxu0 %v1610
      %v3346 = vpop.f32.mrf.mxu0
      %v3347 = vadd.f32 %v3162, %v3346
      %v3348 = vpop.f32.mrf.mxu0
      %3349 = vmatprep.mubr.f32.mxu0 %v1617
      %3350 = vmatmul.mubr.f32.gmra.mxu0 %v1616
      %v3351 = vpop.f32.mrf.mxu0
      %v3352 = vadd.f32 %v3167, %v3351
      %v3353 = vpop.f32.mrf.mxu0
      %3354 = vmatprep.mubr.f32.mxu0 %v1623
      %3355 = vmatmul.mubr.f32.gmra.mxu0 %v1622
      %v3356 = vpop.f32.mrf.mxu0
      %v3357 = vadd.f32 %v3172, %v3356
      %v3358 = vpop.f32.mrf.mxu0
      %3359 = vmatprep.mubr.f32.mxu0 %v1629
      %3360 = vmatmul.mubr.f32.gmra.mxu0 %v1628
      %v3361 = vpop.f32.mrf.mxu0
      %v3362 = vadd.f32 %v3177, %v3361
      %v3363 = vpop.f32.mrf.mxu0
      %3364 = vmatprep.mubr.f32.mxu0 %v1635
      %3365 = vmatmul.mubr.f32.gmra.mxu0 %v1634
      %v3366 = vpop.f32.mrf.mxu0
      %v3367 = vadd.f32 %v3182, %v3366
      %v3368 = vpop.f32.mrf.mxu0
      %3369 = vmatprep.mubr.f32.mxu0 %v1641
      %3370 = vmatmul.mubr.f32.gmra.mxu0 %v1640
      %v3371 = vpop.f32.mrf.mxu0
      %v3372 = vadd.f32 %v3187, %v3371
      %v3373 = vpop.f32.mrf.mxu0
      %3374 = vmatprep.mubr.f32.mxu0 %v1647
      %3375 = vmatmul.mubr.f32.gmra.mxu0 %v1646
      %v3376 = vpop.f32.mrf.mxu0
      %v3377 = vadd.f32 %v3192, %v3376
      %v3378 = vpop.f32.mrf.mxu0
      %3379 = vmatprep.mubr.f32.mxu0 %v1653
      %3380 = vmatmul.mubr.f32.gmra.mxu0 %v1652
      %v3381 = vpop.f32.mrf.mxu0
      %v3382 = vadd.f32 %v3197, %v3381
      %v3383 = vpop.f32.mrf.mxu0
      %3384 = vmatprep.mubr.f32.mxu0 %v1659
      %3385 = vmatmul.mubr.f32.gmra.mxu0 %v1658
      %v3386 = vpop.f32.mrf.mxu0
      %v3387 = vadd.f32 %v3202, %v3386
      %v3388 = vpop.f32.mrf.mxu0
      %3389 = vmatprep.mubr.f32.mxu0 %v1665
      %3390 = vmatmul.mubr.f32.gmra.mxu0 %v1664
      %v3391 = vpop.f32.mrf.mxu0
      %v3392 = vadd.f32 %v3207, %v3391
      %v3393 = vpop.f32.mrf.mxu0
      %3394 = vmatprep.mubr.f32.mxu0 %v1671
      %3395 = vmatmul.mubr.f32.gmra.mxu0 %v1670
      %v3396 = vpop.f32.mrf.mxu0
      %v3397 = vadd.f32 %v3212, %v3396
      %v3398 = vpop.f32.mrf.mxu0
      %3399 = vmatprep.mubr.f32.mxu0 %v1677
      %3400 = vmatmul.mubr.f32.gmra.mxu0 %v1676
      %v3401 = vpop.f32.mrf.mxu0
      %v3402 = vadd.f32 %v3217, %v3401
      %v3403 = vpop.f32.mrf.mxu0
      %3404 = vmatprep.mubr.f32.mxu0 %v1683
      %3405 = vmatmul.mubr.f32.gmra.mxu0 %v1682
      %v3406 = vpop.f32.mrf.mxu0
      %v3407 = vadd.f32 %v3222, %v3406
      %v3408 = vpop.f32.mrf.mxu0
      %3409 = vmatprep.mubr.f32.mxu0 %v1689
      %3410 = vmatmul.mubr.f32.gmra.mxu0 %v1688
      %v3411 = vpop.f32.mrf.mxu0
      %v3412 = vadd.f32 %v3227, %v3411
      %v3413 = vpop.f32.mrf.mxu0
      %3414 = vmatprep.mubr.f32.mxu0 %v1695
      %3415 = vmatmul.mubr.f32.gmra.mxu0 %v1694
      %v3416 = vpop.f32.mrf.mxu0
      %v3417 = vadd.f32 %v3232, %v3416
      %v3418 = vpop.f32.mrf.mxu0
      %3419 = vmatprep.mubr.f32.mxu0 %v1701
      %3420 = vmatmul.mubr.f32.gmra.mxu0 %v1700
      %v3421 = vpop.f32.mrf.mxu0
      %v3422 = vadd.f32 %v3237, %v3421
      %v3423 = vpop.f32.mrf.mxu0
      %3424 = vmatprep.mubr.f32.mxu0 %v1707
      %3425 = vmatmul.mubr.f32.gmra.mxu0 %v1706
      %v3426 = vpop.f32.mrf.mxu0
      %v3427 = vadd.f32 %v3242, %v3426
      %v3428 = vpop.f32.mrf.mxu0
      %3429 = vmatprep.mubr.f32.mxu0 %v1713
      %3430 = vmatmul.mubr.f32.gmra.mxu0 %v1712
      %v3431 = vpop.f32.mrf.mxu0
      %v3432 = vadd.f32 %v3247, %v3431
      %v3433 = vpop.f32.mrf.mxu0
      %3434 = vdwg.mxu0
      %3435 = vmatprep.subr.mxu0 0.0
      %3436 = vmatpush1.msra.mxu0 %v1795
      %3437 = vmatprep.subr.mxu0 0.0
      %3438 = vmatpush1.msra.mxu0 %v1794
      %3439 = vmatprep.subr.mxu0 0.0
      %3440 = vmatpush1.msra.mxu0 %v1793
      %3441 = vmatprep.subr.mxu0 0.0
      %3442 = vmatpush1.msra.mxu0 %v1792
      %3443 = vmatprep.subr.mxu0 0.0
      %3444 = vmatpush1.msra.mxu0 %v1791
      %3445 = vmatprep.subr.mxu0 0.0
      %3446 = vmatpush1.msra.mxu0 %v1790
      %3447 = vmatprep.subr.mxu0 0.0
      %3448 = vmatpush1.msra.mxu0 %v1789
      %3449 = vmatprep.subr.mxu0 0.0
      %3450 = vmatpush1.msra.mxu0 %v1788
      %3451 = vmatprep.subr.mxu0 0.0
      %3452 = vmatpush1.msra.mxu0 %v1787
      %3453 = vmatprep.subr.mxu0 0.0
      %3454 = vmatpush1.msra.mxu0 %v1786
      %3455 = vmatprep.subr.mxu0 0.0
      %3456 = vmatpush1.msra.mxu0 %v1785
      %3457 = vmatprep.subr.mxu0 0.0
      %3458 = vmatpush1.msra.mxu0 %v1784
      %3459 = vmatprep.subr.mxu0 0.0
      %3460 = vmatpush1.msra.mxu0 %v1783
      %3461 = vmatprep.subr.mxu0 0.0
      %3462 = vmatpush1.msra.mxu0 %v1782
      %3463 = vmatprep.subr.mxu0 0.0
      %3464 = vmatpush1.msra.mxu0 %v1781
      %3465 = vmatprep.subr.mxu0 0.0
      %3466 = vmatpush1.msra.mxu0 %v1780
      %3467 = vmatprep.subr.mxu0 0.0
      %3468 = vmatpush2.msra.mxu0 %v1811
      %3469 = vmatprep.subr.mxu0 0.0
      %3470 = vmatpush2.msra.mxu0 %v1810
      %3471 = vmatprep.subr.mxu0 0.0
      %3472 = vmatpush2.msra.mxu0 %v1809
      %3473 = vmatprep.subr.mxu0 0.0
      %3474 = vmatpush2.msra.mxu0 %v1808
      %3475 = vmatprep.subr.mxu0 0.0
      %3476 = vmatpush2.msra.mxu0 %v1807
      %3477 = vmatprep.subr.mxu0 0.0
      %3478 = vmatpush2.msra.mxu0 %v1806
      %3479 = vmatprep.subr.mxu0 0.0
      %3480 = vmatpush2.msra.mxu0 %v1805
      %3481 = vmatprep.subr.mxu0 0.0
      %3482 = vmatpush2.msra.mxu0 %v1804
      %3483 = vmatprep.subr.mxu0 0.0
      %3484 = vmatpush2.msra.mxu0 %v1803
      %3485 = vmatprep.subr.mxu0 0.0
      %3486 = vmatpush2.msra.mxu0 %v1802
      %3487 = vmatprep.subr.mxu0 0.0
      %3488 = vmatpush2.msra.mxu0 %v1801
      %3489 = vmatprep.subr.mxu0 0.0
      %3490 = vmatpush2.msra.mxu0 %v1800
      %3491 = vmatprep.subr.mxu0 0.0
      %3492 = vmatpush2.msra.mxu0 %v1799
      %3493 = vmatprep.subr.mxu0 0.0
      %3494 = vmatpush2.msra.mxu0 %v1798
      %3495 = vmatprep.subr.mxu0 0.0
      %3496 = vmatpush2.msra.mxu0 %v1797
      %3497 = vmatprep.subr.mxu0 0.0
      %3498 = vmatpush2.msra.mxu0 %v1796
      %3499 = vmatprep.mubr.f32.mxu0 %v1577
      %3500 = vmatmul.mubr.f32.gmra.mxu0 %v1576
      %v3501 = vpop.f32.mrf.mxu0
      %v3502 = vadd.f32 %v3317, %v3501
      %v3503 = vpop.f32.mrf.mxu0
      %3504 = vmatprep.mubr.f32.mxu0 %v1583
      %3505 = vmatmul.mubr.f32.gmra.mxu0 %v1582
      %v3506 = vpop.f32.mrf.mxu0
      %v3507 = vadd.f32 %v3322, %v3506
      %v3508 = vpop.f32.mrf.mxu0
      %3509 = vmatprep.mubr.f32.mxu0 %v1589
      %3510 = vmatmul.mubr.f32.gmra.mxu0 %v1588
      %v3511 = vpop.f32.mrf.mxu0
      %v3512 = vadd.f32 %v3327, %v3511
      %v3513 = vpop.f32.mrf.mxu0
      %3514 = vmatprep.mubr.f32.mxu0 %v1595
      %3515 = vmatmul.mubr.f32.gmra.mxu0 %v1594
      %v3516 = vpop.f32.mrf.mxu0
      %v3517 = vadd.f32 %v3332, %v3516
      %v3518 = vpop.f32.mrf.mxu0
      %3519 = vmatprep.mubr.f32.mxu0 %v1601
      %3520 = vmatmul.mubr.f32.gmra.mxu0 %v1600
      %v3521 = vpop.f32.mrf.mxu0
      %v3522 = vadd.f32 %v3337, %v3521
      %v3523 = vpop.f32.mrf.mxu0
      %3524 = vmatprep.mubr.f32.mxu0 %v1607
      %3525 = vmatmul.mubr.f32.gmra.mxu0 %v1606
      %v3526 = vpop.f32.mrf.mxu0
      %v3527 = vadd.f32 %v3342, %v3526
      %v3528 = vpop.f32.mrf.mxu0
      %3529 = vmatprep.mubr.f32.mxu0 %v1613
      %3530 = vmatmul.mubr.f32.gmra.mxu0 %v1612
      %v3531 = vpop.f32.mrf.mxu0
      %v3532 = vadd.f32 %v3347, %v3531
      %v3533 = vpop.f32.mrf.mxu0
      %3534 = vmatprep.mubr.f32.mxu0 %v1619
      %3535 = vmatmul.mubr.f32.gmra.mxu0 %v1618
      %v3536 = vpop.f32.mrf.mxu0
      %v3537 = vadd.f32 %v3352, %v3536
      %v3538 = vpop.f32.mrf.mxu0
      %3539 = vmatprep.mubr.f32.mxu0 %v1625
      %3540 = vmatmul.mubr.f32.gmra.mxu0 %v1624
      %v3541 = vpop.f32.mrf.mxu0
      %v3542 = vadd.f32 %v3357, %v3541
      %v3543 = vpop.f32.mrf.mxu0
      %3544 = vmatprep.mubr.f32.mxu0 %v1631
      %3545 = vmatmul.mubr.f32.gmra.mxu0 %v1630
      %v3546 = vpop.f32.mrf.mxu0
      %v3547 = vadd.f32 %v3362, %v3546
      %v3548 = vpop.f32.mrf.mxu0
      %3549 = vmatprep.mubr.f32.mxu0 %v1637
      %3550 = vmatmul.mubr.f32.gmra.mxu0 %v1636
      %v3551 = vpop.f32.mrf.mxu0
      %v3552 = vadd.f32 %v3367, %v3551
      %v3553 = vpop.f32.mrf.mxu0
      %3554 = vmatprep.mubr.f32.mxu0 %v1643
      %3555 = vmatmul.mubr.f32.gmra.mxu0 %v1642
      %v3556 = vpop.f32.mrf.mxu0
      %v3557 = vadd.f32 %v3372, %v3556
      %v3558 = vpop.f32.mrf.mxu0
      %3559 = vmatprep.mubr.f32.mxu0 %v1649
      %3560 = vmatmul.mubr.f32.gmra.mxu0 %v1648
      %v3561 = vpop.f32.mrf.mxu0
      %v3562 = vadd.f32 %v3377, %v3561
      %v3563 = vpop.f32.mrf.mxu0
      %3564 = vmatprep.mubr.f32.mxu0 %v1655
      %3565 = vmatmul.mubr.f32.gmra.mxu0 %v1654
      %v3566 = vpop.f32.mrf.mxu0
      %v3567 = vadd.f32 %v3382, %v3566
      %v3568 = vpop.f32.mrf.mxu0
      %3569 = vmatprep.mubr.f32.mxu0 %v1661
      %3570 = vmatmul.mubr.f32.gmra.mxu0 %v1660
      %v3571 = vpop.f32.mrf.mxu0
      %v3572 = vadd.f32 %v3387, %v3571
      %v3573 = vpop.f32.mrf.mxu0
      %3574 = vmatprep.mubr.f32.mxu0 %v1667
      %3575 = vmatmul.mubr.f32.gmra.mxu0 %v1666
      %v3576 = vpop.f32.mrf.mxu0
      %v3577 = vadd.f32 %v3392, %v3576
      %v3578 = vpop.f32.mrf.mxu0
      %3579 = vmatprep.mubr.f32.mxu0 %v1673
      %3580 = vmatmul.mubr.f32.gmra.mxu0 %v1672
      %v3581 = vpop.f32.mrf.mxu0
      %v3582 = vadd.f32 %v3397, %v3581
      %v3583 = vpop.f32.mrf.mxu0
      %3584 = vmatprep.mubr.f32.mxu0 %v1679
      %3585 = vmatmul.mubr.f32.gmra.mxu0 %v1678
      %v3586 = vpop.f32.mrf.mxu0
      %v3587 = vadd.f32 %v3402, %v3586
      %v3588 = vpop.f32.mrf.mxu0
      %3589 = vmatprep.mubr.f32.mxu0 %v1685
      %3590 = vmatmul.mubr.f32.gmra.mxu0 %v1684
      %v3591 = vpop.f32.mrf.mxu0
      %v3592 = vadd.f32 %v3407, %v3591
      %v3593 = vpop.f32.mrf.mxu0
      %3594 = vmatprep.mubr.f32.mxu0 %v1691
      %3595 = vmatmul.mubr.f32.gmra.mxu0 %v1690
      %v3596 = vpop.f32.mrf.mxu0
      %v3597 = vadd.f32 %v3412, %v3596
      %v3598 = vpop.f32.mrf.mxu0
      %3599 = vmatprep.mubr.f32.mxu0 %v1697
      %3600 = vmatmul.mubr.f32.gmra.mxu0 %v1696
      %v3601 = vpop.f32.mrf.mxu0
      %v3602 = vadd.f32 %v3417, %v3601
      %v3603 = vpop.f32.mrf.mxu0
      %3604 = vmatprep.mubr.f32.mxu0 %v1703
      %3605 = vmatmul.mubr.f32.gmra.mxu0 %v1702
      %v3606 = vpop.f32.mrf.mxu0
      %v3607 = vadd.f32 %v3422, %v3606
      %v3608 = vpop.f32.mrf.mxu0
      %3609 = vmatprep.mubr.f32.mxu0 %v1709
      %3610 = vmatmul.mubr.f32.gmra.mxu0 %v1708
      %v3611 = vpop.f32.mrf.mxu0
      %v3612 = vadd.f32 %v3427, %v3611
      %v3613 = vpop.f32.mrf.mxu0
      %3614 = vmatprep.mubr.f32.mxu0 %v1715
      %3615 = vmatmul.mubr.f32.gmra.mxu0 %v1714
      %v3616 = vpop.f32.mrf.mxu0
      %v3617 = vadd.f32 %v3432, %v3616
      %v3618 = vpop.f32.mrf.mxu0
      %3619 = vdwg.mxu0
      %v3620 = vld [vmem:[#allocation2] sm:$0xfc]
      %v3621 = vld [vmem:[#allocation2 + $0x8] sm:$0xfc]
      %v3622 = vld [vmem:[#allocation2 + $0x10] sm:$0xfc]
      %v3623 = vld [vmem:[#allocation2 + $0x18] sm:$0xfc]
      %v3624 = vld [vmem:[#allocation2 + $0x20] sm:$0xfc]
      %v3625 = vld [vmem:[#allocation2 + $0x28] sm:$0xfc]
      %v3626 = vld [vmem:[#allocation2 + $0x480] sm:$0x3]
      %v3627 = vld [vmem:[#allocation2 + $0x488] sm:$0x3]
      %v3628 = vld [vmem:[#allocation2 + $0x490] sm:$0x3]
      %v3629 = vld [vmem:[#allocation2 + $0x498] sm:$0x3]
      %v3630 = vld [vmem:[#allocation2 + $0x4a0] sm:$0x3]
      %v3631 = vld [vmem:[#allocation2 + $0x4a8] sm:$0x3]
      %s3632 = scalar_lea.vmem %s3, 1536
      %v3633 = vld [vmem:[%s3632] sm:$0xff]
      %v3634 = vld [vmem:[%s3632 + $0x8] sm:$0xff]
      %v3635 = vld [vmem:[%s3632 + $0x10] sm:$0xff]
      %v3636 = vld [vmem:[%s3632 + $0x18] sm:$0xff]
      %v3637 = vld [vmem:[%s3632 + $0x20] sm:$0xff]
      %v3638 = vld [vmem:[%s3632 + $0x28] sm:$0xff]
      %v3639 = vld [vmem:[%s3632 + $0x30] sm:$0xff]
      %v3640 = vld [vmem:[%s3632 + $0x38] sm:$0xff]
      %v3641 = vld [vmem:[%s3632 + $0x40] sm:$0xff]
      %v3642 = vld [vmem:[%s3632 + $0x48] sm:$0xff]
      %v3643 = vld [vmem:[%s3632 + $0x50] sm:$0xff]
      %v3644 = vld [vmem:[%s3632 + $0x58] sm:$0xff]
      %v3645 = vld [vmem:[%s3632 + $0x60] sm:$0xff]
      %v3646 = vld [vmem:[%s3632 + $0x68] sm:$0xff]
      %v3647 = vld [vmem:[%s3632 + $0x70] sm:$0xff]
      %v3648 = vld [vmem:[%s3632 + $0x78] sm:$0xff]
      %v3649 = vld [vmem:[%s3632 + $0x80] sm:$0xff]
      %v3650 = vld [vmem:[%s3632 + $0x88] sm:$0xff]
      %v3651 = vld [vmem:[%s3632 + $0x90] sm:$0xff]
      %v3652 = vld [vmem:[%s3632 + $0x98] sm:$0xff]
      %v3653 = vld [vmem:[%s3632 + $0xa0] sm:$0xff]
      %v3654 = vld [vmem:[%s3632 + $0xa8] sm:$0xff]
      %v3655 = vld [vmem:[%s3632 + $0xb0] sm:$0xff]
      %v3656 = vld [vmem:[%s3632 + $0xb8] sm:$0xff]
      %v3657 = vld [vmem:[%s3632 + $0xc0] sm:$0xff]
      %v3658 = vld [vmem:[%s3632 + $0xc8] sm:$0xff]
      %v3659 = vld [vmem:[%s3632 + $0xd0] sm:$0xff]
      %v3660 = vld [vmem:[%s3632 + $0xd8] sm:$0xff]
      %v3661 = vld [vmem:[%s3632 + $0xe0] sm:$0xff]
      %v3662 = vld [vmem:[%s3632 + $0xe8] sm:$0xff]
      %v3663 = vld [vmem:[%s3632 + $0xf0] sm:$0xff]
      %v3664 = vld [vmem:[%s3632 + $0xf8] sm:$0xff]
      %v3665 = vld [vmem:[%s3632 + $0x100] sm:$0xff]
      %v3666 = vld [vmem:[%s3632 + $0x108] sm:$0xff]
      %v3667 = vld [vmem:[%s3632 + $0x110] sm:$0xff]
      %v3668 = vld [vmem:[%s3632 + $0x118] sm:$0xff]
      %v3669 = vld [vmem:[%s3632 + $0x120] sm:$0xff]
      %v3670 = vld [vmem:[%s3632 + $0x128] sm:$0xff]
      %v3671 = vld [vmem:[%s3632 + $0x130] sm:$0xff]
      %v3672 = vld [vmem:[%s3632 + $0x138] sm:$0xff]
      %v3673 = vld [vmem:[%s3632 + $0x140] sm:$0xff]
      %v3674 = vld [vmem:[%s3632 + $0x148] sm:$0xff]
      %v3675 = vld [vmem:[%s3632 + $0x150] sm:$0xff]
      %v3676 = vld [vmem:[%s3632 + $0x158] sm:$0xff]
      %v3677 = vld [vmem:[%s3632 + $0x160] sm:$0xff]
      %v3678 = vld [vmem:[%s3632 + $0x168] sm:$0xff]
      %v3679 = vld [vmem:[%s3632 + $0x170] sm:$0xff]
      %v3680 = vld [vmem:[%s3632 + $0x178] sm:$0xff]
      %v3681 = vld [vmem:[%s3632 + $0x180] sm:$0xff]
      %v3682 = vld [vmem:[%s3632 + $0x188] sm:$0xff]
      %v3683 = vld [vmem:[%s3632 + $0x190] sm:$0xff]
      %v3684 = vld [vmem:[%s3632 + $0x198] sm:$0xff]
      %v3685 = vld [vmem:[%s3632 + $0x1a0] sm:$0xff]
      %v3686 = vld [vmem:[%s3632 + $0x1a8] sm:$0xff]
      %v3687 = vld [vmem:[%s3632 + $0x1b0] sm:$0xff]
      %v3688 = vld [vmem:[%s3632 + $0x1b8] sm:$0xff]
      %v3689 = vld [vmem:[%s3632 + $0x1c0] sm:$0xff]
      %v3690 = vld [vmem:[%s3632 + $0x1c8] sm:$0xff]
      %v3691 = vld [vmem:[%s3632 + $0x1d0] sm:$0xff]
      %v3692 = vld [vmem:[%s3632 + $0x1d8] sm:$0xff]
      %v3693 = vld [vmem:[%s3632 + $0x1e0] sm:$0xff]
      %v3694 = vld [vmem:[%s3632 + $0x1e8] sm:$0xff]
      %v3695 = vld [vmem:[%s3632 + $0x1f0] sm:$0xff]
      %v3696 = vld [vmem:[%s3632 + $0x1f8] sm:$0xff]
      %v3697 = vld [vmem:[%s3632 + $0x200] sm:$0xff]
      %v3698 = vld [vmem:[%s3632 + $0x208] sm:$0xff]
      %v3699 = vld [vmem:[%s3632 + $0x210] sm:$0xff]
      %v3700 = vld [vmem:[%s3632 + $0x218] sm:$0xff]
      %v3701 = vld [vmem:[%s3632 + $0x220] sm:$0xff]
      %v3702 = vld [vmem:[%s3632 + $0x228] sm:$0xff]
      %v3703 = vld [vmem:[%s3632 + $0x230] sm:$0xff]
      %v3704 = vld [vmem:[%s3632 + $0x238] sm:$0xff]
      %v3705 = vld [vmem:[%s3632 + $0x240] sm:$0xff]
      %v3706 = vld [vmem:[%s3632 + $0x248] sm:$0xff]
      %v3707 = vld [vmem:[%s3632 + $0x250] sm:$0xff]
      %v3708 = vld [vmem:[%s3632 + $0x258] sm:$0xff]
      %v3709 = vld [vmem:[%s3632 + $0x260] sm:$0xff]
      %v3710 = vld [vmem:[%s3632 + $0x268] sm:$0xff]
      %v3711 = vld [vmem:[%s3632 + $0x270] sm:$0xff]
      %v3712 = vld [vmem:[%s3632 + $0x278] sm:$0xff]
      %v3713 = vld [vmem:[%s3632 + $0x280] sm:$0xff]
      %v3714 = vld [vmem:[%s3632 + $0x288] sm:$0xff]
      %v3715 = vld [vmem:[%s3632 + $0x290] sm:$0xff]
      %v3716 = vld [vmem:[%s3632 + $0x298] sm:$0xff]
      %v3717 = vld [vmem:[%s3632 + $0x2a0] sm:$0xff]
      %v3718 = vld [vmem:[%s3632 + $0x2a8] sm:$0xff]
      %v3719 = vld [vmem:[%s3632 + $0x2b0] sm:$0xff]
      %v3720 = vld [vmem:[%s3632 + $0x2b8] sm:$0xff]
      %v3721 = vld [vmem:[%s3632 + $0x2c0] sm:$0xff]
      %v3722 = vld [vmem:[%s3632 + $0x2c8] sm:$0xff]
      %v3723 = vld [vmem:[%s3632 + $0x2d0] sm:$0xff]
      %v3724 = vld [vmem:[%s3632 + $0x2d8] sm:$0xff]
      %v3725 = vld [vmem:[%s3632 + $0x2e0] sm:$0xff]
      %v3726 = vld [vmem:[%s3632 + $0x2e8] sm:$0xff]
      %v3727 = vld [vmem:[%s3632 + $0x2f0] sm:$0xff]
      %v3728 = vld [vmem:[%s3632 + $0x2f8] sm:$0xff]
      %vm3741 = vcmask 1045504
      %v3742 = vrot.slane %v3620, 2
      %v3743 = vrot.slane %v1578, 2
      %v3744 = vsel %vm3741, %v3742, %v3743
      %v3745 = vrot.slane %v3621, 2
      %v3746 = vrot.slane %v1579, 2
      %v3747 = vsel %vm3741, %v3745, %v3746
      %v3748 = vrot.slane %v3622, 2
      %v3749 = vrot.slane %v1580, 2
      %v3750 = vsel %vm3741, %v3748, %v3749
      %v3751 = vrot.slane %v3623, 2
      %v3752 = vrot.slane %v1581, 2
      %v3753 = vsel %vm3741, %v3751, %v3752
      %v3754 = vrot.slane %v3624, 2
      %v3755 = vrot.slane %v1582, 2
      %v3756 = vsel %vm3741, %v3754, %v3755
      %v3757 = vrot.slane %v3625, 2
      %v3758 = vrot.slane %v1583, 2
      %v3759 = vsel %vm3741, %v3757, %v3758
      %v3760 = vrot.slane %v1584, 2
      %v3761 = vsel %vm3741, %v3743, %v3760
      %v3762 = vrot.slane %v1585, 2
      %v3763 = vsel %vm3741, %v3746, %v3762
      %v3764 = vrot.slane %v1586, 2
      %v3765 = vsel %vm3741, %v3749, %v3764
      %v3766 = vrot.slane %v1587, 2
      %v3767 = vsel %vm3741, %v3752, %v3766
      %v3768 = vrot.slane %v1588, 2
      %v3769 = vsel %vm3741, %v3755, %v3768
      %v3770 = vrot.slane %v1589, 2
      %v3771 = vsel %vm3741, %v3758, %v3770
      %v3772 = vrot.slane %v1590, 2
      %v3773 = vsel %vm3741, %v3760, %v3772
      %v3774 = vrot.slane %v1591, 2
      %v3775 = vsel %vm3741, %v3762, %v3774
      %v3776 = vrot.slane %v1592, 2
      %v3777 = vsel %vm3741, %v3764, %v3776
      %v3778 = vrot.slane %v1593, 2
      %v3779 = vsel %vm3741, %v3766, %v3778
      %v3780 = vrot.slane %v1594, 2
      %v3781 = vsel %vm3741, %v3768, %v3780
      %v3782 = vrot.slane %v1595, 2
      %v3783 = vsel %vm3741, %v3770, %v3782
      %v3784 = vrot.slane %v1596, 2
      %v3785 = vsel %vm3741, %v3772, %v3784
      %v3786 = vrot.slane %v1597, 2
      %v3787 = vsel %vm3741, %v3774, %v3786
      %v3788 = vrot.slane %v1598, 2
      %v3789 = vsel %vm3741, %v3776, %v3788
      %v3790 = vrot.slane %v1599, 2
      %v3791 = vsel %vm3741, %v3778, %v3790
      %v3792 = vrot.slane %v1600, 2
      %v3793 = vsel %vm3741, %v3780, %v3792
      %v3794 = vrot.slane %v1601, 2
      %v3795 = vsel %vm3741, %v3782, %v3794
      %v3796 = vrot.slane %v1602, 2
      %v3797 = vsel %vm3741, %v3784, %v3796
      %v3798 = vrot.slane %v1603, 2
      %v3799 = vsel %vm3741, %v3786, %v3798
      %v3800 = vrot.slane %v1604, 2
      %v3801 = vsel %vm3741, %v3788, %v3800
      %v3802 = vrot.slane %v1605, 2
      %v3803 = vsel %vm3741, %v3790, %v3802
      %v3804 = vrot.slane %v1606, 2
      %v3805 = vsel %vm3741, %v3792, %v3804
      %v3806 = vrot.slane %v1607, 2
      %v3807 = vsel %vm3741, %v3794, %v3806
      %v3808 = vrot.slane %v1608, 2
      %v3809 = vsel %vm3741, %v3796, %v3808
      %v3810 = vrot.slane %v1609, 2
      %v3811 = vsel %vm3741, %v3798, %v3810
      %v3812 = vrot.slane %v1610, 2
      %v3813 = vsel %vm3741, %v3800, %v3812
      %v3814 = vrot.slane %v1611, 2
      %v3815 = vsel %vm3741, %v3802, %v3814
      %v3816 = vrot.slane %v1612, 2
      %v3817 = vsel %vm3741, %v3804, %v3816
      %v3818 = vrot.slane %v1613, 2
      %v3819 = vsel %vm3741, %v3806, %v3818
      %v3820 = vrot.slane %v1614, 2
      %v3821 = vsel %vm3741, %v3808, %v3820
      %v3822 = vrot.slane %v1615, 2
      %v3823 = vsel %vm3741, %v3810, %v3822
      %v3824 = vrot.slane %v1616, 2
      %v3825 = vsel %vm3741, %v3812, %v3824
      %v3826 = vrot.slane %v1617, 2
      %v3827 = vsel %vm3741, %v3814, %v3826
      %v3828 = vrot.slane %v1618, 2
      %v3829 = vsel %vm3741, %v3816, %v3828
      %v3830 = vrot.slane %v1619, 2
      %v3831 = vsel %vm3741, %v3818, %v3830
      %v3832 = vrot.slane %v1620, 2
      %v3833 = vsel %vm3741, %v3820, %v3832
      %v3834 = vrot.slane %v1621, 2
      %v3835 = vsel %vm3741, %v3822, %v3834
      %v3836 = vrot.slane %v1622, 2
      %v3837 = vsel %vm3741, %v3824, %v3836
      %v3838 = vrot.slane %v1623, 2
      %v3839 = vsel %vm3741, %v3826, %v3838
      %v3840 = vrot.slane %v1624, 2
      %v3841 = vsel %vm3741, %v3828, %v3840
      %v3842 = vrot.slane %v1625, 2
      %v3843 = vsel %vm3741, %v3830, %v3842
      %v3844 = vrot.slane %v1626, 2
      %v3845 = vsel %vm3741, %v3832, %v3844
      %v3846 = vrot.slane %v1627, 2
      %v3847 = vsel %vm3741, %v3834, %v3846
      %v3848 = vrot.slane %v1628, 2
      %v3849 = vsel %vm3741, %v3836, %v3848
      %v3850 = vrot.slane %v1629, 2
      %v3851 = vsel %vm3741, %v3838, %v3850
      %v3852 = vrot.slane %v1630, 2
      %v3853 = vsel %vm3741, %v3840, %v3852
      %v3854 = vrot.slane %v1631, 2
      %v3855 = vsel %vm3741, %v3842, %v3854
      %v3856 = vrot.slane %v1632, 2
      %v3857 = vsel %vm3741, %v3844, %v3856
      %v3858 = vrot.slane %v1633, 2
      %v3859 = vsel %vm3741, %v3846, %v3858
      %v3860 = vrot.slane %v1634, 2
      %v3861 = vsel %vm3741, %v3848, %v3860
      %v3862 = vrot.slane %v1635, 2
      %v3863 = vsel %vm3741, %v3850, %v3862
      %v3864 = vrot.slane %v1636, 2
      %v3865 = vsel %vm3741, %v3852, %v3864
      %v3866 = vrot.slane %v1637, 2
      %v3867 = vsel %vm3741, %v3854, %v3866
      %v3868 = vrot.slane %v1638, 2
      %v3869 = vsel %vm3741, %v3856, %v3868
      %v3870 = vrot.slane %v1639, 2
      %v3871 = vsel %vm3741, %v3858, %v3870
      %v3872 = vrot.slane %v1640, 2
      %v3873 = vsel %vm3741, %v3860, %v3872
      %v3874 = vrot.slane %v1641, 2
      %v3875 = vsel %vm3741, %v3862, %v3874
      %v3876 = vrot.slane %v1642, 2
      %v3877 = vsel %vm3741, %v3864, %v3876
      %v3878 = vrot.slane %v1643, 2
      %v3879 = vsel %vm3741, %v3866, %v3878
      %v3880 = vrot.slane %v1644, 2
      %v3881 = vsel %vm3741, %v3868, %v3880
      %v3882 = vrot.slane %v1645, 2
      %v3883 = vsel %vm3741, %v3870, %v3882
      %v3884 = vrot.slane %v1646, 2
      %v3885 = vsel %vm3741, %v3872, %v3884
      %v3886 = vrot.slane %v1647, 2
      %v3887 = vsel %vm3741, %v3874, %v3886
      %v3888 = vrot.slane %v1648, 2
      %v3889 = vsel %vm3741, %v3876, %v3888
      %v3890 = vrot.slane %v1649, 2
      %v3891 = vsel %vm3741, %v3878, %v3890
      %v3892 = vrot.slane %v1650, 2
      %v3893 = vsel %vm3741, %v3880, %v3892
      %v3894 = vrot.slane %v1651, 2
      %v3895 = vsel %vm3741, %v3882, %v3894
      %v3896 = vrot.slane %v1652, 2
      %v3897 = vsel %vm3741, %v3884, %v3896
      %v3898 = vrot.slane %v1653, 2
      %v3899 = vsel %vm3741, %v3886, %v3898
      %v3900 = vrot.slane %v1654, 2
      %v3901 = vsel %vm3741, %v3888, %v3900
      %v3902 = vrot.slane %v1655, 2
      %v3903 = vsel %vm3741, %v3890, %v3902
      %v3904 = vrot.slane %v1656, 2
      %v3905 = vsel %vm3741, %v3892, %v3904
      %v3906 = vrot.slane %v1657, 2
      %v3907 = vsel %vm3741, %v3894, %v3906
      %v3908 = vrot.slane %v1658, 2
      %v3909 = vsel %vm3741, %v3896, %v3908
      %v3910 = vrot.slane %v1659, 2
      %v3911 = vsel %vm3741, %v3898, %v3910
      %v3912 = vrot.slane %v1660, 2
      %v3913 = vsel %vm3741, %v3900, %v3912
      %v3914 = vrot.slane %v1661, 2
      %v3915 = vsel %vm3741, %v3902, %v3914
      %v3916 = vrot.slane %v1662, 2
      %v3917 = vsel %vm3741, %v3904, %v3916
      %v3918 = vrot.slane %v1663, 2
      %v3919 = vsel %vm3741, %v3906, %v3918
      %v3920 = vrot.slane %v1664, 2
      %v3921 = vsel %vm3741, %v3908, %v3920
      %v3922 = vrot.slane %v1665, 2
      %v3923 = vsel %vm3741, %v3910, %v3922
      %v3924 = vrot.slane %v1666, 2
      %v3925 = vsel %vm3741, %v3912, %v3924
      %v3926 = vrot.slane %v1667, 2
      %v3927 = vsel %vm3741, %v3914, %v3926
      %v3928 = vrot.slane %v1668, 2
      %v3929 = vsel %vm3741, %v3916, %v3928
      %v3930 = vrot.slane %v1669, 2
      %v3931 = vsel %vm3741, %v3918, %v3930
      %v3932 = vrot.slane %v1670, 2
      %v3933 = vsel %vm3741, %v3920, %v3932
      %v3934 = vrot.slane %v1671, 2
      %v3935 = vsel %vm3741, %v3922, %v3934
      %v3936 = vrot.slane %v1672, 2
      %v3937 = vsel %vm3741, %v3924, %v3936
      %v3938 = vrot.slane %v1673, 2
      %v3939 = vsel %vm3741, %v3926, %v3938
      %v3940 = vrot.slane %v1674, 2
      %v3941 = vsel %vm3741, %v3928, %v3940
      %v3942 = vrot.slane %v1675, 2
      %v3943 = vsel %vm3741, %v3930, %v3942
      %v3944 = vrot.slane %v1676, 2
      %v3945 = vsel %vm3741, %v3932, %v3944
      %v3946 = vrot.slane %v1677, 2
      %v3947 = vsel %vm3741, %v3934, %v3946
      %v3948 = vrot.slane %v1678, 2
      %v3949 = vsel %vm3741, %v3936, %v3948
      %v3950 = vrot.slane %v1679, 2
      %v3951 = vsel %vm3741, %v3938, %v3950
      %v3952 = vrot.slane %v1680, 2
      %v3953 = vsel %vm3741, %v3940, %v3952
      %v3954 = vrot.slane %v1681, 2
      %v3955 = vsel %vm3741, %v3942, %v3954
      %v3956 = vrot.slane %v1682, 2
      %v3957 = vsel %vm3741, %v3944, %v3956
      %v3958 = vrot.slane %v1683, 2
      %v3959 = vsel %vm3741, %v3946, %v3958
      %v3960 = vrot.slane %v1684, 2
      %v3961 = vsel %vm3741, %v3948, %v3960
      %v3962 = vrot.slane %v1685, 2
      %v3963 = vsel %vm3741, %v3950, %v3962
      %v3964 = vrot.slane %v1686, 2
      %v3965 = vsel %vm3741, %v3952, %v3964
      %v3966 = vrot.slane %v1687, 2
      %v3967 = vsel %vm3741, %v3954, %v3966
      %v3968 = vrot.slane %v1688, 2
      %v3969 = vsel %vm3741, %v3956, %v3968
      %v3970 = vrot.slane %v1689, 2
      %v3971 = vsel %vm3741, %v3958, %v3970
      %v3972 = vrot.slane %v1690, 2
      %v3973 = vsel %vm3741, %v3960, %v3972
      %v3974 = vrot.slane %v1691, 2
      %v3975 = vsel %vm3741, %v3962, %v3974
      %v3976 = vrot.slane %v1692, 2
      %v3977 = vsel %vm3741, %v3964, %v3976
      %v3978 = vrot.slane %v1693, 2
      %v3979 = vsel %vm3741, %v3966, %v3978
      %v3980 = vrot.slane %v1694, 2
      %v3981 = vsel %vm3741, %v3968, %v3980
      %v3982 = vrot.slane %v1695, 2
      %v3983 = vsel %vm3741, %v3970, %v3982
      %v3984 = vrot.slane %v1696, 2
      %v3985 = vsel %vm3741, %v3972, %v3984
      %v3986 = vrot.slane %v1697, 2
      %v3987 = vsel %vm3741, %v3974, %v3986
      %v3988 = vrot.slane %v1698, 2
      %v3989 = vsel %vm3741, %v3976, %v3988
      %v3990 = vrot.slane %v1699, 2
      %v3991 = vsel %vm3741, %v3978, %v3990
      %v3992 = vrot.slane %v1700, 2
      %v3993 = vsel %vm3741, %v3980, %v3992
      %v3994 = vrot.slane %v1701, 2
      %v3995 = vsel %vm3741, %v3982, %v3994
      %v3996 = vrot.slane %v1702, 2
      %v3997 = vsel %vm3741, %v3984, %v3996
      %v3998 = vrot.slane %v1703, 2
      %v3999 = vsel %vm3741, %v3986, %v3998
      %v4000 = vrot.slane %v1704, 2
      %v4001 = vsel %vm3741, %v3988, %v4000
      %v4002 = vrot.slane %v1705, 2
      %v4003 = vsel %vm3741, %v3990, %v4002
      %v4004 = vrot.slane %v1706, 2
      %v4005 = vsel %vm3741, %v3992, %v4004
      %v4006 = vrot.slane %v1707, 2
      %v4007 = vsel %vm3741, %v3994, %v4006
      %v4008 = vrot.slane %v1708, 2
      %v4009 = vsel %vm3741, %v3996, %v4008
      %v4010 = vrot.slane %v1709, 2
      %v4011 = vsel %vm3741, %v3998, %v4010
      %v4012 = vrot.slane %v1710, 2
      %v4013 = vsel %vm3741, %v4000, %v4012
      %v4014 = vrot.slane %v1711, 2
      %v4015 = vsel %vm3741, %v4002, %v4014
      %v4016 = vrot.slane %v1712, 2
      %v4017 = vsel %vm3741, %v4004, %v4016
      %v4018 = vrot.slane %v1713, 2
      %v4019 = vsel %vm3741, %v4006, %v4018
      %v4020 = vrot.slane %v1714, 2
      %v4021 = vsel %vm3741, %v4008, %v4020
      %v4022 = vrot.slane %v1715, 2
      %v4023 = vsel %vm3741, %v4010, %v4022
      %v4024 = vrot.slane %v3626, 2
      %v4025 = vsel %vm3741, %v4012, %v4024
      %v4026 = vrot.slane %v3627, 2
      %v4027 = vsel %vm3741, %v4014, %v4026
      %v4028 = vrot.slane %v3628, 2
      %v4029 = vsel %vm3741, %v4016, %v4028
      %v4030 = vrot.slane %v3629, 2
      %v4031 = vsel %vm3741, %v4018, %v4030
      %v4032 = vrot.slane %v3630, 2
      %v4033 = vsel %vm3741, %v4020, %v4032
      %v4034 = vrot.slane %v3631, 2
      %v4035 = vsel %vm3741, %v4022, %v4034
      %4180 = vmatprep.subr.mxu0 0.0
      %4181 = vmatpush1.msra.mxu0 %v3648
      %4182 = vmatprep.subr.mxu0 0.0
      %4183 = vmatpush1.msra.mxu0 %v3647
      %4184 = vmatprep.subr.mxu0 0.0
      %4185 = vmatpush1.msra.mxu0 %v3646
      %4186 = vmatprep.subr.mxu0 0.0
      %4187 = vmatpush1.msra.mxu0 %v3645
      %4188 = vmatprep.subr.mxu0 0.0
      %4189 = vmatpush1.msra.mxu0 %v3644
      %4190 = vmatprep.subr.mxu0 0.0
      %4191 = vmatpush1.msra.mxu0 %v3643
      %4192 = vmatprep.subr.mxu0 0.0
      %4193 = vmatpush1.msra.mxu0 %v3642
      %4194 = vmatprep.subr.mxu0 0.0
      %4195 = vmatpush1.msra.mxu0 %v3641
      %4196 = vmatprep.subr.mxu0 0.0
      %4197 = vmatpush1.msra.mxu0 %v3640
      %4198 = vmatprep.subr.mxu0 0.0
      %4199 = vmatpush1.msra.mxu0 %v3639
      %4200 = vmatprep.subr.mxu0 0.0
      %4201 = vmatpush1.msra.mxu0 %v3638
      %4202 = vmatprep.subr.mxu0 0.0
      %4203 = vmatpush1.msra.mxu0 %v3637
      %4204 = vmatprep.subr.mxu0 0.0
      %4205 = vmatpush1.msra.mxu0 %v3636
      %4206 = vmatprep.subr.mxu0 0.0
      %4207 = vmatpush1.msra.mxu0 %v3635
      %4208 = vmatprep.subr.mxu0 0.0
      %4209 = vmatpush1.msra.mxu0 %v3634
      %4210 = vmatprep.subr.mxu0 0.0
      %4211 = vmatpush1.msra.mxu0 %v3633
      %4212 = vmatprep.subr.mxu0 0.0
      %4213 = vmatpush2.msra.mxu0 %v3664
      %4214 = vmatprep.subr.mxu0 0.0
      %4215 = vmatpush2.msra.mxu0 %v3663
      %4216 = vmatprep.subr.mxu0 0.0
      %4217 = vmatpush2.msra.mxu0 %v3662
      %4218 = vmatprep.subr.mxu0 0.0
      %4219 = vmatpush2.msra.mxu0 %v3661
      %4220 = vmatprep.subr.mxu0 0.0
      %4221 = vmatpush2.msra.mxu0 %v3660
      %4222 = vmatprep.subr.mxu0 0.0
      %4223 = vmatpush2.msra.mxu0 %v3659
      %4224 = vmatprep.subr.mxu0 0.0
      %4225 = vmatpush2.msra.mxu0 %v3658
      %4226 = vmatprep.subr.mxu0 0.0
      %4227 = vmatpush2.msra.mxu0 %v3657
      %4228 = vmatprep.subr.mxu0 0.0
      %4229 = vmatpush2.msra.mxu0 %v3656
      %4230 = vmatprep.subr.mxu0 0.0
      %4231 = vmatpush2.msra.mxu0 %v3655
      %4232 = vmatprep.subr.mxu0 0.0
      %4233 = vmatpush2.msra.mxu0 %v3654
      %4234 = vmatprep.subr.mxu0 0.0
      %4235 = vmatpush2.msra.mxu0 %v3653
      %4236 = vmatprep.subr.mxu0 0.0
      %4237 = vmatpush2.msra.mxu0 %v3652
      %4238 = vmatprep.subr.mxu0 0.0
      %4239 = vmatpush2.msra.mxu0 %v3651
      %4240 = vmatprep.subr.mxu0 0.0
      %4241 = vmatpush2.msra.mxu0 %v3650
      %4242 = vmatprep.subr.mxu0 0.0
      %4243 = vmatpush2.msra.mxu0 %v3649
      %4244 = vmatprep.mubr.f32.mxu0 %v3747
      %4245 = vmatmul.mubr.f32.gmra.mxu0 %v3744
      %v4246 = vpop.f32.mrf.mxu0
      %v4247 = vadd.f32 0.0, %v4246
      %v4248 = vpop.f32.mrf.mxu0
      %4249 = vmatprep.mubr.f32.mxu0 %v3763
      %4250 = vmatmul.mubr.f32.gmra.mxu0 %v3761
      %v4251 = vpop.f32.mrf.mxu0
      %v4252 = vadd.f32 0.0, %v4251
      %v4253 = vpop.f32.mrf.mxu0
      %4254 = vmatprep.mubr.f32.mxu0 %v3775
      %4255 = vmatmul.mubr.f32.gmra.mxu0 %v3773
      %v4256 = vpop.f32.mrf.mxu0
      %v4257 = vadd.f32 0.0, %v4256
      %v4258 = vpop.f32.mrf.mxu0
      %4259 = vmatprep.mubr.f32.mxu0 %v3787
      %4260 = vmatmul.mubr.f32.gmra.mxu0 %v3785
      %v4261 = vpop.f32.mrf.mxu0
      %v4262 = vadd.f32 0.0, %v4261
      %v4263 = vpop.f32.mrf.mxu0
      %4264 = vmatprep.mubr.f32.mxu0 %v3799
      %4265 = vmatmul.mubr.f32.gmra.mxu0 %v3797
      %v4266 = vpop.f32.mrf.mxu0
      %v4267 = vadd.f32 0.0, %v4266
      %v4268 = vpop.f32.mrf.mxu0
      %4269 = vmatprep.mubr.f32.mxu0 %v3811
      %4270 = vmatmul.mubr.f32.gmra.mxu0 %v3809
      %v4271 = vpop.f32.mrf.mxu0
      %v4272 = vadd.f32 0.0, %v4271
      %v4273 = vpop.f32.mrf.mxu0
      %4274 = vmatprep.mubr.f32.mxu0 %v3823
      %4275 = vmatmul.mubr.f32.gmra.mxu0 %v3821
      %v4276 = vpop.f32.mrf.mxu0
      %v4277 = vadd.f32 0.0, %v4276
      %v4278 = vpop.f32.mrf.mxu0
      %4279 = vmatprep.mubr.f32.mxu0 %v3835
      %4280 = vmatmul.mubr.f32.gmra.mxu0 %v3833
      %v4281 = vpop.f32.mrf.mxu0
      %v4282 = vadd.f32 0.0, %v4281
      %v4283 = vpop.f32.mrf.mxu0
      %4284 = vmatprep.mubr.f32.mxu0 %v3847
      %4285 = vmatmul.mubr.f32.gmra.mxu0 %v3845
      %v4286 = vpop.f32.mrf.mxu0
      %v4287 = vadd.f32 0.0, %v4286
      %v4288 = vpop.f32.mrf.mxu0
      %4289 = vmatprep.mubr.f32.mxu0 %v3859
      %4290 = vmatmul.mubr.f32.gmra.mxu0 %v3857
      %v4291 = vpop.f32.mrf.mxu0
      %v4292 = vadd.f32 0.0, %v4291
      %v4293 = vpop.f32.mrf.mxu0
      %4294 = vmatprep.mubr.f32.mxu0 %v3871
      %4295 = vmatmul.mubr.f32.gmra.mxu0 %v3869
      %v4296 = vpop.f32.mrf.mxu0
      %v4297 = vadd.f32 0.0, %v4296
      %v4298 = vpop.f32.mrf.mxu0
      %4299 = vmatprep.mubr.f32.mxu0 %v3883
      %4300 = vmatmul.mubr.f32.gmra.mxu0 %v3881
      %v4301 = vpop.f32.mrf.mxu0
      %v4302 = vadd.f32 0.0, %v4301
      %v4303 = vpop.f32.mrf.mxu0
      %4304 = vmatprep.mubr.f32.mxu0 %v3895
      %4305 = vmatmul.mubr.f32.gmra.mxu0 %v3893
      %v4306 = vpop.f32.mrf.mxu0
      %v4307 = vadd.f32 0.0, %v4306
      %v4308 = vpop.f32.mrf.mxu0
      %4309 = vmatprep.mubr.f32.mxu0 %v3907
      %4310 = vmatmul.mubr.f32.gmra.mxu0 %v3905
      %v4311 = vpop.f32.mrf.mxu0
      %v4312 = vadd.f32 0.0, %v4311
      %v4313 = vpop.f32.mrf.mxu0
      %4314 = vmatprep.mubr.f32.mxu0 %v3919
      %4315 = vmatmul.mubr.f32.gmra.mxu0 %v3917
      %v4316 = vpop.f32.mrf.mxu0
      %v4317 = vadd.f32 0.0, %v4316
      %v4318 = vpop.f32.mrf.mxu0
      %4319 = vmatprep.mubr.f32.mxu0 %v3931
      %4320 = vmatmul.mubr.f32.gmra.mxu0 %v3929
      %v4321 = vpop.f32.mrf.mxu0
      %v4322 = vadd.f32 0.0, %v4321
      %v4323 = vpop.f32.mrf.mxu0
      %4324 = vmatprep.mubr.f32.mxu0 %v3943
      %4325 = vmatmul.mubr.f32.gmra.mxu0 %v3941
      %v4326 = vpop.f32.mrf.mxu0
      %v4327 = vadd.f32 0.0, %v4326
      %v4328 = vpop.f32.mrf.mxu0
      %4329 = vmatprep.mubr.f32.mxu0 %v3955
      %4330 = vmatmul.mubr.f32.gmra.mxu0 %v3953
      %v4331 = vpop.f32.mrf.mxu0
      %v4332 = vadd.f32 0.0, %v4331
      %v4333 = vpop.f32.mrf.mxu0
      %4334 = vmatprep.mubr.f32.mxu0 %v3967
      %4335 = vmatmul.mubr.f32.gmra.mxu0 %v3965
      %v4336 = vpop.f32.mrf.mxu0
      %v4337 = vadd.f32 0.0, %v4336
      %v4338 = vpop.f32.mrf.mxu0
      %4339 = vmatprep.mubr.f32.mxu0 %v3979
      %4340 = vmatmul.mubr.f32.gmra.mxu0 %v3977
      %v4341 = vpop.f32.mrf.mxu0
      %v4342 = vadd.f32 0.0, %v4341
      %v4343 = vpop.f32.mrf.mxu0
      %4344 = vmatprep.mubr.f32.mxu0 %v3991
      %4345 = vmatmul.mubr.f32.gmra.mxu0 %v3989
      %v4346 = vpop.f32.mrf.mxu0
      %v4347 = vadd.f32 0.0, %v4346
      %v4348 = vpop.f32.mrf.mxu0
      %4349 = vmatprep.mubr.f32.mxu0 %v4003
      %4350 = vmatmul.mubr.f32.gmra.mxu0 %v4001
      %v4351 = vpop.f32.mrf.mxu0
      %v4352 = vadd.f32 0.0, %v4351
      %v4353 = vpop.f32.mrf.mxu0
      %4354 = vmatprep.mubr.f32.mxu0 %v4015
      %4355 = vmatmul.mubr.f32.gmra.mxu0 %v4013
      %v4356 = vpop.f32.mrf.mxu0
      %v4357 = vadd.f32 0.0, %v4356
      %v4358 = vpop.f32.mrf.mxu0
      %4359 = vmatprep.mubr.f32.mxu0 %v4027
      %4360 = vmatmul.mubr.f32.gmra.mxu0 %v4025
      %v4361 = vpop.f32.mrf.mxu0
      %v4362 = vadd.f32 0.0, %v4361
      %v4363 = vpop.f32.mrf.mxu0
      %4364 = vdwg.mxu0
      %4365 = vmatprep.subr.mxu0 0.0
      %4366 = vmatpush1.msra.mxu0 %v3680
      %4367 = vmatprep.subr.mxu0 0.0
      %4368 = vmatpush1.msra.mxu0 %v3679
      %4369 = vmatprep.subr.mxu0 0.0
      %4370 = vmatpush1.msra.mxu0 %v3678
      %4371 = vmatprep.subr.mxu0 0.0
      %4372 = vmatpush1.msra.mxu0 %v3677
      %4373 = vmatprep.subr.mxu0 0.0
      %4374 = vmatpush1.msra.mxu0 %v3676
      %4375 = vmatprep.subr.mxu0 0.0
      %4376 = vmatpush1.msra.mxu0 %v3675
      %4377 = vmatprep.subr.mxu0 0.0
      %4378 = vmatpush1.msra.mxu0 %v3674
      %4379 = vmatprep.subr.mxu0 0.0
      %4380 = vmatpush1.msra.mxu0 %v3673
      %4381 = vmatprep.subr.mxu0 0.0
      %4382 = vmatpush1.msra.mxu0 %v3672
      %4383 = vmatprep.subr.mxu0 0.0
      %4384 = vmatpush1.msra.mxu0 %v3671
      %4385 = vmatprep.subr.mxu0 0.0
      %4386 = vmatpush1.msra.mxu0 %v3670
      %4387 = vmatprep.subr.mxu0 0.0
      %4388 = vmatpush1.msra.mxu0 %v3669
      %4389 = vmatprep.subr.mxu0 0.0
      %4390 = vmatpush1.msra.mxu0 %v3668
      %4391 = vmatprep.subr.mxu0 0.0
      %4392 = vmatpush1.msra.mxu0 %v3667
      %4393 = vmatprep.subr.mxu0 0.0
      %4394 = vmatpush1.msra.mxu0 %v3666
      %4395 = vmatprep.subr.mxu0 0.0
      %4396 = vmatpush1.msra.mxu0 %v3665
      %4397 = vmatprep.subr.mxu0 0.0
      %4398 = vmatpush2.msra.mxu0 %v3696
      %4399 = vmatprep.subr.mxu0 0.0
      %4400 = vmatpush2.msra.mxu0 %v3695
      %4401 = vmatprep.subr.mxu0 0.0
      %4402 = vmatpush2.msra.mxu0 %v3694
      %4403 = vmatprep.subr.mxu0 0.0
      %4404 = vmatpush2.msra.mxu0 %v3693
      %4405 = vmatprep.subr.mxu0 0.0
      %4406 = vmatpush2.msra.mxu0 %v3692
      %4407 = vmatprep.subr.mxu0 0.0
      %4408 = vmatpush2.msra.mxu0 %v3691
      %4409 = vmatprep.subr.mxu0 0.0
      %4410 = vmatpush2.msra.mxu0 %v3690
      %4411 = vmatprep.subr.mxu0 0.0
      %4412 = vmatpush2.msra.mxu0 %v3689
      %4413 = vmatprep.subr.mxu0 0.0
      %4414 = vmatpush2.msra.mxu0 %v3688
      %4415 = vmatprep.subr.mxu0 0.0
      %4416 = vmatpush2.msra.mxu0 %v3687
      %4417 = vmatprep.subr.mxu0 0.0
      %4418 = vmatpush2.msra.mxu0 %v3686
      %4419 = vmatprep.subr.mxu0 0.0
      %4420 = vmatpush2.msra.mxu0 %v3685
      %4421 = vmatprep.subr.mxu0 0.0
      %4422 = vmatpush2.msra.mxu0 %v3684
      %4423 = vmatprep.subr.mxu0 0.0
      %4424 = vmatpush2.msra.mxu0 %v3683
      %4425 = vmatprep.subr.mxu0 0.0
      %4426 = vmatpush2.msra.mxu0 %v3682
      %4427 = vmatprep.subr.mxu0 0.0
      %4428 = vmatpush2.msra.mxu0 %v3681
      %4429 = vmatprep.mubr.f32.mxu0 %v3753
      %4430 = vmatmul.mubr.f32.gmra.mxu0 %v3750
      %v4431 = vpop.f32.mrf.mxu0
      %v4432 = vadd.f32 %v4247, %v4431
      %v4433 = vpop.f32.mrf.mxu0
      %4434 = vmatprep.mubr.f32.mxu0 %v3767
      %4435 = vmatmul.mubr.f32.gmra.mxu0 %v3765
      %v4436 = vpop.f32.mrf.mxu0
      %v4437 = vadd.f32 %v4252, %v4436
      %v4438 = vpop.f32.mrf.mxu0
      %4439 = vmatprep.mubr.f32.mxu0 %v3779
      %4440 = vmatmul.mubr.f32.gmra.mxu0 %v3777
      %v4441 = vpop.f32.mrf.mxu0
      %v4442 = vadd.f32 %v4257, %v4441
      %v4443 = vpop.f32.mrf.mxu0
      %4444 = vmatprep.mubr.f32.mxu0 %v3791
      %4445 = vmatmul.mubr.f32.gmra.mxu0 %v3789
      %v4446 = vpop.f32.mrf.mxu0
      %v4447 = vadd.f32 %v4262, %v4446
      %v4448 = vpop.f32.mrf.mxu0
      %4449 = vmatprep.mubr.f32.mxu0 %v3803
      %4450 = vmatmul.mubr.f32.gmra.mxu0 %v3801
      %v4451 = vpop.f32.mrf.mxu0
      %v4452 = vadd.f32 %v4267, %v4451
      %v4453 = vpop.f32.mrf.mxu0
      %4454 = vmatprep.mubr.f32.mxu0 %v3815
      %4455 = vmatmul.mubr.f32.gmra.mxu0 %v3813
      %v4456 = vpop.f32.mrf.mxu0
      %v4457 = vadd.f32 %v4272, %v4456
      %v4458 = vpop.f32.mrf.mxu0
      %4459 = vmatprep.mubr.f32.mxu0 %v3827
      %4460 = vmatmul.mubr.f32.gmra.mxu0 %v3825
      %v4461 = vpop.f32.mrf.mxu0
      %v4462 = vadd.f32 %v4277, %v4461
      %v4463 = vpop.f32.mrf.mxu0
      %4464 = vmatprep.mubr.f32.mxu0 %v3839
      %4465 = vmatmul.mubr.f32.gmra.mxu0 %v3837
      %v4466 = vpop.f32.mrf.mxu0
      %v4467 = vadd.f32 %v4282, %v4466
      %v4468 = vpop.f32.mrf.mxu0
      %4469 = vmatprep.mubr.f32.mxu0 %v3851
      %4470 = vmatmul.mubr.f32.gmra.mxu0 %v3849
      %v4471 = vpop.f32.mrf.mxu0
      %v4472 = vadd.f32 %v4287, %v4471
      %v4473 = vpop.f32.mrf.mxu0
      %4474 = vmatprep.mubr.f32.mxu0 %v3863
      %4475 = vmatmul.mubr.f32.gmra.mxu0 %v3861
      %v4476 = vpop.f32.mrf.mxu0
      %v4477 = vadd.f32 %v4292, %v4476
      %v4478 = vpop.f32.mrf.mxu0
      %4479 = vmatprep.mubr.f32.mxu0 %v3875
      %4480 = vmatmul.mubr.f32.gmra.mxu0 %v3873
      %v4481 = vpop.f32.mrf.mxu0
      %v4482 = vadd.f32 %v4297, %v4481
      %v4483 = vpop.f32.mrf.mxu0
      %4484 = vmatprep.mubr.f32.mxu0 %v3887
      %4485 = vmatmul.mubr.f32.gmra.mxu0 %v3885
      %v4486 = vpop.f32.mrf.mxu0
      %v4487 = vadd.f32 %v4302, %v4486
      %v4488 = vpop.f32.mrf.mxu0
      %4489 = vmatprep.mubr.f32.mxu0 %v3899
      %4490 = vmatmul.mubr.f32.gmra.mxu0 %v3897
      %v4491 = vpop.f32.mrf.mxu0
      %v4492 = vadd.f32 %v4307, %v4491
      %v4493 = vpop.f32.mrf.mxu0
      %4494 = vmatprep.mubr.f32.mxu0 %v3911
      %4495 = vmatmul.mubr.f32.gmra.mxu0 %v3909
      %v4496 = vpop.f32.mrf.mxu0
      %v4497 = vadd.f32 %v4312, %v4496
      %v4498 = vpop.f32.mrf.mxu0
      %4499 = vmatprep.mubr.f32.mxu0 %v3923
      %4500 = vmatmul.mubr.f32.gmra.mxu0 %v3921
      %v4501 = vpop.f32.mrf.mxu0
      %v4502 = vadd.f32 %v4317, %v4501
      %v4503 = vpop.f32.mrf.mxu0
      %4504 = vmatprep.mubr.f32.mxu0 %v3935
      %4505 = vmatmul.mubr.f32.gmra.mxu0 %v3933
      %v4506 = vpop.f32.mrf.mxu0
      %v4507 = vadd.f32 %v4322, %v4506
      %v4508 = vpop.f32.mrf.mxu0
      %4509 = vmatprep.mubr.f32.mxu0 %v3947
      %4510 = vmatmul.mubr.f32.gmra.mxu0 %v3945
      %v4511 = vpop.f32.mrf.mxu0
      %v4512 = vadd.f32 %v4327, %v4511
      %v4513 = vpop.f32.mrf.mxu0
      %4514 = vmatprep.mubr.f32.mxu0 %v3959
      %4515 = vmatmul.mubr.f32.gmra.mxu0 %v3957
      %v4516 = vpop.f32.mrf.mxu0
      %v4517 = vadd.f32 %v4332, %v4516
      %v4518 = vpop.f32.mrf.mxu0
      %4519 = vmatprep.mubr.f32.mxu0 %v3971
      %4520 = vmatmul.mubr.f32.gmra.mxu0 %v3969
      %v4521 = vpop.f32.mrf.mxu0
      %v4522 = vadd.f32 %v4337, %v4521
      %v4523 = vpop.f32.mrf.mxu0
      %4524 = vmatprep.mubr.f32.mxu0 %v3983
      %4525 = vmatmul.mubr.f32.gmra.mxu0 %v3981
      %v4526 = vpop.f32.mrf.mxu0
      %v4527 = vadd.f32 %v4342, %v4526
      %v4528 = vpop.f32.mrf.mxu0
      %4529 = vmatprep.mubr.f32.mxu0 %v3995
      %4530 = vmatmul.mubr.f32.gmra.mxu0 %v3993
      %v4531 = vpop.f32.mrf.mxu0
      %v4532 = vadd.f32 %v4347, %v4531
      %v4533 = vpop.f32.mrf.mxu0
      %4534 = vmatprep.mubr.f32.mxu0 %v4007
      %4535 = vmatmul.mubr.f32.gmra.mxu0 %v4005
      %v4536 = vpop.f32.mrf.mxu0
      %v4537 = vadd.f32 %v4352, %v4536
      %v4538 = vpop.f32.mrf.mxu0
      %4539 = vmatprep.mubr.f32.mxu0 %v4019
      %4540 = vmatmul.mubr.f32.gmra.mxu0 %v4017
      %v4541 = vpop.f32.mrf.mxu0
      %v4542 = vadd.f32 %v4357, %v4541
      %v4543 = vpop.f32.mrf.mxu0
      %4544 = vmatprep.mubr.f32.mxu0 %v4031
      %4545 = vmatmul.mubr.f32.gmra.mxu0 %v4029
      %v4546 = vpop.f32.mrf.mxu0
      %v4547 = vadd.f32 %v4362, %v4546
      %v4548 = vpop.f32.mrf.mxu0
      %4549 = vdwg.mxu0
      %4550 = vmatprep.subr.mxu0 0.0
      %4551 = vmatpush1.msra.mxu0 %v3712
      %4552 = vmatprep.subr.mxu0 0.0
      %4553 = vmatpush1.msra.mxu0 %v3711
      %4554 = vmatprep.subr.mxu0 0.0
      %4555 = vmatpush1.msra.mxu0 %v3710
      %4556 = vmatprep.subr.mxu0 0.0
      %4557 = vmatpush1.msra.mxu0 %v3709
      %4558 = vmatprep.subr.mxu0 0.0
      %4559 = vmatpush1.msra.mxu0 %v3708
      %4560 = vmatprep.subr.mxu0 0.0
      %4561 = vmatpush1.msra.mxu0 %v3707
      %4562 = vmatprep.subr.mxu0 0.0
      %4563 = vmatpush1.msra.mxu0 %v3706
      %4564 = vmatprep.subr.mxu0 0.0
      %4565 = vmatpush1.msra.mxu0 %v3705
      %4566 = vmatprep.subr.mxu0 0.0
      %4567 = vmatpush1.msra.mxu0 %v3704
      %4568 = vmatprep.subr.mxu0 0.0
      %4569 = vmatpush1.msra.mxu0 %v3703
      %4570 = vmatprep.subr.mxu0 0.0
      %4571 = vmatpush1.msra.mxu0 %v3702
      %4572 = vmatprep.subr.mxu0 0.0
      %4573 = vmatpush1.msra.mxu0 %v3701
      %4574 = vmatprep.subr.mxu0 0.0
      %4575 = vmatpush1.msra.mxu0 %v3700
      %4576 = vmatprep.subr.mxu0 0.0
      %4577 = vmatpush1.msra.mxu0 %v3699
      %4578 = vmatprep.subr.mxu0 0.0
      %4579 = vmatpush1.msra.mxu0 %v3698
      %4580 = vmatprep.subr.mxu0 0.0
      %4581 = vmatpush1.msra.mxu0 %v3697
      %4582 = vmatprep.subr.mxu0 0.0
      %4583 = vmatpush2.msra.mxu0 %v3728
      %4584 = vmatprep.subr.mxu0 0.0
      %4585 = vmatpush2.msra.mxu0 %v3727
      %4586 = vmatprep.subr.mxu0 0.0
      %4587 = vmatpush2.msra.mxu0 %v3726
      %4588 = vmatprep.subr.mxu0 0.0
      %4589 = vmatpush2.msra.mxu0 %v3725
      %4590 = vmatprep.subr.mxu0 0.0
      %4591 = vmatpush2.msra.mxu0 %v3724
      %4592 = vmatprep.subr.mxu0 0.0
      %4593 = vmatpush2.msra.mxu0 %v3723
      %4594 = vmatprep.subr.mxu0 0.0
      %4595 = vmatpush2.msra.mxu0 %v3722
      %4596 = vmatprep.subr.mxu0 0.0
      %4597 = vmatpush2.msra.mxu0 %v3721
      %4598 = vmatprep.subr.mxu0 0.0
      %4599 = vmatpush2.msra.mxu0 %v3720
      %4600 = vmatprep.subr.mxu0 0.0
      %4601 = vmatpush2.msra.mxu0 %v3719
      %4602 = vmatprep.subr.mxu0 0.0
      %4603 = vmatpush2.msra.mxu0 %v3718
      %4604 = vmatprep.subr.mxu0 0.0
      %4605 = vmatpush2.msra.mxu0 %v3717
      %4606 = vmatprep.subr.mxu0 0.0
      %4607 = vmatpush2.msra.mxu0 %v3716
      %4608 = vmatprep.subr.mxu0 0.0
      %4609 = vmatpush2.msra.mxu0 %v3715
      %4610 = vmatprep.subr.mxu0 0.0
      %4611 = vmatpush2.msra.mxu0 %v3714
      %4612 = vmatprep.subr.mxu0 0.0
      %4613 = vmatpush2.msra.mxu0 %v3713
      %4614 = vmatprep.mubr.f32.mxu0 %v3759
      %4615 = vmatmul.mubr.f32.gmra.mxu0 %v3756
      %v4616 = vpop.f32.mrf.mxu0
      %v4617 = vadd.f32 %v4432, %v4616
      %v4618 = vpop.f32.mrf.mxu0
      %4619 = vmatprep.mubr.f32.mxu0 %v3771
      %4620 = vmatmul.mubr.f32.gmra.mxu0 %v3769
      %v4621 = vpop.f32.mrf.mxu0
      %v4622 = vadd.f32 %v4437, %v4621
      %v4623 = vpop.f32.mrf.mxu0
      %4624 = vmatprep.mubr.f32.mxu0 %v3783
      %4625 = vmatmul.mubr.f32.gmra.mxu0 %v3781
      %v4626 = vpop.f32.mrf.mxu0
      %v4627 = vadd.f32 %v4442, %v4626
      %v4628 = vpop.f32.mrf.mxu0
      %4629 = vmatprep.mubr.f32.mxu0 %v3795
      %4630 = vmatmul.mubr.f32.gmra.mxu0 %v3793
      %v4631 = vpop.f32.mrf.mxu0
      %v4632 = vadd.f32 %v4447, %v4631
      %v4633 = vpop.f32.mrf.mxu0
      %4634 = vmatprep.mubr.f32.mxu0 %v3807
      %4635 = vmatmul.mubr.f32.gmra.mxu0 %v3805
      %v4636 = vpop.f32.mrf.mxu0
      %v4637 = vadd.f32 %v4452, %v4636
      %v4638 = vpop.f32.mrf.mxu0
      %4639 = vmatprep.mubr.f32.mxu0 %v3819
      %4640 = vmatmul.mubr.f32.gmra.mxu0 %v3817
      %v4641 = vpop.f32.mrf.mxu0
      %v4642 = vadd.f32 %v4457, %v4641
      %v4643 = vpop.f32.mrf.mxu0
      %4644 = vmatprep.mubr.f32.mxu0 %v3831
      %4645 = vmatmul.mubr.f32.gmra.mxu0 %v3829
      %v4646 = vpop.f32.mrf.mxu0
      %v4647 = vadd.f32 %v4462, %v4646
      %v4648 = vpop.f32.mrf.mxu0
      %4649 = vmatprep.mubr.f32.mxu0 %v3843
      %4650 = vmatmul.mubr.f32.gmra.mxu0 %v3841
      %v4651 = vpop.f32.mrf.mxu0
      %v4652 = vadd.f32 %v4467, %v4651
      %v4653 = vpop.f32.mrf.mxu0
      %4654 = vmatprep.mubr.f32.mxu0 %v3855
      %4655 = vmatmul.mubr.f32.gmra.mxu0 %v3853
      %v4656 = vpop.f32.mrf.mxu0
      %v4657 = vadd.f32 %v4472, %v4656
      %v4658 = vpop.f32.mrf.mxu0
      %4659 = vmatprep.mubr.f32.mxu0 %v3867
      %4660 = vmatmul.mubr.f32.gmra.mxu0 %v3865
      %v4661 = vpop.f32.mrf.mxu0
      %v4662 = vadd.f32 %v4477, %v4661
      %v4663 = vpop.f32.mrf.mxu0
      %4664 = vmatprep.mubr.f32.mxu0 %v3879
      %4665 = vmatmul.mubr.f32.gmra.mxu0 %v3877
      %v4666 = vpop.f32.mrf.mxu0
      %v4667 = vadd.f32 %v4482, %v4666
      %v4668 = vpop.f32.mrf.mxu0
      %4669 = vmatprep.mubr.f32.mxu0 %v3891
      %4670 = vmatmul.mubr.f32.gmra.mxu0 %v3889
      %v4671 = vpop.f32.mrf.mxu0
      %v4672 = vadd.f32 %v4487, %v4671
      %v4673 = vpop.f32.mrf.mxu0
      %4674 = vmatprep.mubr.f32.mxu0 %v3903
      %4675 = vmatmul.mubr.f32.gmra.mxu0 %v3901
      %v4676 = vpop.f32.mrf.mxu0
      %v4677 = vadd.f32 %v4492, %v4676
      %v4678 = vpop.f32.mrf.mxu0
      %4679 = vmatprep.mubr.f32.mxu0 %v3915
      %4680 = vmatmul.mubr.f32.gmra.mxu0 %v3913
      %v4681 = vpop.f32.mrf.mxu0
      %v4682 = vadd.f32 %v4497, %v4681
      %v4683 = vpop.f32.mrf.mxu0
      %4684 = vmatprep.mubr.f32.mxu0 %v3927
      %4685 = vmatmul.mubr.f32.gmra.mxu0 %v3925
      %v4686 = vpop.f32.mrf.mxu0
      %v4687 = vadd.f32 %v4502, %v4686
      %v4688 = vpop.f32.mrf.mxu0
      %4689 = vmatprep.mubr.f32.mxu0 %v3939
      %4690 = vmatmul.mubr.f32.gmra.mxu0 %v3937
      %v4691 = vpop.f32.mrf.mxu0
      %v4692 = vadd.f32 %v4507, %v4691
      %v4693 = vpop.f32.mrf.mxu0
      %4694 = vmatprep.mubr.f32.mxu0 %v3951
      %4695 = vmatmul.mubr.f32.gmra.mxu0 %v3949
      %v4696 = vpop.f32.mrf.mxu0
      %v4697 = vadd.f32 %v4512, %v4696
      %v4698 = vpop.f32.mrf.mxu0
      %4699 = vmatprep.mubr.f32.mxu0 %v3963
      %4700 = vmatmul.mubr.f32.gmra.mxu0 %v3961
      %v4701 = vpop.f32.mrf.mxu0
      %v4702 = vadd.f32 %v4517, %v4701
      %v4703 = vpop.f32.mrf.mxu0
      %4704 = vmatprep.mubr.f32.mxu0 %v3975
      %4705 = vmatmul.mubr.f32.gmra.mxu0 %v3973
      %v4706 = vpop.f32.mrf.mxu0
      %v4707 = vadd.f32 %v4522, %v4706
      %v4708 = vpop.f32.mrf.mxu0
      %4709 = vmatprep.mubr.f32.mxu0 %v3987
      %4710 = vmatmul.mubr.f32.gmra.mxu0 %v3985
      %v4711 = vpop.f32.mrf.mxu0
      %v4712 = vadd.f32 %v4527, %v4711
      %v4713 = vpop.f32.mrf.mxu0
      %4714 = vmatprep.mubr.f32.mxu0 %v3999
      %4715 = vmatmul.mubr.f32.gmra.mxu0 %v3997
      %v4716 = vpop.f32.mrf.mxu0
      %v4717 = vadd.f32 %v4532, %v4716
      %v4718 = vpop.f32.mrf.mxu0
      %4719 = vmatprep.mubr.f32.mxu0 %v4011
      %4720 = vmatmul.mubr.f32.gmra.mxu0 %v4009
      %v4721 = vpop.f32.mrf.mxu0
      %v4722 = vadd.f32 %v4537, %v4721
      %v4723 = vpop.f32.mrf.mxu0
      %4724 = vmatprep.mubr.f32.mxu0 %v4023
      %4725 = vmatmul.mubr.f32.gmra.mxu0 %v4021
      %v4726 = vpop.f32.mrf.mxu0
      %v4727 = vadd.f32 %v4542, %v4726
      %v4728 = vpop.f32.mrf.mxu0
      %4729 = vmatprep.mubr.f32.mxu0 %v4035
      %4730 = vmatmul.mubr.f32.gmra.mxu0 %v4033
      %v4731 = vpop.f32.mrf.mxu0
      %v4732 = vadd.f32 %v4547, %v4731
      %v4733 = vpop.f32.mrf.mxu0
      %4734 = vdwg.mxu0
      %v4735 = vadd.f32 %v3502, %v4617
      %v4736 = vadd.f32 %v3507, %v4622
      %v4737 = vadd.f32 %v3512, %v4627
      %v4738 = vadd.f32 %v3517, %v4632
      %v4739 = vadd.f32 %v3522, %v4637
      %v4740 = vadd.f32 %v3527, %v4642
      %v4741 = vadd.f32 %v3532, %v4647
      %v4742 = vadd.f32 %v3537, %v4652
      %v4743 = vadd.f32 %v3542, %v4657
      %v4744 = vadd.f32 %v3547, %v4662
      %v4745 = vadd.f32 %v3552, %v4667
      %v4746 = vadd.f32 %v3557, %v4672
      %v4747 = vadd.f32 %v3562, %v4677
      %v4748 = vadd.f32 %v3567, %v4682
      %v4749 = vadd.f32 %v3572, %v4687
      %v4750 = vadd.f32 %v3577, %v4692
      %v4751 = vadd.f32 %v3582, %v4697
      %v4752 = vadd.f32 %v3587, %v4702
      %v4753 = vadd.f32 %v3592, %v4707
      %v4754 = vadd.f32 %v3597, %v4712
      %v4755 = vadd.f32 %v3602, %v4717
      %v4756 = vadd.f32 %v3607, %v4722
      %v4757 = vadd.f32 %v3612, %v4727
      %v4758 = vadd.f32 %v3617, %v4732
      %v4759 = vld [vmem:[#allocation2 + $0x60] sm:$0xff]
      %v4760 = vld [vmem:[#allocation2 + $0x68] sm:$0xff]
      %v4761 = vld [vmem:[#allocation2 + $0x70] sm:$0xff]
      %v4762 = vld [vmem:[#allocation2 + $0x78] sm:$0xff]
      %v4763 = vld [vmem:[#allocation2 + $0x80] sm:$0xff]
      %v4764 = vld [vmem:[#allocation2 + $0x88] sm:$0xff]
      %v4765 = vld [vmem:[#allocation2 + $0x90] sm:$0xff]
      %v4766 = vld [vmem:[#allocation2 + $0x98] sm:$0xff]
      %v4767 = vld [vmem:[#allocation2 + $0xa0] sm:$0xff]
      %v4768 = vld [vmem:[#allocation2 + $0xa8] sm:$0xff]
      %v4769 = vld [vmem:[#allocation2 + $0xb0] sm:$0xff]
      %v4770 = vld [vmem:[#allocation2 + $0xb8] sm:$0xff]
      %v4771 = vld [vmem:[#allocation2 + $0xc0] sm:$0xff]
      %v4772 = vld [vmem:[#allocation2 + $0xc8] sm:$0xff]
      %v4773 = vld [vmem:[#allocation2 + $0xd0] sm:$0xff]
      %v4774 = vld [vmem:[#allocation2 + $0xd8] sm:$0xff]
      %v4775 = vld [vmem:[#allocation2 + $0xe0] sm:$0xff]
      %v4776 = vld [vmem:[#allocation2 + $0xe8] sm:$0xff]
      %v4777 = vld [vmem:[#allocation2 + $0xf0] sm:$0xff]
      %v4778 = vld [vmem:[#allocation2 + $0xf8] sm:$0xff]
      %v4779 = vld [vmem:[#allocation2 + $0x100] sm:$0xff]
      %v4780 = vld [vmem:[#allocation2 + $0x108] sm:$0xff]
      %v4781 = vld [vmem:[#allocation2 + $0x110] sm:$0xff]
      %v4782 = vld [vmem:[#allocation2 + $0x118] sm:$0xff]
      %v4783 = vld [vmem:[#allocation2 + $0x120] sm:$0xff]
      %v4784 = vld [vmem:[#allocation2 + $0x128] sm:$0xff]
      %v4785 = vld [vmem:[#allocation2 + $0x130] sm:$0xff]
      %v4786 = vld [vmem:[#allocation2 + $0x138] sm:$0xff]
      %v4787 = vld [vmem:[#allocation2 + $0x140] sm:$0xff]
      %v4788 = vld [vmem:[#allocation2 + $0x148] sm:$0xff]
      %v4789 = vld [vmem:[#allocation2 + $0x150] sm:$0xff]
      %v4790 = vld [vmem:[#allocation2 + $0x158] sm:$0xff]
      %v4791 = vld [vmem:[#allocation2 + $0x160] sm:$0xff]
      %v4792 = vld [vmem:[#allocation2 + $0x168] sm:$0xff]
      %v4793 = vld [vmem:[#allocation2 + $0x170] sm:$0xff]
      %v4794 = vld [vmem:[#allocation2 + $0x178] sm:$0xff]
      %v4795 = vld [vmem:[#allocation2 + $0x180] sm:$0xff]
      %v4796 = vld [vmem:[#allocation2 + $0x188] sm:$0xff]
      %v4797 = vld [vmem:[#allocation2 + $0x190] sm:$0xff]
      %v4798 = vld [vmem:[#allocation2 + $0x198] sm:$0xff]
      %v4799 = vld [vmem:[#allocation2 + $0x1a0] sm:$0xff]
      %v4800 = vld [vmem:[#allocation2 + $0x1a8] sm:$0xff]
      %v4801 = vld [vmem:[#allocation2 + $0x1b0] sm:$0xff]
      %v4802 = vld [vmem:[#allocation2 + $0x1b8] sm:$0xff]
      %v4803 = vld [vmem:[#allocation2 + $0x1c0] sm:$0xff]
      %v4804 = vld [vmem:[#allocation2 + $0x1c8] sm:$0xff]
      %v4805 = vld [vmem:[#allocation2 + $0x1d0] sm:$0xff]
      %v4806 = vld [vmem:[#allocation2 + $0x1d8] sm:$0xff]
      %v4807 = vld [vmem:[#allocation2 + $0x1e0] sm:$0xff]
      %v4808 = vld [vmem:[#allocation2 + $0x1e8] sm:$0xff]
      %v4809 = vld [vmem:[#allocation2 + $0x1f0] sm:$0xff]
      %v4810 = vld [vmem:[#allocation2 + $0x1f8] sm:$0xff]
      %v4811 = vld [vmem:[#allocation2 + $0x200] sm:$0xff]
      %v4812 = vld [vmem:[#allocation2 + $0x208] sm:$0xff]
      %v4813 = vld [vmem:[#allocation2 + $0x210] sm:$0xff]
      %v4814 = vld [vmem:[#allocation2 + $0x218] sm:$0xff]
      %v4815 = vld [vmem:[#allocation2 + $0x220] sm:$0xff]
      %v4816 = vld [vmem:[#allocation2 + $0x228] sm:$0xff]
      %v4817 = vld [vmem:[#allocation2 + $0x230] sm:$0xff]
      %v4818 = vld [vmem:[#allocation2 + $0x238] sm:$0xff]
      %v4819 = vld [vmem:[#allocation2 + $0x240] sm:$0xff]
      %v4820 = vld [vmem:[#allocation2 + $0x248] sm:$0xff]
      %v4821 = vld [vmem:[#allocation2 + $0x250] sm:$0xff]
      %v4822 = vld [vmem:[#allocation2 + $0x258] sm:$0xff]
      %v4823 = vld [vmem:[#allocation2 + $0x260] sm:$0xff]
      %v4824 = vld [vmem:[#allocation2 + $0x268] sm:$0xff]
      %v4825 = vld [vmem:[#allocation2 + $0x270] sm:$0xff]
      %v4826 = vld [vmem:[#allocation2 + $0x278] sm:$0xff]
      %v4827 = vld [vmem:[#allocation2 + $0x280] sm:$0xff]
      %v4828 = vld [vmem:[#allocation2 + $0x288] sm:$0xff]
      %v4829 = vld [vmem:[#allocation2 + $0x290] sm:$0xff]
      %v4830 = vld [vmem:[#allocation2 + $0x298] sm:$0xff]
      %v4831 = vld [vmem:[#allocation2 + $0x2a0] sm:$0xff]
      %v4832 = vld [vmem:[#allocation2 + $0x2a8] sm:$0xff]
      %v4833 = vld [vmem:[#allocation2 + $0x2b0] sm:$0xff]
      %v4834 = vld [vmem:[#allocation2 + $0x2b8] sm:$0xff]
      %v4835 = vld [vmem:[#allocation2 + $0x2c0] sm:$0xff]
      %v4836 = vld [vmem:[#allocation2 + $0x2c8] sm:$0xff]
      %v4837 = vld [vmem:[#allocation2 + $0x2d0] sm:$0xff]
      %v4838 = vld [vmem:[#allocation2 + $0x2d8] sm:$0xff]
      %v4839 = vld [vmem:[#allocation2 + $0x2e0] sm:$0xff]
      %v4840 = vld [vmem:[#allocation2 + $0x2e8] sm:$0xff]
      %v4841 = vld [vmem:[#allocation2 + $0x2f0] sm:$0xff]
      %v4842 = vld [vmem:[#allocation2 + $0x2f8] sm:$0xff]
      %v4843 = vld [vmem:[#allocation2 + $0x300] sm:$0xff]
      %v4844 = vld [vmem:[#allocation2 + $0x308] sm:$0xff]
      %v4845 = vld [vmem:[#allocation2 + $0x310] sm:$0xff]
      %v4846 = vld [vmem:[#allocation2 + $0x318] sm:$0xff]
      %v4847 = vld [vmem:[#allocation2 + $0x320] sm:$0xff]
      %v4848 = vld [vmem:[#allocation2 + $0x328] sm:$0xff]
      %v4849 = vld [vmem:[#allocation2 + $0x330] sm:$0xff]
      %v4850 = vld [vmem:[#allocation2 + $0x338] sm:$0xff]
      %v4851 = vld [vmem:[#allocation2 + $0x340] sm:$0xff]
      %v4852 = vld [vmem:[#allocation2 + $0x348] sm:$0xff]
      %v4853 = vld [vmem:[#allocation2 + $0x350] sm:$0xff]
      %v4854 = vld [vmem:[#allocation2 + $0x358] sm:$0xff]
      %v4855 = vld [vmem:[#allocation2 + $0x360] sm:$0xff]
      %v4856 = vld [vmem:[#allocation2 + $0x368] sm:$0xff]
      %v4857 = vld [vmem:[#allocation2 + $0x370] sm:$0xff]
      %v4858 = vld [vmem:[#allocation2 + $0x378] sm:$0xff]
      %v4859 = vld [vmem:[#allocation2 + $0x380] sm:$0xff]
      %v4860 = vld [vmem:[#allocation2 + $0x388] sm:$0xff]
      %v4861 = vld [vmem:[#allocation2 + $0x390] sm:$0xff]
      %v4862 = vld [vmem:[#allocation2 + $0x398] sm:$0xff]
      %v4863 = vld [vmem:[#allocation2 + $0x3a0] sm:$0xff]
      %v4864 = vld [vmem:[#allocation2 + $0x3a8] sm:$0xff]
      %v4865 = vld [vmem:[#allocation2 + $0x3b0] sm:$0xff]
      %v4866 = vld [vmem:[#allocation2 + $0x3b8] sm:$0xff]
      %v4867 = vld [vmem:[#allocation2 + $0x3c0] sm:$0xff]
      %v4868 = vld [vmem:[#allocation2 + $0x3c8] sm:$0xff]
      %v4869 = vld [vmem:[#allocation2 + $0x3d0] sm:$0xff]
      %v4870 = vld [vmem:[#allocation2 + $0x3d8] sm:$0xff]
      %v4871 = vld [vmem:[#allocation2 + $0x3e0] sm:$0xff]
      %v4872 = vld [vmem:[#allocation2 + $0x3e8] sm:$0xff]
      %v4873 = vld [vmem:[#allocation2 + $0x3f0] sm:$0xff]
      %v4874 = vld [vmem:[#allocation2 + $0x3f8] sm:$0xff]
      %v4875 = vld [vmem:[#allocation2 + $0x400] sm:$0xff]
      %v4876 = vld [vmem:[#allocation2 + $0x408] sm:$0xff]
      %v4877 = vld [vmem:[#allocation2 + $0x410] sm:$0xff]
      %v4878 = vld [vmem:[#allocation2 + $0x418] sm:$0xff]
      %v4879 = vld [vmem:[#allocation2 + $0x420] sm:$0xff]
      %v4880 = vld [vmem:[#allocation2 + $0x428] sm:$0xff]
      %v4881 = vld [vmem:[#allocation2 + $0x430] sm:$0xff]
      %v4882 = vld [vmem:[#allocation2 + $0x438] sm:$0xff]
      %v4883 = vld [vmem:[#allocation2 + $0x440] sm:$0xff]
      %v4884 = vld [vmem:[#allocation2 + $0x448] sm:$0xff]
      %v4885 = vld [vmem:[#allocation2 + $0x450] sm:$0xff]
      %v4886 = vld [vmem:[#allocation2 + $0x458] sm:$0xff]
      %v4887 = vld [vmem:[#allocation2 + $0x460] sm:$0xff]
      %v4888 = vld [vmem:[#allocation2 + $0x468] sm:$0xff]
      %v4889 = vld [vmem:[#allocation2 + $0x470] sm:$0xff]
      %v4890 = vld [vmem:[#allocation2 + $0x478] sm:$0xff]
      %v4891 = vld [vmem:[#allocation2 + $0x480] sm:$0xff]
      %v4892 = vld [vmem:[#allocation2 + $0x488] sm:$0xff]
      %v4893 = vld [vmem:[#allocation2 + $0x490] sm:$0xff]
      %v4894 = vld [vmem:[#allocation2 + $0x498] sm:$0xff]
      %v4895 = vld [vmem:[#allocation2 + $0x4a0] sm:$0xff]
      %v4896 = vld [vmem:[#allocation2 + $0x4a8] sm:$0xff]
      %v4897 = vld [vmem:[#allocation2 + $0x4b0] sm:$0xff]
      %v4898 = vld [vmem:[#allocation2 + $0x4b8] sm:$0xff]
      %v4899 = vld [vmem:[#allocation2 + $0x4c0] sm:$0xff]
      %v4900 = vld [vmem:[#allocation2 + $0x4c8] sm:$0xff]
      %v4901 = vld [vmem:[#allocation2 + $0x4d0] sm:$0xff]
      %v4902 = vld [vmem:[#allocation2 + $0x4d8] sm:$0xff]
      %s4903 = scalar_lea.vmem %s3, 2304
      %v4904 = vld [vmem:[%s4903] sm:$0xff]
      %v4905 = vld [vmem:[%s4903 + $0x8] sm:$0xff]
      %v4906 = vld [vmem:[%s4903 + $0x10] sm:$0xff]
      %v4907 = vld [vmem:[%s4903 + $0x18] sm:$0xff]
      %v4908 = vld [vmem:[%s4903 + $0x20] sm:$0xff]
      %v4909 = vld [vmem:[%s4903 + $0x28] sm:$0xff]
      %v4910 = vld [vmem:[%s4903 + $0x30] sm:$0xff]
      %v4911 = vld [vmem:[%s4903 + $0x38] sm:$0xff]
      %v4912 = vld [vmem:[%s4903 + $0x40] sm:$0xff]
      %v4913 = vld [vmem:[%s4903 + $0x48] sm:$0xff]
      %v4914 = vld [vmem:[%s4903 + $0x50] sm:$0xff]
      %v4915 = vld [vmem:[%s4903 + $0x58] sm:$0xff]
      %v4916 = vld [vmem:[%s4903 + $0x60] sm:$0xff]
      %v4917 = vld [vmem:[%s4903 + $0x68] sm:$0xff]
      %v4918 = vld [vmem:[%s4903 + $0x70] sm:$0xff]
      %v4919 = vld [vmem:[%s4903 + $0x78] sm:$0xff]
      %v4920 = vld [vmem:[%s4903 + $0x80] sm:$0xff]
      %v4921 = vld [vmem:[%s4903 + $0x88] sm:$0xff]
      %v4922 = vld [vmem:[%s4903 + $0x90] sm:$0xff]
      %v4923 = vld [vmem:[%s4903 + $0x98] sm:$0xff]
      %v4924 = vld [vmem:[%s4903 + $0xa0] sm:$0xff]
      %v4925 = vld [vmem:[%s4903 + $0xa8] sm:$0xff]
      %v4926 = vld [vmem:[%s4903 + $0xb0] sm:$0xff]
      %v4927 = vld [vmem:[%s4903 + $0xb8] sm:$0xff]
      %v4928 = vld [vmem:[%s4903 + $0xc0] sm:$0xff]
      %v4929 = vld [vmem:[%s4903 + $0xc8] sm:$0xff]
      %v4930 = vld [vmem:[%s4903 + $0xd0] sm:$0xff]
      %v4931 = vld [vmem:[%s4903 + $0xd8] sm:$0xff]
      %v4932 = vld [vmem:[%s4903 + $0xe0] sm:$0xff]
      %v4933 = vld [vmem:[%s4903 + $0xe8] sm:$0xff]
      %v4934 = vld [vmem:[%s4903 + $0xf0] sm:$0xff]
      %v4935 = vld [vmem:[%s4903 + $0xf8] sm:$0xff]
      %v4936 = vld [vmem:[%s4903 + $0x100] sm:$0xff]
      %v4937 = vld [vmem:[%s4903 + $0x108] sm:$0xff]
      %v4938 = vld [vmem:[%s4903 + $0x110] sm:$0xff]
      %v4939 = vld [vmem:[%s4903 + $0x118] sm:$0xff]
      %v4940 = vld [vmem:[%s4903 + $0x120] sm:$0xff]
      %v4941 = vld [vmem:[%s4903 + $0x128] sm:$0xff]
      %v4942 = vld [vmem:[%s4903 + $0x130] sm:$0xff]
      %v4943 = vld [vmem:[%s4903 + $0x138] sm:$0xff]
      %v4944 = vld [vmem:[%s4903 + $0x140] sm:$0xff]
      %v4945 = vld [vmem:[%s4903 + $0x148] sm:$0xff]
      %v4946 = vld [vmem:[%s4903 + $0x150] sm:$0xff]
      %v4947 = vld [vmem:[%s4903 + $0x158] sm:$0xff]
      %v4948 = vld [vmem:[%s4903 + $0x160] sm:$0xff]
      %v4949 = vld [vmem:[%s4903 + $0x168] sm:$0xff]
      %v4950 = vld [vmem:[%s4903 + $0x170] sm:$0xff]
      %v4951 = vld [vmem:[%s4903 + $0x178] sm:$0xff]
      %v4952 = vld [vmem:[%s4903 + $0x180] sm:$0xff]
      %v4953 = vld [vmem:[%s4903 + $0x188] sm:$0xff]
      %v4954 = vld [vmem:[%s4903 + $0x190] sm:$0xff]
      %v4955 = vld [vmem:[%s4903 + $0x198] sm:$0xff]
      %v4956 = vld [vmem:[%s4903 + $0x1a0] sm:$0xff]
      %v4957 = vld [vmem:[%s4903 + $0x1a8] sm:$0xff]
      %v4958 = vld [vmem:[%s4903 + $0x1b0] sm:$0xff]
      %v4959 = vld [vmem:[%s4903 + $0x1b8] sm:$0xff]
      %v4960 = vld [vmem:[%s4903 + $0x1c0] sm:$0xff]
      %v4961 = vld [vmem:[%s4903 + $0x1c8] sm:$0xff]
      %v4962 = vld [vmem:[%s4903 + $0x1d0] sm:$0xff]
      %v4963 = vld [vmem:[%s4903 + $0x1d8] sm:$0xff]
      %v4964 = vld [vmem:[%s4903 + $0x1e0] sm:$0xff]
      %v4965 = vld [vmem:[%s4903 + $0x1e8] sm:$0xff]
      %v4966 = vld [vmem:[%s4903 + $0x1f0] sm:$0xff]
      %v4967 = vld [vmem:[%s4903 + $0x1f8] sm:$0xff]
      %v4968 = vld [vmem:[%s4903 + $0x200] sm:$0xff]
      %v4969 = vld [vmem:[%s4903 + $0x208] sm:$0xff]
      %v4970 = vld [vmem:[%s4903 + $0x210] sm:$0xff]
      %v4971 = vld [vmem:[%s4903 + $0x218] sm:$0xff]
      %v4972 = vld [vmem:[%s4903 + $0x220] sm:$0xff]
      %v4973 = vld [vmem:[%s4903 + $0x228] sm:$0xff]
      %v4974 = vld [vmem:[%s4903 + $0x230] sm:$0xff]
      %v4975 = vld [vmem:[%s4903 + $0x238] sm:$0xff]
      %v4976 = vld [vmem:[%s4903 + $0x240] sm:$0xff]
      %v4977 = vld [vmem:[%s4903 + $0x248] sm:$0xff]
      %v4978 = vld [vmem:[%s4903 + $0x250] sm:$0xff]
      %v4979 = vld [vmem:[%s4903 + $0x258] sm:$0xff]
      %v4980 = vld [vmem:[%s4903 + $0x260] sm:$0xff]
      %v4981 = vld [vmem:[%s4903 + $0x268] sm:$0xff]
      %v4982 = vld [vmem:[%s4903 + $0x270] sm:$0xff]
      %v4983 = vld [vmem:[%s4903 + $0x278] sm:$0xff]
      %v4984 = vld [vmem:[%s4903 + $0x280] sm:$0xff]
      %v4985 = vld [vmem:[%s4903 + $0x288] sm:$0xff]
      %v4986 = vld [vmem:[%s4903 + $0x290] sm:$0xff]
      %v4987 = vld [vmem:[%s4903 + $0x298] sm:$0xff]
      %v4988 = vld [vmem:[%s4903 + $0x2a0] sm:$0xff]
      %v4989 = vld [vmem:[%s4903 + $0x2a8] sm:$0xff]
      %v4990 = vld [vmem:[%s4903 + $0x2b0] sm:$0xff]
      %v4991 = vld [vmem:[%s4903 + $0x2b8] sm:$0xff]
      %v4992 = vld [vmem:[%s4903 + $0x2c0] sm:$0xff]
      %v4993 = vld [vmem:[%s4903 + $0x2c8] sm:$0xff]
      %v4994 = vld [vmem:[%s4903 + $0x2d0] sm:$0xff]
      %v4995 = vld [vmem:[%s4903 + $0x2d8] sm:$0xff]
      %v4996 = vld [vmem:[%s4903 + $0x2e0] sm:$0xff]
      %v4997 = vld [vmem:[%s4903 + $0x2e8] sm:$0xff]
      %v4998 = vld [vmem:[%s4903 + $0x2f0] sm:$0xff]
      %v4999 = vld [vmem:[%s4903 + $0x2f8] sm:$0xff]
      %5000 = vmatprep.subr.mxu0 0.0
      %5001 = vmatpush1.msra.mxu0 %v4919
      %5002 = vmatprep.subr.mxu0 0.0
      %5003 = vmatpush1.msra.mxu0 %v4918
      %5004 = vmatprep.subr.mxu0 0.0
      %5005 = vmatpush1.msra.mxu0 %v4917
      %5006 = vmatprep.subr.mxu0 0.0
      %5007 = vmatpush1.msra.mxu0 %v4916
      %5008 = vmatprep.subr.mxu0 0.0
      %5009 = vmatpush1.msra.mxu0 %v4915
      %5010 = vmatprep.subr.mxu0 0.0
      %5011 = vmatpush1.msra.mxu0 %v4914
      %5012 = vmatprep.subr.mxu0 0.0
      %5013 = vmatpush1.msra.mxu0 %v4913
      %5014 = vmatprep.subr.mxu0 0.0
      %5015 = vmatpush1.msra.mxu0 %v4912
      %5016 = vmatprep.subr.mxu0 0.0
      %5017 = vmatpush1.msra.mxu0 %v4911
      %5018 = vmatprep.subr.mxu0 0.0
      %5019 = vmatpush1.msra.mxu0 %v4910
      %5020 = vmatprep.subr.mxu0 0.0
      %5021 = vmatpush1.msra.mxu0 %v4909
      %5022 = vmatprep.subr.mxu0 0.0
      %5023 = vmatpush1.msra.mxu0 %v4908
      %5024 = vmatprep.subr.mxu0 0.0
      %5025 = vmatpush1.msra.mxu0 %v4907
      %5026 = vmatprep.subr.mxu0 0.0
      %5027 = vmatpush1.msra.mxu0 %v4906
      %5028 = vmatprep.subr.mxu0 0.0
      %5029 = vmatpush1.msra.mxu0 %v4905
      %5030 = vmatprep.subr.mxu0 0.0
      %5031 = vmatpush1.msra.mxu0 %v4904
      %5032 = vmatprep.subr.mxu0 0.0
      %5033 = vmatpush2.msra.mxu0 %v4935
      %5034 = vmatprep.subr.mxu0 0.0
      %5035 = vmatpush2.msra.mxu0 %v4934
      %5036 = vmatprep.subr.mxu0 0.0
      %5037 = vmatpush2.msra.mxu0 %v4933
      %5038 = vmatprep.subr.mxu0 0.0
      %5039 = vmatpush2.msra.mxu0 %v4932
      %5040 = vmatprep.subr.mxu0 0.0
      %5041 = vmatpush2.msra.mxu0 %v4931
      %5042 = vmatprep.subr.mxu0 0.0
      %5043 = vmatpush2.msra.mxu0 %v4930
      %5044 = vmatprep.subr.mxu0 0.0
      %5045 = vmatpush2.msra.mxu0 %v4929
      %5046 = vmatprep.subr.mxu0 0.0
      %5047 = vmatpush2.msra.mxu0 %v4928
      %5048 = vmatprep.subr.mxu0 0.0
      %5049 = vmatpush2.msra.mxu0 %v4927
      %5050 = vmatprep.subr.mxu0 0.0
      %5051 = vmatpush2.msra.mxu0 %v4926
      %5052 = vmatprep.subr.mxu0 0.0
      %5053 = vmatpush2.msra.mxu0 %v4925
      %5054 = vmatprep.subr.mxu0 0.0
      %5055 = vmatpush2.msra.mxu0 %v4924
      %5056 = vmatprep.subr.mxu0 0.0
      %5057 = vmatpush2.msra.mxu0 %v4923
      %5058 = vmatprep.subr.mxu0 0.0
      %5059 = vmatpush2.msra.mxu0 %v4922
      %5060 = vmatprep.subr.mxu0 0.0
      %5061 = vmatpush2.msra.mxu0 %v4921
      %5062 = vmatprep.subr.mxu0 0.0
      %5063 = vmatpush2.msra.mxu0 %v4920
      %5064 = vmatprep.mubr.f32.mxu0 %v4760
      %5065 = vmatmul.mubr.f32.gmra.mxu0 %v4759
      %v5066 = vpop.f32.mrf.mxu0
      %v5067 = vadd.f32 0.0, %v5066
      %v5068 = vpop.f32.mrf.mxu0
      %5069 = vmatprep.mubr.f32.mxu0 %v4766
      %5070 = vmatmul.mubr.f32.gmra.mxu0 %v4765
      %v5071 = vpop.f32.mrf.mxu0
      %v5072 = vadd.f32 0.0, %v5071
      %v5073 = vpop.f32.mrf.mxu0
      %5074 = vmatprep.mubr.f32.mxu0 %v4772
      %5075 = vmatmul.mubr.f32.gmra.mxu0 %v4771
      %v5076 = vpop.f32.mrf.mxu0
      %v5077 = vadd.f32 0.0, %v5076
      %v5078 = vpop.f32.mrf.mxu0
      %5079 = vmatprep.mubr.f32.mxu0 %v4778
      %5080 = vmatmul.mubr.f32.gmra.mxu0 %v4777
      %v5081 = vpop.f32.mrf.mxu0
      %v5082 = vadd.f32 0.0, %v5081
      %v5083 = vpop.f32.mrf.mxu0
      %5084 = vmatprep.mubr.f32.mxu0 %v4784
      %5085 = vmatmul.mubr.f32.gmra.mxu0 %v4783
      %v5086 = vpop.f32.mrf.mxu0
      %v5087 = vadd.f32 0.0, %v5086
      %v5088 = vpop.f32.mrf.mxu0
      %5089 = vmatprep.mubr.f32.mxu0 %v4790
      %5090 = vmatmul.mubr.f32.gmra.mxu0 %v4789
      %v5091 = vpop.f32.mrf.mxu0
      %v5092 = vadd.f32 0.0, %v5091
      %v5093 = vpop.f32.mrf.mxu0
      %5094 = vmatprep.mubr.f32.mxu0 %v4796
      %5095 = vmatmul.mubr.f32.gmra.mxu0 %v4795
      %v5096 = vpop.f32.mrf.mxu0
      %v5097 = vadd.f32 0.0, %v5096
      %v5098 = vpop.f32.mrf.mxu0
      %5099 = vmatprep.mubr.f32.mxu0 %v4802
      %5100 = vmatmul.mubr.f32.gmra.mxu0 %v4801
      %v5101 = vpop.f32.mrf.mxu0
      %v5102 = vadd.f32 0.0, %v5101
      %v5103 = vpop.f32.mrf.mxu0
      %5104 = vmatprep.mubr.f32.mxu0 %v4808
      %5105 = vmatmul.mubr.f32.gmra.mxu0 %v4807
      %v5106 = vpop.f32.mrf.mxu0
      %v5107 = vadd.f32 0.0, %v5106
      %v5108 = vpop.f32.mrf.mxu0
      %5109 = vmatprep.mubr.f32.mxu0 %v4814
      %5110 = vmatmul.mubr.f32.gmra.mxu0 %v4813
      %v5111 = vpop.f32.mrf.mxu0
      %v5112 = vadd.f32 0.0, %v5111
      %v5113 = vpop.f32.mrf.mxu0
      %5114 = vmatprep.mubr.f32.mxu0 %v4820
      %5115 = vmatmul.mubr.f32.gmra.mxu0 %v4819
      %v5116 = vpop.f32.mrf.mxu0
      %v5117 = vadd.f32 0.0, %v5116
      %v5118 = vpop.f32.mrf.mxu0
      %5119 = vmatprep.mubr.f32.mxu0 %v4826
      %5120 = vmatmul.mubr.f32.gmra.mxu0 %v4825
      %v5121 = vpop.f32.mrf.mxu0
      %v5122 = vadd.f32 0.0, %v5121
      %v5123 = vpop.f32.mrf.mxu0
      %5124 = vmatprep.mubr.f32.mxu0 %v4832
      %5125 = vmatmul.mubr.f32.gmra.mxu0 %v4831
      %v5126 = vpop.f32.mrf.mxu0
      %v5127 = vadd.f32 0.0, %v5126
      %v5128 = vpop.f32.mrf.mxu0
      %5129 = vmatprep.mubr.f32.mxu0 %v4838
      %5130 = vmatmul.mubr.f32.gmra.mxu0 %v4837
      %v5131 = vpop.f32.mrf.mxu0
      %v5132 = vadd.f32 0.0, %v5131
      %v5133 = vpop.f32.mrf.mxu0
      %5134 = vmatprep.mubr.f32.mxu0 %v4844
      %5135 = vmatmul.mubr.f32.gmra.mxu0 %v4843
      %v5136 = vpop.f32.mrf.mxu0
      %v5137 = vadd.f32 0.0, %v5136
      %v5138 = vpop.f32.mrf.mxu0
      %5139 = vmatprep.mubr.f32.mxu0 %v4850
      %5140 = vmatmul.mubr.f32.gmra.mxu0 %v4849
      %v5141 = vpop.f32.mrf.mxu0
      %v5142 = vadd.f32 0.0, %v5141
      %v5143 = vpop.f32.mrf.mxu0
      %5144 = vmatprep.mubr.f32.mxu0 %v4856
      %5145 = vmatmul.mubr.f32.gmra.mxu0 %v4855
      %v5146 = vpop.f32.mrf.mxu0
      %v5147 = vadd.f32 0.0, %v5146
      %v5148 = vpop.f32.mrf.mxu0
      %5149 = vmatprep.mubr.f32.mxu0 %v4862
      %5150 = vmatmul.mubr.f32.gmra.mxu0 %v4861
      %v5151 = vpop.f32.mrf.mxu0
      %v5152 = vadd.f32 0.0, %v5151
      %v5153 = vpop.f32.mrf.mxu0
      %5154 = vmatprep.mubr.f32.mxu0 %v4868
      %5155 = vmatmul.mubr.f32.gmra.mxu0 %v4867
      %v5156 = vpop.f32.mrf.mxu0
      %v5157 = vadd.f32 0.0, %v5156
      %v5158 = vpop.f32.mrf.mxu0
      %5159 = vmatprep.mubr.f32.mxu0 %v4874
      %5160 = vmatmul.mubr.f32.gmra.mxu0 %v4873
      %v5161 = vpop.f32.mrf.mxu0
      %v5162 = vadd.f32 0.0, %v5161
      %v5163 = vpop.f32.mrf.mxu0
      %5164 = vmatprep.mubr.f32.mxu0 %v4880
      %5165 = vmatmul.mubr.f32.gmra.mxu0 %v4879
      %v5166 = vpop.f32.mrf.mxu0
      %v5167 = vadd.f32 0.0, %v5166
      %v5168 = vpop.f32.mrf.mxu0
      %5169 = vmatprep.mubr.f32.mxu0 %v4886
      %5170 = vmatmul.mubr.f32.gmra.mxu0 %v4885
      %v5171 = vpop.f32.mrf.mxu0
      %v5172 = vadd.f32 0.0, %v5171
      %v5173 = vpop.f32.mrf.mxu0
      %5174 = vmatprep.mubr.f32.mxu0 %v4892
      %5175 = vmatmul.mubr.f32.gmra.mxu0 %v4891
      %v5176 = vpop.f32.mrf.mxu0
      %v5177 = vadd.f32 0.0, %v5176
      %v5178 = vpop.f32.mrf.mxu0
      %5179 = vmatprep.mubr.f32.mxu0 %v4898
      %5180 = vmatmul.mubr.f32.gmra.mxu0 %v4897
      %v5181 = vpop.f32.mrf.mxu0
      %v5182 = vadd.f32 0.0, %v5181
      %v5183 = vpop.f32.mrf.mxu0
      %5184 = vdwg.mxu0
      %5185 = vmatprep.subr.mxu0 0.0
      %5186 = vmatpush1.msra.mxu0 %v4951
      %5187 = vmatprep.subr.mxu0 0.0
      %5188 = vmatpush1.msra.mxu0 %v4950
      %5189 = vmatprep.subr.mxu0 0.0
      %5190 = vmatpush1.msra.mxu0 %v4949
      %5191 = vmatprep.subr.mxu0 0.0
      %5192 = vmatpush1.msra.mxu0 %v4948
      %5193 = vmatprep.subr.mxu0 0.0
      %5194 = vmatpush1.msra.mxu0 %v4947
      %5195 = vmatprep.subr.mxu0 0.0
      %5196 = vmatpush1.msra.mxu0 %v4946
      %5197 = vmatprep.subr.mxu0 0.0
      %5198 = vmatpush1.msra.mxu0 %v4945
      %5199 = vmatprep.subr.mxu0 0.0
      %5200 = vmatpush1.msra.mxu0 %v4944
      %5201 = vmatprep.subr.mxu0 0.0
      %5202 = vmatpush1.msra.mxu0 %v4943
      %5203 = vmatprep.subr.mxu0 0.0
      %5204 = vmatpush1.msra.mxu0 %v4942
      %5205 = vmatprep.subr.mxu0 0.0
      %5206 = vmatpush1.msra.mxu0 %v4941
      %5207 = vmatprep.subr.mxu0 0.0
      %5208 = vmatpush1.msra.mxu0 %v4940
      %5209 = vmatprep.subr.mxu0 0.0
      %5210 = vmatpush1.msra.mxu0 %v4939
      %5211 = vmatprep.subr.mxu0 0.0
      %5212 = vmatpush1.msra.mxu0 %v4938
      %5213 = vmatprep.subr.mxu0 0.0
      %5214 = vmatpush1.msra.mxu0 %v4937
      %5215 = vmatprep.subr.mxu0 0.0
      %5216 = vmatpush1.msra.mxu0 %v4936
      %5217 = vmatprep.subr.mxu0 0.0
      %5218 = vmatpush2.msra.mxu0 %v4967
      %5219 = vmatprep.subr.mxu0 0.0
      %5220 = vmatpush2.msra.mxu0 %v4966
      %5221 = vmatprep.subr.mxu0 0.0
      %5222 = vmatpush2.msra.mxu0 %v4965
      %5223 = vmatprep.subr.mxu0 0.0
      %5224 = vmatpush2.msra.mxu0 %v4964
      %5225 = vmatprep.subr.mxu0 0.0
      %5226 = vmatpush2.msra.mxu0 %v4963
      %5227 = vmatprep.subr.mxu0 0.0
      %5228 = vmatpush2.msra.mxu0 %v4962
      %5229 = vmatprep.subr.mxu0 0.0
      %5230 = vmatpush2.msra.mxu0 %v4961
      %5231 = vmatprep.subr.mxu0 0.0
      %5232 = vmatpush2.msra.mxu0 %v4960
      %5233 = vmatprep.subr.mxu0 0.0
      %5234 = vmatpush2.msra.mxu0 %v4959
      %5235 = vmatprep.subr.mxu0 0.0
      %5236 = vmatpush2.msra.mxu0 %v4958
      %5237 = vmatprep.subr.mxu0 0.0
      %5238 = vmatpush2.msra.mxu0 %v4957
      %5239 = vmatprep.subr.mxu0 0.0
      %5240 = vmatpush2.msra.mxu0 %v4956
      %5241 = vmatprep.subr.mxu0 0.0
      %5242 = vmatpush2.msra.mxu0 %v4955
      %5243 = vmatprep.subr.mxu0 0.0
      %5244 = vmatpush2.msra.mxu0 %v4954
      %5245 = vmatprep.subr.mxu0 0.0
      %5246 = vmatpush2.msra.mxu0 %v4953
      %5247 = vmatprep.subr.mxu0 0.0
      %5248 = vmatpush2.msra.mxu0 %v4952
      %5249 = vmatprep.mubr.f32.mxu0 %v4762
      %5250 = vmatmul.mubr.f32.gmra.mxu0 %v4761
      %v5251 = vpop.f32.mrf.mxu0
      %v5252 = vadd.f32 %v5067, %v5251
      %v5253 = vpop.f32.mrf.mxu0
      %5254 = vmatprep.mubr.f32.mxu0 %v4768
      %5255 = vmatmul.mubr.f32.gmra.mxu0 %v4767
      %v5256 = vpop.f32.mrf.mxu0
      %v5257 = vadd.f32 %v5072, %v5256
      %v5258 = vpop.f32.mrf.mxu0
      %5259 = vmatprep.mubr.f32.mxu0 %v4774
      %5260 = vmatmul.mubr.f32.gmra.mxu0 %v4773
      %v5261 = vpop.f32.mrf.mxu0
      %v5262 = vadd.f32 %v5077, %v5261
      %v5263 = vpop.f32.mrf.mxu0
      %5264 = vmatprep.mubr.f32.mxu0 %v4780
      %5265 = vmatmul.mubr.f32.gmra.mxu0 %v4779
      %v5266 = vpop.f32.mrf.mxu0
      %v5267 = vadd.f32 %v5082, %v5266
      %v5268 = vpop.f32.mrf.mxu0
      %5269 = vmatprep.mubr.f32.mxu0 %v4786
      %5270 = vmatmul.mubr.f32.gmra.mxu0 %v4785
      %v5271 = vpop.f32.mrf.mxu0
      %v5272 = vadd.f32 %v5087, %v5271
      %v5273 = vpop.f32.mrf.mxu0
      %5274 = vmatprep.mubr.f32.mxu0 %v4792
      %5275 = vmatmul.mubr.f32.gmra.mxu0 %v4791
      %v5276 = vpop.f32.mrf.mxu0
      %v5277 = vadd.f32 %v5092, %v5276
      %v5278 = vpop.f32.mrf.mxu0
      %5279 = vmatprep.mubr.f32.mxu0 %v4798
      %5280 = vmatmul.mubr.f32.gmra.mxu0 %v4797
      %v5281 = vpop.f32.mrf.mxu0
      %v5282 = vadd.f32 %v5097, %v5281
      %v5283 = vpop.f32.mrf.mxu0
      %5284 = vmatprep.mubr.f32.mxu0 %v4804
      %5285 = vmatmul.mubr.f32.gmra.mxu0 %v4803
      %v5286 = vpop.f32.mrf.mxu0
      %v5287 = vadd.f32 %v5102, %v5286
      %v5288 = vpop.f32.mrf.mxu0
      %5289 = vmatprep.mubr.f32.mxu0 %v4810
      %5290 = vmatmul.mubr.f32.gmra.mxu0 %v4809
      %v5291 = vpop.f32.mrf.mxu0
      %v5292 = vadd.f32 %v5107, %v5291
      %v5293 = vpop.f32.mrf.mxu0
      %5294 = vmatprep.mubr.f32.mxu0 %v4816
      %5295 = vmatmul.mubr.f32.gmra.mxu0 %v4815
      %v5296 = vpop.f32.mrf.mxu0
      %v5297 = vadd.f32 %v5112, %v5296
      %v5298 = vpop.f32.mrf.mxu0
      %5299 = vmatprep.mubr.f32.mxu0 %v4822
      %5300 = vmatmul.mubr.f32.gmra.mxu0 %v4821
      %v5301 = vpop.f32.mrf.mxu0
      %v5302 = vadd.f32 %v5117, %v5301
      %v5303 = vpop.f32.mrf.mxu0
      %5304 = vmatprep.mubr.f32.mxu0 %v4828
      %5305 = vmatmul.mubr.f32.gmra.mxu0 %v4827
      %v5306 = vpop.f32.mrf.mxu0
      %v5307 = vadd.f32 %v5122, %v5306
      %v5308 = vpop.f32.mrf.mxu0
      %5309 = vmatprep.mubr.f32.mxu0 %v4834
      %5310 = vmatmul.mubr.f32.gmra.mxu0 %v4833
      %v5311 = vpop.f32.mrf.mxu0
      %v5312 = vadd.f32 %v5127, %v5311
      %v5313 = vpop.f32.mrf.mxu0
      %5314 = vmatprep.mubr.f32.mxu0 %v4840
      %5315 = vmatmul.mubr.f32.gmra.mxu0 %v4839
      %v5316 = vpop.f32.mrf.mxu0
      %v5317 = vadd.f32 %v5132, %v5316
      %v5318 = vpop.f32.mrf.mxu0
      %5319 = vmatprep.mubr.f32.mxu0 %v4846
      %5320 = vmatmul.mubr.f32.gmra.mxu0 %v4845
      %v5321 = vpop.f32.mrf.mxu0
      %v5322 = vadd.f32 %v5137, %v5321
      %v5323 = vpop.f32.mrf.mxu0
      %5324 = vmatprep.mubr.f32.mxu0 %v4852
      %5325 = vmatmul.mubr.f32.gmra.mxu0 %v4851
      %v5326 = vpop.f32.mrf.mxu0
      %v5327 = vadd.f32 %v5142, %v5326
      %v5328 = vpop.f32.mrf.mxu0
      %5329 = vmatprep.mubr.f32.mxu0 %v4858
      %5330 = vmatmul.mubr.f32.gmra.mxu0 %v4857
      %v5331 = vpop.f32.mrf.mxu0
      %v5332 = vadd.f32 %v5147, %v5331
      %v5333 = vpop.f32.mrf.mxu0
      %5334 = vmatprep.mubr.f32.mxu0 %v4864
      %5335 = vmatmul.mubr.f32.gmra.mxu0 %v4863
      %v5336 = vpop.f32.mrf.mxu0
      %v5337 = vadd.f32 %v5152, %v5336
      %v5338 = vpop.f32.mrf.mxu0
      %5339 = vmatprep.mubr.f32.mxu0 %v4870
      %5340 = vmatmul.mubr.f32.gmra.mxu0 %v4869
      %v5341 = vpop.f32.mrf.mxu0
      %v5342 = vadd.f32 %v5157, %v5341
      %v5343 = vpop.f32.mrf.mxu0
      %5344 = vmatprep.mubr.f32.mxu0 %v4876
      %5345 = vmatmul.mubr.f32.gmra.mxu0 %v4875
      %v5346 = vpop.f32.mrf.mxu0
      %v5347 = vadd.f32 %v5162, %v5346
      %v5348 = vpop.f32.mrf.mxu0
      %5349 = vmatprep.mubr.f32.mxu0 %v4882
      %5350 = vmatmul.mubr.f32.gmra.mxu0 %v4881
      %v5351 = vpop.f32.mrf.mxu0
      %v5352 = vadd.f32 %v5167, %v5351
      %v5353 = vpop.f32.mrf.mxu0
      %5354 = vmatprep.mubr.f32.mxu0 %v4888
      %5355 = vmatmul.mubr.f32.gmra.mxu0 %v4887
      %v5356 = vpop.f32.mrf.mxu0
      %v5357 = vadd.f32 %v5172, %v5356
      %v5358 = vpop.f32.mrf.mxu0
      %5359 = vmatprep.mubr.f32.mxu0 %v4894
      %5360 = vmatmul.mubr.f32.gmra.mxu0 %v4893
      %v5361 = vpop.f32.mrf.mxu0
      %v5362 = vadd.f32 %v5177, %v5361
      %v5363 = vpop.f32.mrf.mxu0
      %5364 = vmatprep.mubr.f32.mxu0 %v4900
      %5365 = vmatmul.mubr.f32.gmra.mxu0 %v4899
      %v5366 = vpop.f32.mrf.mxu0
      %v5367 = vadd.f32 %v5182, %v5366
      %v5368 = vpop.f32.mrf.mxu0
      %5369 = vdwg.mxu0
      %5370 = vmatprep.subr.mxu0 0.0
      %5371 = vmatpush1.msra.mxu0 %v4983
      %5372 = vmatprep.subr.mxu0 0.0
      %5373 = vmatpush1.msra.mxu0 %v4982
      %5374 = vmatprep.subr.mxu0 0.0
      %5375 = vmatpush1.msra.mxu0 %v4981
      %5376 = vmatprep.subr.mxu0 0.0
      %5377 = vmatpush1.msra.mxu0 %v4980
      %5378 = vmatprep.subr.mxu0 0.0
      %5379 = vmatpush1.msra.mxu0 %v4979
      %5380 = vmatprep.subr.mxu0 0.0
      %5381 = vmatpush1.msra.mxu0 %v4978
      %5382 = vmatprep.subr.mxu0 0.0
      %5383 = vmatpush1.msra.mxu0 %v4977
      %5384 = vmatprep.subr.mxu0 0.0
      %5385 = vmatpush1.msra.mxu0 %v4976
      %5386 = vmatprep.subr.mxu0 0.0
      %5387 = vmatpush1.msra.mxu0 %v4975
      %5388 = vmatprep.subr.mxu0 0.0
      %5389 = vmatpush1.msra.mxu0 %v4974
      %5390 = vmatprep.subr.mxu0 0.0
      %5391 = vmatpush1.msra.mxu0 %v4973
      %5392 = vmatprep.subr.mxu0 0.0
      %5393 = vmatpush1.msra.mxu0 %v4972
      %5394 = vmatprep.subr.mxu0 0.0
      %5395 = vmatpush1.msra.mxu0 %v4971
      %5396 = vmatprep.subr.mxu0 0.0
      %5397 = vmatpush1.msra.mxu0 %v4970
      %5398 = vmatprep.subr.mxu0 0.0
      %5399 = vmatpush1.msra.mxu0 %v4969
      %5400 = vmatprep.subr.mxu0 0.0
      %5401 = vmatpush1.msra.mxu0 %v4968
      %5402 = vmatprep.subr.mxu0 0.0
      %5403 = vmatpush2.msra.mxu0 %v4999
      %5404 = vmatprep.subr.mxu0 0.0
      %5405 = vmatpush2.msra.mxu0 %v4998
      %5406 = vmatprep.subr.mxu0 0.0
      %5407 = vmatpush2.msra.mxu0 %v4997
      %5408 = vmatprep.subr.mxu0 0.0
      %5409 = vmatpush2.msra.mxu0 %v4996
      %5410 = vmatprep.subr.mxu0 0.0
      %5411 = vmatpush2.msra.mxu0 %v4995
      %5412 = vmatprep.subr.mxu0 0.0
      %5413 = vmatpush2.msra.mxu0 %v4994
      %5414 = vmatprep.subr.mxu0 0.0
      %5415 = vmatpush2.msra.mxu0 %v4993
      %5416 = vmatprep.subr.mxu0 0.0
      %5417 = vmatpush2.msra.mxu0 %v4992
      %5418 = vmatprep.subr.mxu0 0.0
      %5419 = vmatpush2.msra.mxu0 %v4991
      %5420 = vmatprep.subr.mxu0 0.0
      %5421 = vmatpush2.msra.mxu0 %v4990
      %5422 = vmatprep.subr.mxu0 0.0
      %5423 = vmatpush2.msra.mxu0 %v4989
      %5424 = vmatprep.subr.mxu0 0.0
      %5425 = vmatpush2.msra.mxu0 %v4988
      %5426 = vmatprep.subr.mxu0 0.0
      %5427 = vmatpush2.msra.mxu0 %v4987
      %5428 = vmatprep.subr.mxu0 0.0
      %5429 = vmatpush2.msra.mxu0 %v4986
      %5430 = vmatprep.subr.mxu0 0.0
      %5431 = vmatpush2.msra.mxu0 %v4985
      %5432 = vmatprep.subr.mxu0 0.0
      %5433 = vmatpush2.msra.mxu0 %v4984
      %5434 = vmatprep.mubr.f32.mxu0 %v4764
      %5435 = vmatmul.mubr.f32.gmra.mxu0 %v4763
      %v5436 = vpop.f32.mrf.mxu0
      %v5437 = vadd.f32 %v5252, %v5436
      %v5438 = vpop.f32.mrf.mxu0
      %5439 = vmatprep.mubr.f32.mxu0 %v4770
      %5440 = vmatmul.mubr.f32.gmra.mxu0 %v4769
      %v5441 = vpop.f32.mrf.mxu0
      %v5442 = vadd.f32 %v5257, %v5441
      %v5443 = vpop.f32.mrf.mxu0
      %5444 = vmatprep.mubr.f32.mxu0 %v4776
      %5445 = vmatmul.mubr.f32.gmra.mxu0 %v4775
      %v5446 = vpop.f32.mrf.mxu0
      %v5447 = vadd.f32 %v5262, %v5446
      %v5448 = vpop.f32.mrf.mxu0
      %5449 = vmatprep.mubr.f32.mxu0 %v4782
      %5450 = vmatmul.mubr.f32.gmra.mxu0 %v4781
      %v5451 = vpop.f32.mrf.mxu0
      %v5452 = vadd.f32 %v5267, %v5451
      %v5453 = vpop.f32.mrf.mxu0
      %5454 = vmatprep.mubr.f32.mxu0 %v4788
      %5455 = vmatmul.mubr.f32.gmra.mxu0 %v4787
      %v5456 = vpop.f32.mrf.mxu0
      %v5457 = vadd.f32 %v5272, %v5456
      %v5458 = vpop.f32.mrf.mxu0
      %5459 = vmatprep.mubr.f32.mxu0 %v4794
      %5460 = vmatmul.mubr.f32.gmra.mxu0 %v4793
      %v5461 = vpop.f32.mrf.mxu0
      %v5462 = vadd.f32 %v5277, %v5461
      %v5463 = vpop.f32.mrf.mxu0
      %5464 = vmatprep.mubr.f32.mxu0 %v4800
      %5465 = vmatmul.mubr.f32.gmra.mxu0 %v4799
      %v5466 = vpop.f32.mrf.mxu0
      %v5467 = vadd.f32 %v5282, %v5466
      %v5468 = vpop.f32.mrf.mxu0
      %5469 = vmatprep.mubr.f32.mxu0 %v4806
      %5470 = vmatmul.mubr.f32.gmra.mxu0 %v4805
      %v5471 = vpop.f32.mrf.mxu0
      %v5472 = vadd.f32 %v5287, %v5471
      %v5473 = vpop.f32.mrf.mxu0
      %5474 = vmatprep.mubr.f32.mxu0 %v4812
      %5475 = vmatmul.mubr.f32.gmra.mxu0 %v4811
      %v5476 = vpop.f32.mrf.mxu0
      %v5477 = vadd.f32 %v5292, %v5476
      %v5478 = vpop.f32.mrf.mxu0
      %5479 = vmatprep.mubr.f32.mxu0 %v4818
      %5480 = vmatmul.mubr.f32.gmra.mxu0 %v4817
      %v5481 = vpop.f32.mrf.mxu0
      %v5482 = vadd.f32 %v5297, %v5481
      %v5483 = vpop.f32.mrf.mxu0
      %5484 = vmatprep.mubr.f32.mxu0 %v4824
      %5485 = vmatmul.mubr.f32.gmra.mxu0 %v4823
      %v5486 = vpop.f32.mrf.mxu0
      %v5487 = vadd.f32 %v5302, %v5486
      %v5488 = vpop.f32.mrf.mxu0
      %5489 = vmatprep.mubr.f32.mxu0 %v4830
      %5490 = vmatmul.mubr.f32.gmra.mxu0 %v4829
      %v5491 = vpop.f32.mrf.mxu0
      %v5492 = vadd.f32 %v5307, %v5491
      %v5493 = vpop.f32.mrf.mxu0
      %5494 = vmatprep.mubr.f32.mxu0 %v4836
      %5495 = vmatmul.mubr.f32.gmra.mxu0 %v4835
      %v5496 = vpop.f32.mrf.mxu0
      %v5497 = vadd.f32 %v5312, %v5496
      %v5498 = vpop.f32.mrf.mxu0
      %5499 = vmatprep.mubr.f32.mxu0 %v4842
      %5500 = vmatmul.mubr.f32.gmra.mxu0 %v4841
      %v5501 = vpop.f32.mrf.mxu0
      %v5502 = vadd.f32 %v5317, %v5501
      %v5503 = vpop.f32.mrf.mxu0
      %5504 = vmatprep.mubr.f32.mxu0 %v4848
      %5505 = vmatmul.mubr.f32.gmra.mxu0 %v4847
      %v5506 = vpop.f32.mrf.mxu0
      %v5507 = vadd.f32 %v5322, %v5506
      %v5508 = vpop.f32.mrf.mxu0
      %5509 = vmatprep.mubr.f32.mxu0 %v4854
      %5510 = vmatmul.mubr.f32.gmra.mxu0 %v4853
      %v5511 = vpop.f32.mrf.mxu0
      %v5512 = vadd.f32 %v5327, %v5511
      %v5513 = vpop.f32.mrf.mxu0
      %5514 = vmatprep.mubr.f32.mxu0 %v4860
      %5515 = vmatmul.mubr.f32.gmra.mxu0 %v4859
      %v5516 = vpop.f32.mrf.mxu0
      %v5517 = vadd.f32 %v5332, %v5516
      %v5518 = vpop.f32.mrf.mxu0
      %5519 = vmatprep.mubr.f32.mxu0 %v4866
      %5520 = vmatmul.mubr.f32.gmra.mxu0 %v4865
      %v5521 = vpop.f32.mrf.mxu0
      %v5522 = vadd.f32 %v5337, %v5521
      %v5523 = vpop.f32.mrf.mxu0
      %5524 = vmatprep.mubr.f32.mxu0 %v4872
      %5525 = vmatmul.mubr.f32.gmra.mxu0 %v4871
      %v5526 = vpop.f32.mrf.mxu0
      %v5527 = vadd.f32 %v5342, %v5526
      %v5528 = vpop.f32.mrf.mxu0
      %5529 = vmatprep.mubr.f32.mxu0 %v4878
      %5530 = vmatmul.mubr.f32.gmra.mxu0 %v4877
      %v5531 = vpop.f32.mrf.mxu0
      %v5532 = vadd.f32 %v5347, %v5531
      %v5533 = vpop.f32.mrf.mxu0
      %5534 = vmatprep.mubr.f32.mxu0 %v4884
      %5535 = vmatmul.mubr.f32.gmra.mxu0 %v4883
      %v5536 = vpop.f32.mrf.mxu0
      %v5537 = vadd.f32 %v5352, %v5536
      %v5538 = vpop.f32.mrf.mxu0
      %5539 = vmatprep.mubr.f32.mxu0 %v4890
      %5540 = vmatmul.mubr.f32.gmra.mxu0 %v4889
      %v5541 = vpop.f32.mrf.mxu0
      %v5542 = vadd.f32 %v5357, %v5541
      %v5543 = vpop.f32.mrf.mxu0
      %5544 = vmatprep.mubr.f32.mxu0 %v4896
      %5545 = vmatmul.mubr.f32.gmra.mxu0 %v4895
      %v5546 = vpop.f32.mrf.mxu0
      %v5547 = vadd.f32 %v5362, %v5546
      %v5548 = vpop.f32.mrf.mxu0
      %5549 = vmatprep.mubr.f32.mxu0 %v4902
      %5550 = vmatmul.mubr.f32.gmra.mxu0 %v4901
      %v5551 = vpop.f32.mrf.mxu0
      %v5552 = vadd.f32 %v5367, %v5551
      %v5553 = vpop.f32.mrf.mxu0
      %5554 = vdwg.mxu0
      %v5555 = vadd.f32 %v4735, %v5437
      %v5556 = vadd.f32 %v4736, %v5442
      %v5557 = vadd.f32 %v4737, %v5447
      %v5558 = vadd.f32 %v4738, %v5452
      %v5559 = vadd.f32 %v4739, %v5457
      %v5560 = vadd.f32 %v4740, %v5462
      %v5561 = vadd.f32 %v4741, %v5467
      %v5562 = vadd.f32 %v4742, %v5472
      %v5563 = vadd.f32 %v4743, %v5477
      %v5564 = vadd.f32 %v4744, %v5482
      %v5565 = vadd.f32 %v4745, %v5487
      %v5566 = vadd.f32 %v4746, %v5492
      %v5567 = vadd.f32 %v4747, %v5497
      %v5568 = vadd.f32 %v4748, %v5502
      %v5569 = vadd.f32 %v4749, %v5507
      %v5570 = vadd.f32 %v4750, %v5512
      %v5571 = vadd.f32 %v4751, %v5517
      %v5572 = vadd.f32 %v4752, %v5522
      %v5573 = vadd.f32 %v4753, %v5527
      %v5574 = vadd.f32 %v4754, %v5532
      %v5575 = vadd.f32 %v4755, %v5537
      %v5576 = vadd.f32 %v4756, %v5542
      %v5577 = vadd.f32 %v4757, %v5547
      %v5578 = vadd.f32 %v4758, %v5552
      %v5579 = vld [vmem:[#allocation2 + $0x60] sm:$0xfe]
      %v5580 = vld [vmem:[#allocation2 + $0x68] sm:$0xfe]
      %v5581 = vld [vmem:[#allocation2 + $0x70] sm:$0xfe]
      %v5582 = vld [vmem:[#allocation2 + $0x78] sm:$0xfe]
      %v5583 = vld [vmem:[#allocation2 + $0x80] sm:$0xfe]
      %v5584 = vld [vmem:[#allocation2 + $0x88] sm:$0xfe]
      %v5585 = vld [vmem:[#allocation2 + $0x90] sm:$0xff]
      %v5586 = vld [vmem:[#allocation2 + $0x98] sm:$0xff]
      %v5587 = vld [vmem:[#allocation2 + $0xa0] sm:$0xff]
      %v5588 = vld [vmem:[#allocation2 + $0xa8] sm:$0xff]
      %v5589 = vld [vmem:[#allocation2 + $0xb0] sm:$0xff]
      %v5590 = vld [vmem:[#allocation2 + $0xb8] sm:$0xff]
      %v5591 = vld [vmem:[#allocation2 + $0xc0] sm:$0xff]
      %v5592 = vld [vmem:[#allocation2 + $0xc8] sm:$0xff]
      %v5593 = vld [vmem:[#allocation2 + $0xd0] sm:$0xff]
      %v5594 = vld [vmem:[#allocation2 + $0xd8] sm:$0xff]
      %v5595 = vld [vmem:[#allocation2 + $0xe0] sm:$0xff]
      %v5596 = vld [vmem:[#allocation2 + $0xe8] sm:$0xff]
      %v5597 = vld [vmem:[#allocation2 + $0xf0] sm:$0xff]
      %v5598 = vld [vmem:[#allocation2 + $0xf8] sm:$0xff]
      %v5599 = vld [vmem:[#allocation2 + $0x100] sm:$0xff]
      %v5600 = vld [vmem:[#allocation2 + $0x108] sm:$0xff]
      %v5601 = vld [vmem:[#allocation2 + $0x110] sm:$0xff]
      %v5602 = vld [vmem:[#allocation2 + $0x118] sm:$0xff]
      %v5603 = vld [vmem:[#allocation2 + $0x120] sm:$0xff]
      %v5604 = vld [vmem:[#allocation2 + $0x128] sm:$0xff]
      %v5605 = vld [vmem:[#allocation2 + $0x130] sm:$0xff]
      %v5606 = vld [vmem:[#allocation2 + $0x138] sm:$0xff]
      %v5607 = vld [vmem:[#allocation2 + $0x140] sm:$0xff]
      %v5608 = vld [vmem:[#allocation2 + $0x148] sm:$0xff]
      %v5609 = vld [vmem:[#allocation2 + $0x150] sm:$0xff]
      %v5610 = vld [vmem:[#allocation2 + $0x158] sm:$0xff]
      %v5611 = vld [vmem:[#allocation2 + $0x160] sm:$0xff]
      %v5612 = vld [vmem:[#allocation2 + $0x168] sm:$0xff]
      %v5613 = vld [vmem:[#allocation2 + $0x170] sm:$0xff]
      %v5614 = vld [vmem:[#allocation2 + $0x178] sm:$0xff]
      %v5615 = vld [vmem:[#allocation2 + $0x180] sm:$0xff]
      %v5616 = vld [vmem:[#allocation2 + $0x188] sm:$0xff]
      %v5617 = vld [vmem:[#allocation2 + $0x190] sm:$0xff]
      %v5618 = vld [vmem:[#allocation2 + $0x198] sm:$0xff]
      %v5619 = vld [vmem:[#allocation2 + $0x1a0] sm:$0xff]
      %v5620 = vld [vmem:[#allocation2 + $0x1a8] sm:$0xff]
      %v5621 = vld [vmem:[#allocation2 + $0x1b0] sm:$0xff]
      %v5622 = vld [vmem:[#allocation2 + $0x1b8] sm:$0xff]
      %v5623 = vld [vmem:[#allocation2 + $0x1c0] sm:$0xff]
      %v5624 = vld [vmem:[#allocation2 + $0x1c8] sm:$0xff]
      %v5625 = vld [vmem:[#allocation2 + $0x1d0] sm:$0xff]
      %v5626 = vld [vmem:[#allocation2 + $0x1d8] sm:$0xff]
      %v5627 = vld [vmem:[#allocation2 + $0x1e0] sm:$0xff]
      %v5628 = vld [vmem:[#allocation2 + $0x1e8] sm:$0xff]
      %v5629 = vld [vmem:[#allocation2 + $0x1f0] sm:$0xff]
      %v5630 = vld [vmem:[#allocation2 + $0x1f8] sm:$0xff]
      %v5631 = vld [vmem:[#allocation2 + $0x200] sm:$0xff]
      %v5632 = vld [vmem:[#allocation2 + $0x208] sm:$0xff]
      %v5633 = vld [vmem:[#allocation2 + $0x210] sm:$0xff]
      %v5634 = vld [vmem:[#allocation2 + $0x218] sm:$0xff]
      %v5635 = vld [vmem:[#allocation2 + $0x220] sm:$0xff]
      %v5636 = vld [vmem:[#allocation2 + $0x228] sm:$0xff]
      %v5637 = vld [vmem:[#allocation2 + $0x230] sm:$0xff]
      %v5638 = vld [vmem:[#allocation2 + $0x238] sm:$0xff]
      %v5639 = vld [vmem:[#allocation2 + $0x240] sm:$0xff]
      %v5640 = vld [vmem:[#allocation2 + $0x248] sm:$0xff]
      %v5641 = vld [vmem:[#allocation2 + $0x250] sm:$0xff]
      %v5642 = vld [vmem:[#allocation2 + $0x258] sm:$0xff]
      %v5643 = vld [vmem:[#allocation2 + $0x260] sm:$0xff]
      %v5644 = vld [vmem:[#allocation2 + $0x268] sm:$0xff]
      %v5645 = vld [vmem:[#allocation2 + $0x270] sm:$0xff]
      %v5646 = vld [vmem:[#allocation2 + $0x278] sm:$0xff]
      %v5647 = vld [vmem:[#allocation2 + $0x280] sm:$0xff]
      %v5648 = vld [vmem:[#allocation2 + $0x288] sm:$0xff]
      %v5649 = vld [vmem:[#allocation2 + $0x290] sm:$0xff]
      %v5650 = vld [vmem:[#allocation2 + $0x298] sm:$0xff]
      %v5651 = vld [vmem:[#allocation2 + $0x2a0] sm:$0xff]
      %v5652 = vld [vmem:[#allocation2 + $0x2a8] sm:$0xff]
      %v5653 = vld [vmem:[#allocation2 + $0x2b0] sm:$0xff]
      %v5654 = vld [vmem:[#allocation2 + $0x2b8] sm:$0xff]
      %v5655 = vld [vmem:[#allocation2 + $0x2c0] sm:$0xff]
      %v5656 = vld [vmem:[#allocation2 + $0x2c8] sm:$0xff]
      %v5657 = vld [vmem:[#allocation2 + $0x2d0] sm:$0xff]
      %v5658 = vld [vmem:[#allocation2 + $0x2d8] sm:$0xff]
      %v5659 = vld [vmem:[#allocation2 + $0x2e0] sm:$0xff]
      %v5660 = vld [vmem:[#allocation2 + $0x2e8] sm:$0xff]
      %v5661 = vld [vmem:[#allocation2 + $0x2f0] sm:$0xff]
      %v5662 = vld [vmem:[#allocation2 + $0x2f8] sm:$0xff]
      %v5663 = vld [vmem:[#allocation2 + $0x300] sm:$0xff]
      %v5664 = vld [vmem:[#allocation2 + $0x308] sm:$0xff]
      %v5665 = vld [vmem:[#allocation2 + $0x310] sm:$0xff]
      %v5666 = vld [vmem:[#allocation2 + $0x318] sm:$0xff]
      %v5667 = vld [vmem:[#allocation2 + $0x320] sm:$0xff]
      %v5668 = vld [vmem:[#allocation2 + $0x328] sm:$0xff]
      %v5669 = vld [vmem:[#allocation2 + $0x330] sm:$0xff]
      %v5670 = vld [vmem:[#allocation2 + $0x338] sm:$0xff]
      %v5671 = vld [vmem:[#allocation2 + $0x340] sm:$0xff]
      %v5672 = vld [vmem:[#allocation2 + $0x348] sm:$0xff]
      %v5673 = vld [vmem:[#allocation2 + $0x350] sm:$0xff]
      %v5674 = vld [vmem:[#allocation2 + $0x358] sm:$0xff]
      %v5675 = vld [vmem:[#allocation2 + $0x360] sm:$0xff]
      %v5676 = vld [vmem:[#allocation2 + $0x368] sm:$0xff]
      %v5677 = vld [vmem:[#allocation2 + $0x370] sm:$0xff]
      %v5678 = vld [vmem:[#allocation2 + $0x378] sm:$0xff]
      %v5679 = vld [vmem:[#allocation2 + $0x380] sm:$0xff]
      %v5680 = vld [vmem:[#allocation2 + $0x388] sm:$0xff]
      %v5681 = vld [vmem:[#allocation2 + $0x390] sm:$0xff]
      %v5682 = vld [vmem:[#allocation2 + $0x398] sm:$0xff]
      %v5683 = vld [vmem:[#allocation2 + $0x3a0] sm:$0xff]
      %v5684 = vld [vmem:[#allocation2 + $0x3a8] sm:$0xff]
      %v5685 = vld [vmem:[#allocation2 + $0x3b0] sm:$0xff]
      %v5686 = vld [vmem:[#allocation2 + $0x3b8] sm:$0xff]
      %v5687 = vld [vmem:[#allocation2 + $0x3c0] sm:$0xff]
      %v5688 = vld [vmem:[#allocation2 + $0x3c8] sm:$0xff]
      %v5689 = vld [vmem:[#allocation2 + $0x3d0] sm:$0xff]
      %v5690 = vld [vmem:[#allocation2 + $0x3d8] sm:$0xff]
      %v5691 = vld [vmem:[#allocation2 + $0x3e0] sm:$0xff]
      %v5692 = vld [vmem:[#allocation2 + $0x3e8] sm:$0xff]
      %v5693 = vld [vmem:[#allocation2 + $0x3f0] sm:$0xff]
      %v5694 = vld [vmem:[#allocation2 + $0x3f8] sm:$0xff]
      %v5695 = vld [vmem:[#allocation2 + $0x400] sm:$0xff]
      %v5696 = vld [vmem:[#allocation2 + $0x408] sm:$0xff]
      %v5697 = vld [vmem:[#allocation2 + $0x410] sm:$0xff]
      %v5698 = vld [vmem:[#allocation2 + $0x418] sm:$0xff]
      %v5699 = vld [vmem:[#allocation2 + $0x420] sm:$0xff]
      %v5700 = vld [vmem:[#allocation2 + $0x428] sm:$0xff]
      %v5701 = vld [vmem:[#allocation2 + $0x430] sm:$0xff]
      %v5702 = vld [vmem:[#allocation2 + $0x438] sm:$0xff]
      %v5703 = vld [vmem:[#allocation2 + $0x440] sm:$0xff]
      %v5704 = vld [vmem:[#allocation2 + $0x448] sm:$0xff]
      %v5705 = vld [vmem:[#allocation2 + $0x450] sm:$0xff]
      %v5706 = vld [vmem:[#allocation2 + $0x458] sm:$0xff]
      %v5707 = vld [vmem:[#allocation2 + $0x460] sm:$0xff]
      %v5708 = vld [vmem:[#allocation2 + $0x468] sm:$0xff]
      %v5709 = vld [vmem:[#allocation2 + $0x470] sm:$0xff]
      %v5710 = vld [vmem:[#allocation2 + $0x478] sm:$0xff]
      %v5711 = vld [vmem:[#allocation2 + $0x480] sm:$0xff]
      %v5712 = vld [vmem:[#allocation2 + $0x488] sm:$0xff]
      %v5713 = vld [vmem:[#allocation2 + $0x490] sm:$0xff]
      %v5714 = vld [vmem:[#allocation2 + $0x498] sm:$0xff]
      %v5715 = vld [vmem:[#allocation2 + $0x4a0] sm:$0xff]
      %v5716 = vld [vmem:[#allocation2 + $0x4a8] sm:$0xff]
      %v5717 = vld [vmem:[#allocation2 + $0x4b0] sm:$0xff]
      %v5718 = vld [vmem:[#allocation2 + $0x4b8] sm:$0xff]
      %v5719 = vld [vmem:[#allocation2 + $0x4c0] sm:$0xff]
      %v5720 = vld [vmem:[#allocation2 + $0x4c8] sm:$0xff]
      %v5721 = vld [vmem:[#allocation2 + $0x4d0] sm:$0xff]
      %v5722 = vld [vmem:[#allocation2 + $0x4d8] sm:$0xff]
      %v5723 = vld [vmem:[#allocation2 + $0x4e0] sm:$0x1]
      %v5724 = vld [vmem:[#allocation2 + $0x4e8] sm:$0x1]
      %v5725 = vld [vmem:[#allocation2 + $0x4f0] sm:$0x1]
      %v5726 = vld [vmem:[#allocation2 + $0x4f8] sm:$0x1]
      %v5727 = vld [vmem:[#allocation2 + $0x500] sm:$0x1]
      %v5728 = vld [vmem:[#allocation2 + $0x508] sm:$0x1]
      %s5729 = scalar_lea.vmem %s3, 3072
      %v5730 = vld [vmem:[%s5729] sm:$0xff]
      %v5731 = vld [vmem:[%s5729 + $0x8] sm:$0xff]
      %v5732 = vld [vmem:[%s5729 + $0x10] sm:$0xff]
      %v5733 = vld [vmem:[%s5729 + $0x18] sm:$0xff]
      %v5734 = vld [vmem:[%s5729 + $0x20] sm:$0xff]
      %v5735 = vld [vmem:[%s5729 + $0x28] sm:$0xff]
      %v5736 = vld [vmem:[%s5729 + $0x30] sm:$0xff]
      %v5737 = vld [vmem:[%s5729 + $0x38] sm:$0xff]
      %v5738 = vld [vmem:[%s5729 + $0x40] sm:$0xff]
      %v5739 = vld [vmem:[%s5729 + $0x48] sm:$0xff]
      %v5740 = vld [vmem:[%s5729 + $0x50] sm:$0xff]
      %v5741 = vld [vmem:[%s5729 + $0x58] sm:$0xff]
      %v5742 = vld [vmem:[%s5729 + $0x60] sm:$0xff]
      %v5743 = vld [vmem:[%s5729 + $0x68] sm:$0xff]
      %v5744 = vld [vmem:[%s5729 + $0x70] sm:$0xff]
      %v5745 = vld [vmem:[%s5729 + $0x78] sm:$0xff]
      %v5746 = vld [vmem:[%s5729 + $0x80] sm:$0xff]
      %v5747 = vld [vmem:[%s5729 + $0x88] sm:$0xff]
      %v5748 = vld [vmem:[%s5729 + $0x90] sm:$0xff]
      %v5749 = vld [vmem:[%s5729 + $0x98] sm:$0xff]
      %v5750 = vld [vmem:[%s5729 + $0xa0] sm:$0xff]
      %v5751 = vld [vmem:[%s5729 + $0xa8] sm:$0xff]
      %v5752 = vld [vmem:[%s5729 + $0xb0] sm:$0xff]
      %v5753 = vld [vmem:[%s5729 + $0xb8] sm:$0xff]
      %v5754 = vld [vmem:[%s5729 + $0xc0] sm:$0xff]
      %v5755 = vld [vmem:[%s5729 + $0xc8] sm:$0xff]
      %v5756 = vld [vmem:[%s5729 + $0xd0] sm:$0xff]
      %v5757 = vld [vmem:[%s5729 + $0xd8] sm:$0xff]
      %v5758 = vld [vmem:[%s5729 + $0xe0] sm:$0xff]
      %v5759 = vld [vmem:[%s5729 + $0xe8] sm:$0xff]
      %v5760 = vld [vmem:[%s5729 + $0xf0] sm:$0xff]
      %v5761 = vld [vmem:[%s5729 + $0xf8] sm:$0xff]
      %v5762 = vld [vmem:[%s5729 + $0x100] sm:$0xff]
      %v5763 = vld [vmem:[%s5729 + $0x108] sm:$0xff]
      %v5764 = vld [vmem:[%s5729 + $0x110] sm:$0xff]
      %v5765 = vld [vmem:[%s5729 + $0x118] sm:$0xff]
      %v5766 = vld [vmem:[%s5729 + $0x120] sm:$0xff]
      %v5767 = vld [vmem:[%s5729 + $0x128] sm:$0xff]
      %v5768 = vld [vmem:[%s5729 + $0x130] sm:$0xff]
      %v5769 = vld [vmem:[%s5729 + $0x138] sm:$0xff]
      %v5770 = vld [vmem:[%s5729 + $0x140] sm:$0xff]
      %v5771 = vld [vmem:[%s5729 + $0x148] sm:$0xff]
      %v5772 = vld [vmem:[%s5729 + $0x150] sm:$0xff]
      %v5773 = vld [vmem:[%s5729 + $0x158] sm:$0xff]
      %v5774 = vld [vmem:[%s5729 + $0x160] sm:$0xff]
      %v5775 = vld [vmem:[%s5729 + $0x168] sm:$0xff]
      %v5776 = vld [vmem:[%s5729 + $0x170] sm:$0xff]
      %v5777 = vld [vmem:[%s5729 + $0x178] sm:$0xff]
      %v5778 = vld [vmem:[%s5729 + $0x180] sm:$0xff]
      %v5779 = vld [vmem:[%s5729 + $0x188] sm:$0xff]
      %v5780 = vld [vmem:[%s5729 + $0x190] sm:$0xff]
      %v5781 = vld [vmem:[%s5729 + $0x198] sm:$0xff]
      %v5782 = vld [vmem:[%s5729 + $0x1a0] sm:$0xff]
      %v5783 = vld [vmem:[%s5729 + $0x1a8] sm:$0xff]
      %v5784 = vld [vmem:[%s5729 + $0x1b0] sm:$0xff]
      %v5785 = vld [vmem:[%s5729 + $0x1b8] sm:$0xff]
      %v5786 = vld [vmem:[%s5729 + $0x1c0] sm:$0xff]
      %v5787 = vld [vmem:[%s5729 + $0x1c8] sm:$0xff]
      %v5788 = vld [vmem:[%s5729 + $0x1d0] sm:$0xff]
      %v5789 = vld [vmem:[%s5729 + $0x1d8] sm:$0xff]
      %v5790 = vld [vmem:[%s5729 + $0x1e0] sm:$0xff]
      %v5791 = vld [vmem:[%s5729 + $0x1e8] sm:$0xff]
      %v5792 = vld [vmem:[%s5729 + $0x1f0] sm:$0xff]
      %v5793 = vld [vmem:[%s5729 + $0x1f8] sm:$0xff]
      %v5794 = vld [vmem:[%s5729 + $0x200] sm:$0xff]
      %v5795 = vld [vmem:[%s5729 + $0x208] sm:$0xff]
      %v5796 = vld [vmem:[%s5729 + $0x210] sm:$0xff]
      %v5797 = vld [vmem:[%s5729 + $0x218] sm:$0xff]
      %v5798 = vld [vmem:[%s5729 + $0x220] sm:$0xff]
      %v5799 = vld [vmem:[%s5729 + $0x228] sm:$0xff]
      %v5800 = vld [vmem:[%s5729 + $0x230] sm:$0xff]
      %v5801 = vld [vmem:[%s5729 + $0x238] sm:$0xff]
      %v5802 = vld [vmem:[%s5729 + $0x240] sm:$0xff]
      %v5803 = vld [vmem:[%s5729 + $0x248] sm:$0xff]
      %v5804 = vld [vmem:[%s5729 + $0x250] sm:$0xff]
      %v5805 = vld [vmem:[%s5729 + $0x258] sm:$0xff]
      %v5806 = vld [vmem:[%s5729 + $0x260] sm:$0xff]
      %v5807 = vld [vmem:[%s5729 + $0x268] sm:$0xff]
      %v5808 = vld [vmem:[%s5729 + $0x270] sm:$0xff]
      %v5809 = vld [vmem:[%s5729 + $0x278] sm:$0xff]
      %v5810 = vld [vmem:[%s5729 + $0x280] sm:$0xff]
      %v5811 = vld [vmem:[%s5729 + $0x288] sm:$0xff]
      %v5812 = vld [vmem:[%s5729 + $0x290] sm:$0xff]
      %v5813 = vld [vmem:[%s5729 + $0x298] sm:$0xff]
      %v5814 = vld [vmem:[%s5729 + $0x2a0] sm:$0xff]
      %v5815 = vld [vmem:[%s5729 + $0x2a8] sm:$0xff]
      %v5816 = vld [vmem:[%s5729 + $0x2b0] sm:$0xff]
      %v5817 = vld [vmem:[%s5729 + $0x2b8] sm:$0xff]
      %v5818 = vld [vmem:[%s5729 + $0x2c0] sm:$0xff]
      %v5819 = vld [vmem:[%s5729 + $0x2c8] sm:$0xff]
      %v5820 = vld [vmem:[%s5729 + $0x2d0] sm:$0xff]
      %v5821 = vld [vmem:[%s5729 + $0x2d8] sm:$0xff]
      %v5822 = vld [vmem:[%s5729 + $0x2e0] sm:$0xff]
      %v5823 = vld [vmem:[%s5729 + $0x2e8] sm:$0xff]
      %v5824 = vld [vmem:[%s5729 + $0x2f0] sm:$0xff]
      %v5825 = vld [vmem:[%s5729 + $0x2f8] sm:$0xff]
      %v5976 = vrot.slane %v5579, 1
      %v5977 = vrot.slane %v5585, 1
      %v5978 = vsel %vm2071, %v5976, %v5977
      %v5979 = vrot.slane %v5580, 1
      %v5980 = vrot.slane %v5586, 1
      %v5981 = vsel %vm2071, %v5979, %v5980
      %v5982 = vrot.slane %v5581, 1
      %v5983 = vrot.slane %v5587, 1
      %v5984 = vsel %vm2071, %v5982, %v5983
      %v5985 = vrot.slane %v5582, 1
      %v5986 = vrot.slane %v5588, 1
      %v5987 = vsel %vm2071, %v5985, %v5986
      %v5988 = vrot.slane %v5583, 1
      %v5989 = vrot.slane %v5589, 1
      %v5990 = vsel %vm2071, %v5988, %v5989
      %v5991 = vrot.slane %v5584, 1
      %v5992 = vrot.slane %v5590, 1
      %v5993 = vsel %vm2071, %v5991, %v5992
      %v5994 = vrot.slane %v5591, 1
      %v5995 = vsel %vm2071, %v5977, %v5994
      %v5996 = vrot.slane %v5592, 1
      %v5997 = vsel %vm2071, %v5980, %v5996
      %v5998 = vrot.slane %v5593, 1
      %v5999 = vsel %vm2071, %v5983, %v5998
      %v6000 = vrot.slane %v5594, 1
      %v6001 = vsel %vm2071, %v5986, %v6000
      %v6002 = vrot.slane %v5595, 1
      %v6003 = vsel %vm2071, %v5989, %v6002
      %v6004 = vrot.slane %v5596, 1
      %v6005 = vsel %vm2071, %v5992, %v6004
      %v6006 = vrot.slane %v5597, 1
      %v6007 = vsel %vm2071, %v5994, %v6006
      %v6008 = vrot.slane %v5598, 1
      %v6009 = vsel %vm2071, %v5996, %v6008
      %v6010 = vrot.slane %v5599, 1
      %v6011 = vsel %vm2071, %v5998, %v6010
      %v6012 = vrot.slane %v5600, 1
      %v6013 = vsel %vm2071, %v6000, %v6012
      %v6014 = vrot.slane %v5601, 1
      %v6015 = vsel %vm2071, %v6002, %v6014
      %v6016 = vrot.slane %v5602, 1
      %v6017 = vsel %vm2071, %v6004, %v6016
      %v6018 = vrot.slane %v5603, 1
      %v6019 = vsel %vm2071, %v6006, %v6018
      %v6020 = vrot.slane %v5604, 1
      %v6021 = vsel %vm2071, %v6008, %v6020
      %v6022 = vrot.slane %v5605, 1
      %v6023 = vsel %vm2071, %v6010, %v6022
      %v6024 = vrot.slane %v5606, 1
      %v6025 = vsel %vm2071, %v6012, %v6024
      %v6026 = vrot.slane %v5607, 1
      %v6027 = vsel %vm2071, %v6014, %v6026
      %v6028 = vrot.slane %v5608, 1
      %v6029 = vsel %vm2071, %v6016, %v6028
      %v6030 = vrot.slane %v5609, 1
      %v6031 = vsel %vm2071, %v6018, %v6030
      %v6032 = vrot.slane %v5610, 1
      %v6033 = vsel %vm2071, %v6020, %v6032
      %v6034 = vrot.slane %v5611, 1
      %v6035 = vsel %vm2071, %v6022, %v6034
      %v6036 = vrot.slane %v5612, 1
      %v6037 = vsel %vm2071, %v6024, %v6036
      %v6038 = vrot.slane %v5613, 1
      %v6039 = vsel %vm2071, %v6026, %v6038
      %v6040 = vrot.slane %v5614, 1
      %v6041 = vsel %vm2071, %v6028, %v6040
      %v6042 = vrot.slane %v5615, 1
      %v6043 = vsel %vm2071, %v6030, %v6042
      %v6044 = vrot.slane %v5616, 1
      %v6045 = vsel %vm2071, %v6032, %v6044
      %v6046 = vrot.slane %v5617, 1
      %v6047 = vsel %vm2071, %v6034, %v6046
      %v6048 = vrot.slane %v5618, 1
      %v6049 = vsel %vm2071, %v6036, %v6048
      %v6050 = vrot.slane %v5619, 1
      %v6051 = vsel %vm2071, %v6038, %v6050
      %v6052 = vrot.slane %v5620, 1
      %v6053 = vsel %vm2071, %v6040, %v6052
      %v6054 = vrot.slane %v5621, 1
      %v6055 = vsel %vm2071, %v6042, %v6054
      %v6056 = vrot.slane %v5622, 1
      %v6057 = vsel %vm2071, %v6044, %v6056
      %v6058 = vrot.slane %v5623, 1
      %v6059 = vsel %vm2071, %v6046, %v6058
      %v6060 = vrot.slane %v5624, 1
      %v6061 = vsel %vm2071, %v6048, %v6060
      %v6062 = vrot.slane %v5625, 1
      %v6063 = vsel %vm2071, %v6050, %v6062
      %v6064 = vrot.slane %v5626, 1
      %v6065 = vsel %vm2071, %v6052, %v6064
      %v6066 = vrot.slane %v5627, 1
      %v6067 = vsel %vm2071, %v6054, %v6066
      %v6068 = vrot.slane %v5628, 1
      %v6069 = vsel %vm2071, %v6056, %v6068
      %v6070 = vrot.slane %v5629, 1
      %v6071 = vsel %vm2071, %v6058, %v6070
      %v6072 = vrot.slane %v5630, 1
      %v6073 = vsel %vm2071, %v6060, %v6072
      %v6074 = vrot.slane %v5631, 1
      %v6075 = vsel %vm2071, %v6062, %v6074
      %v6076 = vrot.slane %v5632, 1
      %v6077 = vsel %vm2071, %v6064, %v6076
      %v6078 = vrot.slane %v5633, 1
      %v6079 = vsel %vm2071, %v6066, %v6078
      %v6080 = vrot.slane %v5634, 1
      %v6081 = vsel %vm2071, %v6068, %v6080
      %v6082 = vrot.slane %v5635, 1
      %v6083 = vsel %vm2071, %v6070, %v6082
      %v6084 = vrot.slane %v5636, 1
      %v6085 = vsel %vm2071, %v6072, %v6084
      %v6086 = vrot.slane %v5637, 1
      %v6087 = vsel %vm2071, %v6074, %v6086
      %v6088 = vrot.slane %v5638, 1
      %v6089 = vsel %vm2071, %v6076, %v6088
      %v6090 = vrot.slane %v5639, 1
      %v6091 = vsel %vm2071, %v6078, %v6090
      %v6092 = vrot.slane %v5640, 1
      %v6093 = vsel %vm2071, %v6080, %v6092
      %v6094 = vrot.slane %v5641, 1
      %v6095 = vsel %vm2071, %v6082, %v6094
      %v6096 = vrot.slane %v5642, 1
      %v6097 = vsel %vm2071, %v6084, %v6096
      %v6098 = vrot.slane %v5643, 1
      %v6099 = vsel %vm2071, %v6086, %v6098
      %v6100 = vrot.slane %v5644, 1
      %v6101 = vsel %vm2071, %v6088, %v6100
      %v6102 = vrot.slane %v5645, 1
      %v6103 = vsel %vm2071, %v6090, %v6102
      %v6104 = vrot.slane %v5646, 1
      %v6105 = vsel %vm2071, %v6092, %v6104
      %v6106 = vrot.slane %v5647, 1
      %v6107 = vsel %vm2071, %v6094, %v6106
      %v6108 = vrot.slane %v5648, 1
      %v6109 = vsel %vm2071, %v6096, %v6108
      %v6110 = vrot.slane %v5649, 1
      %v6111 = vsel %vm2071, %v6098, %v6110
      %v6112 = vrot.slane %v5650, 1
      %v6113 = vsel %vm2071, %v6100, %v6112
      %v6114 = vrot.slane %v5651, 1
      %v6115 = vsel %vm2071, %v6102, %v6114
      %v6116 = vrot.slane %v5652, 1
      %v6117 = vsel %vm2071, %v6104, %v6116
      %v6118 = vrot.slane %v5653, 1
      %v6119 = vsel %vm2071, %v6106, %v6118
      %v6120 = vrot.slane %v5654, 1
      %v6121 = vsel %vm2071, %v6108, %v6120
      %v6122 = vrot.slane %v5655, 1
      %v6123 = vsel %vm2071, %v6110, %v6122
      %v6124 = vrot.slane %v5656, 1
      %v6125 = vsel %vm2071, %v6112, %v6124
      %v6126 = vrot.slane %v5657, 1
      %v6127 = vsel %vm2071, %v6114, %v6126
      %v6128 = vrot.slane %v5658, 1
      %v6129 = vsel %vm2071, %v6116, %v6128
      %v6130 = vrot.slane %v5659, 1
      %v6131 = vsel %vm2071, %v6118, %v6130
      %v6132 = vrot.slane %v5660, 1
      %v6133 = vsel %vm2071, %v6120, %v6132
      %v6134 = vrot.slane %v5661, 1
      %v6135 = vsel %vm2071, %v6122, %v6134
      %v6136 = vrot.slane %v5662, 1
      %v6137 = vsel %vm2071, %v6124, %v6136
      %v6138 = vrot.slane %v5663, 1
      %v6139 = vsel %vm2071, %v6126, %v6138
      %v6140 = vrot.slane %v5664, 1
      %v6141 = vsel %vm2071, %v6128, %v6140
      %v6142 = vrot.slane %v5665, 1
      %v6143 = vsel %vm2071, %v6130, %v6142
      %v6144 = vrot.slane %v5666, 1
      %v6145 = vsel %vm2071, %v6132, %v6144
      %v6146 = vrot.slane %v5667, 1
      %v6147 = vsel %vm2071, %v6134, %v6146
      %v6148 = vrot.slane %v5668, 1
      %v6149 = vsel %vm2071, %v6136, %v6148
      %v6150 = vrot.slane %v5669, 1
      %v6151 = vsel %vm2071, %v6138, %v6150
      %v6152 = vrot.slane %v5670, 1
      %v6153 = vsel %vm2071, %v6140, %v6152
      %v6154 = vrot.slane %v5671, 1
      %v6155 = vsel %vm2071, %v6142, %v6154
      %v6156 = vrot.slane %v5672, 1
      %v6157 = vsel %vm2071, %v6144, %v6156
      %v6158 = vrot.slane %v5673, 1
      %v6159 = vsel %vm2071, %v6146, %v6158
      %v6160 = vrot.slane %v5674, 1
      %v6161 = vsel %vm2071, %v6148, %v6160
      %v6162 = vrot.slane %v5675, 1
      %v6163 = vsel %vm2071, %v6150, %v6162
      %v6164 = vrot.slane %v5676, 1
      %v6165 = vsel %vm2071, %v6152, %v6164
      %v6166 = vrot.slane %v5677, 1
      %v6167 = vsel %vm2071, %v6154, %v6166
      %v6168 = vrot.slane %v5678, 1
      %v6169 = vsel %vm2071, %v6156, %v6168
      %v6170 = vrot.slane %v5679, 1
      %v6171 = vsel %vm2071, %v6158, %v6170
      %v6172 = vrot.slane %v5680, 1
      %v6173 = vsel %vm2071, %v6160, %v6172
      %v6174 = vrot.slane %v5681, 1
      %v6175 = vsel %vm2071, %v6162, %v6174
      %v6176 = vrot.slane %v5682, 1
      %v6177 = vsel %vm2071, %v6164, %v6176
      %v6178 = vrot.slane %v5683, 1
      %v6179 = vsel %vm2071, %v6166, %v6178
      %v6180 = vrot.slane %v5684, 1
      %v6181 = vsel %vm2071, %v6168, %v6180
      %v6182 = vrot.slane %v5685, 1
      %v6183 = vsel %vm2071, %v6170, %v6182
      %v6184 = vrot.slane %v5686, 1
      %v6185 = vsel %vm2071, %v6172, %v6184
      %v6186 = vrot.slane %v5687, 1
      %v6187 = vsel %vm2071, %v6174, %v6186
      %v6188 = vrot.slane %v5688, 1
      %v6189 = vsel %vm2071, %v6176, %v6188
      %v6190 = vrot.slane %v5689, 1
      %v6191 = vsel %vm2071, %v6178, %v6190
      %v6192 = vrot.slane %v5690, 1
      %v6193 = vsel %vm2071, %v6180, %v6192
      %v6194 = vrot.slane %v5691, 1
      %v6195 = vsel %vm2071, %v6182, %v6194
      %v6196 = vrot.slane %v5692, 1
      %v6197 = vsel %vm2071, %v6184, %v6196
      %v6198 = vrot.slane %v5693, 1
      %v6199 = vsel %vm2071, %v6186, %v6198
      %v6200 = vrot.slane %v5694, 1
      %v6201 = vsel %vm2071, %v6188, %v6200
      %v6202 = vrot.slane %v5695, 1
      %v6203 = vsel %vm2071, %v6190, %v6202
      %v6204 = vrot.slane %v5696, 1
      %v6205 = vsel %vm2071, %v6192, %v6204
      %v6206 = vrot.slane %v5697, 1
      %v6207 = vsel %vm2071, %v6194, %v6206
      %v6208 = vrot.slane %v5698, 1
      %v6209 = vsel %vm2071, %v6196, %v6208
      %v6210 = vrot.slane %v5699, 1
      %v6211 = vsel %vm2071, %v6198, %v6210
      %v6212 = vrot.slane %v5700, 1
      %v6213 = vsel %vm2071, %v6200, %v6212
      %v6214 = vrot.slane %v5701, 1
      %v6215 = vsel %vm2071, %v6202, %v6214
      %v6216 = vrot.slane %v5702, 1
      %v6217 = vsel %vm2071, %v6204, %v6216
      %v6218 = vrot.slane %v5703, 1
      %v6219 = vsel %vm2071, %v6206, %v6218
      %v6220 = vrot.slane %v5704, 1
      %v6221 = vsel %vm2071, %v6208, %v6220
      %v6222 = vrot.slane %v5705, 1
      %v6223 = vsel %vm2071, %v6210, %v6222
      %v6224 = vrot.slane %v5706, 1
      %v6225 = vsel %vm2071, %v6212, %v6224
      %v6226 = vrot.slane %v5707, 1
      %v6227 = vsel %vm2071, %v6214, %v6226
      %v6228 = vrot.slane %v5708, 1
      %v6229 = vsel %vm2071, %v6216, %v6228
      %v6230 = vrot.slane %v5709, 1
      %v6231 = vsel %vm2071, %v6218, %v6230
      %v6232 = vrot.slane %v5710, 1
      %v6233 = vsel %vm2071, %v6220, %v6232
      %v6234 = vrot.slane %v5711, 1
      %v6235 = vsel %vm2071, %v6222, %v6234
      %v6236 = vrot.slane %v5712, 1
      %v6237 = vsel %vm2071, %v6224, %v6236
      %v6238 = vrot.slane %v5713, 1
      %v6239 = vsel %vm2071, %v6226, %v6238
      %v6240 = vrot.slane %v5714, 1
      %v6241 = vsel %vm2071, %v6228, %v6240
      %v6242 = vrot.slane %v5715, 1
      %v6243 = vsel %vm2071, %v6230, %v6242
      %v6244 = vrot.slane %v5716, 1
      %v6245 = vsel %vm2071, %v6232, %v6244
      %v6246 = vrot.slane %v5717, 1
      %v6247 = vsel %vm2071, %v6234, %v6246
      %v6248 = vrot.slane %v5718, 1
      %v6249 = vsel %vm2071, %v6236, %v6248
      %v6250 = vrot.slane %v5719, 1
      %v6251 = vsel %vm2071, %v6238, %v6250
      %v6252 = vrot.slane %v5720, 1
      %v6253 = vsel %vm2071, %v6240, %v6252
      %v6254 = vrot.slane %v5721, 1
      %v6255 = vsel %vm2071, %v6242, %v6254
      %v6256 = vrot.slane %v5722, 1
      %v6257 = vsel %vm2071, %v6244, %v6256
      %v6258 = vrot.slane %v5723, 1
      %v6259 = vsel %vm2071, %v6246, %v6258
      %v6260 = vrot.slane %v5724, 1
      %v6261 = vsel %vm2071, %v6248, %v6260
      %v6262 = vrot.slane %v5725, 1
      %v6263 = vsel %vm2071, %v6250, %v6262
      %v6264 = vrot.slane %v5726, 1
      %v6265 = vsel %vm2071, %v6252, %v6264
      %v6266 = vrot.slane %v5727, 1
      %v6267 = vsel %vm2071, %v6254, %v6266
      %v6268 = vrot.slane %v5728, 1
      %v6269 = vsel %vm2071, %v6256, %v6268
      %6414 = vmatprep.subr.mxu0 0.0
      %6415 = vmatpush1.msra.mxu0 %v5745
      %6416 = vmatprep.subr.mxu0 0.0
      %6417 = vmatpush1.msra.mxu0 %v5744
      %6418 = vmatprep.subr.mxu0 0.0
      %6419 = vmatpush1.msra.mxu0 %v5743
      %6420 = vmatprep.subr.mxu0 0.0
      %6421 = vmatpush1.msra.mxu0 %v5742
      %6422 = vmatprep.subr.mxu0 0.0
      %6423 = vmatpush1.msra.mxu0 %v5741
      %6424 = vmatprep.subr.mxu0 0.0
      %6425 = vmatpush1.msra.mxu0 %v5740
      %6426 = vmatprep.subr.mxu0 0.0
      %6427 = vmatpush1.msra.mxu0 %v5739
      %6428 = vmatprep.subr.mxu0 0.0
      %6429 = vmatpush1.msra.mxu0 %v5738
      %6430 = vmatprep.subr.mxu0 0.0
      %6431 = vmatpush1.msra.mxu0 %v5737
      %6432 = vmatprep.subr.mxu0 0.0
      %6433 = vmatpush1.msra.mxu0 %v5736
      %6434 = vmatprep.subr.mxu0 0.0
      %6435 = vmatpush1.msra.mxu0 %v5735
      %6436 = vmatprep.subr.mxu0 0.0
      %6437 = vmatpush1.msra.mxu0 %v5734
      %6438 = vmatprep.subr.mxu0 0.0
      %6439 = vmatpush1.msra.mxu0 %v5733
      %6440 = vmatprep.subr.mxu0 0.0
      %6441 = vmatpush1.msra.mxu0 %v5732
      %6442 = vmatprep.subr.mxu0 0.0
      %6443 = vmatpush1.msra.mxu0 %v5731
      %6444 = vmatprep.subr.mxu0 0.0
      %6445 = vmatpush1.msra.mxu0 %v5730
      %6446 = vmatprep.subr.mxu0 0.0
      %6447 = vmatpush2.msra.mxu0 %v5761
      %6448 = vmatprep.subr.mxu0 0.0
      %6449 = vmatpush2.msra.mxu0 %v5760
      %6450 = vmatprep.subr.mxu0 0.0
      %6451 = vmatpush2.msra.mxu0 %v5759
      %6452 = vmatprep.subr.mxu0 0.0
      %6453 = vmatpush2.msra.mxu0 %v5758
      %6454 = vmatprep.subr.mxu0 0.0
      %6455 = vmatpush2.msra.mxu0 %v5757
      %6456 = vmatprep.subr.mxu0 0.0
      %6457 = vmatpush2.msra.mxu0 %v5756
      %6458 = vmatprep.subr.mxu0 0.0
      %6459 = vmatpush2.msra.mxu0 %v5755
      %6460 = vmatprep.subr.mxu0 0.0
      %6461 = vmatpush2.msra.mxu0 %v5754
      %6462 = vmatprep.subr.mxu0 0.0
      %6463 = vmatpush2.msra.mxu0 %v5753
      %6464 = vmatprep.subr.mxu0 0.0
      %6465 = vmatpush2.msra.mxu0 %v5752
      %6466 = vmatprep.subr.mxu0 0.0
      %6467 = vmatpush2.msra.mxu0 %v5751
      %6468 = vmatprep.subr.mxu0 0.0
      %6469 = vmatpush2.msra.mxu0 %v5750
      %6470 = vmatprep.subr.mxu0 0.0
      %6471 = vmatpush2.msra.mxu0 %v5749
      %6472 = vmatprep.subr.mxu0 0.0
      %6473 = vmatpush2.msra.mxu0 %v5748
      %6474 = vmatprep.subr.mxu0 0.0
      %6475 = vmatpush2.msra.mxu0 %v5747
      %6476 = vmatprep.subr.mxu0 0.0
      %6477 = vmatpush2.msra.mxu0 %v5746
      %6478 = vmatprep.mubr.f32.mxu0 %v5981
      %6479 = vmatmul.mubr.f32.gmra.mxu0 %v5978
      %v6480 = vpop.f32.mrf.mxu0
      %v6481 = vadd.f32 0.0, %v6480
      %v6482 = vpop.f32.mrf.mxu0
      %6483 = vmatprep.mubr.f32.mxu0 %v5997
      %6484 = vmatmul.mubr.f32.gmra.mxu0 %v5995
      %v6485 = vpop.f32.mrf.mxu0
      %v6486 = vadd.f32 0.0, %v6485
      %v6487 = vpop.f32.mrf.mxu0
      %6488 = vmatprep.mubr.f32.mxu0 %v6009
      %6489 = vmatmul.mubr.f32.gmra.mxu0 %v6007
      %v6490 = vpop.f32.mrf.mxu0
      %v6491 = vadd.f32 0.0, %v6490
      %v6492 = vpop.f32.mrf.mxu0
      %6493 = vmatprep.mubr.f32.mxu0 %v6021
      %6494 = vmatmul.mubr.f32.gmra.mxu0 %v6019
      %v6495 = vpop.f32.mrf.mxu0
      %v6496 = vadd.f32 0.0, %v6495
      %v6497 = vpop.f32.mrf.mxu0
      %6498 = vmatprep.mubr.f32.mxu0 %v6033
      %6499 = vmatmul.mubr.f32.gmra.mxu0 %v6031
      %v6500 = vpop.f32.mrf.mxu0
      %v6501 = vadd.f32 0.0, %v6500
      %v6502 = vpop.f32.mrf.mxu0
      %6503 = vmatprep.mubr.f32.mxu0 %v6045
      %6504 = vmatmul.mubr.f32.gmra.mxu0 %v6043
      %v6505 = vpop.f32.mrf.mxu0
      %v6506 = vadd.f32 0.0, %v6505
      %v6507 = vpop.f32.mrf.mxu0
      %6508 = vmatprep.mubr.f32.mxu0 %v6057
      %6509 = vmatmul.mubr.f32.gmra.mxu0 %v6055
      %v6510 = vpop.f32.mrf.mxu0
      %v6511 = vadd.f32 0.0, %v6510
      %v6512 = vpop.f32.mrf.mxu0
      %6513 = vmatprep.mubr.f32.mxu0 %v6069
      %6514 = vmatmul.mubr.f32.gmra.mxu0 %v6067
      %v6515 = vpop.f32.mrf.mxu0
      %v6516 = vadd.f32 0.0, %v6515
      %v6517 = vpop.f32.mrf.mxu0
      %6518 = vmatprep.mubr.f32.mxu0 %v6081
      %6519 = vmatmul.mubr.f32.gmra.mxu0 %v6079
      %v6520 = vpop.f32.mrf.mxu0
      %v6521 = vadd.f32 0.0, %v6520
      %v6522 = vpop.f32.mrf.mxu0
      %6523 = vmatprep.mubr.f32.mxu0 %v6093
      %6524 = vmatmul.mubr.f32.gmra.mxu0 %v6091
      %v6525 = vpop.f32.mrf.mxu0
      %v6526 = vadd.f32 0.0, %v6525
      %v6527 = vpop.f32.mrf.mxu0
      %6528 = vmatprep.mubr.f32.mxu0 %v6105
      %6529 = vmatmul.mubr.f32.gmra.mxu0 %v6103
      %v6530 = vpop.f32.mrf.mxu0
      %v6531 = vadd.f32 0.0, %v6530
      %v6532 = vpop.f32.mrf.mxu0
      %6533 = vmatprep.mubr.f32.mxu0 %v6117
      %6534 = vmatmul.mubr.f32.gmra.mxu0 %v6115
      %v6535 = vpop.f32.mrf.mxu0
      %v6536 = vadd.f32 0.0, %v6535
      %v6537 = vpop.f32.mrf.mxu0
      %6538 = vmatprep.mubr.f32.mxu0 %v6129
      %6539 = vmatmul.mubr.f32.gmra.mxu0 %v6127
      %v6540 = vpop.f32.mrf.mxu0
      %v6541 = vadd.f32 0.0, %v6540
      %v6542 = vpop.f32.mrf.mxu0
      %6543 = vmatprep.mubr.f32.mxu0 %v6141
      %6544 = vmatmul.mubr.f32.gmra.mxu0 %v6139
      %v6545 = vpop.f32.mrf.mxu0
      %v6546 = vadd.f32 0.0, %v6545
      %v6547 = vpop.f32.mrf.mxu0
      %6548 = vmatprep.mubr.f32.mxu0 %v6153
      %6549 = vmatmul.mubr.f32.gmra.mxu0 %v6151
      %v6550 = vpop.f32.mrf.mxu0
      %v6551 = vadd.f32 0.0, %v6550
      %v6552 = vpop.f32.mrf.mxu0
      %6553 = vmatprep.mubr.f32.mxu0 %v6165
      %6554 = vmatmul.mubr.f32.gmra.mxu0 %v6163
      %v6555 = vpop.f32.mrf.mxu0
      %v6556 = vadd.f32 0.0, %v6555
      %v6557 = vpop.f32.mrf.mxu0
      %6558 = vmatprep.mubr.f32.mxu0 %v6177
      %6559 = vmatmul.mubr.f32.gmra.mxu0 %v6175
      %v6560 = vpop.f32.mrf.mxu0
      %v6561 = vadd.f32 0.0, %v6560
      %v6562 = vpop.f32.mrf.mxu0
      %6563 = vmatprep.mubr.f32.mxu0 %v6189
      %6564 = vmatmul.mubr.f32.gmra.mxu0 %v6187
      %v6565 = vpop.f32.mrf.mxu0
      %v6566 = vadd.f32 0.0, %v6565
      %v6567 = vpop.f32.mrf.mxu0
      %6568 = vmatprep.mubr.f32.mxu0 %v6201
      %6569 = vmatmul.mubr.f32.gmra.mxu0 %v6199
      %v6570 = vpop.f32.mrf.mxu0
      %v6571 = vadd.f32 0.0, %v6570
      %v6572 = vpop.f32.mrf.mxu0
      %6573 = vmatprep.mubr.f32.mxu0 %v6213
      %6574 = vmatmul.mubr.f32.gmra.mxu0 %v6211
      %v6575 = vpop.f32.mrf.mxu0
      %v6576 = vadd.f32 0.0, %v6575
      %v6577 = vpop.f32.mrf.mxu0
      %6578 = vmatprep.mubr.f32.mxu0 %v6225
      %6579 = vmatmul.mubr.f32.gmra.mxu0 %v6223
      %v6580 = vpop.f32.mrf.mxu0
      %v6581 = vadd.f32 0.0, %v6580
      %v6582 = vpop.f32.mrf.mxu0
      %6583 = vmatprep.mubr.f32.mxu0 %v6237
      %6584 = vmatmul.mubr.f32.gmra.mxu0 %v6235
      %v6585 = vpop.f32.mrf.mxu0
      %v6586 = vadd.f32 0.0, %v6585
      %v6587 = vpop.f32.mrf.mxu0
      %6588 = vmatprep.mubr.f32.mxu0 %v6249
      %6589 = vmatmul.mubr.f32.gmra.mxu0 %v6247
      %v6590 = vpop.f32.mrf.mxu0
      %v6591 = vadd.f32 0.0, %v6590
      %v6592 = vpop.f32.mrf.mxu0
      %6593 = vmatprep.mubr.f32.mxu0 %v6261
      %6594 = vmatmul.mubr.f32.gmra.mxu0 %v6259
      %v6595 = vpop.f32.mrf.mxu0
      %v6596 = vadd.f32 0.0, %v6595
      %v6597 = vpop.f32.mrf.mxu0
      %6598 = vdwg.mxu0
      %6599 = vmatprep.subr.mxu0 0.0
      %6600 = vmatpush1.msra.mxu0 %v5777
      %6601 = vmatprep.subr.mxu0 0.0
      %6602 = vmatpush1.msra.mxu0 %v5776
      %6603 = vmatprep.subr.mxu0 0.0
      %6604 = vmatpush1.msra.mxu0 %v5775
      %6605 = vmatprep.subr.mxu0 0.0
      %6606 = vmatpush1.msra.mxu0 %v5774
      %6607 = vmatprep.subr.mxu0 0.0
      %6608 = vmatpush1.msra.mxu0 %v5773
      %6609 = vmatprep.subr.mxu0 0.0
      %6610 = vmatpush1.msra.mxu0 %v5772
      %6611 = vmatprep.subr.mxu0 0.0
      %6612 = vmatpush1.msra.mxu0 %v5771
      %6613 = vmatprep.subr.mxu0 0.0
      %6614 = vmatpush1.msra.mxu0 %v5770
      %6615 = vmatprep.subr.mxu0 0.0
      %6616 = vmatpush1.msra.mxu0 %v5769
      %6617 = vmatprep.subr.mxu0 0.0
      %6618 = vmatpush1.msra.mxu0 %v5768
      %6619 = vmatprep.subr.mxu0 0.0
      %6620 = vmatpush1.msra.mxu0 %v5767
      %6621 = vmatprep.subr.mxu0 0.0
      %6622 = vmatpush1.msra.mxu0 %v5766
      %6623 = vmatprep.subr.mxu0 0.0
      %6624 = vmatpush1.msra.mxu0 %v5765
      %6625 = vmatprep.subr.mxu0 0.0
      %6626 = vmatpush1.msra.mxu0 %v5764
      %6627 = vmatprep.subr.mxu0 0.0
      %6628 = vmatpush1.msra.mxu0 %v5763
      %6629 = vmatprep.subr.mxu0 0.0
      %6630 = vmatpush1.msra.mxu0 %v5762
      %6631 = vmatprep.subr.mxu0 0.0
      %6632 = vmatpush2.msra.mxu0 %v5793
      %6633 = vmatprep.subr.mxu0 0.0
      %6634 = vmatpush2.msra.mxu0 %v5792
      %6635 = vmatprep.subr.mxu0 0.0
      %6636 = vmatpush2.msra.mxu0 %v5791
      %6637 = vmatprep.subr.mxu0 0.0
      %6638 = vmatpush2.msra.mxu0 %v5790
      %6639 = vmatprep.subr.mxu0 0.0
      %6640 = vmatpush2.msra.mxu0 %v5789
      %6641 = vmatprep.subr.mxu0 0.0
      %6642 = vmatpush2.msra.mxu0 %v5788
      %6643 = vmatprep.subr.mxu0 0.0
      %6644 = vmatpush2.msra.mxu0 %v5787
      %6645 = vmatprep.subr.mxu0 0.0
      %6646 = vmatpush2.msra.mxu0 %v5786
      %6647 = vmatprep.subr.mxu0 0.0
      %6648 = vmatpush2.msra.mxu0 %v5785
      %6649 = vmatprep.subr.mxu0 0.0
      %6650 = vmatpush2.msra.mxu0 %v5784
      %6651 = vmatprep.subr.mxu0 0.0
      %6652 = vmatpush2.msra.mxu0 %v5783
      %6653 = vmatprep.subr.mxu0 0.0
      %6654 = vmatpush2.msra.mxu0 %v5782
      %6655 = vmatprep.subr.mxu0 0.0
      %6656 = vmatpush2.msra.mxu0 %v5781
      %6657 = vmatprep.subr.mxu0 0.0
      %6658 = vmatpush2.msra.mxu0 %v5780
      %6659 = vmatprep.subr.mxu0 0.0
      %6660 = vmatpush2.msra.mxu0 %v5779
      %6661 = vmatprep.subr.mxu0 0.0
      %6662 = vmatpush2.msra.mxu0 %v5778
      %6663 = vmatprep.mubr.f32.mxu0 %v5987
      %6664 = vmatmul.mubr.f32.gmra.mxu0 %v5984
      %v6665 = vpop.f32.mrf.mxu0
      %v6666 = vadd.f32 %v6481, %v6665
      %v6667 = vpop.f32.mrf.mxu0
      %6668 = vmatprep.mubr.f32.mxu0 %v6001
      %6669 = vmatmul.mubr.f32.gmra.mxu0 %v5999
      %v6670 = vpop.f32.mrf.mxu0
      %v6671 = vadd.f32 %v6486, %v6670
      %v6672 = vpop.f32.mrf.mxu0
      %6673 = vmatprep.mubr.f32.mxu0 %v6013
      %6674 = vmatmul.mubr.f32.gmra.mxu0 %v6011
      %v6675 = vpop.f32.mrf.mxu0
      %v6676 = vadd.f32 %v6491, %v6675
      %v6677 = vpop.f32.mrf.mxu0
      %6678 = vmatprep.mubr.f32.mxu0 %v6025
      %6679 = vmatmul.mubr.f32.gmra.mxu0 %v6023
      %v6680 = vpop.f32.mrf.mxu0
      %v6681 = vadd.f32 %v6496, %v6680
      %v6682 = vpop.f32.mrf.mxu0
      %6683 = vmatprep.mubr.f32.mxu0 %v6037
      %6684 = vmatmul.mubr.f32.gmra.mxu0 %v6035
      %v6685 = vpop.f32.mrf.mxu0
      %v6686 = vadd.f32 %v6501, %v6685
      %v6687 = vpop.f32.mrf.mxu0
      %6688 = vmatprep.mubr.f32.mxu0 %v6049
      %6689 = vmatmul.mubr.f32.gmra.mxu0 %v6047
      %v6690 = vpop.f32.mrf.mxu0
      %v6691 = vadd.f32 %v6506, %v6690
      %v6692 = vpop.f32.mrf.mxu0
      %6693 = vmatprep.mubr.f32.mxu0 %v6061
      %6694 = vmatmul.mubr.f32.gmra.mxu0 %v6059
      %v6695 = vpop.f32.mrf.mxu0
      %v6696 = vadd.f32 %v6511, %v6695
      %v6697 = vpop.f32.mrf.mxu0
      %6698 = vmatprep.mubr.f32.mxu0 %v6073
      %6699 = vmatmul.mubr.f32.gmra.mxu0 %v6071
      %v6700 = vpop.f32.mrf.mxu0
      %v6701 = vadd.f32 %v6516, %v6700
      %v6702 = vpop.f32.mrf.mxu0
      %6703 = vmatprep.mubr.f32.mxu0 %v6085
      %6704 = vmatmul.mubr.f32.gmra.mxu0 %v6083
      %v6705 = vpop.f32.mrf.mxu0
      %v6706 = vadd.f32 %v6521, %v6705
      %v6707 = vpop.f32.mrf.mxu0
      %6708 = vmatprep.mubr.f32.mxu0 %v6097
      %6709 = vmatmul.mubr.f32.gmra.mxu0 %v6095
      %v6710 = vpop.f32.mrf.mxu0
      %v6711 = vadd.f32 %v6526, %v6710
      %v6712 = vpop.f32.mrf.mxu0
      %6713 = vmatprep.mubr.f32.mxu0 %v6109
      %6714 = vmatmul.mubr.f32.gmra.mxu0 %v6107
      %v6715 = vpop.f32.mrf.mxu0
      %v6716 = vadd.f32 %v6531, %v6715
      %v6717 = vpop.f32.mrf.mxu0
      %6718 = vmatprep.mubr.f32.mxu0 %v6121
      %6719 = vmatmul.mubr.f32.gmra.mxu0 %v6119
      %v6720 = vpop.f32.mrf.mxu0
      %v6721 = vadd.f32 %v6536, %v6720
      %v6722 = vpop.f32.mrf.mxu0
      %6723 = vmatprep.mubr.f32.mxu0 %v6133
      %6724 = vmatmul.mubr.f32.gmra.mxu0 %v6131
      %v6725 = vpop.f32.mrf.mxu0
      %v6726 = vadd.f32 %v6541, %v6725
      %v6727 = vpop.f32.mrf.mxu0
      %6728 = vmatprep.mubr.f32.mxu0 %v6145
      %6729 = vmatmul.mubr.f32.gmra.mxu0 %v6143
      %v6730 = vpop.f32.mrf.mxu0
      %v6731 = vadd.f32 %v6546, %v6730
      %v6732 = vpop.f32.mrf.mxu0
      %6733 = vmatprep.mubr.f32.mxu0 %v6157
      %6734 = vmatmul.mubr.f32.gmra.mxu0 %v6155
      %v6735 = vpop.f32.mrf.mxu0
      %v6736 = vadd.f32 %v6551, %v6735
      %v6737 = vpop.f32.mrf.mxu0
      %6738 = vmatprep.mubr.f32.mxu0 %v6169
      %6739 = vmatmul.mubr.f32.gmra.mxu0 %v6167
      %v6740 = vpop.f32.mrf.mxu0
      %v6741 = vadd.f32 %v6556, %v6740
      %v6742 = vpop.f32.mrf.mxu0
      %6743 = vmatprep.mubr.f32.mxu0 %v6181
      %6744 = vmatmul.mubr.f32.gmra.mxu0 %v6179
      %v6745 = vpop.f32.mrf.mxu0
      %v6746 = vadd.f32 %v6561, %v6745
      %v6747 = vpop.f32.mrf.mxu0
      %6748 = vmatprep.mubr.f32.mxu0 %v6193
      %6749 = vmatmul.mubr.f32.gmra.mxu0 %v6191
      %v6750 = vpop.f32.mrf.mxu0
      %v6751 = vadd.f32 %v6566, %v6750
      %v6752 = vpop.f32.mrf.mxu0
      %6753 = vmatprep.mubr.f32.mxu0 %v6205
      %6754 = vmatmul.mubr.f32.gmra.mxu0 %v6203
      %v6755 = vpop.f32.mrf.mxu0
      %v6756 = vadd.f32 %v6571, %v6755
      %v6757 = vpop.f32.mrf.mxu0
      %6758 = vmatprep.mubr.f32.mxu0 %v6217
      %6759 = vmatmul.mubr.f32.gmra.mxu0 %v6215
      %v6760 = vpop.f32.mrf.mxu0
      %v6761 = vadd.f32 %v6576, %v6760
      %v6762 = vpop.f32.mrf.mxu0
      %6763 = vmatprep.mubr.f32.mxu0 %v6229
      %6764 = vmatmul.mubr.f32.gmra.mxu0 %v6227
      %v6765 = vpop.f32.mrf.mxu0
      %v6766 = vadd.f32 %v6581, %v6765
      %v6767 = vpop.f32.mrf.mxu0
      %6768 = vmatprep.mubr.f32.mxu0 %v6241
      %6769 = vmatmul.mubr.f32.gmra.mxu0 %v6239
      %v6770 = vpop.f32.mrf.mxu0
      %v6771 = vadd.f32 %v6586, %v6770
      %v6772 = vpop.f32.mrf.mxu0
      %6773 = vmatprep.mubr.f32.mxu0 %v6253
      %6774 = vmatmul.mubr.f32.gmra.mxu0 %v6251
      %v6775 = vpop.f32.mrf.mxu0
      %v6776 = vadd.f32 %v6591, %v6775
      %v6777 = vpop.f32.mrf.mxu0
      %6778 = vmatprep.mubr.f32.mxu0 %v6265
      %6779 = vmatmul.mubr.f32.gmra.mxu0 %v6263
      %v6780 = vpop.f32.mrf.mxu0
      %v6781 = vadd.f32 %v6596, %v6780
      %v6782 = vpop.f32.mrf.mxu0
      %6783 = vdwg.mxu0
      %6784 = vmatprep.subr.mxu0 0.0
      %6785 = vmatpush1.msra.mxu0 %v5809
      %6786 = vmatprep.subr.mxu0 0.0
      %6787 = vmatpush1.msra.mxu0 %v5808
      %6788 = vmatprep.subr.mxu0 0.0
      %6789 = vmatpush1.msra.mxu0 %v5807
      %6790 = vmatprep.subr.mxu0 0.0
      %6791 = vmatpush1.msra.mxu0 %v5806
      %6792 = vmatprep.subr.mxu0 0.0
      %6793 = vmatpush1.msra.mxu0 %v5805
      %6794 = vmatprep.subr.mxu0 0.0
      %6795 = vmatpush1.msra.mxu0 %v5804
      %6796 = vmatprep.subr.mxu0 0.0
      %6797 = vmatpush1.msra.mxu0 %v5803
      %6798 = vmatprep.subr.mxu0 0.0
      %6799 = vmatpush1.msra.mxu0 %v5802
      %6800 = vmatprep.subr.mxu0 0.0
      %6801 = vmatpush1.msra.mxu0 %v5801
      %6802 = vmatprep.subr.mxu0 0.0
      %6803 = vmatpush1.msra.mxu0 %v5800
      %6804 = vmatprep.subr.mxu0 0.0
      %6805 = vmatpush1.msra.mxu0 %v5799
      %6806 = vmatprep.subr.mxu0 0.0
      %6807 = vmatpush1.msra.mxu0 %v5798
      %6808 = vmatprep.subr.mxu0 0.0
      %6809 = vmatpush1.msra.mxu0 %v5797
      %6810 = vmatprep.subr.mxu0 0.0
      %6811 = vmatpush1.msra.mxu0 %v5796
      %6812 = vmatprep.subr.mxu0 0.0
      %6813 = vmatpush1.msra.mxu0 %v5795
      %6814 = vmatprep.subr.mxu0 0.0
      %6815 = vmatpush1.msra.mxu0 %v5794
      %6816 = vmatprep.subr.mxu0 0.0
      %6817 = vmatpush2.msra.mxu0 %v5825
      %6818 = vmatprep.subr.mxu0 0.0
      %6819 = vmatpush2.msra.mxu0 %v5824
      %6820 = vmatprep.subr.mxu0 0.0
      %6821 = vmatpush2.msra.mxu0 %v5823
      %6822 = vmatprep.subr.mxu0 0.0
      %6823 = vmatpush2.msra.mxu0 %v5822
      %6824 = vmatprep.subr.mxu0 0.0
      %6825 = vmatpush2.msra.mxu0 %v5821
      %6826 = vmatprep.subr.mxu0 0.0
      %6827 = vmatpush2.msra.mxu0 %v5820
      %6828 = vmatprep.subr.mxu0 0.0
      %6829 = vmatpush2.msra.mxu0 %v5819
      %6830 = vmatprep.subr.mxu0 0.0
      %6831 = vmatpush2.msra.mxu0 %v5818
      %6832 = vmatprep.subr.mxu0 0.0
      %6833 = vmatpush2.msra.mxu0 %v5817
      %6834 = vmatprep.subr.mxu0 0.0
      %6835 = vmatpush2.msra.mxu0 %v5816
      %6836 = vmatprep.subr.mxu0 0.0
      %6837 = vmatpush2.msra.mxu0 %v5815
      %6838 = vmatprep.subr.mxu0 0.0
      %6839 = vmatpush2.msra.mxu0 %v5814
      %6840 = vmatprep.subr.mxu0 0.0
      %6841 = vmatpush2.msra.mxu0 %v5813
      %6842 = vmatprep.subr.mxu0 0.0
      %6843 = vmatpush2.msra.mxu0 %v5812
      %6844 = vmatprep.subr.mxu0 0.0
      %6845 = vmatpush2.msra.mxu0 %v5811
      %6846 = vmatprep.subr.mxu0 0.0
      %6847 = vmatpush2.msra.mxu0 %v5810
      %6848 = vmatprep.mubr.f32.mxu0 %v5993
      %6849 = vmatmul.mubr.f32.gmra.mxu0 %v5990
      %v6850 = vpop.f32.mrf.mxu0
      %v6851 = vadd.f32 %v6666, %v6850
      %v6852 = vpop.f32.mrf.mxu0
      %6853 = vmatprep.mubr.f32.mxu0 %v6005
      %6854 = vmatmul.mubr.f32.gmra.mxu0 %v6003
      %v6855 = vpop.f32.mrf.mxu0
      %v6856 = vadd.f32 %v6671, %v6855
      %v6857 = vpop.f32.mrf.mxu0
      %6858 = vmatprep.mubr.f32.mxu0 %v6017
      %6859 = vmatmul.mubr.f32.gmra.mxu0 %v6015
      %v6860 = vpop.f32.mrf.mxu0
      %v6861 = vadd.f32 %v6676, %v6860
      %v6862 = vpop.f32.mrf.mxu0
      %6863 = vmatprep.mubr.f32.mxu0 %v6029
      %6864 = vmatmul.mubr.f32.gmra.mxu0 %v6027
      %v6865 = vpop.f32.mrf.mxu0
      %v6866 = vadd.f32 %v6681, %v6865
      %v6867 = vpop.f32.mrf.mxu0
      %6868 = vmatprep.mubr.f32.mxu0 %v6041
      %6869 = vmatmul.mubr.f32.gmra.mxu0 %v6039
      %v6870 = vpop.f32.mrf.mxu0
      %v6871 = vadd.f32 %v6686, %v6870
      %v6872 = vpop.f32.mrf.mxu0
      %6873 = vmatprep.mubr.f32.mxu0 %v6053
      %6874 = vmatmul.mubr.f32.gmra.mxu0 %v6051
      %v6875 = vpop.f32.mrf.mxu0
      %v6876 = vadd.f32 %v6691, %v6875
      %v6877 = vpop.f32.mrf.mxu0
      %6878 = vmatprep.mubr.f32.mxu0 %v6065
      %6879 = vmatmul.mubr.f32.gmra.mxu0 %v6063
      %v6880 = vpop.f32.mrf.mxu0
      %v6881 = vadd.f32 %v6696, %v6880
      %v6882 = vpop.f32.mrf.mxu0
      %6883 = vmatprep.mubr.f32.mxu0 %v6077
      %6884 = vmatmul.mubr.f32.gmra.mxu0 %v6075
      %v6885 = vpop.f32.mrf.mxu0
      %v6886 = vadd.f32 %v6701, %v6885
      %v6887 = vpop.f32.mrf.mxu0
      %6888 = vmatprep.mubr.f32.mxu0 %v6089
      %6889 = vmatmul.mubr.f32.gmra.mxu0 %v6087
      %v6890 = vpop.f32.mrf.mxu0
      %v6891 = vadd.f32 %v6706, %v6890
      %v6892 = vpop.f32.mrf.mxu0
      %6893 = vmatprep.mubr.f32.mxu0 %v6101
      %6894 = vmatmul.mubr.f32.gmra.mxu0 %v6099
      %v6895 = vpop.f32.mrf.mxu0
      %v6896 = vadd.f32 %v6711, %v6895
      %v6897 = vpop.f32.mrf.mxu0
      %6898 = vmatprep.mubr.f32.mxu0 %v6113
      %6899 = vmatmul.mubr.f32.gmra.mxu0 %v6111
      %v6900 = vpop.f32.mrf.mxu0
      %v6901 = vadd.f32 %v6716, %v6900
      %v6902 = vpop.f32.mrf.mxu0
      %6903 = vmatprep.mubr.f32.mxu0 %v6125
      %6904 = vmatmul.mubr.f32.gmra.mxu0 %v6123
      %v6905 = vpop.f32.mrf.mxu0
      %v6906 = vadd.f32 %v6721, %v6905
      %v6907 = vpop.f32.mrf.mxu0
      %6908 = vmatprep.mubr.f32.mxu0 %v6137
      %6909 = vmatmul.mubr.f32.gmra.mxu0 %v6135
      %v6910 = vpop.f32.mrf.mxu0
      %v6911 = vadd.f32 %v6726, %v6910
      %v6912 = vpop.f32.mrf.mxu0
      %6913 = vmatprep.mubr.f32.mxu0 %v6149
      %6914 = vmatmul.mubr.f32.gmra.mxu0 %v6147
      %v6915 = vpop.f32.mrf.mxu0
      %v6916 = vadd.f32 %v6731, %v6915
      %v6917 = vpop.f32.mrf.mxu0
      %6918 = vmatprep.mubr.f32.mxu0 %v6161
      %6919 = vmatmul.mubr.f32.gmra.mxu0 %v6159
      %v6920 = vpop.f32.mrf.mxu0
      %v6921 = vadd.f32 %v6736, %v6920
      %v6922 = vpop.f32.mrf.mxu0
      %6923 = vmatprep.mubr.f32.mxu0 %v6173
      %6924 = vmatmul.mubr.f32.gmra.mxu0 %v6171
      %v6925 = vpop.f32.mrf.mxu0
      %v6926 = vadd.f32 %v6741, %v6925
      %v6927 = vpop.f32.mrf.mxu0
      %6928 = vmatprep.mubr.f32.mxu0 %v6185
      %6929 = vmatmul.mubr.f32.gmra.mxu0 %v6183
      %v6930 = vpop.f32.mrf.mxu0
      %v6931 = vadd.f32 %v6746, %v6930
      %v6932 = vpop.f32.mrf.mxu0
      %6933 = vmatprep.mubr.f32.mxu0 %v6197
      %6934 = vmatmul.mubr.f32.gmra.mxu0 %v6195
      %v6935 = vpop.f32.mrf.mxu0
      %v6936 = vadd.f32 %v6751, %v6935
      %v6937 = vpop.f32.mrf.mxu0
      %6938 = vmatprep.mubr.f32.mxu0 %v6209
      %6939 = vmatmul.mubr.f32.gmra.mxu0 %v6207
      %v6940 = vpop.f32.mrf.mxu0
      %v6941 = vadd.f32 %v6756, %v6940
      %v6942 = vpop.f32.mrf.mxu0
      %6943 = vmatprep.mubr.f32.mxu0 %v6221
      %6944 = vmatmul.mubr.f32.gmra.mxu0 %v6219
      %v6945 = vpop.f32.mrf.mxu0
      %v6946 = vadd.f32 %v6761, %v6945
      %v6947 = vpop.f32.mrf.mxu0
      %6948 = vmatprep.mubr.f32.mxu0 %v6233
      %6949 = vmatmul.mubr.f32.gmra.mxu0 %v6231
      %v6950 = vpop.f32.mrf.mxu0
      %v6951 = vadd.f32 %v6766, %v6950
      %v6952 = vpop.f32.mrf.mxu0
      %6953 = vmatprep.mubr.f32.mxu0 %v6245
      %6954 = vmatmul.mubr.f32.gmra.mxu0 %v6243
      %v6955 = vpop.f32.mrf.mxu0
      %v6956 = vadd.f32 %v6771, %v6955
      %v6957 = vpop.f32.mrf.mxu0
      %6958 = vmatprep.mubr.f32.mxu0 %v6257
      %6959 = vmatmul.mubr.f32.gmra.mxu0 %v6255
      %v6960 = vpop.f32.mrf.mxu0
      %v6961 = vadd.f32 %v6776, %v6960
      %v6962 = vpop.f32.mrf.mxu0
      %6963 = vmatprep.mubr.f32.mxu0 %v6269
      %6964 = vmatmul.mubr.f32.gmra.mxu0 %v6267
      %v6965 = vpop.f32.mrf.mxu0
      %v6966 = vadd.f32 %v6781, %v6965
      %v6967 = vpop.f32.mrf.mxu0
      %6968 = vdwg.mxu0
      %v6969 = vadd.f32 %v5555, %v6851
      %v6970 = vadd.f32 %v5556, %v6856
      %v6971 = vadd.f32 %v5557, %v6861
      %v6972 = vadd.f32 %v5558, %v6866
      %v6973 = vadd.f32 %v5559, %v6871
      %v6974 = vadd.f32 %v5560, %v6876
      %v6975 = vadd.f32 %v5561, %v6881
      %v6976 = vadd.f32 %v5562, %v6886
      %v6977 = vadd.f32 %v5563, %v6891
      %v6978 = vadd.f32 %v5564, %v6896
      %v6979 = vadd.f32 %v5565, %v6901
      %v6980 = vadd.f32 %v5566, %v6906
      %v6981 = vadd.f32 %v5567, %v6911
      %v6982 = vadd.f32 %v5568, %v6916
      %v6983 = vadd.f32 %v5569, %v6921
      %v6984 = vadd.f32 %v5570, %v6926
      %v6985 = vadd.f32 %v5571, %v6931
      %v6986 = vadd.f32 %v5572, %v6936
      %v6987 = vadd.f32 %v5573, %v6941
      %v6988 = vadd.f32 %v5574, %v6946
      %v6989 = vadd.f32 %v5575, %v6951
      %v6990 = vadd.f32 %v5576, %v6956
      %v6991 = vadd.f32 %v5577, %v6961
      %v6992 = vadd.f32 %v5578, %v6966
      %v6993 = vld [vmem:[#allocation2 + $0x60] sm:$0xfc]
      %v6994 = vld [vmem:[#allocation2 + $0x68] sm:$0xfc]
      %v6995 = vld [vmem:[#allocation2 + $0x70] sm:$0xfc]
      %v6996 = vld [vmem:[#allocation2 + $0x78] sm:$0xfc]
      %v6997 = vld [vmem:[#allocation2 + $0x80] sm:$0xfc]
      %v6998 = vld [vmem:[#allocation2 + $0x88] sm:$0xfc]
      %v6999 = vld [vmem:[#allocation2 + $0x4e0] sm:$0x3]
      %v7000 = vld [vmem:[#allocation2 + $0x4e8] sm:$0x3]
      %v7001 = vld [vmem:[#allocation2 + $0x4f0] sm:$0x3]
      %v7002 = vld [vmem:[#allocation2 + $0x4f8] sm:$0x3]
      %v7003 = vld [vmem:[#allocation2 + $0x500] sm:$0x3]
      %v7004 = vld [vmem:[#allocation2 + $0x508] sm:$0x3]
      %s7005 = scalar_lea.vmem %s3, 3840
      %v7006 = vld [vmem:[%s7005] sm:$0xff]
      %v7007 = vld [vmem:[%s7005 + $0x8] sm:$0xff]
      %v7008 = vld [vmem:[%s7005 + $0x10] sm:$0xff]
      %v7009 = vld [vmem:[%s7005 + $0x18] sm:$0xff]
      %v7010 = vld [vmem:[%s7005 + $0x20] sm:$0xff]
      %v7011 = vld [vmem:[%s7005 + $0x28] sm:$0xff]
      %v7012 = vld [vmem:[%s7005 + $0x30] sm:$0xff]
      %v7013 = vld [vmem:[%s7005 + $0x38] sm:$0xff]
      %v7014 = vld [vmem:[%s7005 + $0x40] sm:$0xff]
      %v7015 = vld [vmem:[%s7005 + $0x48] sm:$0xff]
      %v7016 = vld [vmem:[%s7005 + $0x50] sm:$0xff]
      %v7017 = vld [vmem:[%s7005 + $0x58] sm:$0xff]
      %v7018 = vld [vmem:[%s7005 + $0x60] sm:$0xff]
      %v7019 = vld [vmem:[%s7005 + $0x68] sm:$0xff]
      %v7020 = vld [vmem:[%s7005 + $0x70] sm:$0xff]
      %v7021 = vld [vmem:[%s7005 + $0x78] sm:$0xff]
      %v7022 = vld [vmem:[%s7005 + $0x80] sm:$0xff]
      %v7023 = vld [vmem:[%s7005 + $0x88] sm:$0xff]
      %v7024 = vld [vmem:[%s7005 + $0x90] sm:$0xff]
      %v7025 = vld [vmem:[%s7005 + $0x98] sm:$0xff]
      %v7026 = vld [vmem:[%s7005 + $0xa0] sm:$0xff]
      %v7027 = vld [vmem:[%s7005 + $0xa8] sm:$0xff]
      %v7028 = vld [vmem:[%s7005 + $0xb0] sm:$0xff]
      %v7029 = vld [vmem:[%s7005 + $0xb8] sm:$0xff]
      %v7030 = vld [vmem:[%s7005 + $0xc0] sm:$0xff]
      %v7031 = vld [vmem:[%s7005 + $0xc8] sm:$0xff]
      %v7032 = vld [vmem:[%s7005 + $0xd0] sm:$0xff]
      %v7033 = vld [vmem:[%s7005 + $0xd8] sm:$0xff]
      %v7034 = vld [vmem:[%s7005 + $0xe0] sm:$0xff]
      %v7035 = vld [vmem:[%s7005 + $0xe8] sm:$0xff]
      %v7036 = vld [vmem:[%s7005 + $0xf0] sm:$0xff]
      %v7037 = vld [vmem:[%s7005 + $0xf8] sm:$0xff]
      %v7038 = vld [vmem:[%s7005 + $0x100] sm:$0xff]
      %v7039 = vld [vmem:[%s7005 + $0x108] sm:$0xff]
      %v7040 = vld [vmem:[%s7005 + $0x110] sm:$0xff]
      %v7041 = vld [vmem:[%s7005 + $0x118] sm:$0xff]
      %v7042 = vld [vmem:[%s7005 + $0x120] sm:$0xff]
      %v7043 = vld [vmem:[%s7005 + $0x128] sm:$0xff]
      %v7044 = vld [vmem:[%s7005 + $0x130] sm:$0xff]
      %v7045 = vld [vmem:[%s7005 + $0x138] sm:$0xff]
      %v7046 = vld [vmem:[%s7005 + $0x140] sm:$0xff]
      %v7047 = vld [vmem:[%s7005 + $0x148] sm:$0xff]
      %v7048 = vld [vmem:[%s7005 + $0x150] sm:$0xff]
      %v7049 = vld [vmem:[%s7005 + $0x158] sm:$0xff]
      %v7050 = vld [vmem:[%s7005 + $0x160] sm:$0xff]
      %v7051 = vld [vmem:[%s7005 + $0x168] sm:$0xff]
      %v7052 = vld [vmem:[%s7005 + $0x170] sm:$0xff]
      %v7053 = vld [vmem:[%s7005 + $0x178] sm:$0xff]
      %v7054 = vld [vmem:[%s7005 + $0x180] sm:$0xff]
      %v7055 = vld [vmem:[%s7005 + $0x188] sm:$0xff]
      %v7056 = vld [vmem:[%s7005 + $0x190] sm:$0xff]
      %v7057 = vld [vmem:[%s7005 + $0x198] sm:$0xff]
      %v7058 = vld [vmem:[%s7005 + $0x1a0] sm:$0xff]
      %v7059 = vld [vmem:[%s7005 + $0x1a8] sm:$0xff]
      %v7060 = vld [vmem:[%s7005 + $0x1b0] sm:$0xff]
      %v7061 = vld [vmem:[%s7005 + $0x1b8] sm:$0xff]
      %v7062 = vld [vmem:[%s7005 + $0x1c0] sm:$0xff]
      %v7063 = vld [vmem:[%s7005 + $0x1c8] sm:$0xff]
      %v7064 = vld [vmem:[%s7005 + $0x1d0] sm:$0xff]
      %v7065 = vld [vmem:[%s7005 + $0x1d8] sm:$0xff]
      %v7066 = vld [vmem:[%s7005 + $0x1e0] sm:$0xff]
      %v7067 = vld [vmem:[%s7005 + $0x1e8] sm:$0xff]
      %v7068 = vld [vmem:[%s7005 + $0x1f0] sm:$0xff]
      %v7069 = vld [vmem:[%s7005 + $0x1f8] sm:$0xff]
      %v7070 = vld [vmem:[%s7005 + $0x200] sm:$0xff]
      %v7071 = vld [vmem:[%s7005 + $0x208] sm:$0xff]
      %v7072 = vld [vmem:[%s7005 + $0x210] sm:$0xff]
      %v7073 = vld [vmem:[%s7005 + $0x218] sm:$0xff]
      %v7074 = vld [vmem:[%s7005 + $0x220] sm:$0xff]
      %v7075 = vld [vmem:[%s7005 + $0x228] sm:$0xff]
      %v7076 = vld [vmem:[%s7005 + $0x230] sm:$0xff]
      %v7077 = vld [vmem:[%s7005 + $0x238] sm:$0xff]
      %v7078 = vld [vmem:[%s7005 + $0x240] sm:$0xff]
      %v7079 = vld [vmem:[%s7005 + $0x248] sm:$0xff]
      %v7080 = vld [vmem:[%s7005 + $0x250] sm:$0xff]
      %v7081 = vld [vmem:[%s7005 + $0x258] sm:$0xff]
      %v7082 = vld [vmem:[%s7005 + $0x260] sm:$0xff]
      %v7083 = vld [vmem:[%s7005 + $0x268] sm:$0xff]
      %v7084 = vld [vmem:[%s7005 + $0x270] sm:$0xff]
      %v7085 = vld [vmem:[%s7005 + $0x278] sm:$0xff]
      %v7086 = vld [vmem:[%s7005 + $0x280] sm:$0xff]
      %v7087 = vld [vmem:[%s7005 + $0x288] sm:$0xff]
      %v7088 = vld [vmem:[%s7005 + $0x290] sm:$0xff]
      %v7089 = vld [vmem:[%s7005 + $0x298] sm:$0xff]
      %v7090 = vld [vmem:[%s7005 + $0x2a0] sm:$0xff]
      %v7091 = vld [vmem:[%s7005 + $0x2a8] sm:$0xff]
      %v7092 = vld [vmem:[%s7005 + $0x2b0] sm:$0xff]
      %v7093 = vld [vmem:[%s7005 + $0x2b8] sm:$0xff]
      %v7094 = vld [vmem:[%s7005 + $0x2c0] sm:$0xff]
      %v7095 = vld [vmem:[%s7005 + $0x2c8] sm:$0xff]
      %v7096 = vld [vmem:[%s7005 + $0x2d0] sm:$0xff]
      %v7097 = vld [vmem:[%s7005 + $0x2d8] sm:$0xff]
      %v7098 = vld [vmem:[%s7005 + $0x2e0] sm:$0xff]
      %v7099 = vld [vmem:[%s7005 + $0x2e8] sm:$0xff]
      %v7100 = vld [vmem:[%s7005 + $0x2f0] sm:$0xff]
      %v7101 = vld [vmem:[%s7005 + $0x2f8] sm:$0xff]
      %v7114 = vrot.slane %v6993, 2
      %v7115 = vrot.slane %v5585, 2
      %v7116 = vsel %vm3741, %v7114, %v7115
      %v7117 = vrot.slane %v6994, 2
      %v7118 = vrot.slane %v5586, 2
      %v7119 = vsel %vm3741, %v7117, %v7118
      %v7120 = vrot.slane %v6995, 2
      %v7121 = vrot.slane %v5587, 2
      %v7122 = vsel %vm3741, %v7120, %v7121
      %v7123 = vrot.slane %v6996, 2
      %v7124 = vrot.slane %v5588, 2
      %v7125 = vsel %vm3741, %v7123, %v7124
      %v7126 = vrot.slane %v6997, 2
      %v7127 = vrot.slane %v5589, 2
      %v7128 = vsel %vm3741, %v7126, %v7127
      %v7129 = vrot.slane %v6998, 2
      %v7130 = vrot.slane %v5590, 2
      %v7131 = vsel %vm3741, %v7129, %v7130
      %v7132 = vrot.slane %v5591, 2
      %v7133 = vsel %vm3741, %v7115, %v7132
      %v7134 = vrot.slane %v5592, 2
      %v7135 = vsel %vm3741, %v7118, %v7134
      %v7136 = vrot.slane %v5593, 2
      %v7137 = vsel %vm3741, %v7121, %v7136
      %v7138 = vrot.slane %v5594, 2
      %v7139 = vsel %vm3741, %v7124, %v7138
      %v7140 = vrot.slane %v5595, 2
      %v7141 = vsel %vm3741, %v7127, %v7140
      %v7142 = vrot.slane %v5596, 2
      %v7143 = vsel %vm3741, %v7130, %v7142
      %v7144 = vrot.slane %v5597, 2
      %v7145 = vsel %vm3741, %v7132, %v7144
      %v7146 = vrot.slane %v5598, 2
      %v7147 = vsel %vm3741, %v7134, %v7146
      %v7148 = vrot.slane %v5599, 2
      %v7149 = vsel %vm3741, %v7136, %v7148
      %v7150 = vrot.slane %v5600, 2
      %v7151 = vsel %vm3741, %v7138, %v7150
      %v7152 = vrot.slane %v5601, 2
      %v7153 = vsel %vm3741, %v7140, %v7152
      %v7154 = vrot.slane %v5602, 2
      %v7155 = vsel %vm3741, %v7142, %v7154
      %v7156 = vrot.slane %v5603, 2
      %v7157 = vsel %vm3741, %v7144, %v7156
      %v7158 = vrot.slane %v5604, 2
      %v7159 = vsel %vm3741, %v7146, %v7158
      %v7160 = vrot.slane %v5605, 2
      %v7161 = vsel %vm3741, %v7148, %v7160
      %v7162 = vrot.slane %v5606, 2
      %v7163 = vsel %vm3741, %v7150, %v7162
      %v7164 = vrot.slane %v5607, 2
      %v7165 = vsel %vm3741, %v7152, %v7164
      %v7166 = vrot.slane %v5608, 2
      %v7167 = vsel %vm3741, %v7154, %v7166
      %v7168 = vrot.slane %v5609, 2
      %v7169 = vsel %vm3741, %v7156, %v7168
      %v7170 = vrot.slane %v5610, 2
      %v7171 = vsel %vm3741, %v7158, %v7170
      %v7172 = vrot.slane %v5611, 2
      %v7173 = vsel %vm3741, %v7160, %v7172
      %v7174 = vrot.slane %v5612, 2
      %v7175 = vsel %vm3741, %v7162, %v7174
      %v7176 = vrot.slane %v5613, 2
      %v7177 = vsel %vm3741, %v7164, %v7176
      %v7178 = vrot.slane %v5614, 2
      %v7179 = vsel %vm3741, %v7166, %v7178
      %v7180 = vrot.slane %v5615, 2
      %v7181 = vsel %vm3741, %v7168, %v7180
      %v7182 = vrot.slane %v5616, 2
      %v7183 = vsel %vm3741, %v7170, %v7182
      %v7184 = vrot.slane %v5617, 2
      %v7185 = vsel %vm3741, %v7172, %v7184
      %v7186 = vrot.slane %v5618, 2
      %v7187 = vsel %vm3741, %v7174, %v7186
      %v7188 = vrot.slane %v5619, 2
      %v7189 = vsel %vm3741, %v7176, %v7188
      %v7190 = vrot.slane %v5620, 2
      %v7191 = vsel %vm3741, %v7178, %v7190
      %v7192 = vrot.slane %v5621, 2
      %v7193 = vsel %vm3741, %v7180, %v7192
      %v7194 = vrot.slane %v5622, 2
      %v7195 = vsel %vm3741, %v7182, %v7194
      %v7196 = vrot.slane %v5623, 2
      %v7197 = vsel %vm3741, %v7184, %v7196
      %v7198 = vrot.slane %v5624, 2
      %v7199 = vsel %vm3741, %v7186, %v7198
      %v7200 = vrot.slane %v5625, 2
      %v7201 = vsel %vm3741, %v7188, %v7200
      %v7202 = vrot.slane %v5626, 2
      %v7203 = vsel %vm3741, %v7190, %v7202
      %v7204 = vrot.slane %v5627, 2
      %v7205 = vsel %vm3741, %v7192, %v7204
      %v7206 = vrot.slane %v5628, 2
      %v7207 = vsel %vm3741, %v7194, %v7206
      %v7208 = vrot.slane %v5629, 2
      %v7209 = vsel %vm3741, %v7196, %v7208
      %v7210 = vrot.slane %v5630, 2
      %v7211 = vsel %vm3741, %v7198, %v7210
      %v7212 = vrot.slane %v5631, 2
      %v7213 = vsel %vm3741, %v7200, %v7212
      %v7214 = vrot.slane %v5632, 2
      %v7215 = vsel %vm3741, %v7202, %v7214
      %v7216 = vrot.slane %v5633, 2
      %v7217 = vsel %vm3741, %v7204, %v7216
      %v7218 = vrot.slane %v5634, 2
      %v7219 = vsel %vm3741, %v7206, %v7218
      %v7220 = vrot.slane %v5635, 2
      %v7221 = vsel %vm3741, %v7208, %v7220
      %v7222 = vrot.slane %v5636, 2
      %v7223 = vsel %vm3741, %v7210, %v7222
      %v7224 = vrot.slane %v5637, 2
      %v7225 = vsel %vm3741, %v7212, %v7224
      %v7226 = vrot.slane %v5638, 2
      %v7227 = vsel %vm3741, %v7214, %v7226
      %v7228 = vrot.slane %v5639, 2
      %v7229 = vsel %vm3741, %v7216, %v7228
      %v7230 = vrot.slane %v5640, 2
      %v7231 = vsel %vm3741, %v7218, %v7230
      %v7232 = vrot.slane %v5641, 2
      %v7233 = vsel %vm3741, %v7220, %v7232
      %v7234 = vrot.slane %v5642, 2
      %v7235 = vsel %vm3741, %v7222, %v7234
      %v7236 = vrot.slane %v5643, 2
      %v7237 = vsel %vm3741, %v7224, %v7236
      %v7238 = vrot.slane %v5644, 2
      %v7239 = vsel %vm3741, %v7226, %v7238
      %v7240 = vrot.slane %v5645, 2
      %v7241 = vsel %vm3741, %v7228, %v7240
      %v7242 = vrot.slane %v5646, 2
      %v7243 = vsel %vm3741, %v7230, %v7242
      %v7244 = vrot.slane %v5647, 2
      %v7245 = vsel %vm3741, %v7232, %v7244
      %v7246 = vrot.slane %v5648, 2
      %v7247 = vsel %vm3741, %v7234, %v7246
      %v7248 = vrot.slane %v5649, 2
      %v7249 = vsel %vm3741, %v7236, %v7248
      %v7250 = vrot.slane %v5650, 2
      %v7251 = vsel %vm3741, %v7238, %v7250
      %v7252 = vrot.slane %v5651, 2
      %v7253 = vsel %vm3741, %v7240, %v7252
      %v7254 = vrot.slane %v5652, 2
      %v7255 = vsel %vm3741, %v7242, %v7254
      %v7256 = vrot.slane %v5653, 2
      %v7257 = vsel %vm3741, %v7244, %v7256
      %v7258 = vrot.slane %v5654, 2
      %v7259 = vsel %vm3741, %v7246, %v7258
      %v7260 = vrot.slane %v5655, 2
      %v7261 = vsel %vm3741, %v7248, %v7260
      %v7262 = vrot.slane %v5656, 2
      %v7263 = vsel %vm3741, %v7250, %v7262
      %v7264 = vrot.slane %v5657, 2
      %v7265 = vsel %vm3741, %v7252, %v7264
      %v7266 = vrot.slane %v5658, 2
      %v7267 = vsel %vm3741, %v7254, %v7266
      %v7268 = vrot.slane %v5659, 2
      %v7269 = vsel %vm3741, %v7256, %v7268
      %v7270 = vrot.slane %v5660, 2
      %v7271 = vsel %vm3741, %v7258, %v7270
      %v7272 = vrot.slane %v5661, 2
      %v7273 = vsel %vm3741, %v7260, %v7272
      %v7274 = vrot.slane %v5662, 2
      %v7275 = vsel %vm3741, %v7262, %v7274
      %v7276 = vrot.slane %v5663, 2
      %v7277 = vsel %vm3741, %v7264, %v7276
      %v7278 = vrot.slane %v5664, 2
      %v7279 = vsel %vm3741, %v7266, %v7278
      %v7280 = vrot.slane %v5665, 2
      %v7281 = vsel %vm3741, %v7268, %v7280
      %v7282 = vrot.slane %v5666, 2
      %v7283 = vsel %vm3741, %v7270, %v7282
      %v7284 = vrot.slane %v5667, 2
      %v7285 = vsel %vm3741, %v7272, %v7284
      %v7286 = vrot.slane %v5668, 2
      %v7287 = vsel %vm3741, %v7274, %v7286
      %v7288 = vrot.slane %v5669, 2
      %v7289 = vsel %vm3741, %v7276, %v7288
      %v7290 = vrot.slane %v5670, 2
      %v7291 = vsel %vm3741, %v7278, %v7290
      %v7292 = vrot.slane %v5671, 2
      %v7293 = vsel %vm3741, %v7280, %v7292
      %v7294 = vrot.slane %v5672, 2
      %v7295 = vsel %vm3741, %v7282, %v7294
      %v7296 = vrot.slane %v5673, 2
      %v7297 = vsel %vm3741, %v7284, %v7296
      %v7298 = vrot.slane %v5674, 2
      %v7299 = vsel %vm3741, %v7286, %v7298
      %v7300 = vrot.slane %v5675, 2
      %v7301 = vsel %vm3741, %v7288, %v7300
      %v7302 = vrot.slane %v5676, 2
      %v7303 = vsel %vm3741, %v7290, %v7302
      %v7304 = vrot.slane %v5677, 2
      %v7305 = vsel %vm3741, %v7292, %v7304
      %v7306 = vrot.slane %v5678, 2
      %v7307 = vsel %vm3741, %v7294, %v7306
      %v7308 = vrot.slane %v5679, 2
      %v7309 = vsel %vm3741, %v7296, %v7308
      %v7310 = vrot.slane %v5680, 2
      %v7311 = vsel %vm3741, %v7298, %v7310
      %v7312 = vrot.slane %v5681, 2
      %v7313 = vsel %vm3741, %v7300, %v7312
      %v7314 = vrot.slane %v5682, 2
      %v7315 = vsel %vm3741, %v7302, %v7314
      %v7316 = vrot.slane %v5683, 2
      %v7317 = vsel %vm3741, %v7304, %v7316
      %v7318 = vrot.slane %v5684, 2
      %v7319 = vsel %vm3741, %v7306, %v7318
      %v7320 = vrot.slane %v5685, 2
      %v7321 = vsel %vm3741, %v7308, %v7320
      %v7322 = vrot.slane %v5686, 2
      %v7323 = vsel %vm3741, %v7310, %v7322
      %v7324 = vrot.slane %v5687, 2
      %v7325 = vsel %vm3741, %v7312, %v7324
      %v7326 = vrot.slane %v5688, 2
      %v7327 = vsel %vm3741, %v7314, %v7326
      %v7328 = vrot.slane %v5689, 2
      %v7329 = vsel %vm3741, %v7316, %v7328
      %v7330 = vrot.slane %v5690, 2
      %v7331 = vsel %vm3741, %v7318, %v7330
      %v7332 = vrot.slane %v5691, 2
      %v7333 = vsel %vm3741, %v7320, %v7332
      %v7334 = vrot.slane %v5692, 2
      %v7335 = vsel %vm3741, %v7322, %v7334
      %v7336 = vrot.slane %v5693, 2
      %v7337 = vsel %vm3741, %v7324, %v7336
      %v7338 = vrot.slane %v5694, 2
      %v7339 = vsel %vm3741, %v7326, %v7338
      %v7340 = vrot.slane %v5695, 2
      %v7341 = vsel %vm3741, %v7328, %v7340
      %v7342 = vrot.slane %v5696, 2
      %v7343 = vsel %vm3741, %v7330, %v7342
      %v7344 = vrot.slane %v5697, 2
      %v7345 = vsel %vm3741, %v7332, %v7344
      %v7346 = vrot.slane %v5698, 2
      %v7347 = vsel %vm3741, %v7334, %v7346
      %v7348 = vrot.slane %v5699, 2
      %v7349 = vsel %vm3741, %v7336, %v7348
      %v7350 = vrot.slane %v5700, 2
      %v7351 = vsel %vm3741, %v7338, %v7350
      %v7352 = vrot.slane %v5701, 2
      %v7353 = vsel %vm3741, %v7340, %v7352
      %v7354 = vrot.slane %v5702, 2
      %v7355 = vsel %vm3741, %v7342, %v7354
      %v7356 = vrot.slane %v5703, 2
      %v7357 = vsel %vm3741, %v7344, %v7356
      %v7358 = vrot.slane %v5704, 2
      %v7359 = vsel %vm3741, %v7346, %v7358
      %v7360 = vrot.slane %v5705, 2
      %v7361 = vsel %vm3741, %v7348, %v7360
      %v7362 = vrot.slane %v5706, 2
      %v7363 = vsel %vm3741, %v7350, %v7362
      %v7364 = vrot.slane %v5707, 2
      %v7365 = vsel %vm3741, %v7352, %v7364
      %v7366 = vrot.slane %v5708, 2
      %v7367 = vsel %vm3741, %v7354, %v7366
      %v7368 = vrot.slane %v5709, 2
      %v7369 = vsel %vm3741, %v7356, %v7368
      %v7370 = vrot.slane %v5710, 2
      %v7371 = vsel %vm3741, %v7358, %v7370
      %v7372 = vrot.slane %v5711, 2
      %v7373 = vsel %vm3741, %v7360, %v7372
      %v7374 = vrot.slane %v5712, 2
      %v7375 = vsel %vm3741, %v7362, %v7374
      %v7376 = vrot.slane %v5713, 2
      %v7377 = vsel %vm3741, %v7364, %v7376
      %v7378 = vrot.slane %v5714, 2
      %v7379 = vsel %vm3741, %v7366, %v7378
      %v7380 = vrot.slane %v5715, 2
      %v7381 = vsel %vm3741, %v7368, %v7380
      %v7382 = vrot.slane %v5716, 2
      %v7383 = vsel %vm3741, %v7370, %v7382
      %v7384 = vrot.slane %v5717, 2
      %v7385 = vsel %vm3741, %v7372, %v7384
      %v7386 = vrot.slane %v5718, 2
      %v7387 = vsel %vm3741, %v7374, %v7386
      %v7388 = vrot.slane %v5719, 2
      %v7389 = vsel %vm3741, %v7376, %v7388
      %v7390 = vrot.slane %v5720, 2
      %v7391 = vsel %vm3741, %v7378, %v7390
      %v7392 = vrot.slane %v5721, 2
      %v7393 = vsel %vm3741, %v7380, %v7392
      %v7394 = vrot.slane %v5722, 2
      %v7395 = vsel %vm3741, %v7382, %v7394
      %v7396 = vrot.slane %v6999, 2
      %v7397 = vsel %vm3741, %v7384, %v7396
      %v7398 = vrot.slane %v7000, 2
      %v7399 = vsel %vm3741, %v7386, %v7398
      %v7400 = vrot.slane %v7001, 2
      %v7401 = vsel %vm3741, %v7388, %v7400
      %v7402 = vrot.slane %v7002, 2
      %v7403 = vsel %vm3741, %v7390, %v7402
      %v7404 = vrot.slane %v7003, 2
      %v7405 = vsel %vm3741, %v7392, %v7404
      %v7406 = vrot.slane %v7004, 2
      %v7407 = vsel %vm3741, %v7394, %v7406
      %7552 = vmatprep.subr.mxu0 0.0
      %7553 = vmatpush1.msra.mxu0 %v7021
      %7554 = vmatprep.subr.mxu0 0.0
      %7555 = vmatpush1.msra.mxu0 %v7020
      %7556 = vmatprep.subr.mxu0 0.0
      %7557 = vmatpush1.msra.mxu0 %v7019
      %7558 = vmatprep.subr.mxu0 0.0
      %7559 = vmatpush1.msra.mxu0 %v7018
      %7560 = vmatprep.subr.mxu0 0.0
      %7561 = vmatpush1.msra.mxu0 %v7017
      %7562 = vmatprep.subr.mxu0 0.0
      %7563 = vmatpush1.msra.mxu0 %v7016
      %7564 = vmatprep.subr.mxu0 0.0
      %7565 = vmatpush1.msra.mxu0 %v7015
      %7566 = vmatprep.subr.mxu0 0.0
      %7567 = vmatpush1.msra.mxu0 %v7014
      %7568 = vmatprep.subr.mxu0 0.0
      %7569 = vmatpush1.msra.mxu0 %v7013
      %7570 = vmatprep.subr.mxu0 0.0
      %7571 = vmatpush1.msra.mxu0 %v7012
      %7572 = vmatprep.subr.mxu0 0.0
      %7573 = vmatpush1.msra.mxu0 %v7011
      %7574 = vmatprep.subr.mxu0 0.0
      %7575 = vmatpush1.msra.mxu0 %v7010
      %7576 = vmatprep.subr.mxu0 0.0
      %7577 = vmatpush1.msra.mxu0 %v7009
      %7578 = vmatprep.subr.mxu0 0.0
      %7579 = vmatpush1.msra.mxu0 %v7008
      %7580 = vmatprep.subr.mxu0 0.0
      %7581 = vmatpush1.msra.mxu0 %v7007
      %7582 = vmatprep.subr.mxu0 0.0
      %7583 = vmatpush1.msra.mxu0 %v7006
      %7584 = vmatprep.subr.mxu0 0.0
      %7585 = vmatpush2.msra.mxu0 %v7037
      %7586 = vmatprep.subr.mxu0 0.0
      %7587 = vmatpush2.msra.mxu0 %v7036
      %7588 = vmatprep.subr.mxu0 0.0
      %7589 = vmatpush2.msra.mxu0 %v7035
      %7590 = vmatprep.subr.mxu0 0.0
      %7591 = vmatpush2.msra.mxu0 %v7034
      %7592 = vmatprep.subr.mxu0 0.0
      %7593 = vmatpush2.msra.mxu0 %v7033
      %7594 = vmatprep.subr.mxu0 0.0
      %7595 = vmatpush2.msra.mxu0 %v7032
      %7596 = vmatprep.subr.mxu0 0.0
      %7597 = vmatpush2.msra.mxu0 %v7031
      %7598 = vmatprep.subr.mxu0 0.0
      %7599 = vmatpush2.msra.mxu0 %v7030
      %7600 = vmatprep.subr.mxu0 0.0
      %7601 = vmatpush2.msra.mxu0 %v7029
      %7602 = vmatprep.subr.mxu0 0.0
      %7603 = vmatpush2.msra.mxu0 %v7028
      %7604 = vmatprep.subr.mxu0 0.0
      %7605 = vmatpush2.msra.mxu0 %v7027
      %7606 = vmatprep.subr.mxu0 0.0
      %7607 = vmatpush2.msra.mxu0 %v7026
      %7608 = vmatprep.subr.mxu0 0.0
      %7609 = vmatpush2.msra.mxu0 %v7025
      %7610 = vmatprep.subr.mxu0 0.0
      %7611 = vmatpush2.msra.mxu0 %v7024
      %7612 = vmatprep.subr.mxu0 0.0
      %7613 = vmatpush2.msra.mxu0 %v7023
      %7614 = vmatprep.subr.mxu0 0.0
      %7615 = vmatpush2.msra.mxu0 %v7022
      %7616 = vmatprep.mubr.f32.mxu0 %v7119
      %7617 = vmatmul.mubr.f32.gmra.mxu0 %v7116
      %v7618 = vpop.f32.mrf.mxu0
      %v7619 = vadd.f32 0.0, %v7618
      %v7620 = vpop.f32.mrf.mxu0
      %7621 = vmatprep.mubr.f32.mxu0 %v7135
      %7622 = vmatmul.mubr.f32.gmra.mxu0 %v7133
      %v7623 = vpop.f32.mrf.mxu0
      %v7624 = vadd.f32 0.0, %v7623
      %v7625 = vpop.f32.mrf.mxu0
      %7626 = vmatprep.mubr.f32.mxu0 %v7147
      %7627 = vmatmul.mubr.f32.gmra.mxu0 %v7145
      %v7628 = vpop.f32.mrf.mxu0
      %v7629 = vadd.f32 0.0, %v7628
      %v7630 = vpop.f32.mrf.mxu0
      %7631 = vmatprep.mubr.f32.mxu0 %v7159
      %7632 = vmatmul.mubr.f32.gmra.mxu0 %v7157
      %v7633 = vpop.f32.mrf.mxu0
      %v7634 = vadd.f32 0.0, %v7633
      %v7635 = vpop.f32.mrf.mxu0
      %7636 = vmatprep.mubr.f32.mxu0 %v7171
      %7637 = vmatmul.mubr.f32.gmra.mxu0 %v7169
      %v7638 = vpop.f32.mrf.mxu0
      %v7639 = vadd.f32 0.0, %v7638
      %v7640 = vpop.f32.mrf.mxu0
      %7641 = vmatprep.mubr.f32.mxu0 %v7183
      %7642 = vmatmul.mubr.f32.gmra.mxu0 %v7181
      %v7643 = vpop.f32.mrf.mxu0
      %v7644 = vadd.f32 0.0, %v7643
      %v7645 = vpop.f32.mrf.mxu0
      %7646 = vmatprep.mubr.f32.mxu0 %v7195
      %7647 = vmatmul.mubr.f32.gmra.mxu0 %v7193
      %v7648 = vpop.f32.mrf.mxu0
      %v7649 = vadd.f32 0.0, %v7648
      %v7650 = vpop.f32.mrf.mxu0
      %7651 = vmatprep.mubr.f32.mxu0 %v7207
      %7652 = vmatmul.mubr.f32.gmra.mxu0 %v7205
      %v7653 = vpop.f32.mrf.mxu0
      %v7654 = vadd.f32 0.0, %v7653
      %v7655 = vpop.f32.mrf.mxu0
      %7656 = vmatprep.mubr.f32.mxu0 %v7219
      %7657 = vmatmul.mubr.f32.gmra.mxu0 %v7217
      %v7658 = vpop.f32.mrf.mxu0
      %v7659 = vadd.f32 0.0, %v7658
      %v7660 = vpop.f32.mrf.mxu0
      %7661 = vmatprep.mubr.f32.mxu0 %v7231
      %7662 = vmatmul.mubr.f32.gmra.mxu0 %v7229
      %v7663 = vpop.f32.mrf.mxu0
      %v7664 = vadd.f32 0.0, %v7663
      %v7665 = vpop.f32.mrf.mxu0
      %7666 = vmatprep.mubr.f32.mxu0 %v7243
      %7667 = vmatmul.mubr.f32.gmra.mxu0 %v7241
      %v7668 = vpop.f32.mrf.mxu0
      %v7669 = vadd.f32 0.0, %v7668
      %v7670 = vpop.f32.mrf.mxu0
      %7671 = vmatprep.mubr.f32.mxu0 %v7255
      %7672 = vmatmul.mubr.f32.gmra.mxu0 %v7253
      %v7673 = vpop.f32.mrf.mxu0
      %v7674 = vadd.f32 0.0, %v7673
      %v7675 = vpop.f32.mrf.mxu0
      %7676 = vmatprep.mubr.f32.mxu0 %v7267
      %7677 = vmatmul.mubr.f32.gmra.mxu0 %v7265
      %v7678 = vpop.f32.mrf.mxu0
      %v7679 = vadd.f32 0.0, %v7678
      %v7680 = vpop.f32.mrf.mxu0
      %7681 = vmatprep.mubr.f32.mxu0 %v7279
      %7682 = vmatmul.mubr.f32.gmra.mxu0 %v7277
      %v7683 = vpop.f32.mrf.mxu0
      %v7684 = vadd.f32 0.0, %v7683
      %v7685 = vpop.f32.mrf.mxu0
      %7686 = vmatprep.mubr.f32.mxu0 %v7291
      %7687 = vmatmul.mubr.f32.gmra.mxu0 %v7289
      %v7688 = vpop.f32.mrf.mxu0
      %v7689 = vadd.f32 0.0, %v7688
      %v7690 = vpop.f32.mrf.mxu0
      %7691 = vmatprep.mubr.f32.mxu0 %v7303
      %7692 = vmatmul.mubr.f32.gmra.mxu0 %v7301
      %v7693 = vpop.f32.mrf.mxu0
      %v7694 = vadd.f32 0.0, %v7693
      %v7695 = vpop.f32.mrf.mxu0
      %7696 = vmatprep.mubr.f32.mxu0 %v7315
      %7697 = vmatmul.mubr.f32.gmra.mxu0 %v7313
      %v7698 = vpop.f32.mrf.mxu0
      %v7699 = vadd.f32 0.0, %v7698
      %v7700 = vpop.f32.mrf.mxu0
      %7701 = vmatprep.mubr.f32.mxu0 %v7327
      %7702 = vmatmul.mubr.f32.gmra.mxu0 %v7325
      %v7703 = vpop.f32.mrf.mxu0
      %v7704 = vadd.f32 0.0, %v7703
      %v7705 = vpop.f32.mrf.mxu0
      %7706 = vmatprep.mubr.f32.mxu0 %v7339
      %7707 = vmatmul.mubr.f32.gmra.mxu0 %v7337
      %v7708 = vpop.f32.mrf.mxu0
      %v7709 = vadd.f32 0.0, %v7708
      %v7710 = vpop.f32.mrf.mxu0
      %7711 = vmatprep.mubr.f32.mxu0 %v7351
      %7712 = vmatmul.mubr.f32.gmra.mxu0 %v7349
      %v7713 = vpop.f32.mrf.mxu0
      %v7714 = vadd.f32 0.0, %v7713
      %v7715 = vpop.f32.mrf.mxu0
      %7716 = vmatprep.mubr.f32.mxu0 %v7363
      %7717 = vmatmul.mubr.f32.gmra.mxu0 %v7361
      %v7718 = vpop.f32.mrf.mxu0
      %v7719 = vadd.f32 0.0, %v7718
      %v7720 = vpop.f32.mrf.mxu0
      %7721 = vmatprep.mubr.f32.mxu0 %v7375
      %7722 = vmatmul.mubr.f32.gmra.mxu0 %v7373
      %v7723 = vpop.f32.mrf.mxu0
      %v7724 = vadd.f32 0.0, %v7723
      %v7725 = vpop.f32.mrf.mxu0
      %7726 = vmatprep.mubr.f32.mxu0 %v7387
      %7727 = vmatmul.mubr.f32.gmra.mxu0 %v7385
      %v7728 = vpop.f32.mrf.mxu0
      %v7729 = vadd.f32 0.0, %v7728
      %v7730 = vpop.f32.mrf.mxu0
      %7731 = vmatprep.mubr.f32.mxu0 %v7399
      %7732 = vmatmul.mubr.f32.gmra.mxu0 %v7397
      %v7733 = vpop.f32.mrf.mxu0
      %v7734 = vadd.f32 0.0, %v7733
      %v7735 = vpop.f32.mrf.mxu0
      %7736 = vdwg.mxu0
      %7737 = vmatprep.subr.mxu0 0.0
      %7738 = vmatpush1.msra.mxu0 %v7053
      %7739 = vmatprep.subr.mxu0 0.0
      %7740 = vmatpush1.msra.mxu0 %v7052
      %7741 = vmatprep.subr.mxu0 0.0
      %7742 = vmatpush1.msra.mxu0 %v7051
      %7743 = vmatprep.subr.mxu0 0.0
      %7744 = vmatpush1.msra.mxu0 %v7050
      %7745 = vmatprep.subr.mxu0 0.0
      %7746 = vmatpush1.msra.mxu0 %v7049
      %7747 = vmatprep.subr.mxu0 0.0
      %7748 = vmatpush1.msra.mxu0 %v7048
      %7749 = vmatprep.subr.mxu0 0.0
      %7750 = vmatpush1.msra.mxu0 %v7047
      %7751 = vmatprep.subr.mxu0 0.0
      %7752 = vmatpush1.msra.mxu0 %v7046
      %7753 = vmatprep.subr.mxu0 0.0
      %7754 = vmatpush1.msra.mxu0 %v7045
      %7755 = vmatprep.subr.mxu0 0.0
      %7756 = vmatpush1.msra.mxu0 %v7044
      %7757 = vmatprep.subr.mxu0 0.0
      %7758 = vmatpush1.msra.mxu0 %v7043
      %7759 = vmatprep.subr.mxu0 0.0
      %7760 = vmatpush1.msra.mxu0 %v7042
      %7761 = vmatprep.subr.mxu0 0.0
      %7762 = vmatpush1.msra.mxu0 %v7041
      %7763 = vmatprep.subr.mxu0 0.0
      %7764 = vmatpush1.msra.mxu0 %v7040
      %7765 = vmatprep.subr.mxu0 0.0
      %7766 = vmatpush1.msra.mxu0 %v7039
      %7767 = vmatprep.subr.mxu0 0.0
      %7768 = vmatpush1.msra.mxu0 %v7038
      %7769 = vmatprep.subr.mxu0 0.0
      %7770 = vmatpush2.msra.mxu0 %v7069
      %7771 = vmatprep.subr.mxu0 0.0
      %7772 = vmatpush2.msra.mxu0 %v7068
      %7773 = vmatprep.subr.mxu0 0.0
      %7774 = vmatpush2.msra.mxu0 %v7067
      %7775 = vmatprep.subr.mxu0 0.0
      %7776 = vmatpush2.msra.mxu0 %v7066
      %7777 = vmatprep.subr.mxu0 0.0
      %7778 = vmatpush2.msra.mxu0 %v7065
      %7779 = vmatprep.subr.mxu0 0.0
      %7780 = vmatpush2.msra.mxu0 %v7064
      %7781 = vmatprep.subr.mxu0 0.0
      %7782 = vmatpush2.msra.mxu0 %v7063
      %7783 = vmatprep.subr.mxu0 0.0
      %7784 = vmatpush2.msra.mxu0 %v7062
      %7785 = vmatprep.subr.mxu0 0.0
      %7786 = vmatpush2.msra.mxu0 %v7061
      %7787 = vmatprep.subr.mxu0 0.0
      %7788 = vmatpush2.msra.mxu0 %v7060
      %7789 = vmatprep.subr.mxu0 0.0
      %7790 = vmatpush2.msra.mxu0 %v7059
      %7791 = vmatprep.subr.mxu0 0.0
      %7792 = vmatpush2.msra.mxu0 %v7058
      %7793 = vmatprep.subr.mxu0 0.0
      %7794 = vmatpush2.msra.mxu0 %v7057
      %7795 = vmatprep.subr.mxu0 0.0
      %7796 = vmatpush2.msra.mxu0 %v7056
      %7797 = vmatprep.subr.mxu0 0.0
      %7798 = vmatpush2.msra.mxu0 %v7055
      %7799 = vmatprep.subr.mxu0 0.0
      %7800 = vmatpush2.msra.mxu0 %v7054
      %7801 = vmatprep.mubr.f32.mxu0 %v7125
      %7802 = vmatmul.mubr.f32.gmra.mxu0 %v7122
      %v7803 = vpop.f32.mrf.mxu0
      %v7804 = vadd.f32 %v7619, %v7803
      %v7805 = vpop.f32.mrf.mxu0
      %7806 = vmatprep.mubr.f32.mxu0 %v7139
      %7807 = vmatmul.mubr.f32.gmra.mxu0 %v7137
      %v7808 = vpop.f32.mrf.mxu0
      %v7809 = vadd.f32 %v7624, %v7808
      %v7810 = vpop.f32.mrf.mxu0
      %7811 = vmatprep.mubr.f32.mxu0 %v7151
      %7812 = vmatmul.mubr.f32.gmra.mxu0 %v7149
      %v7813 = vpop.f32.mrf.mxu0
      %v7814 = vadd.f32 %v7629, %v7813
      %v7815 = vpop.f32.mrf.mxu0
      %7816 = vmatprep.mubr.f32.mxu0 %v7163
      %7817 = vmatmul.mubr.f32.gmra.mxu0 %v7161
      %v7818 = vpop.f32.mrf.mxu0
      %v7819 = vadd.f32 %v7634, %v7818
      %v7820 = vpop.f32.mrf.mxu0
      %7821 = vmatprep.mubr.f32.mxu0 %v7175
      %7822 = vmatmul.mubr.f32.gmra.mxu0 %v7173
      %v7823 = vpop.f32.mrf.mxu0
      %v7824 = vadd.f32 %v7639, %v7823
      %v7825 = vpop.f32.mrf.mxu0
      %7826 = vmatprep.mubr.f32.mxu0 %v7187
      %7827 = vmatmul.mubr.f32.gmra.mxu0 %v7185
      %v7828 = vpop.f32.mrf.mxu0
      %v7829 = vadd.f32 %v7644, %v7828
      %v7830 = vpop.f32.mrf.mxu0
      %7831 = vmatprep.mubr.f32.mxu0 %v7199
      %7832 = vmatmul.mubr.f32.gmra.mxu0 %v7197
      %v7833 = vpop.f32.mrf.mxu0
      %v7834 = vadd.f32 %v7649, %v7833
      %v7835 = vpop.f32.mrf.mxu0
      %7836 = vmatprep.mubr.f32.mxu0 %v7211
      %7837 = vmatmul.mubr.f32.gmra.mxu0 %v7209
      %v7838 = vpop.f32.mrf.mxu0
      %v7839 = vadd.f32 %v7654, %v7838
      %v7840 = vpop.f32.mrf.mxu0
      %7841 = vmatprep.mubr.f32.mxu0 %v7223
      %7842 = vmatmul.mubr.f32.gmra.mxu0 %v7221
      %v7843 = vpop.f32.mrf.mxu0
      %v7844 = vadd.f32 %v7659, %v7843
      %v7845 = vpop.f32.mrf.mxu0
      %7846 = vmatprep.mubr.f32.mxu0 %v7235
      %7847 = vmatmul.mubr.f32.gmra.mxu0 %v7233
      %v7848 = vpop.f32.mrf.mxu0
      %v7849 = vadd.f32 %v7664, %v7848
      %v7850 = vpop.f32.mrf.mxu0
      %7851 = vmatprep.mubr.f32.mxu0 %v7247
      %7852 = vmatmul.mubr.f32.gmra.mxu0 %v7245
      %v7853 = vpop.f32.mrf.mxu0
      %v7854 = vadd.f32 %v7669, %v7853
      %v7855 = vpop.f32.mrf.mxu0
      %7856 = vmatprep.mubr.f32.mxu0 %v7259
      %7857 = vmatmul.mubr.f32.gmra.mxu0 %v7257
      %v7858 = vpop.f32.mrf.mxu0
      %v7859 = vadd.f32 %v7674, %v7858
      %v7860 = vpop.f32.mrf.mxu0
      %7861 = vmatprep.mubr.f32.mxu0 %v7271
      %7862 = vmatmul.mubr.f32.gmra.mxu0 %v7269
      %v7863 = vpop.f32.mrf.mxu0
      %v7864 = vadd.f32 %v7679, %v7863
      %v7865 = vpop.f32.mrf.mxu0
      %7866 = vmatprep.mubr.f32.mxu0 %v7283
      %7867 = vmatmul.mubr.f32.gmra.mxu0 %v7281
      %v7868 = vpop.f32.mrf.mxu0
      %v7869 = vadd.f32 %v7684, %v7868
      %v7870 = vpop.f32.mrf.mxu0
      %7871 = vmatprep.mubr.f32.mxu0 %v7295
      %7872 = vmatmul.mubr.f32.gmra.mxu0 %v7293
      %v7873 = vpop.f32.mrf.mxu0
      %v7874 = vadd.f32 %v7689, %v7873
      %v7875 = vpop.f32.mrf.mxu0
      %7876 = vmatprep.mubr.f32.mxu0 %v7307
      %7877 = vmatmul.mubr.f32.gmra.mxu0 %v7305
      %v7878 = vpop.f32.mrf.mxu0
      %v7879 = vadd.f32 %v7694, %v7878
      %v7880 = vpop.f32.mrf.mxu0
      %7881 = vmatprep.mubr.f32.mxu0 %v7319
      %7882 = vmatmul.mubr.f32.gmra.mxu0 %v7317
      %v7883 = vpop.f32.mrf.mxu0
      %v7884 = vadd.f32 %v7699, %v7883
      %v7885 = vpop.f32.mrf.mxu0
      %7886 = vmatprep.mubr.f32.mxu0 %v7331
      %7887 = vmatmul.mubr.f32.gmra.mxu0 %v7329
      %v7888 = vpop.f32.mrf.mxu0
      %v7889 = vadd.f32 %v7704, %v7888
      %v7890 = vpop.f32.mrf.mxu0
      %7891 = vmatprep.mubr.f32.mxu0 %v7343
      %7892 = vmatmul.mubr.f32.gmra.mxu0 %v7341
      %v7893 = vpop.f32.mrf.mxu0
      %v7894 = vadd.f32 %v7709, %v7893
      %v7895 = vpop.f32.mrf.mxu0
      %7896 = vmatprep.mubr.f32.mxu0 %v7355
      %7897 = vmatmul.mubr.f32.gmra.mxu0 %v7353
      %v7898 = vpop.f32.mrf.mxu0
      %v7899 = vadd.f32 %v7714, %v7898
      %v7900 = vpop.f32.mrf.mxu0
      %7901 = vmatprep.mubr.f32.mxu0 %v7367
      %7902 = vmatmul.mubr.f32.gmra.mxu0 %v7365
      %v7903 = vpop.f32.mrf.mxu0
      %v7904 = vadd.f32 %v7719, %v7903
      %v7905 = vpop.f32.mrf.mxu0
      %7906 = vmatprep.mubr.f32.mxu0 %v7379
      %7907 = vmatmul.mubr.f32.gmra.mxu0 %v7377
      %v7908 = vpop.f32.mrf.mxu0
      %v7909 = vadd.f32 %v7724, %v7908
      %v7910 = vpop.f32.mrf.mxu0
      %7911 = vmatprep.mubr.f32.mxu0 %v7391
      %7912 = vmatmul.mubr.f32.gmra.mxu0 %v7389
      %v7913 = vpop.f32.mrf.mxu0
      %v7914 = vadd.f32 %v7729, %v7913
      %v7915 = vpop.f32.mrf.mxu0
      %7916 = vmatprep.mubr.f32.mxu0 %v7403
      %7917 = vmatmul.mubr.f32.gmra.mxu0 %v7401
      %v7918 = vpop.f32.mrf.mxu0
      %v7919 = vadd.f32 %v7734, %v7918
      %v7920 = vpop.f32.mrf.mxu0
      %7921 = vdwg.mxu0
      %7922 = vmatprep.subr.mxu0 0.0
      %7923 = vmatpush1.msra.mxu0 %v7085
      %7924 = vmatprep.subr.mxu0 0.0
      %7925 = vmatpush1.msra.mxu0 %v7084
      %7926 = vmatprep.subr.mxu0 0.0
      %7927 = vmatpush1.msra.mxu0 %v7083
      %7928 = vmatprep.subr.mxu0 0.0
      %7929 = vmatpush1.msra.mxu0 %v7082
      %7930 = vmatprep.subr.mxu0 0.0
      %7931 = vmatpush1.msra.mxu0 %v7081
      %7932 = vmatprep.subr.mxu0 0.0
      %7933 = vmatpush1.msra.mxu0 %v7080
      %7934 = vmatprep.subr.mxu0 0.0
      %7935 = vmatpush1.msra.mxu0 %v7079
      %7936 = vmatprep.subr.mxu0 0.0
      %7937 = vmatpush1.msra.mxu0 %v7078
      %7938 = vmatprep.subr.mxu0 0.0
      %7939 = vmatpush1.msra.mxu0 %v7077
      %7940 = vmatprep.subr.mxu0 0.0
      %7941 = vmatpush1.msra.mxu0 %v7076
      %7942 = vmatprep.subr.mxu0 0.0
      %7943 = vmatpush1.msra.mxu0 %v7075
      %7944 = vmatprep.subr.mxu0 0.0
      %7945 = vmatpush1.msra.mxu0 %v7074
      %7946 = vmatprep.subr.mxu0 0.0
      %7947 = vmatpush1.msra.mxu0 %v7073
      %7948 = vmatprep.subr.mxu0 0.0
      %7949 = vmatpush1.msra.mxu0 %v7072
      %7950 = vmatprep.subr.mxu0 0.0
      %7951 = vmatpush1.msra.mxu0 %v7071
      %7952 = vmatprep.subr.mxu0 0.0
      %7953 = vmatpush1.msra.mxu0 %v7070
      %7954 = vmatprep.subr.mxu0 0.0
      %7955 = vmatpush2.msra.mxu0 %v7101
      %7956 = vmatprep.subr.mxu0 0.0
      %7957 = vmatpush2.msra.mxu0 %v7100
      %7958 = vmatprep.subr.mxu0 0.0
      %7959 = vmatpush2.msra.mxu0 %v7099
      %7960 = vmatprep.subr.mxu0 0.0
      %7961 = vmatpush2.msra.mxu0 %v7098
      %7962 = vmatprep.subr.mxu0 0.0
      %7963 = vmatpush2.msra.mxu0 %v7097
      %7964 = vmatprep.subr.mxu0 0.0
      %7965 = vmatpush2.msra.mxu0 %v7096
      %7966 = vmatprep.subr.mxu0 0.0
      %7967 = vmatpush2.msra.mxu0 %v7095
      %7968 = vmatprep.subr.mxu0 0.0
      %7969 = vmatpush2.msra.mxu0 %v7094
      %7970 = vmatprep.subr.mxu0 0.0
      %7971 = vmatpush2.msra.mxu0 %v7093
      %7972 = vmatprep.subr.mxu0 0.0
      %7973 = vmatpush2.msra.mxu0 %v7092
      %7974 = vmatprep.subr.mxu0 0.0
      %7975 = vmatpush2.msra.mxu0 %v7091
      %7976 = vmatprep.subr.mxu0 0.0
      %7977 = vmatpush2.msra.mxu0 %v7090
      %7978 = vmatprep.subr.mxu0 0.0
      %7979 = vmatpush2.msra.mxu0 %v7089
      %7980 = vmatprep.subr.mxu0 0.0
      %7981 = vmatpush2.msra.mxu0 %v7088
      %7982 = vmatprep.subr.mxu0 0.0
      %7983 = vmatpush2.msra.mxu0 %v7087
      %7984 = vmatprep.subr.mxu0 0.0
      %7985 = vmatpush2.msra.mxu0 %v7086
      %7986 = vmatprep.mubr.f32.mxu0 %v7131
      %7987 = vmatmul.mubr.f32.gmra.mxu0 %v7128
      %v7988 = vpop.f32.mrf.mxu0
      %v7989 = vadd.f32 %v7804, %v7988
      %v7990 = vpop.f32.mrf.mxu0
      %7991 = vmatprep.mubr.f32.mxu0 %v7143
      %7992 = vmatmul.mubr.f32.gmra.mxu0 %v7141
      %v7993 = vpop.f32.mrf.mxu0
      %v7994 = vadd.f32 %v7809, %v7993
      %v7995 = vpop.f32.mrf.mxu0
      %7996 = vmatprep.mubr.f32.mxu0 %v7155
      %7997 = vmatmul.mubr.f32.gmra.mxu0 %v7153
      %v7998 = vpop.f32.mrf.mxu0
      %v7999 = vadd.f32 %v7814, %v7998
      %v8000 = vpop.f32.mrf.mxu0
      %8001 = vmatprep.mubr.f32.mxu0 %v7167
      %8002 = vmatmul.mubr.f32.gmra.mxu0 %v7165
      %v8003 = vpop.f32.mrf.mxu0
      %v8004 = vadd.f32 %v7819, %v8003
      %v8005 = vpop.f32.mrf.mxu0
      %8006 = vmatprep.mubr.f32.mxu0 %v7179
      %8007 = vmatmul.mubr.f32.gmra.mxu0 %v7177
      %v8008 = vpop.f32.mrf.mxu0
      %v8009 = vadd.f32 %v7824, %v8008
      %v8010 = vpop.f32.mrf.mxu0
      %8011 = vmatprep.mubr.f32.mxu0 %v7191
      %8012 = vmatmul.mubr.f32.gmra.mxu0 %v7189
      %v8013 = vpop.f32.mrf.mxu0
      %v8014 = vadd.f32 %v7829, %v8013
      %v8015 = vpop.f32.mrf.mxu0
      %8016 = vmatprep.mubr.f32.mxu0 %v7203
      %8017 = vmatmul.mubr.f32.gmra.mxu0 %v7201
      %v8018 = vpop.f32.mrf.mxu0
      %v8019 = vadd.f32 %v7834, %v8018
      %v8020 = vpop.f32.mrf.mxu0
      %8021 = vmatprep.mubr.f32.mxu0 %v7215
      %8022 = vmatmul.mubr.f32.gmra.mxu0 %v7213
      %v8023 = vpop.f32.mrf.mxu0
      %v8024 = vadd.f32 %v7839, %v8023
      %v8025 = vpop.f32.mrf.mxu0
      %8026 = vmatprep.mubr.f32.mxu0 %v7227
      %8027 = vmatmul.mubr.f32.gmra.mxu0 %v7225
      %v8028 = vpop.f32.mrf.mxu0
      %v8029 = vadd.f32 %v7844, %v8028
      %v8030 = vpop.f32.mrf.mxu0
      %8031 = vmatprep.mubr.f32.mxu0 %v7239
      %8032 = vmatmul.mubr.f32.gmra.mxu0 %v7237
      %v8033 = vpop.f32.mrf.mxu0
      %v8034 = vadd.f32 %v7849, %v8033
      %v8035 = vpop.f32.mrf.mxu0
      %8036 = vmatprep.mubr.f32.mxu0 %v7251
      %8037 = vmatmul.mubr.f32.gmra.mxu0 %v7249
      %v8038 = vpop.f32.mrf.mxu0
      %v8039 = vadd.f32 %v7854, %v8038
      %v8040 = vpop.f32.mrf.mxu0
      %8041 = vmatprep.mubr.f32.mxu0 %v7263
      %8042 = vmatmul.mubr.f32.gmra.mxu0 %v7261
      %v8043 = vpop.f32.mrf.mxu0
      %v8044 = vadd.f32 %v7859, %v8043
      %v8045 = vpop.f32.mrf.mxu0
      %8046 = vmatprep.mubr.f32.mxu0 %v7275
      %8047 = vmatmul.mubr.f32.gmra.mxu0 %v7273
      %v8048 = vpop.f32.mrf.mxu0
      %v8049 = vadd.f32 %v7864, %v8048
      %v8050 = vpop.f32.mrf.mxu0
      %8051 = vmatprep.mubr.f32.mxu0 %v7287
      %8052 = vmatmul.mubr.f32.gmra.mxu0 %v7285
      %v8053 = vpop.f32.mrf.mxu0
      %v8054 = vadd.f32 %v7869, %v8053
      %v8055 = vpop.f32.mrf.mxu0
      %8056 = vmatprep.mubr.f32.mxu0 %v7299
      %8057 = vmatmul.mubr.f32.gmra.mxu0 %v7297
      %v8058 = vpop.f32.mrf.mxu0
      %v8059 = vadd.f32 %v7874, %v8058
      %v8060 = vpop.f32.mrf.mxu0
      %8061 = vmatprep.mubr.f32.mxu0 %v7311
      %8062 = vmatmul.mubr.f32.gmra.mxu0 %v7309
      %v8063 = vpop.f32.mrf.mxu0
      %v8064 = vadd.f32 %v7879, %v8063
      %v8065 = vpop.f32.mrf.mxu0
      %8066 = vmatprep.mubr.f32.mxu0 %v7323
      %8067 = vmatmul.mubr.f32.gmra.mxu0 %v7321
      %v8068 = vpop.f32.mrf.mxu0
      %v8069 = vadd.f32 %v7884, %v8068
      %v8070 = vpop.f32.mrf.mxu0
      %8071 = vmatprep.mubr.f32.mxu0 %v7335
      %8072 = vmatmul.mubr.f32.gmra.mxu0 %v7333
      %v8073 = vpop.f32.mrf.mxu0
      %v8074 = vadd.f32 %v7889, %v8073
      %v8075 = vpop.f32.mrf.mxu0
      %8076 = vmatprep.mubr.f32.mxu0 %v7347
      %8077 = vmatmul.mubr.f32.gmra.mxu0 %v7345
      %v8078 = vpop.f32.mrf.mxu0
      %v8079 = vadd.f32 %v7894, %v8078
      %v8080 = vpop.f32.mrf.mxu0
      %8081 = vmatprep.mubr.f32.mxu0 %v7359
      %8082 = vmatmul.mubr.f32.gmra.mxu0 %v7357
      %v8083 = vpop.f32.mrf.mxu0
      %v8084 = vadd.f32 %v7899, %v8083
      %v8085 = vpop.f32.mrf.mxu0
      %8086 = vmatprep.mubr.f32.mxu0 %v7371
      %8087 = vmatmul.mubr.f32.gmra.mxu0 %v7369
      %v8088 = vpop.f32.mrf.mxu0
      %v8089 = vadd.f32 %v7904, %v8088
      %v8090 = vpop.f32.mrf.mxu0
      %8091 = vmatprep.mubr.f32.mxu0 %v7383
      %8092 = vmatmul.mubr.f32.gmra.mxu0 %v7381
      %v8093 = vpop.f32.mrf.mxu0
      %v8094 = vadd.f32 %v7909, %v8093
      %v8095 = vpop.f32.mrf.mxu0
      %8096 = vmatprep.mubr.f32.mxu0 %v7395
      %8097 = vmatmul.mubr.f32.gmra.mxu0 %v7393
      %v8098 = vpop.f32.mrf.mxu0
      %v8099 = vadd.f32 %v7914, %v8098
      %v8100 = vpop.f32.mrf.mxu0
      %8101 = vmatprep.mubr.f32.mxu0 %v7407
      %8102 = vmatmul.mubr.f32.gmra.mxu0 %v7405
      %v8103 = vpop.f32.mrf.mxu0
      %v8104 = vadd.f32 %v7919, %v8103
      %v8105 = vpop.f32.mrf.mxu0
      %8106 = vdwg.mxu0
      %v8107 = vadd.f32 %v6969, %v7989
      %v8108 = vadd.f32 %v6970, %v7994
      %v8109 = vadd.f32 %v6971, %v7999
      %v8110 = vadd.f32 %v6972, %v8004
      %v8111 = vadd.f32 %v6973, %v8009
      %v8112 = vadd.f32 %v6974, %v8014
      %v8113 = vadd.f32 %v6975, %v8019
      %v8114 = vadd.f32 %v6976, %v8024
      %v8115 = vadd.f32 %v6977, %v8029
      %v8116 = vadd.f32 %v6978, %v8034
      %v8117 = vadd.f32 %v6979, %v8039
      %v8118 = vadd.f32 %v6980, %v8044
      %v8119 = vadd.f32 %v6981, %v8049
      %v8120 = vadd.f32 %v6982, %v8054
      %v8121 = vadd.f32 %v6983, %v8059
      %v8122 = vadd.f32 %v6984, %v8064
      %v8123 = vadd.f32 %v6985, %v8069
      %v8124 = vadd.f32 %v6986, %v8074
      %v8125 = vadd.f32 %v6987, %v8079
      %v8126 = vadd.f32 %v6988, %v8084
      %v8127 = vadd.f32 %v6989, %v8089
      %v8128 = vadd.f32 %v6990, %v8094
      %v8129 = vadd.f32 %v6991, %v8099
      %v8130 = vadd.f32 %v6992, %v8104
      %v8131 = vld [vmem:[#allocation2 + $0xc0] sm:$0xff]
      %v8132 = vld [vmem:[#allocation2 + $0xc8] sm:$0xff]
      %v8133 = vld [vmem:[#allocation2 + $0xd0] sm:$0xff]
      %v8134 = vld [vmem:[#allocation2 + $0xd8] sm:$0xff]
      %v8135 = vld [vmem:[#allocation2 + $0xe0] sm:$0xff]
      %v8136 = vld [vmem:[#allocation2 + $0xe8] sm:$0xff]
      %v8137 = vld [vmem:[#allocation2 + $0xf0] sm:$0xff]
      %v8138 = vld [vmem:[#allocation2 + $0xf8] sm:$0xff]
      %v8139 = vld [vmem:[#allocation2 + $0x100] sm:$0xff]
      %v8140 = vld [vmem:[#allocation2 + $0x108] sm:$0xff]
      %v8141 = vld [vmem:[#allocation2 + $0x110] sm:$0xff]
      %v8142 = vld [vmem:[#allocation2 + $0x118] sm:$0xff]
      %v8143 = vld [vmem:[#allocation2 + $0x120] sm:$0xff]
      %v8144 = vld [vmem:[#allocation2 + $0x128] sm:$0xff]
      %v8145 = vld [vmem:[#allocation2 + $0x130] sm:$0xff]
      %v8146 = vld [vmem:[#allocation2 + $0x138] sm:$0xff]
      %v8147 = vld [vmem:[#allocation2 + $0x140] sm:$0xff]
      %v8148 = vld [vmem:[#allocation2 + $0x148] sm:$0xff]
      %v8149 = vld [vmem:[#allocation2 + $0x150] sm:$0xff]
      %v8150 = vld [vmem:[#allocation2 + $0x158] sm:$0xff]
      %v8151 = vld [vmem:[#allocation2 + $0x160] sm:$0xff]
      %v8152 = vld [vmem:[#allocation2 + $0x168] sm:$0xff]
      %v8153 = vld [vmem:[#allocation2 + $0x170] sm:$0xff]
      %v8154 = vld [vmem:[#allocation2 + $0x178] sm:$0xff]
      %v8155 = vld [vmem:[#allocation2 + $0x180] sm:$0xff]
      %v8156 = vld [vmem:[#allocation2 + $0x188] sm:$0xff]
      %v8157 = vld [vmem:[#allocation2 + $0x190] sm:$0xff]
      %v8158 = vld [vmem:[#allocation2 + $0x198] sm:$0xff]
      %v8159 = vld [vmem:[#allocation2 + $0x1a0] sm:$0xff]
      %v8160 = vld [vmem:[#allocation2 + $0x1a8] sm:$0xff]
      %v8161 = vld [vmem:[#allocation2 + $0x1b0] sm:$0xff]
      %v8162 = vld [vmem:[#allocation2 + $0x1b8] sm:$0xff]
      %v8163 = vld [vmem:[#allocation2 + $0x1c0] sm:$0xff]
      %v8164 = vld [vmem:[#allocation2 + $0x1c8] sm:$0xff]
      %v8165 = vld [vmem:[#allocation2 + $0x1d0] sm:$0xff]
      %v8166 = vld [vmem:[#allocation2 + $0x1d8] sm:$0xff]
      %v8167 = vld [vmem:[#allocation2 + $0x1e0] sm:$0xff]
      %v8168 = vld [vmem:[#allocation2 + $0x1e8] sm:$0xff]
      %v8169 = vld [vmem:[#allocation2 + $0x1f0] sm:$0xff]
      %v8170 = vld [vmem:[#allocation2 + $0x1f8] sm:$0xff]
      %v8171 = vld [vmem:[#allocation2 + $0x200] sm:$0xff]
      %v8172 = vld [vmem:[#allocation2 + $0x208] sm:$0xff]
      %v8173 = vld [vmem:[#allocation2 + $0x210] sm:$0xff]
      %v8174 = vld [vmem:[#allocation2 + $0x218] sm:$0xff]
      %v8175 = vld [vmem:[#allocation2 + $0x220] sm:$0xff]
      %v8176 = vld [vmem:[#allocation2 + $0x228] sm:$0xff]
      %v8177 = vld [vmem:[#allocation2 + $0x230] sm:$0xff]
      %v8178 = vld [vmem:[#allocation2 + $0x238] sm:$0xff]
      %v8179 = vld [vmem:[#allocation2 + $0x240] sm:$0xff]
      %v8180 = vld [vmem:[#allocation2 + $0x248] sm:$0xff]
      %v8181 = vld [vmem:[#allocation2 + $0x250] sm:$0xff]
      %v8182 = vld [vmem:[#allocation2 + $0x258] sm:$0xff]
      %v8183 = vld [vmem:[#allocation2 + $0x260] sm:$0xff]
      %v8184 = vld [vmem:[#allocation2 + $0x268] sm:$0xff]
      %v8185 = vld [vmem:[#allocation2 + $0x270] sm:$0xff]
      %v8186 = vld [vmem:[#allocation2 + $0x278] sm:$0xff]
      %v8187 = vld [vmem:[#allocation2 + $0x280] sm:$0xff]
      %v8188 = vld [vmem:[#allocation2 + $0x288] sm:$0xff]
      %v8189 = vld [vmem:[#allocation2 + $0x290] sm:$0xff]
      %v8190 = vld [vmem:[#allocation2 + $0x298] sm:$0xff]
      %v8191 = vld [vmem:[#allocation2 + $0x2a0] sm:$0xff]
      %v8192 = vld [vmem:[#allocation2 + $0x2a8] sm:$0xff]
      %v8193 = vld [vmem:[#allocation2 + $0x2b0] sm:$0xff]
      %v8194 = vld [vmem:[#allocation2 + $0x2b8] sm:$0xff]
      %v8195 = vld [vmem:[#allocation2 + $0x2c0] sm:$0xff]
      %v8196 = vld [vmem:[#allocation2 + $0x2c8] sm:$0xff]
      %v8197 = vld [vmem:[#allocation2 + $0x2d0] sm:$0xff]
      %v8198 = vld [vmem:[#allocation2 + $0x2d8] sm:$0xff]
      %v8199 = vld [vmem:[#allocation2 + $0x2e0] sm:$0xff]
      %v8200 = vld [vmem:[#allocation2 + $0x2e8] sm:$0xff]
      %v8201 = vld [vmem:[#allocation2 + $0x2f0] sm:$0xff]
      %v8202 = vld [vmem:[#allocation2 + $0x2f8] sm:$0xff]
      %v8203 = vld [vmem:[#allocation2 + $0x300] sm:$0xff]
      %v8204 = vld [vmem:[#allocation2 + $0x308] sm:$0xff]
      %v8205 = vld [vmem:[#allocation2 + $0x310] sm:$0xff]
      %v8206 = vld [vmem:[#allocation2 + $0x318] sm:$0xff]
      %v8207 = vld [vmem:[#allocation2 + $0x320] sm:$0xff]
      %v8208 = vld [vmem:[#allocation2 + $0x328] sm:$0xff]
      %v8209 = vld [vmem:[#allocation2 + $0x330] sm:$0xff]
      %v8210 = vld [vmem:[#allocation2 + $0x338] sm:$0xff]
      %v8211 = vld [vmem:[#allocation2 + $0x340] sm:$0xff]
      %v8212 = vld [vmem:[#allocation2 + $0x348] sm:$0xff]
      %v8213 = vld [vmem:[#allocation2 + $0x350] sm:$0xff]
      %v8214 = vld [vmem:[#allocation2 + $0x358] sm:$0xff]
      %v8215 = vld [vmem:[#allocation2 + $0x360] sm:$0xff]
      %v8216 = vld [vmem:[#allocation2 + $0x368] sm:$0xff]
      %v8217 = vld [vmem:[#allocation2 + $0x370] sm:$0xff]
      %v8218 = vld [vmem:[#allocation2 + $0x378] sm:$0xff]
      %v8219 = vld [vmem:[#allocation2 + $0x380] sm:$0xff]
      %v8220 = vld [vmem:[#allocation2 + $0x388] sm:$0xff]
      %v8221 = vld [vmem:[#allocation2 + $0x390] sm:$0xff]
      %v8222 = vld [vmem:[#allocation2 + $0x398] sm:$0xff]
      %v8223 = vld [vmem:[#allocation2 + $0x3a0] sm:$0xff]
      %v8224 = vld [vmem:[#allocation2 + $0x3a8] sm:$0xff]
      %v8225 = vld [vmem:[#allocation2 + $0x3b0] sm:$0xff]
      %v8226 = vld [vmem:[#allocation2 + $0x3b8] sm:$0xff]
      %v8227 = vld [vmem:[#allocation2 + $0x3c0] sm:$0xff]
      %v8228 = vld [vmem:[#allocation2 + $0x3c8] sm:$0xff]
      %v8229 = vld [vmem:[#allocation2 + $0x3d0] sm:$0xff]
      %v8230 = vld [vmem:[#allocation2 + $0x3d8] sm:$0xff]
      %v8231 = vld [vmem:[#allocation2 + $0x3e0] sm:$0xff]
      %v8232 = vld [vmem:[#allocation2 + $0x3e8] sm:$0xff]
      %v8233 = vld [vmem:[#allocation2 + $0x3f0] sm:$0xff]
      %v8234 = vld [vmem:[#allocation2 + $0x3f8] sm:$0xff]
      %v8235 = vld [vmem:[#allocation2 + $0x400] sm:$0xff]
      %v8236 = vld [vmem:[#allocation2 + $0x408] sm:$0xff]
      %v8237 = vld [vmem:[#allocation2 + $0x410] sm:$0xff]
      %v8238 = vld [vmem:[#allocation2 + $0x418] sm:$0xff]
      %v8239 = vld [vmem:[#allocation2 + $0x420] sm:$0xff]
      %v8240 = vld [vmem:[#allocation2 + $0x428] sm:$0xff]
      %v8241 = vld [vmem:[#allocation2 + $0x430] sm:$0xff]
      %v8242 = vld [vmem:[#allocation2 + $0x438] sm:$0xff]
      %v8243 = vld [vmem:[#allocation2 + $0x440] sm:$0xff]
      %v8244 = vld [vmem:[#allocation2 + $0x448] sm:$0xff]
      %v8245 = vld [vmem:[#allocation2 + $0x450] sm:$0xff]
      %v8246 = vld [vmem:[#allocation2 + $0x458] sm:$0xff]
      %v8247 = vld [vmem:[#allocation2 + $0x460] sm:$0xff]
      %v8248 = vld [vmem:[#allocation2 + $0x468] sm:$0xff]
      %v8249 = vld [vmem:[#allocation2 + $0x470] sm:$0xff]
      %v8250 = vld [vmem:[#allocation2 + $0x478] sm:$0xff]
      %v8251 = vld [vmem:[#allocation2 + $0x480] sm:$0xff]
      %v8252 = vld [vmem:[#allocation2 + $0x488] sm:$0xff]
      %v8253 = vld [vmem:[#allocation2 + $0x490] sm:$0xff]
      %v8254 = vld [vmem:[#allocation2 + $0x498] sm:$0xff]
      %v8255 = vld [vmem:[#allocation2 + $0x4a0] sm:$0xff]
      %v8256 = vld [vmem:[#allocation2 + $0x4a8] sm:$0xff]
      %v8257 = vld [vmem:[#allocation2 + $0x4b0] sm:$0xff]
      %v8258 = vld [vmem:[#allocation2 + $0x4b8] sm:$0xff]
      %v8259 = vld [vmem:[#allocation2 + $0x4c0] sm:$0xff]
      %v8260 = vld [vmem:[#allocation2 + $0x4c8] sm:$0xff]
      %v8261 = vld [vmem:[#allocation2 + $0x4d0] sm:$0xff]
      %v8262 = vld [vmem:[#allocation2 + $0x4d8] sm:$0xff]
      %v8263 = vld [vmem:[#allocation2 + $0x4e0] sm:$0xff]
      %v8264 = vld [vmem:[#allocation2 + $0x4e8] sm:$0xff]
      %v8265 = vld [vmem:[#allocation2 + $0x4f0] sm:$0xff]
      %v8266 = vld [vmem:[#allocation2 + $0x4f8] sm:$0xff]
      %v8267 = vld [vmem:[#allocation2 + $0x500] sm:$0xff]
      %v8268 = vld [vmem:[#allocation2 + $0x508] sm:$0xff]
      %v8269 = vld [vmem:[#allocation2 + $0x510] sm:$0xff]
      %v8270 = vld [vmem:[#allocation2 + $0x518] sm:$0xff]
      %v8271 = vld [vmem:[#allocation2 + $0x520] sm:$0xff]
      %v8272 = vld [vmem:[#allocation2 + $0x528] sm:$0xff]
      %v8273 = vld [vmem:[#allocation2 + $0x530] sm:$0xff]
      %v8274 = vld [vmem:[#allocation2 + $0x538] sm:$0xff]
      %s8275 = scalar_lea.vmem %s3, 4608
      %v8276 = vld [vmem:[%s8275] sm:$0xff]
      %v8277 = vld [vmem:[%s8275 + $0x8] sm:$0xff]
      %v8278 = vld [vmem:[%s8275 + $0x10] sm:$0xff]
      %v8279 = vld [vmem:[%s8275 + $0x18] sm:$0xff]
      %v8280 = vld [vmem:[%s8275 + $0x20] sm:$0xff]
      %v8281 = vld [vmem:[%s8275 + $0x28] sm:$0xff]
      %v8282 = vld [vmem:[%s8275 + $0x30] sm:$0xff]
      %v8283 = vld [vmem:[%s8275 + $0x38] sm:$0xff]
      %v8284 = vld [vmem:[%s8275 + $0x40] sm:$0xff]
      %v8285 = vld [vmem:[%s8275 + $0x48] sm:$0xff]
      %v8286 = vld [vmem:[%s8275 + $0x50] sm:$0xff]
      %v8287 = vld [vmem:[%s8275 + $0x58] sm:$0xff]
      %v8288 = vld [vmem:[%s8275 + $0x60] sm:$0xff]
      %v8289 = vld [vmem:[%s8275 + $0x68] sm:$0xff]
      %v8290 = vld [vmem:[%s8275 + $0x70] sm:$0xff]
      %v8291 = vld [vmem:[%s8275 + $0x78] sm:$0xff]
      %v8292 = vld [vmem:[%s8275 + $0x80] sm:$0xff]
      %v8293 = vld [vmem:[%s8275 + $0x88] sm:$0xff]
      %v8294 = vld [vmem:[%s8275 + $0x90] sm:$0xff]
      %v8295 = vld [vmem:[%s8275 + $0x98] sm:$0xff]
      %v8296 = vld [vmem:[%s8275 + $0xa0] sm:$0xff]
      %v8297 = vld [vmem:[%s8275 + $0xa8] sm:$0xff]
      %v8298 = vld [vmem:[%s8275 + $0xb0] sm:$0xff]
      %v8299 = vld [vmem:[%s8275 + $0xb8] sm:$0xff]
      %v8300 = vld [vmem:[%s8275 + $0xc0] sm:$0xff]
      %v8301 = vld [vmem:[%s8275 + $0xc8] sm:$0xff]
      %v8302 = vld [vmem:[%s8275 + $0xd0] sm:$0xff]
      %v8303 = vld [vmem:[%s8275 + $0xd8] sm:$0xff]
      %v8304 = vld [vmem:[%s8275 + $0xe0] sm:$0xff]
      %v8305 = vld [vmem:[%s8275 + $0xe8] sm:$0xff]
      %v8306 = vld [vmem:[%s8275 + $0xf0] sm:$0xff]
      %v8307 = vld [vmem:[%s8275 + $0xf8] sm:$0xff]
      %v8308 = vld [vmem:[%s8275 + $0x100] sm:$0xff]
      %v8309 = vld [vmem:[%s8275 + $0x108] sm:$0xff]
      %v8310 = vld [vmem:[%s8275 + $0x110] sm:$0xff]
      %v8311 = vld [vmem:[%s8275 + $0x118] sm:$0xff]
      %v8312 = vld [vmem:[%s8275 + $0x120] sm:$0xff]
      %v8313 = vld [vmem:[%s8275 + $0x128] sm:$0xff]
      %v8314 = vld [vmem:[%s8275 + $0x130] sm:$0xff]
      %v8315 = vld [vmem:[%s8275 + $0x138] sm:$0xff]
      %v8316 = vld [vmem:[%s8275 + $0x140] sm:$0xff]
      %v8317 = vld [vmem:[%s8275 + $0x148] sm:$0xff]
      %v8318 = vld [vmem:[%s8275 + $0x150] sm:$0xff]
      %v8319 = vld [vmem:[%s8275 + $0x158] sm:$0xff]
      %v8320 = vld [vmem:[%s8275 + $0x160] sm:$0xff]
      %v8321 = vld [vmem:[%s8275 + $0x168] sm:$0xff]
      %v8322 = vld [vmem:[%s8275 + $0x170] sm:$0xff]
      %v8323 = vld [vmem:[%s8275 + $0x178] sm:$0xff]
      %v8324 = vld [vmem:[%s8275 + $0x180] sm:$0xff]
      %v8325 = vld [vmem:[%s8275 + $0x188] sm:$0xff]
      %v8326 = vld [vmem:[%s8275 + $0x190] sm:$0xff]
      %v8327 = vld [vmem:[%s8275 + $0x198] sm:$0xff]
      %v8328 = vld [vmem:[%s8275 + $0x1a0] sm:$0xff]
      %v8329 = vld [vmem:[%s8275 + $0x1a8] sm:$0xff]
      %v8330 = vld [vmem:[%s8275 + $0x1b0] sm:$0xff]
      %v8331 = vld [vmem:[%s8275 + $0x1b8] sm:$0xff]
      %v8332 = vld [vmem:[%s8275 + $0x1c0] sm:$0xff]
      %v8333 = vld [vmem:[%s8275 + $0x1c8] sm:$0xff]
      %v8334 = vld [vmem:[%s8275 + $0x1d0] sm:$0xff]
      %v8335 = vld [vmem:[%s8275 + $0x1d8] sm:$0xff]
      %v8336 = vld [vmem:[%s8275 + $0x1e0] sm:$0xff]
      %v8337 = vld [vmem:[%s8275 + $0x1e8] sm:$0xff]
      %v8338 = vld [vmem:[%s8275 + $0x1f0] sm:$0xff]
      %v8339 = vld [vmem:[%s8275 + $0x1f8] sm:$0xff]
      %v8340 = vld [vmem:[%s8275 + $0x200] sm:$0xff]
      %v8341 = vld [vmem:[%s8275 + $0x208] sm:$0xff]
      %v8342 = vld [vmem:[%s8275 + $0x210] sm:$0xff]
      %v8343 = vld [vmem:[%s8275 + $0x218] sm:$0xff]
      %v8344 = vld [vmem:[%s8275 + $0x220] sm:$0xff]
      %v8345 = vld [vmem:[%s8275 + $0x228] sm:$0xff]
      %v8346 = vld [vmem:[%s8275 + $0x230] sm:$0xff]
      %v8347 = vld [vmem:[%s8275 + $0x238] sm:$0xff]
      %v8348 = vld [vmem:[%s8275 + $0x240] sm:$0xff]
      %v8349 = vld [vmem:[%s8275 + $0x248] sm:$0xff]
      %v8350 = vld [vmem:[%s8275 + $0x250] sm:$0xff]
      %v8351 = vld [vmem:[%s8275 + $0x258] sm:$0xff]
      %v8352 = vld [vmem:[%s8275 + $0x260] sm:$0xff]
      %v8353 = vld [vmem:[%s8275 + $0x268] sm:$0xff]
      %v8354 = vld [vmem:[%s8275 + $0x270] sm:$0xff]
      %v8355 = vld [vmem:[%s8275 + $0x278] sm:$0xff]
      %v8356 = vld [vmem:[%s8275 + $0x280] sm:$0xff]
      %v8357 = vld [vmem:[%s8275 + $0x288] sm:$0xff]
      %v8358 = vld [vmem:[%s8275 + $0x290] sm:$0xff]
      %v8359 = vld [vmem:[%s8275 + $0x298] sm:$0xff]
      %v8360 = vld [vmem:[%s8275 + $0x2a0] sm:$0xff]
      %v8361 = vld [vmem:[%s8275 + $0x2a8] sm:$0xff]
      %v8362 = vld [vmem:[%s8275 + $0x2b0] sm:$0xff]
      %v8363 = vld [vmem:[%s8275 + $0x2b8] sm:$0xff]
      %v8364 = vld [vmem:[%s8275 + $0x2c0] sm:$0xff]
      %v8365 = vld [vmem:[%s8275 + $0x2c8] sm:$0xff]
      %v8366 = vld [vmem:[%s8275 + $0x2d0] sm:$0xff]
      %v8367 = vld [vmem:[%s8275 + $0x2d8] sm:$0xff]
      %v8368 = vld [vmem:[%s8275 + $0x2e0] sm:$0xff]
      %v8369 = vld [vmem:[%s8275 + $0x2e8] sm:$0xff]
      %v8370 = vld [vmem:[%s8275 + $0x2f0] sm:$0xff]
      %v8371 = vld [vmem:[%s8275 + $0x2f8] sm:$0xff]
      %8372 = vmatprep.subr.mxu0 0.0
      %8373 = vmatpush1.msra.mxu0 %v8291
      %8374 = vmatprep.subr.mxu0 0.0
      %8375 = vmatpush1.msra.mxu0 %v8290
      %8376 = vmatprep.subr.mxu0 0.0
      %8377 = vmatpush1.msra.mxu0 %v8289
      %8378 = vmatprep.subr.mxu0 0.0
      %8379 = vmatpush1.msra.mxu0 %v8288
      %8380 = vmatprep.subr.mxu0 0.0
      %8381 = vmatpush1.msra.mxu0 %v8287
      %8382 = vmatprep.subr.mxu0 0.0
      %8383 = vmatpush1.msra.mxu0 %v8286
      %8384 = vmatprep.subr.mxu0 0.0
      %8385 = vmatpush1.msra.mxu0 %v8285
      %8386 = vmatprep.subr.mxu0 0.0
      %8387 = vmatpush1.msra.mxu0 %v8284
      %8388 = vmatprep.subr.mxu0 0.0
      %8389 = vmatpush1.msra.mxu0 %v8283
      %8390 = vmatprep.subr.mxu0 0.0
      %8391 = vmatpush1.msra.mxu0 %v8282
      %8392 = vmatprep.subr.mxu0 0.0
      %8393 = vmatpush1.msra.mxu0 %v8281
      %8394 = vmatprep.subr.mxu0 0.0
      %8395 = vmatpush1.msra.mxu0 %v8280
      %8396 = vmatprep.subr.mxu0 0.0
      %8397 = vmatpush1.msra.mxu0 %v8279
      %8398 = vmatprep.subr.mxu0 0.0
      %8399 = vmatpush1.msra.mxu0 %v8278
      %8400 = vmatprep.subr.mxu0 0.0
      %8401 = vmatpush1.msra.mxu0 %v8277
      %8402 = vmatprep.subr.mxu0 0.0
      %8403 = vmatpush1.msra.mxu0 %v8276
      %8404 = vmatprep.subr.mxu0 0.0
      %8405 = vmatpush2.msra.mxu0 %v8307
      %8406 = vmatprep.subr.mxu0 0.0
      %8407 = vmatpush2.msra.mxu0 %v8306
      %8408 = vmatprep.subr.mxu0 0.0
      %8409 = vmatpush2.msra.mxu0 %v8305
      %8410 = vmatprep.subr.mxu0 0.0
      %8411 = vmatpush2.msra.mxu0 %v8304
      %8412 = vmatprep.subr.mxu0 0.0
      %8413 = vmatpush2.msra.mxu0 %v8303
      %8414 = vmatprep.subr.mxu0 0.0
      %8415 = vmatpush2.msra.mxu0 %v8302
      %8416 = vmatprep.subr.mxu0 0.0
      %8417 = vmatpush2.msra.mxu0 %v8301
      %8418 = vmatprep.subr.mxu0 0.0
      %8419 = vmatpush2.msra.mxu0 %v8300
      %8420 = vmatprep.subr.mxu0 0.0
      %8421 = vmatpush2.msra.mxu0 %v8299
      %8422 = vmatprep.subr.mxu0 0.0
      %8423 = vmatpush2.msra.mxu0 %v8298
      %8424 = vmatprep.subr.mxu0 0.0
      %8425 = vmatpush2.msra.mxu0 %v8297
      %8426 = vmatprep.subr.mxu0 0.0
      %8427 = vmatpush2.msra.mxu0 %v8296
      %8428 = vmatprep.subr.mxu0 0.0
      %8429 = vmatpush2.msra.mxu0 %v8295
      %8430 = vmatprep.subr.mxu0 0.0
      %8431 = vmatpush2.msra.mxu0 %v8294
      %8432 = vmatprep.subr.mxu0 0.0
      %8433 = vmatpush2.msra.mxu0 %v8293
      %8434 = vmatprep.subr.mxu0 0.0
      %8435 = vmatpush2.msra.mxu0 %v8292
      %8436 = vmatprep.mubr.f32.mxu0 %v8132
      %8437 = vmatmul.mubr.f32.gmra.mxu0 %v8131
      %v8438 = vpop.f32.mrf.mxu0
      %v8439 = vadd.f32 0.0, %v8438
      %v8440 = vpop.f32.mrf.mxu0
      %8441 = vmatprep.mubr.f32.mxu0 %v8138
      %8442 = vmatmul.mubr.f32.gmra.mxu0 %v8137
      %v8443 = vpop.f32.mrf.mxu0
      %v8444 = vadd.f32 0.0, %v8443
      %v8445 = vpop.f32.mrf.mxu0
      %8446 = vmatprep.mubr.f32.mxu0 %v8144
      %8447 = vmatmul.mubr.f32.gmra.mxu0 %v8143
      %v8448 = vpop.f32.mrf.mxu0
      %v8449 = vadd.f32 0.0, %v8448
      %v8450 = vpop.f32.mrf.mxu0
      %8451 = vmatprep.mubr.f32.mxu0 %v8150
      %8452 = vmatmul.mubr.f32.gmra.mxu0 %v8149
      %v8453 = vpop.f32.mrf.mxu0
      %v8454 = vadd.f32 0.0, %v8453
      %v8455 = vpop.f32.mrf.mxu0
      %8456 = vmatprep.mubr.f32.mxu0 %v8156
      %8457 = vmatmul.mubr.f32.gmra.mxu0 %v8155
      %v8458 = vpop.f32.mrf.mxu0
      %v8459 = vadd.f32 0.0, %v8458
      %v8460 = vpop.f32.mrf.mxu0
      %8461 = vmatprep.mubr.f32.mxu0 %v8162
      %8462 = vmatmul.mubr.f32.gmra.mxu0 %v8161
      %v8463 = vpop.f32.mrf.mxu0
      %v8464 = vadd.f32 0.0, %v8463
      %v8465 = vpop.f32.mrf.mxu0
      %8466 = vmatprep.mubr.f32.mxu0 %v8168
      %8467 = vmatmul.mubr.f32.gmra.mxu0 %v8167
      %v8468 = vpop.f32.mrf.mxu0
      %v8469 = vadd.f32 0.0, %v8468
      %v8470 = vpop.f32.mrf.mxu0
      %8471 = vmatprep.mubr.f32.mxu0 %v8174
      %8472 = vmatmul.mubr.f32.gmra.mxu0 %v8173
      %v8473 = vpop.f32.mrf.mxu0
      %v8474 = vadd.f32 0.0, %v8473
      %v8475 = vpop.f32.mrf.mxu0
      %8476 = vmatprep.mubr.f32.mxu0 %v8180
      %8477 = vmatmul.mubr.f32.gmra.mxu0 %v8179
      %v8478 = vpop.f32.mrf.mxu0
      %v8479 = vadd.f32 0.0, %v8478
      %v8480 = vpop.f32.mrf.mxu0
      %8481 = vmatprep.mubr.f32.mxu0 %v8186
      %8482 = vmatmul.mubr.f32.gmra.mxu0 %v8185
      %v8483 = vpop.f32.mrf.mxu0
      %v8484 = vadd.f32 0.0, %v8483
      %v8485 = vpop.f32.mrf.mxu0
      %8486 = vmatprep.mubr.f32.mxu0 %v8192
      %8487 = vmatmul.mubr.f32.gmra.mxu0 %v8191
      %v8488 = vpop.f32.mrf.mxu0
      %v8489 = vadd.f32 0.0, %v8488
      %v8490 = vpop.f32.mrf.mxu0
      %8491 = vmatprep.mubr.f32.mxu0 %v8198
      %8492 = vmatmul.mubr.f32.gmra.mxu0 %v8197
      %v8493 = vpop.f32.mrf.mxu0
      %v8494 = vadd.f32 0.0, %v8493
      %v8495 = vpop.f32.mrf.mxu0
      %8496 = vmatprep.mubr.f32.mxu0 %v8204
      %8497 = vmatmul.mubr.f32.gmra.mxu0 %v8203
      %v8498 = vpop.f32.mrf.mxu0
      %v8499 = vadd.f32 0.0, %v8498
      %v8500 = vpop.f32.mrf.mxu0
      %8501 = vmatprep.mubr.f32.mxu0 %v8210
      %8502 = vmatmul.mubr.f32.gmra.mxu0 %v8209
      %v8503 = vpop.f32.mrf.mxu0
      %v8504 = vadd.f32 0.0, %v8503
      %v8505 = vpop.f32.mrf.mxu0
      %8506 = vmatprep.mubr.f32.mxu0 %v8216
      %8507 = vmatmul.mubr.f32.gmra.mxu0 %v8215
      %v8508 = vpop.f32.mrf.mxu0
      %v8509 = vadd.f32 0.0, %v8508
      %v8510 = vpop.f32.mrf.mxu0
      %8511 = vmatprep.mubr.f32.mxu0 %v8222
      %8512 = vmatmul.mubr.f32.gmra.mxu0 %v8221
      %v8513 = vpop.f32.mrf.mxu0
      %v8514 = vadd.f32 0.0, %v8513
      %v8515 = vpop.f32.mrf.mxu0
      %8516 = vmatprep.mubr.f32.mxu0 %v8228
      %8517 = vmatmul.mubr.f32.gmra.mxu0 %v8227
      %v8518 = vpop.f32.mrf.mxu0
      %v8519 = vadd.f32 0.0, %v8518
      %v8520 = vpop.f32.mrf.mxu0
      %8521 = vmatprep.mubr.f32.mxu0 %v8234
      %8522 = vmatmul.mubr.f32.gmra.mxu0 %v8233
      %v8523 = vpop.f32.mrf.mxu0
      %v8524 = vadd.f32 0.0, %v8523
      %v8525 = vpop.f32.mrf.mxu0
      %8526 = vmatprep.mubr.f32.mxu0 %v8240
      %8527 = vmatmul.mubr.f32.gmra.mxu0 %v8239
      %v8528 = vpop.f32.mrf.mxu0
      %v8529 = vadd.f32 0.0, %v8528
      %v8530 = vpop.f32.mrf.mxu0
      %8531 = vmatprep.mubr.f32.mxu0 %v8246
      %8532 = vmatmul.mubr.f32.gmra.mxu0 %v8245
      %v8533 = vpop.f32.mrf.mxu0
      %v8534 = vadd.f32 0.0, %v8533
      %v8535 = vpop.f32.mrf.mxu0
      %8536 = vmatprep.mubr.f32.mxu0 %v8252
      %8537 = vmatmul.mubr.f32.gmra.mxu0 %v8251
      %v8538 = vpop.f32.mrf.mxu0
      %v8539 = vadd.f32 0.0, %v8538
      %v8540 = vpop.f32.mrf.mxu0
      %8541 = vmatprep.mubr.f32.mxu0 %v8258
      %8542 = vmatmul.mubr.f32.gmra.mxu0 %v8257
      %v8543 = vpop.f32.mrf.mxu0
      %v8544 = vadd.f32 0.0, %v8543
      %v8545 = vpop.f32.mrf.mxu0
      %8546 = vmatprep.mubr.f32.mxu0 %v8264
      %8547 = vmatmul.mubr.f32.gmra.mxu0 %v8263
      %v8548 = vpop.f32.mrf.mxu0
      %v8549 = vadd.f32 0.0, %v8548
      %v8550 = vpop.f32.mrf.mxu0
      %8551 = vmatprep.mubr.f32.mxu0 %v8270
      %8552 = vmatmul.mubr.f32.gmra.mxu0 %v8269
      %v8553 = vpop.f32.mrf.mxu0
      %v8554 = vadd.f32 0.0, %v8553
      %v8555 = vpop.f32.mrf.mxu0
      %8556 = vdwg.mxu0
      %8557 = vmatprep.subr.mxu0 0.0
      %8558 = vmatpush1.msra.mxu0 %v8323
      %8559 = vmatprep.subr.mxu0 0.0
      %8560 = vmatpush1.msra.mxu0 %v8322
      %8561 = vmatprep.subr.mxu0 0.0
      %8562 = vmatpush1.msra.mxu0 %v8321
      %8563 = vmatprep.subr.mxu0 0.0
      %8564 = vmatpush1.msra.mxu0 %v8320
      %8565 = vmatprep.subr.mxu0 0.0
      %8566 = vmatpush1.msra.mxu0 %v8319
      %8567 = vmatprep.subr.mxu0 0.0
      %8568 = vmatpush1.msra.mxu0 %v8318
      %8569 = vmatprep.subr.mxu0 0.0
      %8570 = vmatpush1.msra.mxu0 %v8317
      %8571 = vmatprep.subr.mxu0 0.0
      %8572 = vmatpush1.msra.mxu0 %v8316
      %8573 = vmatprep.subr.mxu0 0.0
      %8574 = vmatpush1.msra.mxu0 %v8315
      %8575 = vmatprep.subr.mxu0 0.0
      %8576 = vmatpush1.msra.mxu0 %v8314
      %8577 = vmatprep.subr.mxu0 0.0
      %8578 = vmatpush1.msra.mxu0 %v8313
      %8579 = vmatprep.subr.mxu0 0.0
      %8580 = vmatpush1.msra.mxu0 %v8312
      %8581 = vmatprep.subr.mxu0 0.0
      %8582 = vmatpush1.msra.mxu0 %v8311
      %8583 = vmatprep.subr.mxu0 0.0
      %8584 = vmatpush1.msra.mxu0 %v8310
      %8585 = vmatprep.subr.mxu0 0.0
      %8586 = vmatpush1.msra.mxu0 %v8309
      %8587 = vmatprep.subr.mxu0 0.0
      %8588 = vmatpush1.msra.mxu0 %v8308
      %8589 = vmatprep.subr.mxu0 0.0
      %8590 = vmatpush2.msra.mxu0 %v8339
      %8591 = vmatprep.subr.mxu0 0.0
      %8592 = vmatpush2.msra.mxu0 %v8338
      %8593 = vmatprep.subr.mxu0 0.0
      %8594 = vmatpush2.msra.mxu0 %v8337
      %8595 = vmatprep.subr.mxu0 0.0
      %8596 = vmatpush2.msra.mxu0 %v8336
      %8597 = vmatprep.subr.mxu0 0.0
      %8598 = vmatpush2.msra.mxu0 %v8335
      %8599 = vmatprep.subr.mxu0 0.0
      %8600 = vmatpush2.msra.mxu0 %v8334
      %8601 = vmatprep.subr.mxu0 0.0
      %8602 = vmatpush2.msra.mxu0 %v8333
      %8603 = vmatprep.subr.mxu0 0.0
      %8604 = vmatpush2.msra.mxu0 %v8332
      %8605 = vmatprep.subr.mxu0 0.0
      %8606 = vmatpush2.msra.mxu0 %v8331
      %8607 = vmatprep.subr.mxu0 0.0
      %8608 = vmatpush2.msra.mxu0 %v8330
      %8609 = vmatprep.subr.mxu0 0.0
      %8610 = vmatpush2.msra.mxu0 %v8329
      %8611 = vmatprep.subr.mxu0 0.0
      %8612 = vmatpush2.msra.mxu0 %v8328
      %8613 = vmatprep.subr.mxu0 0.0
      %8614 = vmatpush2.msra.mxu0 %v8327
      %8615 = vmatprep.subr.mxu0 0.0
      %8616 = vmatpush2.msra.mxu0 %v8326
      %8617 = vmatprep.subr.mxu0 0.0
      %8618 = vmatpush2.msra.mxu0 %v8325
      %8619 = vmatprep.subr.mxu0 0.0
      %8620 = vmatpush2.msra.mxu0 %v8324
      %8621 = vmatprep.mubr.f32.mxu0 %v8134
      %8622 = vmatmul.mubr.f32.gmra.mxu0 %v8133
      %v8623 = vpop.f32.mrf.mxu0
      %v8624 = vadd.f32 %v8439, %v8623
      %v8625 = vpop.f32.mrf.mxu0
      %8626 = vmatprep.mubr.f32.mxu0 %v8140
      %8627 = vmatmul.mubr.f32.gmra.mxu0 %v8139
      %v8628 = vpop.f32.mrf.mxu0
      %v8629 = vadd.f32 %v8444, %v8628
      %v8630 = vpop.f32.mrf.mxu0
      %8631 = vmatprep.mubr.f32.mxu0 %v8146
      %8632 = vmatmul.mubr.f32.gmra.mxu0 %v8145
      %v8633 = vpop.f32.mrf.mxu0
      %v8634 = vadd.f32 %v8449, %v8633
      %v8635 = vpop.f32.mrf.mxu0
      %8636 = vmatprep.mubr.f32.mxu0 %v8152
      %8637 = vmatmul.mubr.f32.gmra.mxu0 %v8151
      %v8638 = vpop.f32.mrf.mxu0
      %v8639 = vadd.f32 %v8454, %v8638
      %v8640 = vpop.f32.mrf.mxu0
      %8641 = vmatprep.mubr.f32.mxu0 %v8158
      %8642 = vmatmul.mubr.f32.gmra.mxu0 %v8157
      %v8643 = vpop.f32.mrf.mxu0
      %v8644 = vadd.f32 %v8459, %v8643
      %v8645 = vpop.f32.mrf.mxu0
      %8646 = vmatprep.mubr.f32.mxu0 %v8164
      %8647 = vmatmul.mubr.f32.gmra.mxu0 %v8163
      %v8648 = vpop.f32.mrf.mxu0
      %v8649 = vadd.f32 %v8464, %v8648
      %v8650 = vpop.f32.mrf.mxu0
      %8651 = vmatprep.mubr.f32.mxu0 %v8170
      %8652 = vmatmul.mubr.f32.gmra.mxu0 %v8169
      %v8653 = vpop.f32.mrf.mxu0
      %v8654 = vadd.f32 %v8469, %v8653
      %v8655 = vpop.f32.mrf.mxu0
      %8656 = vmatprep.mubr.f32.mxu0 %v8176
      %8657 = vmatmul.mubr.f32.gmra.mxu0 %v8175
      %v8658 = vpop.f32.mrf.mxu0
      %v8659 = vadd.f32 %v8474, %v8658
      %v8660 = vpop.f32.mrf.mxu0
      %8661 = vmatprep.mubr.f32.mxu0 %v8182
      %8662 = vmatmul.mubr.f32.gmra.mxu0 %v8181
      %v8663 = vpop.f32.mrf.mxu0
      %v8664 = vadd.f32 %v8479, %v8663
      %v8665 = vpop.f32.mrf.mxu0
      %8666 = vmatprep.mubr.f32.mxu0 %v8188
      %8667 = vmatmul.mubr.f32.gmra.mxu0 %v8187
      %v8668 = vpop.f32.mrf.mxu0
      %v8669 = vadd.f32 %v8484, %v8668
      %v8670 = vpop.f32.mrf.mxu0
      %8671 = vmatprep.mubr.f32.mxu0 %v8194
      %8672 = vmatmul.mubr.f32.gmra.mxu0 %v8193
      %v8673 = vpop.f32.mrf.mxu0
      %v8674 = vadd.f32 %v8489, %v8673
      %v8675 = vpop.f32.mrf.mxu0
      %8676 = vmatprep.mubr.f32.mxu0 %v8200
      %8677 = vmatmul.mubr.f32.gmra.mxu0 %v8199
      %v8678 = vpop.f32.mrf.mxu0
      %v8679 = vadd.f32 %v8494, %v8678
      %v8680 = vpop.f32.mrf.mxu0
      %8681 = vmatprep.mubr.f32.mxu0 %v8206
      %8682 = vmatmul.mubr.f32.gmra.mxu0 %v8205
      %v8683 = vpop.f32.mrf.mxu0
      %v8684 = vadd.f32 %v8499, %v8683
      %v8685 = vpop.f32.mrf.mxu0
      %8686 = vmatprep.mubr.f32.mxu0 %v8212
      %8687 = vmatmul.mubr.f32.gmra.mxu0 %v8211
      %v8688 = vpop.f32.mrf.mxu0
      %v8689 = vadd.f32 %v8504, %v8688
      %v8690 = vpop.f32.mrf.mxu0
      %8691 = vmatprep.mubr.f32.mxu0 %v8218
      %8692 = vmatmul.mubr.f32.gmra.mxu0 %v8217
      %v8693 = vpop.f32.mrf.mxu0
      %v8694 = vadd.f32 %v8509, %v8693
      %v8695 = vpop.f32.mrf.mxu0
      %8696 = vmatprep.mubr.f32.mxu0 %v8224
      %8697 = vmatmul.mubr.f32.gmra.mxu0 %v8223
      %v8698 = vpop.f32.mrf.mxu0
      %v8699 = vadd.f32 %v8514, %v8698
      %v8700 = vpop.f32.mrf.mxu0
      %8701 = vmatprep.mubr.f32.mxu0 %v8230
      %8702 = vmatmul.mubr.f32.gmra.mxu0 %v8229
      %v8703 = vpop.f32.mrf.mxu0
      %v8704 = vadd.f32 %v8519, %v8703
      %v8705 = vpop.f32.mrf.mxu0
      %8706 = vmatprep.mubr.f32.mxu0 %v8236
      %8707 = vmatmul.mubr.f32.gmra.mxu0 %v8235
      %v8708 = vpop.f32.mrf.mxu0
      %v8709 = vadd.f32 %v8524, %v8708
      %v8710 = vpop.f32.mrf.mxu0
      %8711 = vmatprep.mubr.f32.mxu0 %v8242
      %8712 = vmatmul.mubr.f32.gmra.mxu0 %v8241
      %v8713 = vpop.f32.mrf.mxu0
      %v8714 = vadd.f32 %v8529, %v8713
      %v8715 = vpop.f32.mrf.mxu0
      %8716 = vmatprep.mubr.f32.mxu0 %v8248
      %8717 = vmatmul.mubr.f32.gmra.mxu0 %v8247
      %v8718 = vpop.f32.mrf.mxu0
      %v8719 = vadd.f32 %v8534, %v8718
      %v8720 = vpop.f32.mrf.mxu0
      %8721 = vmatprep.mubr.f32.mxu0 %v8254
      %8722 = vmatmul.mubr.f32.gmra.mxu0 %v8253
      %v8723 = vpop.f32.mrf.mxu0
      %v8724 = vadd.f32 %v8539, %v8723
      %v8725 = vpop.f32.mrf.mxu0
      %8726 = vmatprep.mubr.f32.mxu0 %v8260
      %8727 = vmatmul.mubr.f32.gmra.mxu0 %v8259
      %v8728 = vpop.f32.mrf.mxu0
      %v8729 = vadd.f32 %v8544, %v8728
      %v8730 = vpop.f32.mrf.mxu0
      %8731 = vmatprep.mubr.f32.mxu0 %v8266
      %8732 = vmatmul.mubr.f32.gmra.mxu0 %v8265
      %v8733 = vpop.f32.mrf.mxu0
      %v8734 = vadd.f32 %v8549, %v8733
      %v8735 = vpop.f32.mrf.mxu0
      %8736 = vmatprep.mubr.f32.mxu0 %v8272
      %8737 = vmatmul.mubr.f32.gmra.mxu0 %v8271
      %v8738 = vpop.f32.mrf.mxu0
      %v8739 = vadd.f32 %v8554, %v8738
      %v8740 = vpop.f32.mrf.mxu0
      %8741 = vdwg.mxu0
      %8742 = vmatprep.subr.mxu0 0.0
      %8743 = vmatpush1.msra.mxu0 %v8355
      %8744 = vmatprep.subr.mxu0 0.0
      %8745 = vmatpush1.msra.mxu0 %v8354
      %8746 = vmatprep.subr.mxu0 0.0
      %8747 = vmatpush1.msra.mxu0 %v8353
      %8748 = vmatprep.subr.mxu0 0.0
      %8749 = vmatpush1.msra.mxu0 %v8352
      %8750 = vmatprep.subr.mxu0 0.0
      %8751 = vmatpush1.msra.mxu0 %v8351
      %8752 = vmatprep.subr.mxu0 0.0
      %8753 = vmatpush1.msra.mxu0 %v8350
      %8754 = vmatprep.subr.mxu0 0.0
      %8755 = vmatpush1.msra.mxu0 %v8349
      %8756 = vmatprep.subr.mxu0 0.0
      %8757 = vmatpush1.msra.mxu0 %v8348
      %8758 = vmatprep.subr.mxu0 0.0
      %8759 = vmatpush1.msra.mxu0 %v8347
      %8760 = vmatprep.subr.mxu0 0.0
      %8761 = vmatpush1.msra.mxu0 %v8346
      %8762 = vmatprep.subr.mxu0 0.0
      %8763 = vmatpush1.msra.mxu0 %v8345
      %8764 = vmatprep.subr.mxu0 0.0
      %8765 = vmatpush1.msra.mxu0 %v8344
      %8766 = vmatprep.subr.mxu0 0.0
      %8767 = vmatpush1.msra.mxu0 %v8343
      %8768 = vmatprep.subr.mxu0 0.0
      %8769 = vmatpush1.msra.mxu0 %v8342
      %8770 = vmatprep.subr.mxu0 0.0
      %8771 = vmatpush1.msra.mxu0 %v8341
      %8772 = vmatprep.subr.mxu0 0.0
      %8773 = vmatpush1.msra.mxu0 %v8340
      %8774 = vmatprep.subr.mxu0 0.0
      %8775 = vmatpush2.msra.mxu0 %v8371
      %8776 = vmatprep.subr.mxu0 0.0
      %8777 = vmatpush2.msra.mxu0 %v8370
      %8778 = vmatprep.subr.mxu0 0.0
      %8779 = vmatpush2.msra.mxu0 %v8369
      %8780 = vmatprep.subr.mxu0 0.0
      %8781 = vmatpush2.msra.mxu0 %v8368
      %8782 = vmatprep.subr.mxu0 0.0
      %8783 = vmatpush2.msra.mxu0 %v8367
      %8784 = vmatprep.subr.mxu0 0.0
      %8785 = vmatpush2.msra.mxu0 %v8366
      %8786 = vmatprep.subr.mxu0 0.0
      %8787 = vmatpush2.msra.mxu0 %v8365
      %8788 = vmatprep.subr.mxu0 0.0
      %8789 = vmatpush2.msra.mxu0 %v8364
      %8790 = vmatprep.subr.mxu0 0.0
      %8791 = vmatpush2.msra.mxu0 %v8363
      %8792 = vmatprep.subr.mxu0 0.0
      %8793 = vmatpush2.msra.mxu0 %v8362
      %8794 = vmatprep.subr.mxu0 0.0
      %8795 = vmatpush2.msra.mxu0 %v8361
      %8796 = vmatprep.subr.mxu0 0.0
      %8797 = vmatpush2.msra.mxu0 %v8360
      %8798 = vmatprep.subr.mxu0 0.0
      %8799 = vmatpush2.msra.mxu0 %v8359
      %8800 = vmatprep.subr.mxu0 0.0
      %8801 = vmatpush2.msra.mxu0 %v8358
      %8802 = vmatprep.subr.mxu0 0.0
      %8803 = vmatpush2.msra.mxu0 %v8357
      %8804 = vmatprep.subr.mxu0 0.0
      %8805 = vmatpush2.msra.mxu0 %v8356
      %8806 = vmatprep.mubr.f32.mxu0 %v8136
      %8807 = vmatmul.mubr.f32.gmra.mxu0 %v8135
      %v8808 = vpop.f32.mrf.mxu0
      %v8809 = vadd.f32 %v8624, %v8808
      %v8810 = vpop.f32.mrf.mxu0
      %8811 = vmatprep.mubr.f32.mxu0 %v8142
      %8812 = vmatmul.mubr.f32.gmra.mxu0 %v8141
      %v8813 = vpop.f32.mrf.mxu0
      %v8814 = vadd.f32 %v8629, %v8813
      %v8815 = vpop.f32.mrf.mxu0
      %8816 = vmatprep.mubr.f32.mxu0 %v8148
      %8817 = vmatmul.mubr.f32.gmra.mxu0 %v8147
      %v8818 = vpop.f32.mrf.mxu0
      %v8819 = vadd.f32 %v8634, %v8818
      %v8820 = vpop.f32.mrf.mxu0
      %8821 = vmatprep.mubr.f32.mxu0 %v8154
      %8822 = vmatmul.mubr.f32.gmra.mxu0 %v8153
      %v8823 = vpop.f32.mrf.mxu0
      %v8824 = vadd.f32 %v8639, %v8823
      %v8825 = vpop.f32.mrf.mxu0
      %8826 = vmatprep.mubr.f32.mxu0 %v8160
      %8827 = vmatmul.mubr.f32.gmra.mxu0 %v8159
      %v8828 = vpop.f32.mrf.mxu0
      %v8829 = vadd.f32 %v8644, %v8828
      %v8830 = vpop.f32.mrf.mxu0
      %8831 = vmatprep.mubr.f32.mxu0 %v8166
      %8832 = vmatmul.mubr.f32.gmra.mxu0 %v8165
      %v8833 = vpop.f32.mrf.mxu0
      %v8834 = vadd.f32 %v8649, %v8833
      %v8835 = vpop.f32.mrf.mxu0
      %8836 = vmatprep.mubr.f32.mxu0 %v8172
      %8837 = vmatmul.mubr.f32.gmra.mxu0 %v8171
      %v8838 = vpop.f32.mrf.mxu0
      %v8839 = vadd.f32 %v8654, %v8838
      %v8840 = vpop.f32.mrf.mxu0
      %8841 = vmatprep.mubr.f32.mxu0 %v8178
      %8842 = vmatmul.mubr.f32.gmra.mxu0 %v8177
      %v8843 = vpop.f32.mrf.mxu0
      %v8844 = vadd.f32 %v8659, %v8843
      %v8845 = vpop.f32.mrf.mxu0
      %8846 = vmatprep.mubr.f32.mxu0 %v8184
      %8847 = vmatmul.mubr.f32.gmra.mxu0 %v8183
      %v8848 = vpop.f32.mrf.mxu0
      %v8849 = vadd.f32 %v8664, %v8848
      %v8850 = vpop.f32.mrf.mxu0
      %8851 = vmatprep.mubr.f32.mxu0 %v8190
      %8852 = vmatmul.mubr.f32.gmra.mxu0 %v8189
      %v8853 = vpop.f32.mrf.mxu0
      %v8854 = vadd.f32 %v8669, %v8853
      %v8855 = vpop.f32.mrf.mxu0
      %8856 = vmatprep.mubr.f32.mxu0 %v8196
      %8857 = vmatmul.mubr.f32.gmra.mxu0 %v8195
      %v8858 = vpop.f32.mrf.mxu0
      %v8859 = vadd.f32 %v8674, %v8858
      %v8860 = vpop.f32.mrf.mxu0
      %8861 = vmatprep.mubr.f32.mxu0 %v8202
      %8862 = vmatmul.mubr.f32.gmra.mxu0 %v8201
      %v8863 = vpop.f32.mrf.mxu0
      %v8864 = vadd.f32 %v8679, %v8863
      %v8865 = vpop.f32.mrf.mxu0
      %8866 = vmatprep.mubr.f32.mxu0 %v8208
      %8867 = vmatmul.mubr.f32.gmra.mxu0 %v8207
      %v8868 = vpop.f32.mrf.mxu0
      %v8869 = vadd.f32 %v8684, %v8868
      %v8870 = vpop.f32.mrf.mxu0
      %8871 = vmatprep.mubr.f32.mxu0 %v8214
      %8872 = vmatmul.mubr.f32.gmra.mxu0 %v8213
      %v8873 = vpop.f32.mrf.mxu0
      %v8874 = vadd.f32 %v8689, %v8873
      %v8875 = vpop.f32.mrf.mxu0
      %8876 = vmatprep.mubr.f32.mxu0 %v8220
      %8877 = vmatmul.mubr.f32.gmra.mxu0 %v8219
      %v8878 = vpop.f32.mrf.mxu0
      %v8879 = vadd.f32 %v8694, %v8878
      %v8880 = vpop.f32.mrf.mxu0
      %8881 = vmatprep.mubr.f32.mxu0 %v8226
      %8882 = vmatmul.mubr.f32.gmra.mxu0 %v8225
      %v8883 = vpop.f32.mrf.mxu0
      %v8884 = vadd.f32 %v8699, %v8883
      %v8885 = vpop.f32.mrf.mxu0
      %8886 = vmatprep.mubr.f32.mxu0 %v8232
      %8887 = vmatmul.mubr.f32.gmra.mxu0 %v8231
      %v8888 = vpop.f32.mrf.mxu0
      %v8889 = vadd.f32 %v8704, %v8888
      %v8890 = vpop.f32.mrf.mxu0
      %8891 = vmatprep.mubr.f32.mxu0 %v8238
      %8892 = vmatmul.mubr.f32.gmra.mxu0 %v8237
      %v8893 = vpop.f32.mrf.mxu0
      %v8894 = vadd.f32 %v8709, %v8893
      %v8895 = vpop.f32.mrf.mxu0
      %8896 = vmatprep.mubr.f32.mxu0 %v8244
      %8897 = vmatmul.mubr.f32.gmra.mxu0 %v8243
      %v8898 = vpop.f32.mrf.mxu0
      %v8899 = vadd.f32 %v8714, %v8898
      %v8900 = vpop.f32.mrf.mxu0
      %8901 = vmatprep.mubr.f32.mxu0 %v8250
      %8902 = vmatmul.mubr.f32.gmra.mxu0 %v8249
      %v8903 = vpop.f32.mrf.mxu0
      %v8904 = vadd.f32 %v8719, %v8903
      %v8905 = vpop.f32.mrf.mxu0
      %8906 = vmatprep.mubr.f32.mxu0 %v8256
      %8907 = vmatmul.mubr.f32.gmra.mxu0 %v8255
      %v8908 = vpop.f32.mrf.mxu0
      %v8909 = vadd.f32 %v8724, %v8908
      %v8910 = vpop.f32.mrf.mxu0
      %8911 = vmatprep.mubr.f32.mxu0 %v8262
      %8912 = vmatmul.mubr.f32.gmra.mxu0 %v8261
      %v8913 = vpop.f32.mrf.mxu0
      %v8914 = vadd.f32 %v8729, %v8913
      %v8915 = vpop.f32.mrf.mxu0
      %8916 = vmatprep.mubr.f32.mxu0 %v8268
      %8917 = vmatmul.mubr.f32.gmra.mxu0 %v8267
      %v8918 = vpop.f32.mrf.mxu0
      %v8919 = vadd.f32 %v8734, %v8918
      %v8920 = vpop.f32.mrf.mxu0
      %8921 = vmatprep.mubr.f32.mxu0 %v8274
      %8922 = vmatmul.mubr.f32.gmra.mxu0 %v8273
      %v8923 = vpop.f32.mrf.mxu0
      %v8924 = vadd.f32 %v8739, %v8923
      %v8925 = vpop.f32.mrf.mxu0
      %8926 = vdwg.mxu0
      %v8927 = vadd.f32 %v8107, %v8809
      %v8928 = vadd.f32 %v8108, %v8814
      %v8929 = vadd.f32 %v8109, %v8819
      %v8930 = vadd.f32 %v8110, %v8824
      %v8931 = vadd.f32 %v8111, %v8829
      %v8932 = vadd.f32 %v8112, %v8834
      %v8933 = vadd.f32 %v8113, %v8839
      %v8934 = vadd.f32 %v8114, %v8844
      %v8935 = vadd.f32 %v8115, %v8849
      %v8936 = vadd.f32 %v8116, %v8854
      %v8937 = vadd.f32 %v8117, %v8859
      %v8938 = vadd.f32 %v8118, %v8864
      %v8939 = vadd.f32 %v8119, %v8869
      %v8940 = vadd.f32 %v8120, %v8874
      %v8941 = vadd.f32 %v8121, %v8879
      %v8942 = vadd.f32 %v8122, %v8884
      %v8943 = vadd.f32 %v8123, %v8889
      %v8944 = vadd.f32 %v8124, %v8894
      %v8945 = vadd.f32 %v8125, %v8899
      %v8946 = vadd.f32 %v8126, %v8904
      %v8947 = vadd.f32 %v8127, %v8909
      %v8948 = vadd.f32 %v8128, %v8914
      %v8949 = vadd.f32 %v8129, %v8919
      %v8950 = vadd.f32 %v8130, %v8924
      %v8951 = vld [vmem:[#allocation2 + $0xc0] sm:$0xfe]
      %v8952 = vld [vmem:[#allocation2 + $0xc8] sm:$0xfe]
      %v8953 = vld [vmem:[#allocation2 + $0xd0] sm:$0xfe]
      %v8954 = vld [vmem:[#allocation2 + $0xd8] sm:$0xfe]
      %v8955 = vld [vmem:[#allocation2 + $0xe0] sm:$0xfe]
      %v8956 = vld [vmem:[#allocation2 + $0xe8] sm:$0xfe]
      %v8957 = vld [vmem:[#allocation2 + $0xf0] sm:$0xff]
      %v8958 = vld [vmem:[#allocation2 + $0xf8] sm:$0xff]
      %v8959 = vld [vmem:[#allocation2 + $0x100] sm:$0xff]
      %v8960 = vld [vmem:[#allocation2 + $0x108] sm:$0xff]
      %v8961 = vld [vmem:[#allocation2 + $0x110] sm:$0xff]
      %v8962 = vld [vmem:[#allocation2 + $0x118] sm:$0xff]
      %v8963 = vld [vmem:[#allocation2 + $0x120] sm:$0xff]
      %v8964 = vld [vmem:[#allocation2 + $0x128] sm:$0xff]
      %v8965 = vld [vmem:[#allocation2 + $0x130] sm:$0xff]
      %v8966 = vld [vmem:[#allocation2 + $0x138] sm:$0xff]
      %v8967 = vld [vmem:[#allocation2 + $0x140] sm:$0xff]
      %v8968 = vld [vmem:[#allocation2 + $0x148] sm:$0xff]
      %v8969 = vld [vmem:[#allocation2 + $0x150] sm:$0xff]
      %v8970 = vld [vmem:[#allocation2 + $0x158] sm:$0xff]
      %v8971 = vld [vmem:[#allocation2 + $0x160] sm:$0xff]
      %v8972 = vld [vmem:[#allocation2 + $0x168] sm:$0xff]
      %v8973 = vld [vmem:[#allocation2 + $0x170] sm:$0xff]
      %v8974 = vld [vmem:[#allocation2 + $0x178] sm:$0xff]
      %v8975 = vld [vmem:[#allocation2 + $0x180] sm:$0xff]
      %v8976 = vld [vmem:[#allocation2 + $0x188] sm:$0xff]
      %v8977 = vld [vmem:[#allocation2 + $0x190] sm:$0xff]
      %v8978 = vld [vmem:[#allocation2 + $0x198] sm:$0xff]
      %v8979 = vld [vmem:[#allocation2 + $0x1a0] sm:$0xff]
      %v8980 = vld [vmem:[#allocation2 + $0x1a8] sm:$0xff]
      %v8981 = vld [vmem:[#allocation2 + $0x1b0] sm:$0xff]
      %v8982 = vld [vmem:[#allocation2 + $0x1b8] sm:$0xff]
      %v8983 = vld [vmem:[#allocation2 + $0x1c0] sm:$0xff]
      %v8984 = vld [vmem:[#allocation2 + $0x1c8] sm:$0xff]
      %v8985 = vld [vmem:[#allocation2 + $0x1d0] sm:$0xff]
      %v8986 = vld [vmem:[#allocation2 + $0x1d8] sm:$0xff]
      %v8987 = vld [vmem:[#allocation2 + $0x1e0] sm:$0xff]
      %v8988 = vld [vmem:[#allocation2 + $0x1e8] sm:$0xff]
      %v8989 = vld [vmem:[#allocation2 + $0x1f0] sm:$0xff]
      %v8990 = vld [vmem:[#allocation2 + $0x1f8] sm:$0xff]
      %v8991 = vld [vmem:[#allocation2 + $0x200] sm:$0xff]
      %v8992 = vld [vmem:[#allocation2 + $0x208] sm:$0xff]
      %v8993 = vld [vmem:[#allocation2 + $0x210] sm:$0xff]
      %v8994 = vld [vmem:[#allocation2 + $0x218] sm:$0xff]
      %v8995 = vld [vmem:[#allocation2 + $0x220] sm:$0xff]
      %v8996 = vld [vmem:[#allocation2 + $0x228] sm:$0xff]
      %v8997 = vld [vmem:[#allocation2 + $0x230] sm:$0xff]
      %v8998 = vld [vmem:[#allocation2 + $0x238] sm:$0xff]
      %v8999 = vld [vmem:[#allocation2 + $0x240] sm:$0xff]
      %v9000 = vld [vmem:[#allocation2 + $0x248] sm:$0xff]
      %v9001 = vld [vmem:[#allocation2 + $0x250] sm:$0xff]
      %v9002 = vld [vmem:[#allocation2 + $0x258] sm:$0xff]
      %v9003 = vld [vmem:[#allocation2 + $0x260] sm:$0xff]
      %v9004 = vld [vmem:[#allocation2 + $0x268] sm:$0xff]
      %v9005 = vld [vmem:[#allocation2 + $0x270] sm:$0xff]
      %v9006 = vld [vmem:[#allocation2 + $0x278] sm:$0xff]
      %v9007 = vld [vmem:[#allocation2 + $0x280] sm:$0xff]
      %v9008 = vld [vmem:[#allocation2 + $0x288] sm:$0xff]
      %v9009 = vld [vmem:[#allocation2 + $0x290] sm:$0xff]
      %v9010 = vld [vmem:[#allocation2 + $0x298] sm:$0xff]
      %v9011 = vld [vmem:[#allocation2 + $0x2a0] sm:$0xff]
      %v9012 = vld [vmem:[#allocation2 + $0x2a8] sm:$0xff]
      %v9013 = vld [vmem:[#allocation2 + $0x2b0] sm:$0xff]
      %v9014 = vld [vmem:[#allocation2 + $0x2b8] sm:$0xff]
      %v9015 = vld [vmem:[#allocation2 + $0x2c0] sm:$0xff]
      %v9016 = vld [vmem:[#allocation2 + $0x2c8] sm:$0xff]
      %v9017 = vld [vmem:[#allocation2 + $0x2d0] sm:$0xff]
      %v9018 = vld [vmem:[#allocation2 + $0x2d8] sm:$0xff]
      %v9019 = vld [vmem:[#allocation2 + $0x2e0] sm:$0xff]
      %v9020 = vld [vmem:[#allocation2 + $0x2e8] sm:$0xff]
      %v9021 = vld [vmem:[#allocation2 + $0x2f0] sm:$0xff]
      %v9022 = vld [vmem:[#allocation2 + $0x2f8] sm:$0xff]
      %v9023 = vld [vmem:[#allocation2 + $0x300] sm:$0xff]
      %v9024 = vld [vmem:[#allocation2 + $0x308] sm:$0xff]
      %v9025 = vld [vmem:[#allocation2 + $0x310] sm:$0xff]
      %v9026 = vld [vmem:[#allocation2 + $0x318] sm:$0xff]
      %v9027 = vld [vmem:[#allocation2 + $0x320] sm:$0xff]
      %v9028 = vld [vmem:[#allocation2 + $0x328] sm:$0xff]
      %v9029 = vld [vmem:[#allocation2 + $0x330] sm:$0xff]
      %v9030 = vld [vmem:[#allocation2 + $0x338] sm:$0xff]
      %v9031 = vld [vmem:[#allocation2 + $0x340] sm:$0xff]
      %v9032 = vld [vmem:[#allocation2 + $0x348] sm:$0xff]
      %v9033 = vld [vmem:[#allocation2 + $0x350] sm:$0xff]
      %v9034 = vld [vmem:[#allocation2 + $0x358] sm:$0xff]
      %v9035 = vld [vmem:[#allocation2 + $0x360] sm:$0xff]
      %v9036 = vld [vmem:[#allocation2 + $0x368] sm:$0xff]
      %v9037 = vld [vmem:[#allocation2 + $0x370] sm:$0xff]
      %v9038 = vld [vmem:[#allocation2 + $0x378] sm:$0xff]
      %v9039 = vld [vmem:[#allocation2 + $0x380] sm:$0xff]
      %v9040 = vld [vmem:[#allocation2 + $0x388] sm:$0xff]
      %v9041 = vld [vmem:[#allocation2 + $0x390] sm:$0xff]
      %v9042 = vld [vmem:[#allocation2 + $0x398] sm:$0xff]
      %v9043 = vld [vmem:[#allocation2 + $0x3a0] sm:$0xff]
      %v9044 = vld [vmem:[#allocation2 + $0x3a8] sm:$0xff]
      %v9045 = vld [vmem:[#allocation2 + $0x3b0] sm:$0xff]
      %v9046 = vld [vmem:[#allocation2 + $0x3b8] sm:$0xff]
      %v9047 = vld [vmem:[#allocation2 + $0x3c0] sm:$0xff]
      %v9048 = vld [vmem:[#allocation2 + $0x3c8] sm:$0xff]
      %v9049 = vld [vmem:[#allocation2 + $0x3d0] sm:$0xff]
      %v9050 = vld [vmem:[#allocation2 + $0x3d8] sm:$0xff]
      %v9051 = vld [vmem:[#allocation2 + $0x3e0] sm:$0xff]
      %v9052 = vld [vmem:[#allocation2 + $0x3e8] sm:$0xff]
      %v9053 = vld [vmem:[#allocation2 + $0x3f0] sm:$0xff]
      %v9054 = vld [vmem:[#allocation2 + $0x3f8] sm:$0xff]
      %v9055 = vld [vmem:[#allocation2 + $0x400] sm:$0xff]
      %v9056 = vld [vmem:[#allocation2 + $0x408] sm:$0xff]
      %v9057 = vld [vmem:[#allocation2 + $0x410] sm:$0xff]
      %v9058 = vld [vmem:[#allocation2 + $0x418] sm:$0xff]
      %v9059 = vld [vmem:[#allocation2 + $0x420] sm:$0xff]
      %v9060 = vld [vmem:[#allocation2 + $0x428] sm:$0xff]
      %v9061 = vld [vmem:[#allocation2 + $0x430] sm:$0xff]
      %v9062 = vld [vmem:[#allocation2 + $0x438] sm:$0xff]
      %v9063 = vld [vmem:[#allocation2 + $0x440] sm:$0xff]
      %v9064 = vld [vmem:[#allocation2 + $0x448] sm:$0xff]
      %v9065 = vld [vmem:[#allocation2 + $0x450] sm:$0xff]
      %v9066 = vld [vmem:[#allocation2 + $0x458] sm:$0xff]
      %v9067 = vld [vmem:[#allocation2 + $0x460] sm:$0xff]
      %v9068 = vld [vmem:[#allocation2 + $0x468] sm:$0xff]
      %v9069 = vld [vmem:[#allocation2 + $0x470] sm:$0xff]
      %v9070 = vld [vmem:[#allocation2 + $0x478] sm:$0xff]
      %v9071 = vld [vmem:[#allocation2 + $0x480] sm:$0xff]
      %v9072 = vld [vmem:[#allocation2 + $0x488] sm:$0xff]
      %v9073 = vld [vmem:[#allocation2 + $0x490] sm:$0xff]
      %v9074 = vld [vmem:[#allocation2 + $0x498] sm:$0xff]
      %v9075 = vld [vmem:[#allocation2 + $0x4a0] sm:$0xff]
      %v9076 = vld [vmem:[#allocation2 + $0x4a8] sm:$0xff]
      %v9077 = vld [vmem:[#allocation2 + $0x4b0] sm:$0xff]
      %v9078 = vld [vmem:[#allocation2 + $0x4b8] sm:$0xff]
      %v9079 = vld [vmem:[#allocation2 + $0x4c0] sm:$0xff]
      %v9080 = vld [vmem:[#allocation2 + $0x4c8] sm:$0xff]
      %v9081 = vld [vmem:[#allocation2 + $0x4d0] sm:$0xff]
      %v9082 = vld [vmem:[#allocation2 + $0x4d8] sm:$0xff]
      %v9083 = vld [vmem:[#allocation2 + $0x4e0] sm:$0xff]
      %v9084 = vld [vmem:[#allocation2 + $0x4e8] sm:$0xff]
      %v9085 = vld [vmem:[#allocation2 + $0x4f0] sm:$0xff]
      %v9086 = vld [vmem:[#allocation2 + $0x4f8] sm:$0xff]
      %v9087 = vld [vmem:[#allocation2 + $0x500] sm:$0xff]
      %v9088 = vld [vmem:[#allocation2 + $0x508] sm:$0xff]
      %v9089 = vld [vmem:[#allocation2 + $0x510] sm:$0xff]
      %v9090 = vld [vmem:[#allocation2 + $0x518] sm:$0xff]
      %v9091 = vld [vmem:[#allocation2 + $0x520] sm:$0xff]
      %v9092 = vld [vmem:[#allocation2 + $0x528] sm:$0xff]
      %v9093 = vld [vmem:[#allocation2 + $0x530] sm:$0xff]
      %v9094 = vld [vmem:[#allocation2 + $0x538] sm:$0xff]
      %v9095 = vld [vmem:[#allocation2 + $0x540] sm:$0x1]
      %v9096 = vld [vmem:[#allocation2 + $0x548] sm:$0x1]
      %v9097 = vld [vmem:[#allocation2 + $0x550] sm:$0x1]
      %v9098 = vld [vmem:[#allocation2 + $0x558] sm:$0x1]
      %v9099 = vld [vmem:[#allocation2 + $0x560] sm:$0x1]
      %v9100 = vld [vmem:[#allocation2 + $0x568] sm:$0x1]
      %s9101 = scalar_lea.vmem %s3, 5376
      %v9102 = vld [vmem:[%s9101] sm:$0xff]
      %v9103 = vld [vmem:[%s9101 + $0x8] sm:$0xff]
      %v9104 = vld [vmem:[%s9101 + $0x10] sm:$0xff]
      %v9105 = vld [vmem:[%s9101 + $0x18] sm:$0xff]
      %v9106 = vld [vmem:[%s9101 + $0x20] sm:$0xff]
      %v9107 = vld [vmem:[%s9101 + $0x28] sm:$0xff]
      %v9108 = vld [vmem:[%s9101 + $0x30] sm:$0xff]
      %v9109 = vld [vmem:[%s9101 + $0x38] sm:$0xff]
      %v9110 = vld [vmem:[%s9101 + $0x40] sm:$0xff]
      %v9111 = vld [vmem:[%s9101 + $0x48] sm:$0xff]
      %v9112 = vld [vmem:[%s9101 + $0x50] sm:$0xff]
      %v9113 = vld [vmem:[%s9101 + $0x58] sm:$0xff]
      %v9114 = vld [vmem:[%s9101 + $0x60] sm:$0xff]
      %v9115 = vld [vmem:[%s9101 + $0x68] sm:$0xff]
      %v9116 = vld [vmem:[%s9101 + $0x70] sm:$0xff]
      %v9117 = vld [vmem:[%s9101 + $0x78] sm:$0xff]
      %v9118 = vld [vmem:[%s9101 + $0x80] sm:$0xff]
      %v9119 = vld [vmem:[%s9101 + $0x88] sm:$0xff]
      %v9120 = vld [vmem:[%s9101 + $0x90] sm:$0xff]
      %v9121 = vld [vmem:[%s9101 + $0x98] sm:$0xff]
      %v9122 = vld [vmem:[%s9101 + $0xa0] sm:$0xff]
      %v9123 = vld [vmem:[%s9101 + $0xa8] sm:$0xff]
      %v9124 = vld [vmem:[%s9101 + $0xb0] sm:$0xff]
      %v9125 = vld [vmem:[%s9101 + $0xb8] sm:$0xff]
      %v9126 = vld [vmem:[%s9101 + $0xc0] sm:$0xff]
      %v9127 = vld [vmem:[%s9101 + $0xc8] sm:$0xff]
      %v9128 = vld [vmem:[%s9101 + $0xd0] sm:$0xff]
      %v9129 = vld [vmem:[%s9101 + $0xd8] sm:$0xff]
      %v9130 = vld [vmem:[%s9101 + $0xe0] sm:$0xff]
      %v9131 = vld [vmem:[%s9101 + $0xe8] sm:$0xff]
      %v9132 = vld [vmem:[%s9101 + $0xf0] sm:$0xff]
      %v9133 = vld [vmem:[%s9101 + $0xf8] sm:$0xff]
      %v9134 = vld [vmem:[%s9101 + $0x100] sm:$0xff]
      %v9135 = vld [vmem:[%s9101 + $0x108] sm:$0xff]
      %v9136 = vld [vmem:[%s9101 + $0x110] sm:$0xff]
      %v9137 = vld [vmem:[%s9101 + $0x118] sm:$0xff]
      %v9138 = vld [vmem:[%s9101 + $0x120] sm:$0xff]
      %v9139 = vld [vmem:[%s9101 + $0x128] sm:$0xff]
      %v9140 = vld [vmem:[%s9101 + $0x130] sm:$0xff]
      %v9141 = vld [vmem:[%s9101 + $0x138] sm:$0xff]
      %v9142 = vld [vmem:[%s9101 + $0x140] sm:$0xff]
      %v9143 = vld [vmem:[%s9101 + $0x148] sm:$0xff]
      %v9144 = vld [vmem:[%s9101 + $0x150] sm:$0xff]
      %v9145 = vld [vmem:[%s9101 + $0x158] sm:$0xff]
      %v9146 = vld [vmem:[%s9101 + $0x160] sm:$0xff]
      %v9147 = vld [vmem:[%s9101 + $0x168] sm:$0xff]
      %v9148 = vld [vmem:[%s9101 + $0x170] sm:$0xff]
      %v9149 = vld [vmem:[%s9101 + $0x178] sm:$0xff]
      %v9150 = vld [vmem:[%s9101 + $0x180] sm:$0xff]
      %v9151 = vld [vmem:[%s9101 + $0x188] sm:$0xff]
      %v9152 = vld [vmem:[%s9101 + $0x190] sm:$0xff]
      %v9153 = vld [vmem:[%s9101 + $0x198] sm:$0xff]
      %v9154 = vld [vmem:[%s9101 + $0x1a0] sm:$0xff]
      %v9155 = vld [vmem:[%s9101 + $0x1a8] sm:$0xff]
      %v9156 = vld [vmem:[%s9101 + $0x1b0] sm:$0xff]
      %v9157 = vld [vmem:[%s9101 + $0x1b8] sm:$0xff]
      %v9158 = vld [vmem:[%s9101 + $0x1c0] sm:$0xff]
      %v9159 = vld [vmem:[%s9101 + $0x1c8] sm:$0xff]
      %v9160 = vld [vmem:[%s9101 + $0x1d0] sm:$0xff]
      %v9161 = vld [vmem:[%s9101 + $0x1d8] sm:$0xff]
      %v9162 = vld [vmem:[%s9101 + $0x1e0] sm:$0xff]
      %v9163 = vld [vmem:[%s9101 + $0x1e8] sm:$0xff]
      %v9164 = vld [vmem:[%s9101 + $0x1f0] sm:$0xff]
      %v9165 = vld [vmem:[%s9101 + $0x1f8] sm:$0xff]
      %v9166 = vld [vmem:[%s9101 + $0x200] sm:$0xff]
      %v9167 = vld [vmem:[%s9101 + $0x208] sm:$0xff]
      %v9168 = vld [vmem:[%s9101 + $0x210] sm:$0xff]
      %v9169 = vld [vmem:[%s9101 + $0x218] sm:$0xff]
      %v9170 = vld [vmem:[%s9101 + $0x220] sm:$0xff]
      %v9171 = vld [vmem:[%s9101 + $0x228] sm:$0xff]
      %v9172 = vld [vmem:[%s9101 + $0x230] sm:$0xff]
      %v9173 = vld [vmem:[%s9101 + $0x238] sm:$0xff]
      %v9174 = vld [vmem:[%s9101 + $0x240] sm:$0xff]
      %v9175 = vld [vmem:[%s9101 + $0x248] sm:$0xff]
      %v9176 = vld [vmem:[%s9101 + $0x250] sm:$0xff]
      %v9177 = vld [vmem:[%s9101 + $0x258] sm:$0xff]
      %v9178 = vld [vmem:[%s9101 + $0x260] sm:$0xff]
      %v9179 = vld [vmem:[%s9101 + $0x268] sm:$0xff]
      %v9180 = vld [vmem:[%s9101 + $0x270] sm:$0xff]
      %v9181 = vld [vmem:[%s9101 + $0x278] sm:$0xff]
      %v9182 = vld [vmem:[%s9101 + $0x280] sm:$0xff]
      %v9183 = vld [vmem:[%s9101 + $0x288] sm:$0xff]
      %v9184 = vld [vmem:[%s9101 + $0x290] sm:$0xff]
      %v9185 = vld [vmem:[%s9101 + $0x298] sm:$0xff]
      %v9186 = vld [vmem:[%s9101 + $0x2a0] sm:$0xff]
      %v9187 = vld [vmem:[%s9101 + $0x2a8] sm:$0xff]
      %v9188 = vld [vmem:[%s9101 + $0x2b0] sm:$0xff]
      %v9189 = vld [vmem:[%s9101 + $0x2b8] sm:$0xff]
      %v9190 = vld [vmem:[%s9101 + $0x2c0] sm:$0xff]
      %v9191 = vld [vmem:[%s9101 + $0x2c8] sm:$0xff]
      %v9192 = vld [vmem:[%s9101 + $0x2d0] sm:$0xff]
      %v9193 = vld [vmem:[%s9101 + $0x2d8] sm:$0xff]
      %v9194 = vld [vmem:[%s9101 + $0x2e0] sm:$0xff]
      %v9195 = vld [vmem:[%s9101 + $0x2e8] sm:$0xff]
      %v9196 = vld [vmem:[%s9101 + $0x2f0] sm:$0xff]
      %v9197 = vld [vmem:[%s9101 + $0x2f8] sm:$0xff]
      %v9348 = vrot.slane %v8951, 1
      %v9349 = vrot.slane %v8957, 1
      %v9350 = vsel %vm2071, %v9348, %v9349
      %v9351 = vrot.slane %v8952, 1
      %v9352 = vrot.slane %v8958, 1
      %v9353 = vsel %vm2071, %v9351, %v9352
      %v9354 = vrot.slane %v8953, 1
      %v9355 = vrot.slane %v8959, 1
      %v9356 = vsel %vm2071, %v9354, %v9355
      %v9357 = vrot.slane %v8954, 1
      %v9358 = vrot.slane %v8960, 1
      %v9359 = vsel %vm2071, %v9357, %v9358
      %v9360 = vrot.slane %v8955, 1
      %v9361 = vrot.slane %v8961, 1
      %v9362 = vsel %vm2071, %v9360, %v9361
      %v9363 = vrot.slane %v8956, 1
      %v9364 = vrot.slane %v8962, 1
      %v9365 = vsel %vm2071, %v9363, %v9364
      %v9366 = vrot.slane %v8963, 1
      %v9367 = vsel %vm2071, %v9349, %v9366
      %v9368 = vrot.slane %v8964, 1
      %v9369 = vsel %vm2071, %v9352, %v9368
      %v9370 = vrot.slane %v8965, 1
      %v9371 = vsel %vm2071, %v9355, %v9370
      %v9372 = vrot.slane %v8966, 1
      %v9373 = vsel %vm2071, %v9358, %v9372
      %v9374 = vrot.slane %v8967, 1
      %v9375 = vsel %vm2071, %v9361, %v9374
      %v9376 = vrot.slane %v8968, 1
      %v9377 = vsel %vm2071, %v9364, %v9376
      %v9378 = vrot.slane %v8969, 1
      %v9379 = vsel %vm2071, %v9366, %v9378
      %v9380 = vrot.slane %v8970, 1
      %v9381 = vsel %vm2071, %v9368, %v9380
      %v9382 = vrot.slane %v8971, 1
      %v9383 = vsel %vm2071, %v9370, %v9382
      %v9384 = vrot.slane %v8972, 1
      %v9385 = vsel %vm2071, %v9372, %v9384
      %v9386 = vrot.slane %v8973, 1
      %v9387 = vsel %vm2071, %v9374, %v9386
      %v9388 = vrot.slane %v8974, 1
      %v9389 = vsel %vm2071, %v9376, %v9388
      %v9390 = vrot.slane %v8975, 1
      %v9391 = vsel %vm2071, %v9378, %v9390
      %v9392 = vrot.slane %v8976, 1
      %v9393 = vsel %vm2071, %v9380, %v9392
      %v9394 = vrot.slane %v8977, 1
      %v9395 = vsel %vm2071, %v9382, %v9394
      %v9396 = vrot.slane %v8978, 1
      %v9397 = vsel %vm2071, %v9384, %v9396
      %v9398 = vrot.slane %v8979, 1
      %v9399 = vsel %vm2071, %v9386, %v9398
      %v9400 = vrot.slane %v8980, 1
      %v9401 = vsel %vm2071, %v9388, %v9400
      %v9402 = vrot.slane %v8981, 1
      %v9403 = vsel %vm2071, %v9390, %v9402
      %v9404 = vrot.slane %v8982, 1
      %v9405 = vsel %vm2071, %v9392, %v9404
      %v9406 = vrot.slane %v8983, 1
      %v9407 = vsel %vm2071, %v9394, %v9406
      %v9408 = vrot.slane %v8984, 1
      %v9409 = vsel %vm2071, %v9396, %v9408
      %v9410 = vrot.slane %v8985, 1
      %v9411 = vsel %vm2071, %v9398, %v9410
      %v9412 = vrot.slane %v8986, 1
      %v9413 = vsel %vm2071, %v9400, %v9412
      %v9414 = vrot.slane %v8987, 1
      %v9415 = vsel %vm2071, %v9402, %v9414
      %v9416 = vrot.slane %v8988, 1
      %v9417 = vsel %vm2071, %v9404, %v9416
      %v9418 = vrot.slane %v8989, 1
      %v9419 = vsel %vm2071, %v9406, %v9418
      %v9420 = vrot.slane %v8990, 1
      %v9421 = vsel %vm2071, %v9408, %v9420
      %v9422 = vrot.slane %v8991, 1
      %v9423 = vsel %vm2071, %v9410, %v9422
      %v9424 = vrot.slane %v8992, 1
      %v9425 = vsel %vm2071, %v9412, %v9424
      %v9426 = vrot.slane %v8993, 1
      %v9427 = vsel %vm2071, %v9414, %v9426
      %v9428 = vrot.slane %v8994, 1
      %v9429 = vsel %vm2071, %v9416, %v9428
      %v9430 = vrot.slane %v8995, 1
      %v9431 = vsel %vm2071, %v9418, %v9430
      %v9432 = vrot.slane %v8996, 1
      %v9433 = vsel %vm2071, %v9420, %v9432
      %v9434 = vrot.slane %v8997, 1
      %v9435 = vsel %vm2071, %v9422, %v9434
      %v9436 = vrot.slane %v8998, 1
      %v9437 = vsel %vm2071, %v9424, %v9436
      %v9438 = vrot.slane %v8999, 1
      %v9439 = vsel %vm2071, %v9426, %v9438
      %v9440 = vrot.slane %v9000, 1
      %v9441 = vsel %vm2071, %v9428, %v9440
      %v9442 = vrot.slane %v9001, 1
      %v9443 = vsel %vm2071, %v9430, %v9442
      %v9444 = vrot.slane %v9002, 1
      %v9445 = vsel %vm2071, %v9432, %v9444
      %v9446 = vrot.slane %v9003, 1
      %v9447 = vsel %vm2071, %v9434, %v9446
      %v9448 = vrot.slane %v9004, 1
      %v9449 = vsel %vm2071, %v9436, %v9448
      %v9450 = vrot.slane %v9005, 1
      %v9451 = vsel %vm2071, %v9438, %v9450
      %v9452 = vrot.slane %v9006, 1
      %v9453 = vsel %vm2071, %v9440, %v9452
      %v9454 = vrot.slane %v9007, 1
      %v9455 = vsel %vm2071, %v9442, %v9454
      %v9456 = vrot.slane %v9008, 1
      %v9457 = vsel %vm2071, %v9444, %v9456
      %v9458 = vrot.slane %v9009, 1
      %v9459 = vsel %vm2071, %v9446, %v9458
      %v9460 = vrot.slane %v9010, 1
      %v9461 = vsel %vm2071, %v9448, %v9460
      %v9462 = vrot.slane %v9011, 1
      %v9463 = vsel %vm2071, %v9450, %v9462
      %v9464 = vrot.slane %v9012, 1
      %v9465 = vsel %vm2071, %v9452, %v9464
      %v9466 = vrot.slane %v9013, 1
      %v9467 = vsel %vm2071, %v9454, %v9466
      %v9468 = vrot.slane %v9014, 1
      %v9469 = vsel %vm2071, %v9456, %v9468
      %v9470 = vrot.slane %v9015, 1
      %v9471 = vsel %vm2071, %v9458, %v9470
      %v9472 = vrot.slane %v9016, 1
      %v9473 = vsel %vm2071, %v9460, %v9472
      %v9474 = vrot.slane %v9017, 1
      %v9475 = vsel %vm2071, %v9462, %v9474
      %v9476 = vrot.slane %v9018, 1
      %v9477 = vsel %vm2071, %v9464, %v9476
      %v9478 = vrot.slane %v9019, 1
      %v9479 = vsel %vm2071, %v9466, %v9478
      %v9480 = vrot.slane %v9020, 1
      %v9481 = vsel %vm2071, %v9468, %v9480
      %v9482 = vrot.slane %v9021, 1
      %v9483 = vsel %vm2071, %v9470, %v9482
      %v9484 = vrot.slane %v9022, 1
      %v9485 = vsel %vm2071, %v9472, %v9484
      %v9486 = vrot.slane %v9023, 1
      %v9487 = vsel %vm2071, %v9474, %v9486
      %v9488 = vrot.slane %v9024, 1
      %v9489 = vsel %vm2071, %v9476, %v9488
      %v9490 = vrot.slane %v9025, 1
      %v9491 = vsel %vm2071, %v9478, %v9490
      %v9492 = vrot.slane %v9026, 1
      %v9493 = vsel %vm2071, %v9480, %v9492
      %v9494 = vrot.slane %v9027, 1
      %v9495 = vsel %vm2071, %v9482, %v9494
      %v9496 = vrot.slane %v9028, 1
      %v9497 = vsel %vm2071, %v9484, %v9496
      %v9498 = vrot.slane %v9029, 1
      %v9499 = vsel %vm2071, %v9486, %v9498
      %v9500 = vrot.slane %v9030, 1
      %v9501 = vsel %vm2071, %v9488, %v9500
      %v9502 = vrot.slane %v9031, 1
      %v9503 = vsel %vm2071, %v9490, %v9502
      %v9504 = vrot.slane %v9032, 1
      %v9505 = vsel %vm2071, %v9492, %v9504
      %v9506 = vrot.slane %v9033, 1
      %v9507 = vsel %vm2071, %v9494, %v9506
      %v9508 = vrot.slane %v9034, 1
      %v9509 = vsel %vm2071, %v9496, %v9508
      %v9510 = vrot.slane %v9035, 1
      %v9511 = vsel %vm2071, %v9498, %v9510
      %v9512 = vrot.slane %v9036, 1
      %v9513 = vsel %vm2071, %v9500, %v9512
      %v9514 = vrot.slane %v9037, 1
      %v9515 = vsel %vm2071, %v9502, %v9514
      %v9516 = vrot.slane %v9038, 1
      %v9517 = vsel %vm2071, %v9504, %v9516
      %v9518 = vrot.slane %v9039, 1
      %v9519 = vsel %vm2071, %v9506, %v9518
      %v9520 = vrot.slane %v9040, 1
      %v9521 = vsel %vm2071, %v9508, %v9520
      %v9522 = vrot.slane %v9041, 1
      %v9523 = vsel %vm2071, %v9510, %v9522
      %v9524 = vrot.slane %v9042, 1
      %v9525 = vsel %vm2071, %v9512, %v9524
      %v9526 = vrot.slane %v9043, 1
      %v9527 = vsel %vm2071, %v9514, %v9526
      %v9528 = vrot.slane %v9044, 1
      %v9529 = vsel %vm2071, %v9516, %v9528
      %v9530 = vrot.slane %v9045, 1
      %v9531 = vsel %vm2071, %v9518, %v9530
      %v9532 = vrot.slane %v9046, 1
      %v9533 = vsel %vm2071, %v9520, %v9532
      %v9534 = vrot.slane %v9047, 1
      %v9535 = vsel %vm2071, %v9522, %v9534
      %v9536 = vrot.slane %v9048, 1
      %v9537 = vsel %vm2071, %v9524, %v9536
      %v9538 = vrot.slane %v9049, 1
      %v9539 = vsel %vm2071, %v9526, %v9538
      %v9540 = vrot.slane %v9050, 1
      %v9541 = vsel %vm2071, %v9528, %v9540
      %v9542 = vrot.slane %v9051, 1
      %v9543 = vsel %vm2071, %v9530, %v9542
      %v9544 = vrot.slane %v9052, 1
      %v9545 = vsel %vm2071, %v9532, %v9544
      %v9546 = vrot.slane %v9053, 1
      %v9547 = vsel %vm2071, %v9534, %v9546
      %v9548 = vrot.slane %v9054, 1
      %v9549 = vsel %vm2071, %v9536, %v9548
      %v9550 = vrot.slane %v9055, 1
      %v9551 = vsel %vm2071, %v9538, %v9550
      %v9552 = vrot.slane %v9056, 1
      %v9553 = vsel %vm2071, %v9540, %v9552
      %v9554 = vrot.slane %v9057, 1
      %v9555 = vsel %vm2071, %v9542, %v9554
      %v9556 = vrot.slane %v9058, 1
      %v9557 = vsel %vm2071, %v9544, %v9556
      %v9558 = vrot.slane %v9059, 1
      %v9559 = vsel %vm2071, %v9546, %v9558
      %v9560 = vrot.slane %v9060, 1
      %v9561 = vsel %vm2071, %v9548, %v9560
      %v9562 = vrot.slane %v9061, 1
      %v9563 = vsel %vm2071, %v9550, %v9562
      %v9564 = vrot.slane %v9062, 1
      %v9565 = vsel %vm2071, %v9552, %v9564
      %v9566 = vrot.slane %v9063, 1
      %v9567 = vsel %vm2071, %v9554, %v9566
      %v9568 = vrot.slane %v9064, 1
      %v9569 = vsel %vm2071, %v9556, %v9568
      %v9570 = vrot.slane %v9065, 1
      %v9571 = vsel %vm2071, %v9558, %v9570
      %v9572 = vrot.slane %v9066, 1
      %v9573 = vsel %vm2071, %v9560, %v9572
      %v9574 = vrot.slane %v9067, 1
      %v9575 = vsel %vm2071, %v9562, %v9574
      %v9576 = vrot.slane %v9068, 1
      %v9577 = vsel %vm2071, %v9564, %v9576
      %v9578 = vrot.slane %v9069, 1
      %v9579 = vsel %vm2071, %v9566, %v9578
      %v9580 = vrot.slane %v9070, 1
      %v9581 = vsel %vm2071, %v9568, %v9580
      %v9582 = vrot.slane %v9071, 1
      %v9583 = vsel %vm2071, %v9570, %v9582
      %v9584 = vrot.slane %v9072, 1
      %v9585 = vsel %vm2071, %v9572, %v9584
      %v9586 = vrot.slane %v9073, 1
      %v9587 = vsel %vm2071, %v9574, %v9586
      %v9588 = vrot.slane %v9074, 1
      %v9589 = vsel %vm2071, %v9576, %v9588
      %v9590 = vrot.slane %v9075, 1
      %v9591 = vsel %vm2071, %v9578, %v9590
      %v9592 = vrot.slane %v9076, 1
      %v9593 = vsel %vm2071, %v9580, %v9592
      %v9594 = vrot.slane %v9077, 1
      %v9595 = vsel %vm2071, %v9582, %v9594
      %v9596 = vrot.slane %v9078, 1
      %v9597 = vsel %vm2071, %v9584, %v9596
      %v9598 = vrot.slane %v9079, 1
      %v9599 = vsel %vm2071, %v9586, %v9598
      %v9600 = vrot.slane %v9080, 1
      %v9601 = vsel %vm2071, %v9588, %v9600
      %v9602 = vrot.slane %v9081, 1
      %v9603 = vsel %vm2071, %v9590, %v9602
      %v9604 = vrot.slane %v9082, 1
      %v9605 = vsel %vm2071, %v9592, %v9604
      %v9606 = vrot.slane %v9083, 1
      %v9607 = vsel %vm2071, %v9594, %v9606
      %v9608 = vrot.slane %v9084, 1
      %v9609 = vsel %vm2071, %v9596, %v9608
      %v9610 = vrot.slane %v9085, 1
      %v9611 = vsel %vm2071, %v9598, %v9610
      %v9612 = vrot.slane %v9086, 1
      %v9613 = vsel %vm2071, %v9600, %v9612
      %v9614 = vrot.slane %v9087, 1
      %v9615 = vsel %vm2071, %v9602, %v9614
      %v9616 = vrot.slane %v9088, 1
      %v9617 = vsel %vm2071, %v9604, %v9616
      %v9618 = vrot.slane %v9089, 1
      %v9619 = vsel %vm2071, %v9606, %v9618
      %v9620 = vrot.slane %v9090, 1
      %v9621 = vsel %vm2071, %v9608, %v9620
      %v9622 = vrot.slane %v9091, 1
      %v9623 = vsel %vm2071, %v9610, %v9622
      %v9624 = vrot.slane %v9092, 1
      %v9625 = vsel %vm2071, %v9612, %v9624
      %v9626 = vrot.slane %v9093, 1
      %v9627 = vsel %vm2071, %v9614, %v9626
      %v9628 = vrot.slane %v9094, 1
      %v9629 = vsel %vm2071, %v9616, %v9628
      %v9630 = vrot.slane %v9095, 1
      %v9631 = vsel %vm2071, %v9618, %v9630
      %v9632 = vrot.slane %v9096, 1
      %v9633 = vsel %vm2071, %v9620, %v9632
      %v9634 = vrot.slane %v9097, 1
      %v9635 = vsel %vm2071, %v9622, %v9634
      %v9636 = vrot.slane %v9098, 1
      %v9637 = vsel %vm2071, %v9624, %v9636
      %v9638 = vrot.slane %v9099, 1
      %v9639 = vsel %vm2071, %v9626, %v9638
      %v9640 = vrot.slane %v9100, 1
      %v9641 = vsel %vm2071, %v9628, %v9640
      %9786 = vmatprep.subr.mxu0 0.0
      %9787 = vmatpush1.msra.mxu0 %v9117
      %9788 = vmatprep.subr.mxu0 0.0
      %9789 = vmatpush1.msra.mxu0 %v9116
      %9790 = vmatprep.subr.mxu0 0.0
      %9791 = vmatpush1.msra.mxu0 %v9115
      %9792 = vmatprep.subr.mxu0 0.0
      %9793 = vmatpush1.msra.mxu0 %v9114
      %9794 = vmatprep.subr.mxu0 0.0
      %9795 = vmatpush1.msra.mxu0 %v9113
      %9796 = vmatprep.subr.mxu0 0.0
      %9797 = vmatpush1.msra.mxu0 %v9112
      %9798 = vmatprep.subr.mxu0 0.0
      %9799 = vmatpush1.msra.mxu0 %v9111
      %9800 = vmatprep.subr.mxu0 0.0
      %9801 = vmatpush1.msra.mxu0 %v9110
      %9802 = vmatprep.subr.mxu0 0.0
      %9803 = vmatpush1.msra.mxu0 %v9109
      %9804 = vmatprep.subr.mxu0 0.0
      %9805 = vmatpush1.msra.mxu0 %v9108
      %9806 = vmatprep.subr.mxu0 0.0
      %9807 = vmatpush1.msra.mxu0 %v9107
      %9808 = vmatprep.subr.mxu0 0.0
      %9809 = vmatpush1.msra.mxu0 %v9106
      %9810 = vmatprep.subr.mxu0 0.0
      %9811 = vmatpush1.msra.mxu0 %v9105
      %9812 = vmatprep.subr.mxu0 0.0
      %9813 = vmatpush1.msra.mxu0 %v9104
      %9814 = vmatprep.subr.mxu0 0.0
      %9815 = vmatpush1.msra.mxu0 %v9103
      %9816 = vmatprep.subr.mxu0 0.0
      %9817 = vmatpush1.msra.mxu0 %v9102
      %9818 = vmatprep.subr.mxu0 0.0
      %9819 = vmatpush2.msra.mxu0 %v9133
      %9820 = vmatprep.subr.mxu0 0.0
      %9821 = vmatpush2.msra.mxu0 %v9132
      %9822 = vmatprep.subr.mxu0 0.0
      %9823 = vmatpush2.msra.mxu0 %v9131
      %9824 = vmatprep.subr.mxu0 0.0
      %9825 = vmatpush2.msra.mxu0 %v9130
      %9826 = vmatprep.subr.mxu0 0.0
      %9827 = vmatpush2.msra.mxu0 %v9129
      %9828 = vmatprep.subr.mxu0 0.0
      %9829 = vmatpush2.msra.mxu0 %v9128
      %9830 = vmatprep.subr.mxu0 0.0
      %9831 = vmatpush2.msra.mxu0 %v9127
      %9832 = vmatprep.subr.mxu0 0.0
      %9833 = vmatpush2.msra.mxu0 %v9126
      %9834 = vmatprep.subr.mxu0 0.0
      %9835 = vmatpush2.msra.mxu0 %v9125
      %9836 = vmatprep.subr.mxu0 0.0
      %9837 = vmatpush2.msra.mxu0 %v9124
      %9838 = vmatprep.subr.mxu0 0.0
      %9839 = vmatpush2.msra.mxu0 %v9123
      %9840 = vmatprep.subr.mxu0 0.0
      %9841 = vmatpush2.msra.mxu0 %v9122
      %9842 = vmatprep.subr.mxu0 0.0
      %9843 = vmatpush2.msra.mxu0 %v9121
      %9844 = vmatprep.subr.mxu0 0.0
      %9845 = vmatpush2.msra.mxu0 %v9120
      %9846 = vmatprep.subr.mxu0 0.0
      %9847 = vmatpush2.msra.mxu0 %v9119
      %9848 = vmatprep.subr.mxu0 0.0
      %9849 = vmatpush2.msra.mxu0 %v9118
      %9850 = vmatprep.mubr.f32.mxu0 %v9353
      %9851 = vmatmul.mubr.f32.gmra.mxu0 %v9350
      %v9852 = vpop.f32.mrf.mxu0
      %v9853 = vadd.f32 0.0, %v9852
      %v9854 = vpop.f32.mrf.mxu0
      %9855 = vmatprep.mubr.f32.mxu0 %v9369
      %9856 = vmatmul.mubr.f32.gmra.mxu0 %v9367
      %v9857 = vpop.f32.mrf.mxu0
      %v9858 = vadd.f32 0.0, %v9857
      %v9859 = vpop.f32.mrf.mxu0
      %9860 = vmatprep.mubr.f32.mxu0 %v9381
      %9861 = vmatmul.mubr.f32.gmra.mxu0 %v9379
      %v9862 = vpop.f32.mrf.mxu0
      %v9863 = vadd.f32 0.0, %v9862
      %v9864 = vpop.f32.mrf.mxu0
      %9865 = vmatprep.mubr.f32.mxu0 %v9393
      %9866 = vmatmul.mubr.f32.gmra.mxu0 %v9391
      %v9867 = vpop.f32.mrf.mxu0
      %v9868 = vadd.f32 0.0, %v9867
      %v9869 = vpop.f32.mrf.mxu0
      %9870 = vmatprep.mubr.f32.mxu0 %v9405
      %9871 = vmatmul.mubr.f32.gmra.mxu0 %v9403
      %v9872 = vpop.f32.mrf.mxu0
      %v9873 = vadd.f32 0.0, %v9872
      %v9874 = vpop.f32.mrf.mxu0
      %9875 = vmatprep.mubr.f32.mxu0 %v9417
      %9876 = vmatmul.mubr.f32.gmra.mxu0 %v9415
      %v9877 = vpop.f32.mrf.mxu0
      %v9878 = vadd.f32 0.0, %v9877
      %v9879 = vpop.f32.mrf.mxu0
      %9880 = vmatprep.mubr.f32.mxu0 %v9429
      %9881 = vmatmul.mubr.f32.gmra.mxu0 %v9427
      %v9882 = vpop.f32.mrf.mxu0
      %v9883 = vadd.f32 0.0, %v9882
      %v9884 = vpop.f32.mrf.mxu0
      %9885 = vmatprep.mubr.f32.mxu0 %v9441
      %9886 = vmatmul.mubr.f32.gmra.mxu0 %v9439
      %v9887 = vpop.f32.mrf.mxu0
      %v9888 = vadd.f32 0.0, %v9887
      %v9889 = vpop.f32.mrf.mxu0
      %9890 = vmatprep.mubr.f32.mxu0 %v9453
      %9891 = vmatmul.mubr.f32.gmra.mxu0 %v9451
      %v9892 = vpop.f32.mrf.mxu0
      %v9893 = vadd.f32 0.0, %v9892
      %v9894 = vpop.f32.mrf.mxu0
      %9895 = vmatprep.mubr.f32.mxu0 %v9465
      %9896 = vmatmul.mubr.f32.gmra.mxu0 %v9463
      %v9897 = vpop.f32.mrf.mxu0
      %v9898 = vadd.f32 0.0, %v9897
      %v9899 = vpop.f32.mrf.mxu0
      %9900 = vmatprep.mubr.f32.mxu0 %v9477
      %9901 = vmatmul.mubr.f32.gmra.mxu0 %v9475
      %v9902 = vpop.f32.mrf.mxu0
      %v9903 = vadd.f32 0.0, %v9902
      %v9904 = vpop.f32.mrf.mxu0
      %9905 = vmatprep.mubr.f32.mxu0 %v9489
      %9906 = vmatmul.mubr.f32.gmra.mxu0 %v9487
      %v9907 = vpop.f32.mrf.mxu0
      %v9908 = vadd.f32 0.0, %v9907
      %v9909 = vpop.f32.mrf.mxu0
      %9910 = vmatprep.mubr.f32.mxu0 %v9501
      %9911 = vmatmul.mubr.f32.gmra.mxu0 %v9499
      %v9912 = vpop.f32.mrf.mxu0
      %v9913 = vadd.f32 0.0, %v9912
      %v9914 = vpop.f32.mrf.mxu0
      %9915 = vmatprep.mubr.f32.mxu0 %v9513
      %9916 = vmatmul.mubr.f32.gmra.mxu0 %v9511
      %v9917 = vpop.f32.mrf.mxu0
      %v9918 = vadd.f32 0.0, %v9917
      %v9919 = vpop.f32.mrf.mxu0
      %9920 = vmatprep.mubr.f32.mxu0 %v9525
      %9921 = vmatmul.mubr.f32.gmra.mxu0 %v9523
      %v9922 = vpop.f32.mrf.mxu0
      %v9923 = vadd.f32 0.0, %v9922
      %v9924 = vpop.f32.mrf.mxu0
      %9925 = vmatprep.mubr.f32.mxu0 %v9537
      %9926 = vmatmul.mubr.f32.gmra.mxu0 %v9535
      %v9927 = vpop.f32.mrf.mxu0
      %v9928 = vadd.f32 0.0, %v9927
      %v9929 = vpop.f32.mrf.mxu0
      %9930 = vmatprep.mubr.f32.mxu0 %v9549
      %9931 = vmatmul.mubr.f32.gmra.mxu0 %v9547
      %v9932 = vpop.f32.mrf.mxu0
      %v9933 = vadd.f32 0.0, %v9932
      %v9934 = vpop.f32.mrf.mxu0
      %9935 = vmatprep.mubr.f32.mxu0 %v9561
      %9936 = vmatmul.mubr.f32.gmra.mxu0 %v9559
      %v9937 = vpop.f32.mrf.mxu0
      %v9938 = vadd.f32 0.0, %v9937
      %v9939 = vpop.f32.mrf.mxu0
      %9940 = vmatprep.mubr.f32.mxu0 %v9573
      %9941 = vmatmul.mubr.f32.gmra.mxu0 %v9571
      %v9942 = vpop.f32.mrf.mxu0
      %v9943 = vadd.f32 0.0, %v9942
      %v9944 = vpop.f32.mrf.mxu0
      %9945 = vmatprep.mubr.f32.mxu0 %v9585
      %9946 = vmatmul.mubr.f32.gmra.mxu0 %v9583
      %v9947 = vpop.f32.mrf.mxu0
      %v9948 = vadd.f32 0.0, %v9947
      %v9949 = vpop.f32.mrf.mxu0
      %9950 = vmatprep.mubr.f32.mxu0 %v9597
      %9951 = vmatmul.mubr.f32.gmra.mxu0 %v9595
      %v9952 = vpop.f32.mrf.mxu0
      %v9953 = vadd.f32 0.0, %v9952
      %v9954 = vpop.f32.mrf.mxu0
      %9955 = vmatprep.mubr.f32.mxu0 %v9609
      %9956 = vmatmul.mubr.f32.gmra.mxu0 %v9607
      %v9957 = vpop.f32.mrf.mxu0
      %v9958 = vadd.f32 0.0, %v9957
      %v9959 = vpop.f32.mrf.mxu0
      %9960 = vmatprep.mubr.f32.mxu0 %v9621
      %9961 = vmatmul.mubr.f32.gmra.mxu0 %v9619
      %v9962 = vpop.f32.mrf.mxu0
      %v9963 = vadd.f32 0.0, %v9962
      %v9964 = vpop.f32.mrf.mxu0
      %9965 = vmatprep.mubr.f32.mxu0 %v9633
      %9966 = vmatmul.mubr.f32.gmra.mxu0 %v9631
      %v9967 = vpop.f32.mrf.mxu0
      %v9968 = vadd.f32 0.0, %v9967
      %v9969 = vpop.f32.mrf.mxu0
      %9970 = vdwg.mxu0
      %9971 = vmatprep.subr.mxu0 0.0
      %9972 = vmatpush1.msra.mxu0 %v9149
      %9973 = vmatprep.subr.mxu0 0.0
      %9974 = vmatpush1.msra.mxu0 %v9148
      %9975 = vmatprep.subr.mxu0 0.0
      %9976 = vmatpush1.msra.mxu0 %v9147
      %9977 = vmatprep.subr.mxu0 0.0
      %9978 = vmatpush1.msra.mxu0 %v9146
      %9979 = vmatprep.subr.mxu0 0.0
      %9980 = vmatpush1.msra.mxu0 %v9145
      %9981 = vmatprep.subr.mxu0 0.0
      %9982 = vmatpush1.msra.mxu0 %v9144
      %9983 = vmatprep.subr.mxu0 0.0
      %9984 = vmatpush1.msra.mxu0 %v9143
      %9985 = vmatprep.subr.mxu0 0.0
      %9986 = vmatpush1.msra.mxu0 %v9142
      %9987 = vmatprep.subr.mxu0 0.0
      %9988 = vmatpush1.msra.mxu0 %v9141
      %9989 = vmatprep.subr.mxu0 0.0
      %9990 = vmatpush1.msra.mxu0 %v9140
      %9991 = vmatprep.subr.mxu0 0.0
      %9992 = vmatpush1.msra.mxu0 %v9139
      %9993 = vmatprep.subr.mxu0 0.0
      %9994 = vmatpush1.msra.mxu0 %v9138
      %9995 = vmatprep.subr.mxu0 0.0
      %9996 = vmatpush1.msra.mxu0 %v9137
      %9997 = vmatprep.subr.mxu0 0.0
      %9998 = vmatpush1.msra.mxu0 %v9136
      %9999 = vmatprep.subr.mxu0 0.0
      %10000 = vmatpush1.msra.mxu0 %v9135
      %10001 = vmatprep.subr.mxu0 0.0
      %10002 = vmatpush1.msra.mxu0 %v9134
      %10003 = vmatprep.subr.mxu0 0.0
      %10004 = vmatpush2.msra.mxu0 %v9165
      %10005 = vmatprep.subr.mxu0 0.0
      %10006 = vmatpush2.msra.mxu0 %v9164
      %10007 = vmatprep.subr.mxu0 0.0
      %10008 = vmatpush2.msra.mxu0 %v9163
      %10009 = vmatprep.subr.mxu0 0.0
      %10010 = vmatpush2.msra.mxu0 %v9162
      %10011 = vmatprep.subr.mxu0 0.0
      %10012 = vmatpush2.msra.mxu0 %v9161
      %10013 = vmatprep.subr.mxu0 0.0
      %10014 = vmatpush2.msra.mxu0 %v9160
      %10015 = vmatprep.subr.mxu0 0.0
      %10016 = vmatpush2.msra.mxu0 %v9159
      %10017 = vmatprep.subr.mxu0 0.0
      %10018 = vmatpush2.msra.mxu0 %v9158
      %10019 = vmatprep.subr.mxu0 0.0
      %10020 = vmatpush2.msra.mxu0 %v9157
      %10021 = vmatprep.subr.mxu0 0.0
      %10022 = vmatpush2.msra.mxu0 %v9156
      %10023 = vmatprep.subr.mxu0 0.0
      %10024 = vmatpush2.msra.mxu0 %v9155
      %10025 = vmatprep.subr.mxu0 0.0
      %10026 = vmatpush2.msra.mxu0 %v9154
      %10027 = vmatprep.subr.mxu0 0.0
      %10028 = vmatpush2.msra.mxu0 %v9153
      %10029 = vmatprep.subr.mxu0 0.0
      %10030 = vmatpush2.msra.mxu0 %v9152
      %10031 = vmatprep.subr.mxu0 0.0
      %10032 = vmatpush2.msra.mxu0 %v9151
      %10033 = vmatprep.subr.mxu0 0.0
      %10034 = vmatpush2.msra.mxu0 %v9150
      %10035 = vmatprep.mubr.f32.mxu0 %v9359
      %10036 = vmatmul.mubr.f32.gmra.mxu0 %v9356
      %v10037 = vpop.f32.mrf.mxu0
      %v10038 = vadd.f32 %v9853, %v10037
      %v10039 = vpop.f32.mrf.mxu0
      %10040 = vmatprep.mubr.f32.mxu0 %v9373
      %10041 = vmatmul.mubr.f32.gmra.mxu0 %v9371
      %v10042 = vpop.f32.mrf.mxu0
      %v10043 = vadd.f32 %v9858, %v10042
      %v10044 = vpop.f32.mrf.mxu0
      %10045 = vmatprep.mubr.f32.mxu0 %v9385
      %10046 = vmatmul.mubr.f32.gmra.mxu0 %v9383
      %v10047 = vpop.f32.mrf.mxu0
      %v10048 = vadd.f32 %v9863, %v10047
      %v10049 = vpop.f32.mrf.mxu0
      %10050 = vmatprep.mubr.f32.mxu0 %v9397
      %10051 = vmatmul.mubr.f32.gmra.mxu0 %v9395
      %v10052 = vpop.f32.mrf.mxu0
      %v10053 = vadd.f32 %v9868, %v10052
      %v10054 = vpop.f32.mrf.mxu0
      %10055 = vmatprep.mubr.f32.mxu0 %v9409
      %10056 = vmatmul.mubr.f32.gmra.mxu0 %v9407
      %v10057 = vpop.f32.mrf.mxu0
      %v10058 = vadd.f32 %v9873, %v10057
      %v10059 = vpop.f32.mrf.mxu0
      %10060 = vmatprep.mubr.f32.mxu0 %v9421
      %10061 = vmatmul.mubr.f32.gmra.mxu0 %v9419
      %v10062 = vpop.f32.mrf.mxu0
      %v10063 = vadd.f32 %v9878, %v10062
      %v10064 = vpop.f32.mrf.mxu0
      %10065 = vmatprep.mubr.f32.mxu0 %v9433
      %10066 = vmatmul.mubr.f32.gmra.mxu0 %v9431
      %v10067 = vpop.f32.mrf.mxu0
      %v10068 = vadd.f32 %v9883, %v10067
      %v10069 = vpop.f32.mrf.mxu0
      %10070 = vmatprep.mubr.f32.mxu0 %v9445
      %10071 = vmatmul.mubr.f32.gmra.mxu0 %v9443
      %v10072 = vpop.f32.mrf.mxu0
      %v10073 = vadd.f32 %v9888, %v10072
      %v10074 = vpop.f32.mrf.mxu0
      %10075 = vmatprep.mubr.f32.mxu0 %v9457
      %10076 = vmatmul.mubr.f32.gmra.mxu0 %v9455
      %v10077 = vpop.f32.mrf.mxu0
      %v10078 = vadd.f32 %v9893, %v10077
      %v10079 = vpop.f32.mrf.mxu0
      %10080 = vmatprep.mubr.f32.mxu0 %v9469
      %10081 = vmatmul.mubr.f32.gmra.mxu0 %v9467
      %v10082 = vpop.f32.mrf.mxu0
      %v10083 = vadd.f32 %v9898, %v10082
      %v10084 = vpop.f32.mrf.mxu0
      %10085 = vmatprep.mubr.f32.mxu0 %v9481
      %10086 = vmatmul.mubr.f32.gmra.mxu0 %v9479
      %v10087 = vpop.f32.mrf.mxu0
      %v10088 = vadd.f32 %v9903, %v10087
      %v10089 = vpop.f32.mrf.mxu0
      %10090 = vmatprep.mubr.f32.mxu0 %v9493
      %10091 = vmatmul.mubr.f32.gmra.mxu0 %v9491
      %v10092 = vpop.f32.mrf.mxu0
      %v10093 = vadd.f32 %v9908, %v10092
      %v10094 = vpop.f32.mrf.mxu0
      %10095 = vmatprep.mubr.f32.mxu0 %v9505
      %10096 = vmatmul.mubr.f32.gmra.mxu0 %v9503
      %v10097 = vpop.f32.mrf.mxu0
      %v10098 = vadd.f32 %v9913, %v10097
      %v10099 = vpop.f32.mrf.mxu0
      %10100 = vmatprep.mubr.f32.mxu0 %v9517
      %10101 = vmatmul.mubr.f32.gmra.mxu0 %v9515
      %v10102 = vpop.f32.mrf.mxu0
      %v10103 = vadd.f32 %v9918, %v10102
      %v10104 = vpop.f32.mrf.mxu0
      %10105 = vmatprep.mubr.f32.mxu0 %v9529
      %10106 = vmatmul.mubr.f32.gmra.mxu0 %v9527
      %v10107 = vpop.f32.mrf.mxu0
      %v10108 = vadd.f32 %v9923, %v10107
      %v10109 = vpop.f32.mrf.mxu0
      %10110 = vmatprep.mubr.f32.mxu0 %v9541
      %10111 = vmatmul.mubr.f32.gmra.mxu0 %v9539
      %v10112 = vpop.f32.mrf.mxu0
      %v10113 = vadd.f32 %v9928, %v10112
      %v10114 = vpop.f32.mrf.mxu0
      %10115 = vmatprep.mubr.f32.mxu0 %v9553
      %10116 = vmatmul.mubr.f32.gmra.mxu0 %v9551
      %v10117 = vpop.f32.mrf.mxu0
      %v10118 = vadd.f32 %v9933, %v10117
      %v10119 = vpop.f32.mrf.mxu0
      %10120 = vmatprep.mubr.f32.mxu0 %v9565
      %10121 = vmatmul.mubr.f32.gmra.mxu0 %v9563
      %v10122 = vpop.f32.mrf.mxu0
      %v10123 = vadd.f32 %v9938, %v10122
      %v10124 = vpop.f32.mrf.mxu0
      %10125 = vmatprep.mubr.f32.mxu0 %v9577
      %10126 = vmatmul.mubr.f32.gmra.mxu0 %v9575
      %v10127 = vpop.f32.mrf.mxu0
      %v10128 = vadd.f32 %v9943, %v10127
      %v10129 = vpop.f32.mrf.mxu0
      %10130 = vmatprep.mubr.f32.mxu0 %v9589
      %10131 = vmatmul.mubr.f32.gmra.mxu0 %v9587
      %v10132 = vpop.f32.mrf.mxu0
      %v10133 = vadd.f32 %v9948, %v10132
      %v10134 = vpop.f32.mrf.mxu0
      %10135 = vmatprep.mubr.f32.mxu0 %v9601
      %10136 = vmatmul.mubr.f32.gmra.mxu0 %v9599
      %v10137 = vpop.f32.mrf.mxu0
      %v10138 = vadd.f32 %v9953, %v10137
      %v10139 = vpop.f32.mrf.mxu0
      %10140 = vmatprep.mubr.f32.mxu0 %v9613
      %10141 = vmatmul.mubr.f32.gmra.mxu0 %v9611
      %v10142 = vpop.f32.mrf.mxu0
      %v10143 = vadd.f32 %v9958, %v10142
      %v10144 = vpop.f32.mrf.mxu0
      %10145 = vmatprep.mubr.f32.mxu0 %v9625
      %10146 = vmatmul.mubr.f32.gmra.mxu0 %v9623
      %v10147 = vpop.f32.mrf.mxu0
      %v10148 = vadd.f32 %v9963, %v10147
      %v10149 = vpop.f32.mrf.mxu0
      %10150 = vmatprep.mubr.f32.mxu0 %v9637
      %10151 = vmatmul.mubr.f32.gmra.mxu0 %v9635
      %v10152 = vpop.f32.mrf.mxu0
      %v10153 = vadd.f32 %v9968, %v10152
      %v10154 = vpop.f32.mrf.mxu0
      %10155 = vdwg.mxu0
      %10156 = vmatprep.subr.mxu0 0.0
      %10157 = vmatpush1.msra.mxu0 %v9181
      %10158 = vmatprep.subr.mxu0 0.0
      %10159 = vmatpush1.msra.mxu0 %v9180
      %10160 = vmatprep.subr.mxu0 0.0
      %10161 = vmatpush1.msra.mxu0 %v9179
      %10162 = vmatprep.subr.mxu0 0.0
      %10163 = vmatpush1.msra.mxu0 %v9178
      %10164 = vmatprep.subr.mxu0 0.0
      %10165 = vmatpush1.msra.mxu0 %v9177
      %10166 = vmatprep.subr.mxu0 0.0
      %10167 = vmatpush1.msra.mxu0 %v9176
      %10168 = vmatprep.subr.mxu0 0.0
      %10169 = vmatpush1.msra.mxu0 %v9175
      %10170 = vmatprep.subr.mxu0 0.0
      %10171 = vmatpush1.msra.mxu0 %v9174
      %10172 = vmatprep.subr.mxu0 0.0
      %10173 = vmatpush1.msra.mxu0 %v9173
      %10174 = vmatprep.subr.mxu0 0.0
      %10175 = vmatpush1.msra.mxu0 %v9172
      %10176 = vmatprep.subr.mxu0 0.0
      %10177 = vmatpush1.msra.mxu0 %v9171
      %10178 = vmatprep.subr.mxu0 0.0
      %10179 = vmatpush1.msra.mxu0 %v9170
      %10180 = vmatprep.subr.mxu0 0.0
      %10181 = vmatpush1.msra.mxu0 %v9169
      %10182 = vmatprep.subr.mxu0 0.0
      %10183 = vmatpush1.msra.mxu0 %v9168
      %10184 = vmatprep.subr.mxu0 0.0
      %10185 = vmatpush1.msra.mxu0 %v9167
      %10186 = vmatprep.subr.mxu0 0.0
      %10187 = vmatpush1.msra.mxu0 %v9166
      %10188 = vmatprep.subr.mxu0 0.0
      %10189 = vmatpush2.msra.mxu0 %v9197
      %10190 = vmatprep.subr.mxu0 0.0
      %10191 = vmatpush2.msra.mxu0 %v9196
      %10192 = vmatprep.subr.mxu0 0.0
      %10193 = vmatpush2.msra.mxu0 %v9195
      %10194 = vmatprep.subr.mxu0 0.0
      %10195 = vmatpush2.msra.mxu0 %v9194
      %10196 = vmatprep.subr.mxu0 0.0
      %10197 = vmatpush2.msra.mxu0 %v9193
      %10198 = vmatprep.subr.mxu0 0.0
      %10199 = vmatpush2.msra.mxu0 %v9192
      %10200 = vmatprep.subr.mxu0 0.0
      %10201 = vmatpush2.msra.mxu0 %v9191
      %10202 = vmatprep.subr.mxu0 0.0
      %10203 = vmatpush2.msra.mxu0 %v9190
      %10204 = vmatprep.subr.mxu0 0.0
      %10205 = vmatpush2.msra.mxu0 %v9189
      %10206 = vmatprep.subr.mxu0 0.0
      %10207 = vmatpush2.msra.mxu0 %v9188
      %10208 = vmatprep.subr.mxu0 0.0
      %10209 = vmatpush2.msra.mxu0 %v9187
      %10210 = vmatprep.subr.mxu0 0.0
      %10211 = vmatpush2.msra.mxu0 %v9186
      %10212 = vmatprep.subr.mxu0 0.0
      %10213 = vmatpush2.msra.mxu0 %v9185
      %10214 = vmatprep.subr.mxu0 0.0
      %10215 = vmatpush2.msra.mxu0 %v9184
      %10216 = vmatprep.subr.mxu0 0.0
      %10217 = vmatpush2.msra.mxu0 %v9183
      %10218 = vmatprep.subr.mxu0 0.0
      %10219 = vmatpush2.msra.mxu0 %v9182
      %10220 = vmatprep.mubr.f32.mxu0 %v9365
      %10221 = vmatmul.mubr.f32.gmra.mxu0 %v9362
      %v10222 = vpop.f32.mrf.mxu0
      %v10223 = vadd.f32 %v10038, %v10222
      %v10224 = vpop.f32.mrf.mxu0
      %10225 = vmatprep.mubr.f32.mxu0 %v9377
      %10226 = vmatmul.mubr.f32.gmra.mxu0 %v9375
      %v10227 = vpop.f32.mrf.mxu0
      %v10228 = vadd.f32 %v10043, %v10227
      %v10229 = vpop.f32.mrf.mxu0
      %10230 = vmatprep.mubr.f32.mxu0 %v9389
      %10231 = vmatmul.mubr.f32.gmra.mxu0 %v9387
      %v10232 = vpop.f32.mrf.mxu0
      %v10233 = vadd.f32 %v10048, %v10232
      %v10234 = vpop.f32.mrf.mxu0
      %10235 = vmatprep.mubr.f32.mxu0 %v9401
      %10236 = vmatmul.mubr.f32.gmra.mxu0 %v9399
      %v10237 = vpop.f32.mrf.mxu0
      %v10238 = vadd.f32 %v10053, %v10237
      %v10239 = vpop.f32.mrf.mxu0
      %10240 = vmatprep.mubr.f32.mxu0 %v9413
      %10241 = vmatmul.mubr.f32.gmra.mxu0 %v9411
      %v10242 = vpop.f32.mrf.mxu0
      %v10243 = vadd.f32 %v10058, %v10242
      %v10244 = vpop.f32.mrf.mxu0
      %10245 = vmatprep.mubr.f32.mxu0 %v9425
      %10246 = vmatmul.mubr.f32.gmra.mxu0 %v9423
      %v10247 = vpop.f32.mrf.mxu0
      %v10248 = vadd.f32 %v10063, %v10247
      %v10249 = vpop.f32.mrf.mxu0
      %10250 = vmatprep.mubr.f32.mxu0 %v9437
      %10251 = vmatmul.mubr.f32.gmra.mxu0 %v9435
      %v10252 = vpop.f32.mrf.mxu0
      %v10253 = vadd.f32 %v10068, %v10252
      %v10254 = vpop.f32.mrf.mxu0
      %10255 = vmatprep.mubr.f32.mxu0 %v9449
      %10256 = vmatmul.mubr.f32.gmra.mxu0 %v9447
      %v10257 = vpop.f32.mrf.mxu0
      %v10258 = vadd.f32 %v10073, %v10257
      %v10259 = vpop.f32.mrf.mxu0
      %10260 = vmatprep.mubr.f32.mxu0 %v9461
      %10261 = vmatmul.mubr.f32.gmra.mxu0 %v9459
      %v10262 = vpop.f32.mrf.mxu0
      %v10263 = vadd.f32 %v10078, %v10262
      %v10264 = vpop.f32.mrf.mxu0
      %10265 = vmatprep.mubr.f32.mxu0 %v9473
      %10266 = vmatmul.mubr.f32.gmra.mxu0 %v9471
      %v10267 = vpop.f32.mrf.mxu0
      %v10268 = vadd.f32 %v10083, %v10267
      %v10269 = vpop.f32.mrf.mxu0
      %10270 = vmatprep.mubr.f32.mxu0 %v9485
      %10271 = vmatmul.mubr.f32.gmra.mxu0 %v9483
      %v10272 = vpop.f32.mrf.mxu0
      %v10273 = vadd.f32 %v10088, %v10272
      %v10274 = vpop.f32.mrf.mxu0
      %10275 = vmatprep.mubr.f32.mxu0 %v9497
      %10276 = vmatmul.mubr.f32.gmra.mxu0 %v9495
      %v10277 = vpop.f32.mrf.mxu0
      %v10278 = vadd.f32 %v10093, %v10277
      %v10279 = vpop.f32.mrf.mxu0
      %10280 = vmatprep.mubr.f32.mxu0 %v9509
      %10281 = vmatmul.mubr.f32.gmra.mxu0 %v9507
      %v10282 = vpop.f32.mrf.mxu0
      %v10283 = vadd.f32 %v10098, %v10282
      %v10284 = vpop.f32.mrf.mxu0
      %10285 = vmatprep.mubr.f32.mxu0 %v9521
      %10286 = vmatmul.mubr.f32.gmra.mxu0 %v9519
      %v10287 = vpop.f32.mrf.mxu0
      %v10288 = vadd.f32 %v10103, %v10287
      %v10289 = vpop.f32.mrf.mxu0
      %10290 = vmatprep.mubr.f32.mxu0 %v9533
      %10291 = vmatmul.mubr.f32.gmra.mxu0 %v9531
      %v10292 = vpop.f32.mrf.mxu0
      %v10293 = vadd.f32 %v10108, %v10292
      %v10294 = vpop.f32.mrf.mxu0
      %10295 = vmatprep.mubr.f32.mxu0 %v9545
      %10296 = vmatmul.mubr.f32.gmra.mxu0 %v9543
      %v10297 = vpop.f32.mrf.mxu0
      %v10298 = vadd.f32 %v10113, %v10297
      %v10299 = vpop.f32.mrf.mxu0
      %10300 = vmatprep.mubr.f32.mxu0 %v9557
      %10301 = vmatmul.mubr.f32.gmra.mxu0 %v9555
      %v10302 = vpop.f32.mrf.mxu0
      %v10303 = vadd.f32 %v10118, %v10302
      %v10304 = vpop.f32.mrf.mxu0
      %10305 = vmatprep.mubr.f32.mxu0 %v9569
      %10306 = vmatmul.mubr.f32.gmra.mxu0 %v9567
      %v10307 = vpop.f32.mrf.mxu0
      %v10308 = vadd.f32 %v10123, %v10307
      %v10309 = vpop.f32.mrf.mxu0
      %10310 = vmatprep.mubr.f32.mxu0 %v9581
      %10311 = vmatmul.mubr.f32.gmra.mxu0 %v9579
      %v10312 = vpop.f32.mrf.mxu0
      %v10313 = vadd.f32 %v10128, %v10312
      %v10314 = vpop.f32.mrf.mxu0
      %10315 = vmatprep.mubr.f32.mxu0 %v9593
      %10316 = vmatmul.mubr.f32.gmra.mxu0 %v9591
      %v10317 = vpop.f32.mrf.mxu0
      %v10318 = vadd.f32 %v10133, %v10317
      %v10319 = vpop.f32.mrf.mxu0
      %10320 = vmatprep.mubr.f32.mxu0 %v9605
      %10321 = vmatmul.mubr.f32.gmra.mxu0 %v9603
      %v10322 = vpop.f32.mrf.mxu0
      %v10323 = vadd.f32 %v10138, %v10322
      %v10324 = vpop.f32.mrf.mxu0
      %10325 = vmatprep.mubr.f32.mxu0 %v9617
      %10326 = vmatmul.mubr.f32.gmra.mxu0 %v9615
      %v10327 = vpop.f32.mrf.mxu0
      %v10328 = vadd.f32 %v10143, %v10327
      %v10329 = vpop.f32.mrf.mxu0
      %10330 = vmatprep.mubr.f32.mxu0 %v9629
      %10331 = vmatmul.mubr.f32.gmra.mxu0 %v9627
      %v10332 = vpop.f32.mrf.mxu0
      %v10333 = vadd.f32 %v10148, %v10332
      %v10334 = vpop.f32.mrf.mxu0
      %10335 = vmatprep.mubr.f32.mxu0 %v9641
      %10336 = vmatmul.mubr.f32.gmra.mxu0 %v9639
      %v10337 = vpop.f32.mrf.mxu0
      %v10338 = vadd.f32 %v10153, %v10337
      %v10339 = vpop.f32.mrf.mxu0
      %10340 = vdwg.mxu0
      %v10341 = vadd.f32 %v8927, %v10223
      %v10342 = vadd.f32 %v8928, %v10228
      %v10343 = vadd.f32 %v8929, %v10233
      %v10344 = vadd.f32 %v8930, %v10238
      %v10345 = vadd.f32 %v8931, %v10243
      %v10346 = vadd.f32 %v8932, %v10248
      %v10347 = vadd.f32 %v8933, %v10253
      %v10348 = vadd.f32 %v8934, %v10258
      %v10349 = vadd.f32 %v8935, %v10263
      %v10350 = vadd.f32 %v8936, %v10268
      %v10351 = vadd.f32 %v8937, %v10273
      %v10352 = vadd.f32 %v8938, %v10278
      %v10353 = vadd.f32 %v8939, %v10283
      %v10354 = vadd.f32 %v8940, %v10288
      %v10355 = vadd.f32 %v8941, %v10293
      %v10356 = vadd.f32 %v8942, %v10298
      %v10357 = vadd.f32 %v8943, %v10303
      %v10358 = vadd.f32 %v8944, %v10308
      %v10359 = vadd.f32 %v8945, %v10313
      %v10360 = vadd.f32 %v8946, %v10318
      %v10361 = vadd.f32 %v8947, %v10323
      %v10362 = vadd.f32 %v8948, %v10328
      %v10363 = vadd.f32 %v8949, %v10333
      %v10364 = vadd.f32 %v8950, %v10338
      %v10365 = vld [vmem:[#allocation2 + $0xc0] sm:$0xfc]
      %v10366 = vld [vmem:[#allocation2 + $0xc8] sm:$0xfc]
      %v10367 = vld [vmem:[#allocation2 + $0xd0] sm:$0xfc]
      %v10368 = vld [vmem:[#allocation2 + $0xd8] sm:$0xfc]
      %v10369 = vld [vmem:[#allocation2 + $0xe0] sm:$0xfc]
      %v10370 = vld [vmem:[#allocation2 + $0xe8] sm:$0xfc]
      %v10371 = vld [vmem:[#allocation2 + $0x540] sm:$0x3]
      %v10372 = vld [vmem:[#allocation2 + $0x548] sm:$0x3]
      %v10373 = vld [vmem:[#allocation2 + $0x550] sm:$0x3]
      %v10374 = vld [vmem:[#allocation2 + $0x558] sm:$0x3]
      %v10375 = vld [vmem:[#allocation2 + $0x560] sm:$0x3]
      %v10376 = vld [vmem:[#allocation2 + $0x568] sm:$0x3]
      %s10377 = scalar_lea.vmem %s3, 6144
      %v10378 = vld [vmem:[%s10377] sm:$0xff]
      %v10379 = vld [vmem:[%s10377 + $0x8] sm:$0xff]
      %v10380 = vld [vmem:[%s10377 + $0x10] sm:$0xff]
      %v10381 = vld [vmem:[%s10377 + $0x18] sm:$0xff]
      %v10382 = vld [vmem:[%s10377 + $0x20] sm:$0xff]
      %v10383 = vld [vmem:[%s10377 + $0x28] sm:$0xff]
      %v10384 = vld [vmem:[%s10377 + $0x30] sm:$0xff]
      %v10385 = vld [vmem:[%s10377 + $0x38] sm:$0xff]
      %v10386 = vld [vmem:[%s10377 + $0x40] sm:$0xff]
      %v10387 = vld [vmem:[%s10377 + $0x48] sm:$0xff]
      %v10388 = vld [vmem:[%s10377 + $0x50] sm:$0xff]
      %v10389 = vld [vmem:[%s10377 + $0x58] sm:$0xff]
      %v10390 = vld [vmem:[%s10377 + $0x60] sm:$0xff]
      %v10391 = vld [vmem:[%s10377 + $0x68] sm:$0xff]
      %v10392 = vld [vmem:[%s10377 + $0x70] sm:$0xff]
      %v10393 = vld [vmem:[%s10377 + $0x78] sm:$0xff]
      %v10394 = vld [vmem:[%s10377 + $0x80] sm:$0xff]
      %v10395 = vld [vmem:[%s10377 + $0x88] sm:$0xff]
      %v10396 = vld [vmem:[%s10377 + $0x90] sm:$0xff]
      %v10397 = vld [vmem:[%s10377 + $0x98] sm:$0xff]
      %v10398 = vld [vmem:[%s10377 + $0xa0] sm:$0xff]
      %v10399 = vld [vmem:[%s10377 + $0xa8] sm:$0xff]
      %v10400 = vld [vmem:[%s10377 + $0xb0] sm:$0xff]
      %v10401 = vld [vmem:[%s10377 + $0xb8] sm:$0xff]
      %v10402 = vld [vmem:[%s10377 + $0xc0] sm:$0xff]
      %v10403 = vld [vmem:[%s10377 + $0xc8] sm:$0xff]
      %v10404 = vld [vmem:[%s10377 + $0xd0] sm:$0xff]
      %v10405 = vld [vmem:[%s10377 + $0xd8] sm:$0xff]
      %v10406 = vld [vmem:[%s10377 + $0xe0] sm:$0xff]
      %v10407 = vld [vmem:[%s10377 + $0xe8] sm:$0xff]
      %v10408 = vld [vmem:[%s10377 + $0xf0] sm:$0xff]
      %v10409 = vld [vmem:[%s10377 + $0xf8] sm:$0xff]
      %v10410 = vld [vmem:[%s10377 + $0x100] sm:$0xff]
      %v10411 = vld [vmem:[%s10377 + $0x108] sm:$0xff]
      %v10412 = vld [vmem:[%s10377 + $0x110] sm:$0xff]
      %v10413 = vld [vmem:[%s10377 + $0x118] sm:$0xff]
      %v10414 = vld [vmem:[%s10377 + $0x120] sm:$0xff]
      %v10415 = vld [vmem:[%s10377 + $0x128] sm:$0xff]
      %v10416 = vld [vmem:[%s10377 + $0x130] sm:$0xff]
      %v10417 = vld [vmem:[%s10377 + $0x138] sm:$0xff]
      %v10418 = vld [vmem:[%s10377 + $0x140] sm:$0xff]
      %v10419 = vld [vmem:[%s10377 + $0x148] sm:$0xff]
      %v10420 = vld [vmem:[%s10377 + $0x150] sm:$0xff]
      %v10421 = vld [vmem:[%s10377 + $0x158] sm:$0xff]
      %v10422 = vld [vmem:[%s10377 + $0x160] sm:$0xff]
      %v10423 = vld [vmem:[%s10377 + $0x168] sm:$0xff]
      %v10424 = vld [vmem:[%s10377 + $0x170] sm:$0xff]
      %v10425 = vld [vmem:[%s10377 + $0x178] sm:$0xff]
      %v10426 = vld [vmem:[%s10377 + $0x180] sm:$0xff]
      %v10427 = vld [vmem:[%s10377 + $0x188] sm:$0xff]
      %v10428 = vld [vmem:[%s10377 + $0x190] sm:$0xff]
      %v10429 = vld [vmem:[%s10377 + $0x198] sm:$0xff]
      %v10430 = vld [vmem:[%s10377 + $0x1a0] sm:$0xff]
      %v10431 = vld [vmem:[%s10377 + $0x1a8] sm:$0xff]
      %v10432 = vld [vmem:[%s10377 + $0x1b0] sm:$0xff]
      %v10433 = vld [vmem:[%s10377 + $0x1b8] sm:$0xff]
      %v10434 = vld [vmem:[%s10377 + $0x1c0] sm:$0xff]
      %v10435 = vld [vmem:[%s10377 + $0x1c8] sm:$0xff]
      %v10436 = vld [vmem:[%s10377 + $0x1d0] sm:$0xff]
      %v10437 = vld [vmem:[%s10377 + $0x1d8] sm:$0xff]
      %v10438 = vld [vmem:[%s10377 + $0x1e0] sm:$0xff]
      %v10439 = vld [vmem:[%s10377 + $0x1e8] sm:$0xff]
      %v10440 = vld [vmem:[%s10377 + $0x1f0] sm:$0xff]
      %v10441 = vld [vmem:[%s10377 + $0x1f8] sm:$0xff]
      %v10442 = vld [vmem:[%s10377 + $0x200] sm:$0xff]
      %v10443 = vld [vmem:[%s10377 + $0x208] sm:$0xff]
      %v10444 = vld [vmem:[%s10377 + $0x210] sm:$0xff]
      %v10445 = vld [vmem:[%s10377 + $0x218] sm:$0xff]
      %v10446 = vld [vmem:[%s10377 + $0x220] sm:$0xff]
      %v10447 = vld [vmem:[%s10377 + $0x228] sm:$0xff]
      %v10448 = vld [vmem:[%s10377 + $0x230] sm:$0xff]
      %v10449 = vld [vmem:[%s10377 + $0x238] sm:$0xff]
      %v10450 = vld [vmem:[%s10377 + $0x240] sm:$0xff]
      %v10451 = vld [vmem:[%s10377 + $0x248] sm:$0xff]
      %v10452 = vld [vmem:[%s10377 + $0x250] sm:$0xff]
      %v10453 = vld [vmem:[%s10377 + $0x258] sm:$0xff]
      %v10454 = vld [vmem:[%s10377 + $0x260] sm:$0xff]
      %v10455 = vld [vmem:[%s10377 + $0x268] sm:$0xff]
      %v10456 = vld [vmem:[%s10377 + $0x270] sm:$0xff]
      %v10457 = vld [vmem:[%s10377 + $0x278] sm:$0xff]
      %v10458 = vld [vmem:[%s10377 + $0x280] sm:$0xff]
      %v10459 = vld [vmem:[%s10377 + $0x288] sm:$0xff]
      %v10460 = vld [vmem:[%s10377 + $0x290] sm:$0xff]
      %v10461 = vld [vmem:[%s10377 + $0x298] sm:$0xff]
      %v10462 = vld [vmem:[%s10377 + $0x2a0] sm:$0xff]
      %v10463 = vld [vmem:[%s10377 + $0x2a8] sm:$0xff]
      %v10464 = vld [vmem:[%s10377 + $0x2b0] sm:$0xff]
      %v10465 = vld [vmem:[%s10377 + $0x2b8] sm:$0xff]
      %v10466 = vld [vmem:[%s10377 + $0x2c0] sm:$0xff]
      %v10467 = vld [vmem:[%s10377 + $0x2c8] sm:$0xff]
      %v10468 = vld [vmem:[%s10377 + $0x2d0] sm:$0xff]
      %v10469 = vld [vmem:[%s10377 + $0x2d8] sm:$0xff]
      %v10470 = vld [vmem:[%s10377 + $0x2e0] sm:$0xff]
      %v10471 = vld [vmem:[%s10377 + $0x2e8] sm:$0xff]
      %v10472 = vld [vmem:[%s10377 + $0x2f0] sm:$0xff]
      %v10473 = vld [vmem:[%s10377 + $0x2f8] sm:$0xff]
      %v10486 = vrot.slane %v10365, 2
      %v10487 = vrot.slane %v8957, 2
      %v10488 = vsel %vm3741, %v10486, %v10487
      %v10489 = vrot.slane %v10366, 2
      %v10490 = vrot.slane %v8958, 2
      %v10491 = vsel %vm3741, %v10489, %v10490
      %v10492 = vrot.slane %v10367, 2
      %v10493 = vrot.slane %v8959, 2
      %v10494 = vsel %vm3741, %v10492, %v10493
      %v10495 = vrot.slane %v10368, 2
      %v10496 = vrot.slane %v8960, 2
      %v10497 = vsel %vm3741, %v10495, %v10496
      %v10498 = vrot.slane %v10369, 2
      %v10499 = vrot.slane %v8961, 2
      %v10500 = vsel %vm3741, %v10498, %v10499
      %v10501 = vrot.slane %v10370, 2
      %v10502 = vrot.slane %v8962, 2
      %v10503 = vsel %vm3741, %v10501, %v10502
      %v10504 = vrot.slane %v8963, 2
      %v10505 = vsel %vm3741, %v10487, %v10504
      %v10506 = vrot.slane %v8964, 2
      %v10507 = vsel %vm3741, %v10490, %v10506
      %v10508 = vrot.slane %v8965, 2
      %v10509 = vsel %vm3741, %v10493, %v10508
      %v10510 = vrot.slane %v8966, 2
      %v10511 = vsel %vm3741, %v10496, %v10510
      %v10512 = vrot.slane %v8967, 2
      %v10513 = vsel %vm3741, %v10499, %v10512
      %v10514 = vrot.slane %v8968, 2
      %v10515 = vsel %vm3741, %v10502, %v10514
      %v10516 = vrot.slane %v8969, 2
      %v10517 = vsel %vm3741, %v10504, %v10516
      %v10518 = vrot.slane %v8970, 2
      %v10519 = vsel %vm3741, %v10506, %v10518
      %v10520 = vrot.slane %v8971, 2
      %v10521 = vsel %vm3741, %v10508, %v10520
      %v10522 = vrot.slane %v8972, 2
      %v10523 = vsel %vm3741, %v10510, %v10522
      %v10524 = vrot.slane %v8973, 2
      %v10525 = vsel %vm3741, %v10512, %v10524
      %v10526 = vrot.slane %v8974, 2
      %v10527 = vsel %vm3741, %v10514, %v10526
      %v10528 = vrot.slane %v8975, 2
      %v10529 = vsel %vm3741, %v10516, %v10528
      %v10530 = vrot.slane %v8976, 2
      %v10531 = vsel %vm3741, %v10518, %v10530
      %v10532 = vrot.slane %v8977, 2
      %v10533 = vsel %vm3741, %v10520, %v10532
      %v10534 = vrot.slane %v8978, 2
      %v10535 = vsel %vm3741, %v10522, %v10534
      %v10536 = vrot.slane %v8979, 2
      %v10537 = vsel %vm3741, %v10524, %v10536
      %v10538 = vrot.slane %v8980, 2
      %v10539 = vsel %vm3741, %v10526, %v10538
      %v10540 = vrot.slane %v8981, 2
      %v10541 = vsel %vm3741, %v10528, %v10540
      %v10542 = vrot.slane %v8982, 2
      %v10543 = vsel %vm3741, %v10530, %v10542
      %v10544 = vrot.slane %v8983, 2
      %v10545 = vsel %vm3741, %v10532, %v10544
      %v10546 = vrot.slane %v8984, 2
      %v10547 = vsel %vm3741, %v10534, %v10546
      %v10548 = vrot.slane %v8985, 2
      %v10549 = vsel %vm3741, %v10536, %v10548
      %v10550 = vrot.slane %v8986, 2
      %v10551 = vsel %vm3741, %v10538, %v10550
      %v10552 = vrot.slane %v8987, 2
      %v10553 = vsel %vm3741, %v10540, %v10552
      %v10554 = vrot.slane %v8988, 2
      %v10555 = vsel %vm3741, %v10542, %v10554
      %v10556 = vrot.slane %v8989, 2
      %v10557 = vsel %vm3741, %v10544, %v10556
      %v10558 = vrot.slane %v8990, 2
      %v10559 = vsel %vm3741, %v10546, %v10558
      %v10560 = vrot.slane %v8991, 2
      %v10561 = vsel %vm3741, %v10548, %v10560
      %v10562 = vrot.slane %v8992, 2
      %v10563 = vsel %vm3741, %v10550, %v10562
      %v10564 = vrot.slane %v8993, 2
      %v10565 = vsel %vm3741, %v10552, %v10564
      %v10566 = vrot.slane %v8994, 2
      %v10567 = vsel %vm3741, %v10554, %v10566
      %v10568 = vrot.slane %v8995, 2
      %v10569 = vsel %vm3741, %v10556, %v10568
      %v10570 = vrot.slane %v8996, 2
      %v10571 = vsel %vm3741, %v10558, %v10570
      %v10572 = vrot.slane %v8997, 2
      %v10573 = vsel %vm3741, %v10560, %v10572
      %v10574 = vrot.slane %v8998, 2
      %v10575 = vsel %vm3741, %v10562, %v10574
      %v10576 = vrot.slane %v8999, 2
      %v10577 = vsel %vm3741, %v10564, %v10576
      %v10578 = vrot.slane %v9000, 2
      %v10579 = vsel %vm3741, %v10566, %v10578
      %v10580 = vrot.slane %v9001, 2
      %v10581 = vsel %vm3741, %v10568, %v10580
      %v10582 = vrot.slane %v9002, 2
      %v10583 = vsel %vm3741, %v10570, %v10582
      %v10584 = vrot.slane %v9003, 2
      %v10585 = vsel %vm3741, %v10572, %v10584
      %v10586 = vrot.slane %v9004, 2
      %v10587 = vsel %vm3741, %v10574, %v10586
      %v10588 = vrot.slane %v9005, 2
      %v10589 = vsel %vm3741, %v10576, %v10588
      %v10590 = vrot.slane %v9006, 2
      %v10591 = vsel %vm3741, %v10578, %v10590
      %v10592 = vrot.slane %v9007, 2
      %v10593 = vsel %vm3741, %v10580, %v10592
      %v10594 = vrot.slane %v9008, 2
      %v10595 = vsel %vm3741, %v10582, %v10594
      %v10596 = vrot.slane %v9009, 2
      %v10597 = vsel %vm3741, %v10584, %v10596
      %v10598 = vrot.slane %v9010, 2
      %v10599 = vsel %vm3741, %v10586, %v10598
      %v10600 = vrot.slane %v9011, 2
      %v10601 = vsel %vm3741, %v10588, %v10600
      %v10602 = vrot.slane %v9012, 2
      %v10603 = vsel %vm3741, %v10590, %v10602
      %v10604 = vrot.slane %v9013, 2
      %v10605 = vsel %vm3741, %v10592, %v10604
      %v10606 = vrot.slane %v9014, 2
      %v10607 = vsel %vm3741, %v10594, %v10606
      %v10608 = vrot.slane %v9015, 2
      %v10609 = vsel %vm3741, %v10596, %v10608
      %v10610 = vrot.slane %v9016, 2
      %v10611 = vsel %vm3741, %v10598, %v10610
      %v10612 = vrot.slane %v9017, 2
      %v10613 = vsel %vm3741, %v10600, %v10612
      %v10614 = vrot.slane %v9018, 2
      %v10615 = vsel %vm3741, %v10602, %v10614
      %v10616 = vrot.slane %v9019, 2
      %v10617 = vsel %vm3741, %v10604, %v10616
      %v10618 = vrot.slane %v9020, 2
      %v10619 = vsel %vm3741, %v10606, %v10618
      %v10620 = vrot.slane %v9021, 2
      %v10621 = vsel %vm3741, %v10608, %v10620
      %v10622 = vrot.slane %v9022, 2
      %v10623 = vsel %vm3741, %v10610, %v10622
      %v10624 = vrot.slane %v9023, 2
      %v10625 = vsel %vm3741, %v10612, %v10624
      %v10626 = vrot.slane %v9024, 2
      %v10627 = vsel %vm3741, %v10614, %v10626
      %v10628 = vrot.slane %v9025, 2
      %v10629 = vsel %vm3741, %v10616, %v10628
      %v10630 = vrot.slane %v9026, 2
      %v10631 = vsel %vm3741, %v10618, %v10630
      %v10632 = vrot.slane %v9027, 2
      %v10633 = vsel %vm3741, %v10620, %v10632
      %v10634 = vrot.slane %v9028, 2
      %v10635 = vsel %vm3741, %v10622, %v10634
      %v10636 = vrot.slane %v9029, 2
      %v10637 = vsel %vm3741, %v10624, %v10636
      %v10638 = vrot.slane %v9030, 2
      %v10639 = vsel %vm3741, %v10626, %v10638
      %v10640 = vrot.slane %v9031, 2
      %v10641 = vsel %vm3741, %v10628, %v10640
      %v10642 = vrot.slane %v9032, 2
      %v10643 = vsel %vm3741, %v10630, %v10642
      %v10644 = vrot.slane %v9033, 2
      %v10645 = vsel %vm3741, %v10632, %v10644
      %v10646 = vrot.slane %v9034, 2
      %v10647 = vsel %vm3741, %v10634, %v10646
      %v10648 = vrot.slane %v9035, 2
      %v10649 = vsel %vm3741, %v10636, %v10648
      %v10650 = vrot.slane %v9036, 2
      %v10651 = vsel %vm3741, %v10638, %v10650
      %v10652 = vrot.slane %v9037, 2
      %v10653 = vsel %vm3741, %v10640, %v10652
      %v10654 = vrot.slane %v9038, 2
      %v10655 = vsel %vm3741, %v10642, %v10654
      %v10656 = vrot.slane %v9039, 2
      %v10657 = vsel %vm3741, %v10644, %v10656
      %v10658 = vrot.slane %v9040, 2
      %v10659 = vsel %vm3741, %v10646, %v10658
      %v10660 = vrot.slane %v9041, 2
      %v10661 = vsel %vm3741, %v10648, %v10660
      %v10662 = vrot.slane %v9042, 2
      %v10663 = vsel %vm3741, %v10650, %v10662
      %v10664 = vrot.slane %v9043, 2
      %v10665 = vsel %vm3741, %v10652, %v10664
      %v10666 = vrot.slane %v9044, 2
      %v10667 = vsel %vm3741, %v10654, %v10666
      %v10668 = vrot.slane %v9045, 2
      %v10669 = vsel %vm3741, %v10656, %v10668
      %v10670 = vrot.slane %v9046, 2
      %v10671 = vsel %vm3741, %v10658, %v10670
      %v10672 = vrot.slane %v9047, 2
      %v10673 = vsel %vm3741, %v10660, %v10672
      %v10674 = vrot.slane %v9048, 2
      %v10675 = vsel %vm3741, %v10662, %v10674
      %v10676 = vrot.slane %v9049, 2
      %v10677 = vsel %vm3741, %v10664, %v10676
      %v10678 = vrot.slane %v9050, 2
      %v10679 = vsel %vm3741, %v10666, %v10678
      %v10680 = vrot.slane %v9051, 2
      %v10681 = vsel %vm3741, %v10668, %v10680
      %v10682 = vrot.slane %v9052, 2
      %v10683 = vsel %vm3741, %v10670, %v10682
      %v10684 = vrot.slane %v9053, 2
      %v10685 = vsel %vm3741, %v10672, %v10684
      %v10686 = vrot.slane %v9054, 2
      %v10687 = vsel %vm3741, %v10674, %v10686
      %v10688 = vrot.slane %v9055, 2
      %v10689 = vsel %vm3741, %v10676, %v10688
      %v10690 = vrot.slane %v9056, 2
      %v10691 = vsel %vm3741, %v10678, %v10690
      %v10692 = vrot.slane %v9057, 2
      %v10693 = vsel %vm3741, %v10680, %v10692
      %v10694 = vrot.slane %v9058, 2
      %v10695 = vsel %vm3741, %v10682, %v10694
      %v10696 = vrot.slane %v9059, 2
      %v10697 = vsel %vm3741, %v10684, %v10696
      %v10698 = vrot.slane %v9060, 2
      %v10699 = vsel %vm3741, %v10686, %v10698
      %v10700 = vrot.slane %v9061, 2
      %v10701 = vsel %vm3741, %v10688, %v10700
      %v10702 = vrot.slane %v9062, 2
      %v10703 = vsel %vm3741, %v10690, %v10702
      %v10704 = vrot.slane %v9063, 2
      %v10705 = vsel %vm3741, %v10692, %v10704
      %v10706 = vrot.slane %v9064, 2
      %v10707 = vsel %vm3741, %v10694, %v10706
      %v10708 = vrot.slane %v9065, 2
      %v10709 = vsel %vm3741, %v10696, %v10708
      %v10710 = vrot.slane %v9066, 2
      %v10711 = vsel %vm3741, %v10698, %v10710
      %v10712 = vrot.slane %v9067, 2
      %v10713 = vsel %vm3741, %v10700, %v10712
      %v10714 = vrot.slane %v9068, 2
      %v10715 = vsel %vm3741, %v10702, %v10714
      %v10716 = vrot.slane %v9069, 2
      %v10717 = vsel %vm3741, %v10704, %v10716
      %v10718 = vrot.slane %v9070, 2
      %v10719 = vsel %vm3741, %v10706, %v10718
      %v10720 = vrot.slane %v9071, 2
      %v10721 = vsel %vm3741, %v10708, %v10720
      %v10722 = vrot.slane %v9072, 2
      %v10723 = vsel %vm3741, %v10710, %v10722
      %v10724 = vrot.slane %v9073, 2
      %v10725 = vsel %vm3741, %v10712, %v10724
      %v10726 = vrot.slane %v9074, 2
      %v10727 = vsel %vm3741, %v10714, %v10726
      %v10728 = vrot.slane %v9075, 2
      %v10729 = vsel %vm3741, %v10716, %v10728
      %v10730 = vrot.slane %v9076, 2
      %v10731 = vsel %vm3741, %v10718, %v10730
      %v10732 = vrot.slane %v9077, 2
      %v10733 = vsel %vm3741, %v10720, %v10732
      %v10734 = vrot.slane %v9078, 2
      %v10735 = vsel %vm3741, %v10722, %v10734
      %v10736 = vrot.slane %v9079, 2
      %v10737 = vsel %vm3741, %v10724, %v10736
      %v10738 = vrot.slane %v9080, 2
      %v10739 = vsel %vm3741, %v10726, %v10738
      %v10740 = vrot.slane %v9081, 2
      %v10741 = vsel %vm3741, %v10728, %v10740
      %v10742 = vrot.slane %v9082, 2
      %v10743 = vsel %vm3741, %v10730, %v10742
      %v10744 = vrot.slane %v9083, 2
      %v10745 = vsel %vm3741, %v10732, %v10744
      %v10746 = vrot.slane %v9084, 2
      %v10747 = vsel %vm3741, %v10734, %v10746
      %v10748 = vrot.slane %v9085, 2
      %v10749 = vsel %vm3741, %v10736, %v10748
      %v10750 = vrot.slane %v9086, 2
      %v10751 = vsel %vm3741, %v10738, %v10750
      %v10752 = vrot.slane %v9087, 2
      %v10753 = vsel %vm3741, %v10740, %v10752
      %v10754 = vrot.slane %v9088, 2
      %v10755 = vsel %vm3741, %v10742, %v10754
      %v10756 = vrot.slane %v9089, 2
      %v10757 = vsel %vm3741, %v10744, %v10756
      %v10758 = vrot.slane %v9090, 2
      %v10759 = vsel %vm3741, %v10746, %v10758
      %v10760 = vrot.slane %v9091, 2
      %v10761 = vsel %vm3741, %v10748, %v10760
      %v10762 = vrot.slane %v9092, 2
      %v10763 = vsel %vm3741, %v10750, %v10762
      %v10764 = vrot.slane %v9093, 2
      %v10765 = vsel %vm3741, %v10752, %v10764
      %v10766 = vrot.slane %v9094, 2
      %v10767 = vsel %vm3741, %v10754, %v10766
      %v10768 = vrot.slane %v10371, 2
      %v10769 = vsel %vm3741, %v10756, %v10768
      %v10770 = vrot.slane %v10372, 2
      %v10771 = vsel %vm3741, %v10758, %v10770
      %v10772 = vrot.slane %v10373, 2
      %v10773 = vsel %vm3741, %v10760, %v10772
      %v10774 = vrot.slane %v10374, 2
      %v10775 = vsel %vm3741, %v10762, %v10774
      %v10776 = vrot.slane %v10375, 2
      %v10777 = vsel %vm3741, %v10764, %v10776
      %v10778 = vrot.slane %v10376, 2
      %v10779 = vsel %vm3741, %v10766, %v10778
      %10924 = vmatprep.subr.mxu0 0.0
      %10925 = vmatpush1.msra.mxu0 %v10393
      %10926 = vmatprep.subr.mxu0 0.0
      %10927 = vmatpush1.msra.mxu0 %v10392
      %10928 = vmatprep.subr.mxu0 0.0
      %10929 = vmatpush1.msra.mxu0 %v10391
      %10930 = vmatprep.subr.mxu0 0.0
      %10931 = vmatpush1.msra.mxu0 %v10390
      %10932 = vmatprep.subr.mxu0 0.0
      %10933 = vmatpush1.msra.mxu0 %v10389
      %10934 = vmatprep.subr.mxu0 0.0
      %10935 = vmatpush1.msra.mxu0 %v10388
      %10936 = vmatprep.subr.mxu0 0.0
      %10937 = vmatpush1.msra.mxu0 %v10387
      %10938 = vmatprep.subr.mxu0 0.0
      %10939 = vmatpush1.msra.mxu0 %v10386
      %10940 = vmatprep.subr.mxu0 0.0
      %10941 = vmatpush1.msra.mxu0 %v10385
      %10942 = vmatprep.subr.mxu0 0.0
      %10943 = vmatpush1.msra.mxu0 %v10384
      %10944 = vmatprep.subr.mxu0 0.0
      %10945 = vmatpush1.msra.mxu0 %v10383
      %10946 = vmatprep.subr.mxu0 0.0
      %10947 = vmatpush1.msra.mxu0 %v10382
      %10948 = vmatprep.subr.mxu0 0.0
      %10949 = vmatpush1.msra.mxu0 %v10381
      %10950 = vmatprep.subr.mxu0 0.0
      %10951 = vmatpush1.msra.mxu0 %v10380
      %10952 = vmatprep.subr.mxu0 0.0
      %10953 = vmatpush1.msra.mxu0 %v10379
      %10954 = vmatprep.subr.mxu0 0.0
      %10955 = vmatpush1.msra.mxu0 %v10378
      %10956 = vmatprep.subr.mxu0 0.0
      %10957 = vmatpush2.msra.mxu0 %v10409
      %10958 = vmatprep.subr.mxu0 0.0
      %10959 = vmatpush2.msra.mxu0 %v10408
      %10960 = vmatprep.subr.mxu0 0.0
      %10961 = vmatpush2.msra.mxu0 %v10407
      %10962 = vmatprep.subr.mxu0 0.0
      %10963 = vmatpush2.msra.mxu0 %v10406
      %10964 = vmatprep.subr.mxu0 0.0
      %10965 = vmatpush2.msra.mxu0 %v10405
      %10966 = vmatprep.subr.mxu0 0.0
      %10967 = vmatpush2.msra.mxu0 %v10404
      %10968 = vmatprep.subr.mxu0 0.0
      %10969 = vmatpush2.msra.mxu0 %v10403
      %10970 = vmatprep.subr.mxu0 0.0
      %10971 = vmatpush2.msra.mxu0 %v10402
      %10972 = vmatprep.subr.mxu0 0.0
      %10973 = vmatpush2.msra.mxu0 %v10401
      %10974 = vmatprep.subr.mxu0 0.0
      %10975 = vmatpush2.msra.mxu0 %v10400
      %10976 = vmatprep.subr.mxu0 0.0
      %10977 = vmatpush2.msra.mxu0 %v10399
      %10978 = vmatprep.subr.mxu0 0.0
      %10979 = vmatpush2.msra.mxu0 %v10398
      %10980 = vmatprep.subr.mxu0 0.0
      %10981 = vmatpush2.msra.mxu0 %v10397
      %10982 = vmatprep.subr.mxu0 0.0
      %10983 = vmatpush2.msra.mxu0 %v10396
      %10984 = vmatprep.subr.mxu0 0.0
      %10985 = vmatpush2.msra.mxu0 %v10395
      %10986 = vmatprep.subr.mxu0 0.0
      %10987 = vmatpush2.msra.mxu0 %v10394
      %10988 = vmatprep.mubr.f32.mxu0 %v10491
      %10989 = vmatmul.mubr.f32.gmra.mxu0 %v10488
      %v10990 = vpop.f32.mrf.mxu0
      %v10991 = vadd.f32 0.0, %v10990
      %v10992 = vpop.f32.mrf.mxu0
      %10993 = vmatprep.mubr.f32.mxu0 %v10507
      %10994 = vmatmul.mubr.f32.gmra.mxu0 %v10505
      %v10995 = vpop.f32.mrf.mxu0
      %v10996 = vadd.f32 0.0, %v10995
      %v10997 = vpop.f32.mrf.mxu0
      %10998 = vmatprep.mubr.f32.mxu0 %v10519
      %10999 = vmatmul.mubr.f32.gmra.mxu0 %v10517
      %v11000 = vpop.f32.mrf.mxu0
      %v11001 = vadd.f32 0.0, %v11000
      %v11002 = vpop.f32.mrf.mxu0
      %11003 = vmatprep.mubr.f32.mxu0 %v10531
      %11004 = vmatmul.mubr.f32.gmra.mxu0 %v10529
      %v11005 = vpop.f32.mrf.mxu0
      %v11006 = vadd.f32 0.0, %v11005
      %v11007 = vpop.f32.mrf.mxu0
      %11008 = vmatprep.mubr.f32.mxu0 %v10543
      %11009 = vmatmul.mubr.f32.gmra.mxu0 %v10541
      %v11010 = vpop.f32.mrf.mxu0
      %v11011 = vadd.f32 0.0, %v11010
      %v11012 = vpop.f32.mrf.mxu0
      %11013 = vmatprep.mubr.f32.mxu0 %v10555
      %11014 = vmatmul.mubr.f32.gmra.mxu0 %v10553
      %v11015 = vpop.f32.mrf.mxu0
      %v11016 = vadd.f32 0.0, %v11015
      %v11017 = vpop.f32.mrf.mxu0
      %11018 = vmatprep.mubr.f32.mxu0 %v10567
      %11019 = vmatmul.mubr.f32.gmra.mxu0 %v10565
      %v11020 = vpop.f32.mrf.mxu0
      %v11021 = vadd.f32 0.0, %v11020
      %v11022 = vpop.f32.mrf.mxu0
      %11023 = vmatprep.mubr.f32.mxu0 %v10579
      %11024 = vmatmul.mubr.f32.gmra.mxu0 %v10577
      %v11025 = vpop.f32.mrf.mxu0
      %v11026 = vadd.f32 0.0, %v11025
      %v11027 = vpop.f32.mrf.mxu0
      %11028 = vmatprep.mubr.f32.mxu0 %v10591
      %11029 = vmatmul.mubr.f32.gmra.mxu0 %v10589
      %v11030 = vpop.f32.mrf.mxu0
      %v11031 = vadd.f32 0.0, %v11030
      %v11032 = vpop.f32.mrf.mxu0
      %11033 = vmatprep.mubr.f32.mxu0 %v10603
      %11034 = vmatmul.mubr.f32.gmra.mxu0 %v10601
      %v11035 = vpop.f32.mrf.mxu0
      %v11036 = vadd.f32 0.0, %v11035
      %v11037 = vpop.f32.mrf.mxu0
      %11038 = vmatprep.mubr.f32.mxu0 %v10615
      %11039 = vmatmul.mubr.f32.gmra.mxu0 %v10613
      %v11040 = vpop.f32.mrf.mxu0
      %v11041 = vadd.f32 0.0, %v11040
      %v11042 = vpop.f32.mrf.mxu0
      %11043 = vmatprep.mubr.f32.mxu0 %v10627
      %11044 = vmatmul.mubr.f32.gmra.mxu0 %v10625
      %v11045 = vpop.f32.mrf.mxu0
      %v11046 = vadd.f32 0.0, %v11045
      %v11047 = vpop.f32.mrf.mxu0
      %11048 = vmatprep.mubr.f32.mxu0 %v10639
      %11049 = vmatmul.mubr.f32.gmra.mxu0 %v10637
      %v11050 = vpop.f32.mrf.mxu0
      %v11051 = vadd.f32 0.0, %v11050
      %v11052 = vpop.f32.mrf.mxu0
      %11053 = vmatprep.mubr.f32.mxu0 %v10651
      %11054 = vmatmul.mubr.f32.gmra.mxu0 %v10649
      %v11055 = vpop.f32.mrf.mxu0
      %v11056 = vadd.f32 0.0, %v11055
      %v11057 = vpop.f32.mrf.mxu0
      %11058 = vmatprep.mubr.f32.mxu0 %v10663
      %11059 = vmatmul.mubr.f32.gmra.mxu0 %v10661
      %v11060 = vpop.f32.mrf.mxu0
      %v11061 = vadd.f32 0.0, %v11060
      %v11062 = vpop.f32.mrf.mxu0
      %11063 = vmatprep.mubr.f32.mxu0 %v10675
      %11064 = vmatmul.mubr.f32.gmra.mxu0 %v10673
      %v11065 = vpop.f32.mrf.mxu0
      %v11066 = vadd.f32 0.0, %v11065
      %v11067 = vpop.f32.mrf.mxu0
      %11068 = vmatprep.mubr.f32.mxu0 %v10687
      %11069 = vmatmul.mubr.f32.gmra.mxu0 %v10685
      %v11070 = vpop.f32.mrf.mxu0
      %v11071 = vadd.f32 0.0, %v11070
      %v11072 = vpop.f32.mrf.mxu0
      %11073 = vmatprep.mubr.f32.mxu0 %v10699
      %11074 = vmatmul.mubr.f32.gmra.mxu0 %v10697
      %v11075 = vpop.f32.mrf.mxu0
      %v11076 = vadd.f32 0.0, %v11075
      %v11077 = vpop.f32.mrf.mxu0
      %11078 = vmatprep.mubr.f32.mxu0 %v10711
      %11079 = vmatmul.mubr.f32.gmra.mxu0 %v10709
      %v11080 = vpop.f32.mrf.mxu0
      %v11081 = vadd.f32 0.0, %v11080
      %v11082 = vpop.f32.mrf.mxu0
      %11083 = vmatprep.mubr.f32.mxu0 %v10723
      %11084 = vmatmul.mubr.f32.gmra.mxu0 %v10721
      %v11085 = vpop.f32.mrf.mxu0
      %v11086 = vadd.f32 0.0, %v11085
      %v11087 = vpop.f32.mrf.mxu0
      %11088 = vmatprep.mubr.f32.mxu0 %v10735
      %11089 = vmatmul.mubr.f32.gmra.mxu0 %v10733
      %v11090 = vpop.f32.mrf.mxu0
      %v11091 = vadd.f32 0.0, %v11090
      %v11092 = vpop.f32.mrf.mxu0
      %11093 = vmatprep.mubr.f32.mxu0 %v10747
      %11094 = vmatmul.mubr.f32.gmra.mxu0 %v10745
      %v11095 = vpop.f32.mrf.mxu0
      %v11096 = vadd.f32 0.0, %v11095
      %v11097 = vpop.f32.mrf.mxu0
      %11098 = vmatprep.mubr.f32.mxu0 %v10759
      %11099 = vmatmul.mubr.f32.gmra.mxu0 %v10757
      %v11100 = vpop.f32.mrf.mxu0
      %v11101 = vadd.f32 0.0, %v11100
      %v11102 = vpop.f32.mrf.mxu0
      %11103 = vmatprep.mubr.f32.mxu0 %v10771
      %11104 = vmatmul.mubr.f32.gmra.mxu0 %v10769
      %v11105 = vpop.f32.mrf.mxu0
      %v11106 = vadd.f32 0.0, %v11105
      %v11107 = vpop.f32.mrf.mxu0
      %11108 = vdwg.mxu0
      %11109 = vmatprep.subr.mxu0 0.0
      %11110 = vmatpush1.msra.mxu0 %v10425
      %11111 = vmatprep.subr.mxu0 0.0
      %11112 = vmatpush1.msra.mxu0 %v10424
      %11113 = vmatprep.subr.mxu0 0.0
      %11114 = vmatpush1.msra.mxu0 %v10423
      %11115 = vmatprep.subr.mxu0 0.0
      %11116 = vmatpush1.msra.mxu0 %v10422
      %11117 = vmatprep.subr.mxu0 0.0
      %11118 = vmatpush1.msra.mxu0 %v10421
      %11119 = vmatprep.subr.mxu0 0.0
      %11120 = vmatpush1.msra.mxu0 %v10420
      %11121 = vmatprep.subr.mxu0 0.0
      %11122 = vmatpush1.msra.mxu0 %v10419
      %11123 = vmatprep.subr.mxu0 0.0
      %11124 = vmatpush1.msra.mxu0 %v10418
      %11125 = vmatprep.subr.mxu0 0.0
      %11126 = vmatpush1.msra.mxu0 %v10417
      %11127 = vmatprep.subr.mxu0 0.0
      %11128 = vmatpush1.msra.mxu0 %v10416
      %11129 = vmatprep.subr.mxu0 0.0
      %11130 = vmatpush1.msra.mxu0 %v10415
      %11131 = vmatprep.subr.mxu0 0.0
      %11132 = vmatpush1.msra.mxu0 %v10414
      %11133 = vmatprep.subr.mxu0 0.0
      %11134 = vmatpush1.msra.mxu0 %v10413
      %11135 = vmatprep.subr.mxu0 0.0
      %11136 = vmatpush1.msra.mxu0 %v10412
      %11137 = vmatprep.subr.mxu0 0.0
      %11138 = vmatpush1.msra.mxu0 %v10411
      %11139 = vmatprep.subr.mxu0 0.0
      %11140 = vmatpush1.msra.mxu0 %v10410
      %11141 = vmatprep.subr.mxu0 0.0
      %11142 = vmatpush2.msra.mxu0 %v10441
      %11143 = vmatprep.subr.mxu0 0.0
      %11144 = vmatpush2.msra.mxu0 %v10440
      %11145 = vmatprep.subr.mxu0 0.0
      %11146 = vmatpush2.msra.mxu0 %v10439
      %11147 = vmatprep.subr.mxu0 0.0
      %11148 = vmatpush2.msra.mxu0 %v10438
      %11149 = vmatprep.subr.mxu0 0.0
      %11150 = vmatpush2.msra.mxu0 %v10437
      %11151 = vmatprep.subr.mxu0 0.0
      %11152 = vmatpush2.msra.mxu0 %v10436
      %11153 = vmatprep.subr.mxu0 0.0
      %11154 = vmatpush2.msra.mxu0 %v10435
      %11155 = vmatprep.subr.mxu0 0.0
      %11156 = vmatpush2.msra.mxu0 %v10434
      %11157 = vmatprep.subr.mxu0 0.0
      %11158 = vmatpush2.msra.mxu0 %v10433
      %11159 = vmatprep.subr.mxu0 0.0
      %11160 = vmatpush2.msra.mxu0 %v10432
      %11161 = vmatprep.subr.mxu0 0.0
      %11162 = vmatpush2.msra.mxu0 %v10431
      %11163 = vmatprep.subr.mxu0 0.0
      %11164 = vmatpush2.msra.mxu0 %v10430
      %11165 = vmatprep.subr.mxu0 0.0
      %11166 = vmatpush2.msra.mxu0 %v10429
      %11167 = vmatprep.subr.mxu0 0.0
      %11168 = vmatpush2.msra.mxu0 %v10428
      %11169 = vmatprep.subr.mxu0 0.0
      %11170 = vmatpush2.msra.mxu0 %v10427
      %11171 = vmatprep.subr.mxu0 0.0
      %11172 = vmatpush2.msra.mxu0 %v10426
      %11173 = vmatprep.mubr.f32.mxu0 %v10497
      %11174 = vmatmul.mubr.f32.gmra.mxu0 %v10494
      %v11175 = vpop.f32.mrf.mxu0
      %v11176 = vadd.f32 %v10991, %v11175
      %v11177 = vpop.f32.mrf.mxu0
      %11178 = vmatprep.mubr.f32.mxu0 %v10511
      %11179 = vmatmul.mubr.f32.gmra.mxu0 %v10509
      %v11180 = vpop.f32.mrf.mxu0
      %v11181 = vadd.f32 %v10996, %v11180
      %v11182 = vpop.f32.mrf.mxu0
      %11183 = vmatprep.mubr.f32.mxu0 %v10523
      %11184 = vmatmul.mubr.f32.gmra.mxu0 %v10521
      %v11185 = vpop.f32.mrf.mxu0
      %v11186 = vadd.f32 %v11001, %v11185
      %v11187 = vpop.f32.mrf.mxu0
      %11188 = vmatprep.mubr.f32.mxu0 %v10535
      %11189 = vmatmul.mubr.f32.gmra.mxu0 %v10533
      %v11190 = vpop.f32.mrf.mxu0
      %v11191 = vadd.f32 %v11006, %v11190
      %v11192 = vpop.f32.mrf.mxu0
      %11193 = vmatprep.mubr.f32.mxu0 %v10547
      %11194 = vmatmul.mubr.f32.gmra.mxu0 %v10545
      %v11195 = vpop.f32.mrf.mxu0
      %v11196 = vadd.f32 %v11011, %v11195
      %v11197 = vpop.f32.mrf.mxu0
      %11198 = vmatprep.mubr.f32.mxu0 %v10559
      %11199 = vmatmul.mubr.f32.gmra.mxu0 %v10557
      %v11200 = vpop.f32.mrf.mxu0
      %v11201 = vadd.f32 %v11016, %v11200
      %v11202 = vpop.f32.mrf.mxu0
      %11203 = vmatprep.mubr.f32.mxu0 %v10571
      %11204 = vmatmul.mubr.f32.gmra.mxu0 %v10569
      %v11205 = vpop.f32.mrf.mxu0
      %v11206 = vadd.f32 %v11021, %v11205
      %v11207 = vpop.f32.mrf.mxu0
      %11208 = vmatprep.mubr.f32.mxu0 %v10583
      %11209 = vmatmul.mubr.f32.gmra.mxu0 %v10581
      %v11210 = vpop.f32.mrf.mxu0
      %v11211 = vadd.f32 %v11026, %v11210
      %v11212 = vpop.f32.mrf.mxu0
      %11213 = vmatprep.mubr.f32.mxu0 %v10595
      %11214 = vmatmul.mubr.f32.gmra.mxu0 %v10593
      %v11215 = vpop.f32.mrf.mxu0
      %v11216 = vadd.f32 %v11031, %v11215
      %v11217 = vpop.f32.mrf.mxu0
      %11218 = vmatprep.mubr.f32.mxu0 %v10607
      %11219 = vmatmul.mubr.f32.gmra.mxu0 %v10605
      %v11220 = vpop.f32.mrf.mxu0
      %v11221 = vadd.f32 %v11036, %v11220
      %v11222 = vpop.f32.mrf.mxu0
      %11223 = vmatprep.mubr.f32.mxu0 %v10619
      %11224 = vmatmul.mubr.f32.gmra.mxu0 %v10617
      %v11225 = vpop.f32.mrf.mxu0
      %v11226 = vadd.f32 %v11041, %v11225
      %v11227 = vpop.f32.mrf.mxu0
      %11228 = vmatprep.mubr.f32.mxu0 %v10631
      %11229 = vmatmul.mubr.f32.gmra.mxu0 %v10629
      %v11230 = vpop.f32.mrf.mxu0
      %v11231 = vadd.f32 %v11046, %v11230
      %v11232 = vpop.f32.mrf.mxu0
      %11233 = vmatprep.mubr.f32.mxu0 %v10643
      %11234 = vmatmul.mubr.f32.gmra.mxu0 %v10641
      %v11235 = vpop.f32.mrf.mxu0
      %v11236 = vadd.f32 %v11051, %v11235
      %v11237 = vpop.f32.mrf.mxu0
      %11238 = vmatprep.mubr.f32.mxu0 %v10655
      %11239 = vmatmul.mubr.f32.gmra.mxu0 %v10653
      %v11240 = vpop.f32.mrf.mxu0
      %v11241 = vadd.f32 %v11056, %v11240
      %v11242 = vpop.f32.mrf.mxu0
      %11243 = vmatprep.mubr.f32.mxu0 %v10667
      %11244 = vmatmul.mubr.f32.gmra.mxu0 %v10665
      %v11245 = vpop.f32.mrf.mxu0
      %v11246 = vadd.f32 %v11061, %v11245
      %v11247 = vpop.f32.mrf.mxu0
      %11248 = vmatprep.mubr.f32.mxu0 %v10679
      %11249 = vmatmul.mubr.f32.gmra.mxu0 %v10677
      %v11250 = vpop.f32.mrf.mxu0
      %v11251 = vadd.f32 %v11066, %v11250
      %v11252 = vpop.f32.mrf.mxu0
      %11253 = vmatprep.mubr.f32.mxu0 %v10691
      %11254 = vmatmul.mubr.f32.gmra.mxu0 %v10689
      %v11255 = vpop.f32.mrf.mxu0
      %v11256 = vadd.f32 %v11071, %v11255
      %v11257 = vpop.f32.mrf.mxu0
      %11258 = vmatprep.mubr.f32.mxu0 %v10703
      %11259 = vmatmul.mubr.f32.gmra.mxu0 %v10701
      %v11260 = vpop.f32.mrf.mxu0
      %v11261 = vadd.f32 %v11076, %v11260
      %v11262 = vpop.f32.mrf.mxu0
      %11263 = vmatprep.mubr.f32.mxu0 %v10715
      %11264 = vmatmul.mubr.f32.gmra.mxu0 %v10713
      %v11265 = vpop.f32.mrf.mxu0
      %v11266 = vadd.f32 %v11081, %v11265
      %v11267 = vpop.f32.mrf.mxu0
      %11268 = vmatprep.mubr.f32.mxu0 %v10727
      %11269 = vmatmul.mubr.f32.gmra.mxu0 %v10725
      %v11270 = vpop.f32.mrf.mxu0
      %v11271 = vadd.f32 %v11086, %v11270
      %v11272 = vpop.f32.mrf.mxu0
      %11273 = vmatprep.mubr.f32.mxu0 %v10739
      %11274 = vmatmul.mubr.f32.gmra.mxu0 %v10737
      %v11275 = vpop.f32.mrf.mxu0
      %v11276 = vadd.f32 %v11091, %v11275
      %v11277 = vpop.f32.mrf.mxu0
      %11278 = vmatprep.mubr.f32.mxu0 %v10751
      %11279 = vmatmul.mubr.f32.gmra.mxu0 %v10749
      %v11280 = vpop.f32.mrf.mxu0
      %v11281 = vadd.f32 %v11096, %v11280
      %v11282 = vpop.f32.mrf.mxu0
      %11283 = vmatprep.mubr.f32.mxu0 %v10763
      %11284 = vmatmul.mubr.f32.gmra.mxu0 %v10761
      %v11285 = vpop.f32.mrf.mxu0
      %v11286 = vadd.f32 %v11101, %v11285
      %v11287 = vpop.f32.mrf.mxu0
      %11288 = vmatprep.mubr.f32.mxu0 %v10775
      %11289 = vmatmul.mubr.f32.gmra.mxu0 %v10773
      %v11290 = vpop.f32.mrf.mxu0
      %v11291 = vadd.f32 %v11106, %v11290
      %v11292 = vpop.f32.mrf.mxu0
      %11293 = vdwg.mxu0
      %11294 = vmatprep.subr.mxu0 0.0
      %11295 = vmatpush1.msra.mxu0 %v10457
      %11296 = vmatprep.subr.mxu0 0.0
      %11297 = vmatpush1.msra.mxu0 %v10456
      %11298 = vmatprep.subr.mxu0 0.0
      %11299 = vmatpush1.msra.mxu0 %v10455
      %11300 = vmatprep.subr.mxu0 0.0
      %11301 = vmatpush1.msra.mxu0 %v10454
      %11302 = vmatprep.subr.mxu0 0.0
      %11303 = vmatpush1.msra.mxu0 %v10453
      %11304 = vmatprep.subr.mxu0 0.0
      %11305 = vmatpush1.msra.mxu0 %v10452
      %11306 = vmatprep.subr.mxu0 0.0
      %11307 = vmatpush1.msra.mxu0 %v10451
      %11308 = vmatprep.subr.mxu0 0.0
      %11309 = vmatpush1.msra.mxu0 %v10450
      %11310 = vmatprep.subr.mxu0 0.0
      %11311 = vmatpush1.msra.mxu0 %v10449
      %11312 = vmatprep.subr.mxu0 0.0
      %11313 = vmatpush1.msra.mxu0 %v10448
      %11314 = vmatprep.subr.mxu0 0.0
      %11315 = vmatpush1.msra.mxu0 %v10447
      %11316 = vmatprep.subr.mxu0 0.0
      %11317 = vmatpush1.msra.mxu0 %v10446
      %11318 = vmatprep.subr.mxu0 0.0
      %11319 = vmatpush1.msra.mxu0 %v10445
      %11320 = vmatprep.subr.mxu0 0.0
      %11321 = vmatpush1.msra.mxu0 %v10444
      %11322 = vmatprep.subr.mxu0 0.0
      %11323 = vmatpush1.msra.mxu0 %v10443
      %11324 = vmatprep.subr.mxu0 0.0
      %11325 = vmatpush1.msra.mxu0 %v10442
      %11326 = vmatprep.subr.mxu0 0.0
      %11327 = vmatpush2.msra.mxu0 %v10473
      %11328 = vmatprep.subr.mxu0 0.0
      %11329 = vmatpush2.msra.mxu0 %v10472
      %11330 = vmatprep.subr.mxu0 0.0
      %11331 = vmatpush2.msra.mxu0 %v10471
      %11332 = vmatprep.subr.mxu0 0.0
      %11333 = vmatpush2.msra.mxu0 %v10470
      %11334 = vmatprep.subr.mxu0 0.0
      %11335 = vmatpush2.msra.mxu0 %v10469
      %11336 = vmatprep.subr.mxu0 0.0
      %11337 = vmatpush2.msra.mxu0 %v10468
      %11338 = vmatprep.subr.mxu0 0.0
      %11339 = vmatpush2.msra.mxu0 %v10467
      %11340 = vmatprep.subr.mxu0 0.0
      %11341 = vmatpush2.msra.mxu0 %v10466
      %11342 = vmatprep.subr.mxu0 0.0
      %11343 = vmatpush2.msra.mxu0 %v10465
      %11344 = vmatprep.subr.mxu0 0.0
      %11345 = vmatpush2.msra.mxu0 %v10464
      %11346 = vmatprep.subr.mxu0 0.0
      %11347 = vmatpush2.msra.mxu0 %v10463
      %11348 = vmatprep.subr.mxu0 0.0
      %11349 = vmatpush2.msra.mxu0 %v10462
      %11350 = vmatprep.subr.mxu0 0.0
      %11351 = vmatpush2.msra.mxu0 %v10461
      %11352 = vmatprep.subr.mxu0 0.0
      %11353 = vmatpush2.msra.mxu0 %v10460
      %11354 = vmatprep.subr.mxu0 0.0
      %11355 = vmatpush2.msra.mxu0 %v10459
      %11356 = vmatprep.subr.mxu0 0.0
      %11357 = vmatpush2.msra.mxu0 %v10458
      %11358 = vmatprep.mubr.f32.mxu0 %v10503
      %11359 = vmatmul.mubr.f32.gmra.mxu0 %v10500
      %v11360 = vpop.f32.mrf.mxu0
      %v11361 = vadd.f32 %v11176, %v11360
      %v11362 = vpop.f32.mrf.mxu0
      %11363 = vmatprep.mubr.f32.mxu0 %v10515
      %11364 = vmatmul.mubr.f32.gmra.mxu0 %v10513
      %v11365 = vpop.f32.mrf.mxu0
      %v11366 = vadd.f32 %v11181, %v11365
      %v11367 = vpop.f32.mrf.mxu0
      %11368 = vmatprep.mubr.f32.mxu0 %v10527
      %11369 = vmatmul.mubr.f32.gmra.mxu0 %v10525
      %v11370 = vpop.f32.mrf.mxu0
      %v11371 = vadd.f32 %v11186, %v11370
      %v11372 = vpop.f32.mrf.mxu0
      %11373 = vmatprep.mubr.f32.mxu0 %v10539
      %11374 = vmatmul.mubr.f32.gmra.mxu0 %v10537
      %v11375 = vpop.f32.mrf.mxu0
      %v11376 = vadd.f32 %v11191, %v11375
      %v11377 = vpop.f32.mrf.mxu0
      %11378 = vmatprep.mubr.f32.mxu0 %v10551
      %11379 = vmatmul.mubr.f32.gmra.mxu0 %v10549
      %v11380 = vpop.f32.mrf.mxu0
      %v11381 = vadd.f32 %v11196, %v11380
      %v11382 = vpop.f32.mrf.mxu0
      %11383 = vmatprep.mubr.f32.mxu0 %v10563
      %11384 = vmatmul.mubr.f32.gmra.mxu0 %v10561
      %v11385 = vpop.f32.mrf.mxu0
      %v11386 = vadd.f32 %v11201, %v11385
      %v11387 = vpop.f32.mrf.mxu0
      %11388 = vmatprep.mubr.f32.mxu0 %v10575
      %11389 = vmatmul.mubr.f32.gmra.mxu0 %v10573
      %v11390 = vpop.f32.mrf.mxu0
      %v11391 = vadd.f32 %v11206, %v11390
      %v11392 = vpop.f32.mrf.mxu0
      %11393 = vmatprep.mubr.f32.mxu0 %v10587
      %11394 = vmatmul.mubr.f32.gmra.mxu0 %v10585
      %v11395 = vpop.f32.mrf.mxu0
      %v11396 = vadd.f32 %v11211, %v11395
      %v11397 = vpop.f32.mrf.mxu0
      %11398 = vmatprep.mubr.f32.mxu0 %v10599
      %11399 = vmatmul.mubr.f32.gmra.mxu0 %v10597
      %v11400 = vpop.f32.mrf.mxu0
      %v11401 = vadd.f32 %v11216, %v11400
      %v11402 = vpop.f32.mrf.mxu0
      %11403 = vmatprep.mubr.f32.mxu0 %v10611
      %11404 = vmatmul.mubr.f32.gmra.mxu0 %v10609
      %v11405 = vpop.f32.mrf.mxu0
      %v11406 = vadd.f32 %v11221, %v11405
      %v11407 = vpop.f32.mrf.mxu0
      %11408 = vmatprep.mubr.f32.mxu0 %v10623
      %11409 = vmatmul.mubr.f32.gmra.mxu0 %v10621
      %v11410 = vpop.f32.mrf.mxu0
      %v11411 = vadd.f32 %v11226, %v11410
      %v11412 = vpop.f32.mrf.mxu0
      %11413 = vmatprep.mubr.f32.mxu0 %v10635
      %11414 = vmatmul.mubr.f32.gmra.mxu0 %v10633
      %v11415 = vpop.f32.mrf.mxu0
      %v11416 = vadd.f32 %v11231, %v11415
      %v11417 = vpop.f32.mrf.mxu0
      %11418 = vmatprep.mubr.f32.mxu0 %v10647
      %11419 = vmatmul.mubr.f32.gmra.mxu0 %v10645
      %v11420 = vpop.f32.mrf.mxu0
      %v11421 = vadd.f32 %v11236, %v11420
      %v11422 = vpop.f32.mrf.mxu0
      %11423 = vmatprep.mubr.f32.mxu0 %v10659
      %11424 = vmatmul.mubr.f32.gmra.mxu0 %v10657
      %v11425 = vpop.f32.mrf.mxu0
      %v11426 = vadd.f32 %v11241, %v11425
      %v11427 = vpop.f32.mrf.mxu0
      %11428 = vmatprep.mubr.f32.mxu0 %v10671
      %11429 = vmatmul.mubr.f32.gmra.mxu0 %v10669
      %v11430 = vpop.f32.mrf.mxu0
      %v11431 = vadd.f32 %v11246, %v11430
      %v11432 = vpop.f32.mrf.mxu0
      %11433 = vmatprep.mubr.f32.mxu0 %v10683
      %11434 = vmatmul.mubr.f32.gmra.mxu0 %v10681
      %v11435 = vpop.f32.mrf.mxu0
      %v11436 = vadd.f32 %v11251, %v11435
      %v11437 = vpop.f32.mrf.mxu0
      %11438 = vmatprep.mubr.f32.mxu0 %v10695
      %11439 = vmatmul.mubr.f32.gmra.mxu0 %v10693
      %v11440 = vpop.f32.mrf.mxu0
      %v11441 = vadd.f32 %v11256, %v11440
      %v11442 = vpop.f32.mrf.mxu0
      %11443 = vmatprep.mubr.f32.mxu0 %v10707
      %11444 = vmatmul.mubr.f32.gmra.mxu0 %v10705
      %v11445 = vpop.f32.mrf.mxu0
      %v11446 = vadd.f32 %v11261, %v11445
      %v11447 = vpop.f32.mrf.mxu0
      %11448 = vmatprep.mubr.f32.mxu0 %v10719
      %11449 = vmatmul.mubr.f32.gmra.mxu0 %v10717
      %v11450 = vpop.f32.mrf.mxu0
      %v11451 = vadd.f32 %v11266, %v11450
      %v11452 = vpop.f32.mrf.mxu0
      %11453 = vmatprep.mubr.f32.mxu0 %v10731
      %11454 = vmatmul.mubr.f32.gmra.mxu0 %v10729
      %v11455 = vpop.f32.mrf.mxu0
      %v11456 = vadd.f32 %v11271, %v11455
      %v11457 = vpop.f32.mrf.mxu0
      %11458 = vmatprep.mubr.f32.mxu0 %v10743
      %11459 = vmatmul.mubr.f32.gmra.mxu0 %v10741
      %v11460 = vpop.f32.mrf.mxu0
      %v11461 = vadd.f32 %v11276, %v11460
      %v11462 = vpop.f32.mrf.mxu0
      %11463 = vmatprep.mubr.f32.mxu0 %v10755
      %11464 = vmatmul.mubr.f32.gmra.mxu0 %v10753
      %v11465 = vpop.f32.mrf.mxu0
      %v11466 = vadd.f32 %v11281, %v11465
      %v11467 = vpop.f32.mrf.mxu0
      %11468 = vmatprep.mubr.f32.mxu0 %v10767
      %11469 = vmatmul.mubr.f32.gmra.mxu0 %v10765
      %v11470 = vpop.f32.mrf.mxu0
      %v11471 = vadd.f32 %v11286, %v11470
      %v11472 = vpop.f32.mrf.mxu0
      %11473 = vmatprep.mubr.f32.mxu0 %v10779
      %11474 = vmatmul.mubr.f32.gmra.mxu0 %v10777
      %v11475 = vpop.f32.mrf.mxu0
      %v11476 = vadd.f32 %v11291, %v11475
      %v11477 = vpop.f32.mrf.mxu0
      %11478 = vdwg.mxu0
      %v11479 = vadd.f32 %v10341, %v11361
      %v11480 = vadd.f32 %v10342, %v11366
      %v11481 = vadd.f32 %v10343, %v11371
      %v11482 = vadd.f32 %v10344, %v11376
      %v11483 = vadd.f32 %v10345, %v11381
      %v11484 = vadd.f32 %v10346, %v11386
      %v11485 = vadd.f32 %v10347, %v11391
      %v11486 = vadd.f32 %v10348, %v11396
      %v11487 = vadd.f32 %v10349, %v11401
      %v11488 = vadd.f32 %v10350, %v11406
      %v11489 = vadd.f32 %v10351, %v11411
      %v11490 = vadd.f32 %v10352, %v11416
      %v11491 = vadd.f32 %v10353, %v11421
      %v11492 = vadd.f32 %v10354, %v11426
      %v11493 = vadd.f32 %v10355, %v11431
      %v11494 = vadd.f32 %v10356, %v11436
      %v11495 = vadd.f32 %v10357, %v11441
      %v11496 = vadd.f32 %v10358, %v11446
      %v11497 = vadd.f32 %v10359, %v11451
      %v11498 = vadd.f32 %v10360, %v11456
      %v11499 = vadd.f32 %v10361, %v11461
      %v11500 = vadd.f32 %v10362, %v11466
      %v11501 = vadd.f32 %v10363, %v11471
      %v11502 = vadd.f32 %v10364, %v11476
      %v11503 = vld [vmem:[%s4] sm:$0x1]
      %v11505 = vlaneseq
      %v11506 = vshrl.u32 %v11505, 7
      %v11507 = vsub.s32 0, %v11506
      %v11508 = vrot.slane %v11503, %v11507
      %v11510 = vadd.f32 %v11479, %v11508
      %v11511 = vadd.f32 %v11480, %v11508
      %v11512 = vadd.f32 %v11481, %v11508
      %v11513 = vadd.f32 %v11482, %v11508
      %v11514 = vadd.f32 %v11483, %v11508
      %v11515 = vadd.f32 %v11484, %v11508
      %v11516 = vadd.f32 %v11485, %v11508
      %v11517 = vadd.f32 %v11486, %v11508
      %v11518 = vadd.f32 %v11487, %v11508
      %v11519 = vadd.f32 %v11488, %v11508
      %v11520 = vadd.f32 %v11489, %v11508
      %v11521 = vadd.f32 %v11490, %v11508
      %v11522 = vadd.f32 %v11491, %v11508
      %v11523 = vadd.f32 %v11492, %v11508
      %v11524 = vadd.f32 %v11493, %v11508
      %v11525 = vadd.f32 %v11494, %v11508
      %v11526 = vadd.f32 %v11495, %v11508
      %v11527 = vadd.f32 %v11496, %v11508
      %v11528 = vadd.f32 %v11497, %v11508
      %v11529 = vadd.f32 %v11498, %v11508
      %v11530 = vadd.f32 %v11499, %v11508
      %v11531 = vadd.f32 %v11500, %v11508
      %v11532 = vadd.f32 %v11501, %v11508
      %v11533 = vadd.f32 %v11502, %v11508
      %v11534 = vmax.f32 %v11510, 0.0
      %v11535 = vmax.f32 %v11511, 0.0
      %v11536 = vmax.f32 %v11512, 0.0
      %v11537 = vmax.f32 %v11513, 0.0
      %v11538 = vmax.f32 %v11514, 0.0
      %v11539 = vmax.f32 %v11515, 0.0
      %v11540 = vmax.f32 %v11516, 0.0
      %v11541 = vmax.f32 %v11517, 0.0
      %v11542 = vmax.f32 %v11518, 0.0
      %v11543 = vmax.f32 %v11519, 0.0
      %v11544 = vmax.f32 %v11520, 0.0
      %v11545 = vmax.f32 %v11521, 0.0
      %v11546 = vmax.f32 %v11522, 0.0
      %v11547 = vmax.f32 %v11523, 0.0
      %v11548 = vmax.f32 %v11524, 0.0
      %v11549 = vmax.f32 %v11525, 0.0
      %v11550 = vmax.f32 %v11526, 0.0
      %v11551 = vmax.f32 %v11527, 0.0
      %v11552 = vmax.f32 %v11528, 0.0
      %v11553 = vmax.f32 %v11529, 0.0
      %v11554 = vmax.f32 %v11530, 0.0
      %v11555 = vmax.f32 %v11531, 0.0
      %v11556 = vmax.f32 %v11532, 0.0
      %v11557 = vmax.f32 %v11533, 0.0
      %vm11558 = vcmask 523264
      %11559 = vst.msk [vmem:[#allocation3] sm:$0xff] %vm11558, %v11534
      %11560 = vst.msk [vmem:[#allocation3 + $0x8] sm:$0xff] %vm11558, %v11535
      %11561 = vst.msk [vmem:[#allocation3 + $0x10] sm:$0xff] %vm11558, %v11536
      %11562 = vst.msk [vmem:[#allocation3 + $0x18] sm:$0xff] %vm11558, %v11537
      %11563 = vst.msk [vmem:[#allocation3 + $0x20] sm:$0xff] %vm11558, %v11538
      %11564 = vst.msk [vmem:[#allocation3 + $0x28] sm:$0xff] %vm11558, %v11539
      %11565 = vst.msk [vmem:[#allocation3 + $0x30] sm:$0xff] %vm11558, %v11540
      %11566 = vst.msk [vmem:[#allocation3 + $0x38] sm:$0xff] %vm11558, %v11541
      %11567 = vst.msk [vmem:[#allocation3 + $0x40] sm:$0xff] %vm11558, %v11542
      %11568 = vst.msk [vmem:[#allocation3 + $0x48] sm:$0xff] %vm11558, %v11543
      %11569 = vst.msk [vmem:[#allocation3 + $0x50] sm:$0xff] %vm11558, %v11544
      %11570 = vst.msk [vmem:[#allocation3 + $0x58] sm:$0xff] %vm11558, %v11545
      %11571 = vst.msk [vmem:[#allocation3 + $0x60] sm:$0xff] %vm11558, %v11546
      %11572 = vst.msk [vmem:[#allocation3 + $0x68] sm:$0xff] %vm11558, %v11547
      %11573 = vst.msk [vmem:[#allocation3 + $0x70] sm:$0xff] %vm11558, %v11548
      %11574 = vst.msk [vmem:[#allocation3 + $0x78] sm:$0xff] %vm11558, %v11549
      %11575 = vst.msk [vmem:[#allocation3 + $0x80] sm:$0xff] %vm11558, %v11550
      %11576 = vst.msk [vmem:[#allocation3 + $0x88] sm:$0xff] %vm11558, %v11551
      %11577 = vst.msk [vmem:[#allocation3 + $0x90] sm:$0xff] %vm11558, %v11552
      %11578 = vst.msk [vmem:[#allocation3 + $0x98] sm:$0xff] %vm11558, %v11553
      %11579 = vst.msk [vmem:[#allocation3 + $0xa0] sm:$0xff] %vm11558, %v11554
      %11580 = vst.msk [vmem:[#allocation3 + $0xa8] sm:$0xff] %vm11558, %v11555
      %11581 = vst.msk [vmem:[#allocation3 + $0xb0] sm:$0xff] %vm11558, %v11556
      %11582 = vst.msk [vmem:[#allocation3 + $0xb8] sm:$0xff] %vm11558, %v11557
      %v11583 = vld [vmem:[#allocation3] ss:$2 sm:$0x3f]
      %s11584 = scalar_lea.vmem [#allocation3], 1
      %v11585 = vld [vmem:[%s11584] ss:$2 sm:$0x3f]
      %v11586 = vmax.f32 %v11583, %v11585
      %s11587 = scalar_lea.vmem [#allocation3], 16
      %v11588 = vld [vmem:[%s11587] ss:$2 sm:$0x3f]
      %s11589 = scalar_lea.vmem [#allocation3], 17
      %v11590 = vld [vmem:[%s11589] ss:$2 sm:$0x3f]
      %v11591 = vmax.f32 %v11588, %v11590
      %v11592 = vmax.f32 %v11586, %v11591
      %vm11593 = vcmask 521216
      %11594 = vst.msk [vmem:[%s224] sm:$0x3f] %vm11593, %v11592
      %s11595 = scalar_lea.vmem [#allocation3], 32
      %v11596 = vld [vmem:[%s11595] ss:$2 sm:$0x3f]
      %s11597 = scalar_lea.vmem [#allocation3], 33
      %v11598 = vld [vmem:[%s11597] ss:$2 sm:$0x3f]
      %v11599 = vmax.f32 %v11596, %v11598
      %s11600 = scalar_lea.vmem [#allocation3], 48
      %v11601 = vld [vmem:[%s11600] ss:$2 sm:$0x3f]
      %s11602 = scalar_lea.vmem [#allocation3], 49
      %v11603 = vld [vmem:[%s11602] ss:$2 sm:$0x3f]
      %v11604 = vmax.f32 %v11601, %v11603
      %v11605 = vmax.f32 %v11599, %v11604
      %11606 = vst.msk [vmem:[%s224 + $0x6] sm:$0x3f] %vm11593, %v11605
      %s11607 = scalar_lea.vmem [#allocation3], 64
      %v11608 = vld [vmem:[%s11607] ss:$2 sm:$0x3f]
      %s11609 = scalar_lea.vmem [#allocation3], 65
      %v11610 = vld [vmem:[%s11609] ss:$2 sm:$0x3f]
      %v11611 = vmax.f32 %v11608, %v11610
      %s11612 = scalar_lea.vmem [#allocation3], 80
      %v11613 = vld [vmem:[%s11612] ss:$2 sm:$0x3f]
      %s11614 = scalar_lea.vmem [#allocation3], 81
      %v11615 = vld [vmem:[%s11614] ss:$2 sm:$0x3f]
      %v11616 = vmax.f32 %v11613, %v11615
      %v11617 = vmax.f32 %v11611, %v11616
      %11618 = vst.msk [vmem:[%s224 + $0xc] sm:$0x3f] %vm11593, %v11617
      %s11619 = scalar_lea.vmem [#allocation3], 96
      %v11620 = vld [vmem:[%s11619] ss:$2 sm:$0x3f]
      %s11621 = scalar_lea.vmem [#allocation3], 97
      %v11622 = vld [vmem:[%s11621] ss:$2 sm:$0x3f]
      %v11623 = vmax.f32 %v11620, %v11622
      %s11624 = scalar_lea.vmem [#allocation3], 112
      %v11625 = vld [vmem:[%s11624] ss:$2 sm:$0x3f]
      %s11626 = scalar_lea.vmem [#allocation3], 113
      %v11627 = vld [vmem:[%s11626] ss:$2 sm:$0x3f]
      %v11628 = vmax.f32 %v11625, %v11627
      %v11629 = vmax.f32 %v11623, %v11628
      %11630 = vst.msk [vmem:[%s224 + $0x12] sm:$0x3f] %vm11593, %v11629
      %s11631 = scalar_lea.vmem [#allocation3], 128
      %v11632 = vld [vmem:[%s11631] ss:$2 sm:$0x3f]
      %s11633 = scalar_lea.vmem [#allocation3], 129
      %v11634 = vld [vmem:[%s11633] ss:$2 sm:$0x3f]
      %v11635 = vmax.f32 %v11632, %v11634
      %s11636 = scalar_lea.vmem [#allocation3], 144
      %v11637 = vld [vmem:[%s11636] ss:$2 sm:$0x3f]
      %s11638 = scalar_lea.vmem [#allocation3], 145
      %v11639 = vld [vmem:[%s11638] ss:$2 sm:$0x3f]
      %v11640 = vmax.f32 %v11637, %v11639
      %v11641 = vmax.f32 %v11635, %v11640
      %11642 = vst.msk [vmem:[%s224 + $0x18] sm:$0x3f] %vm11593, %v11641
      %s11643 = scalar_lea.vmem [#allocation3], 160
      %v11644 = vld [vmem:[%s11643] ss:$2 sm:$0x3f]
      %s11645 = scalar_lea.vmem [#allocation3], 161
      %v11646 = vld [vmem:[%s11645] ss:$2 sm:$0x3f]
      %v11647 = vmax.f32 %v11644, %v11646
      %s11648 = scalar_lea.vmem [#allocation3], 176
      %v11649 = vld [vmem:[%s11648] ss:$2 sm:$0x3f]
      %s11650 = scalar_lea.vmem [#allocation3], 177
      %v11651 = vld [vmem:[%s11650] ss:$2 sm:$0x3f]
      %v11652 = vmax.f32 %v11649, %v11651
      %v11653 = vmax.f32 %v11647, %v11652
      %11654 = vst.msk [vmem:[%s224 + $0x1e] sm:$0x3f] %vm11593, %v11653
      %p11655 = scmp.lt.s32.totalorder %s16, 1
      %s11656 = scalar_select %p11655, %s16, 1
      %s11657 = smul.addr %s11656, 5
      %s11658 = smul.addr %s11657, 8
      %s11659 = scalar_lea.vmem %s5, %s11658
      // Predicated region
      $region41: #{net_part1_forward.1} parent=39 // pred_check
        %p11660 = pneg %p144
      $region42: #{net_part1_forward.1} parent=39 // pred_check_branch
        %11662 = sbr.rel (%p11660) target = $region44
      $region43: #{net_part1_forward.1} parent=39 // pred_region
        _
      $region44: #{net_part1_forward.1} parent=39 // pred_fallthru
        _
    $region40: #{net_part1_forward.1} parent=5 // pred_fallthru
      _
    %p11663 = scmp.le.s32.totalorder 2, %s11
    // Predicated region
    $region45: #{net_part1_forward.1} parent=5 // pred_check
      %p11664 = pneg %p11663
    $region46: #{net_part1_forward.1} parent=5 // pred_check_branch
      %11666 = sbr.rel (%p11664) target = $region48
    $region47: #{net_part1_forward.1} parent=5 // pred_region
      %s11667 = ssub.s32 %s11, 2
      // Predicated region
      $region49: #{net_part1_forward.1} parent=47 // pred_check
        %p11668 = pneg %p150
      $region50: #{net_part1_forward.1} parent=47 // pred_check_branch
        %11670 = sbr.rel (%p11668) target = $region52
      $region51: #{net_part1_forward.1} parent=47 // pred_region
        %p11671 = scmp.lt.s32.totalorder %s17, 1
        %s11672 = scalar_select %p11671, %s17, 1
        %s11673 = smul.addr %s11672, 5
        %s11674 = smul.addr %s11673, 8
        %s11675 = scalar_lea.vmem %s5, %s11674
      $region52: #{net_part1_forward.1} parent=47 // pred_fallthru
        _
    $region48: #{net_part1_forward.1} parent=5 // pred_fallthru
      _
  $region6: #{net_part1_forward.1} parent=0 // loop_footer
    %s15 = sadd.s32 1, %s11
  $region7: #{net_part1_forward.1} parent=0 // loop_footer_branch
    %10 = sbr.rel target = $region3
  $region8: #{net_part1_forward.1} parent=0 // loop_exit
    _

</llo_original>
